<compile_context>
chip_gen: v6e
topology: v6e:2x2x1
jax: 0.10.0
libtpu: 0.0.40
codegen_flags: <defaults>
</compile_context>

<pallas_src>
import functools
import math

import numpy as np
import jax
import jax.numpy as jnp
from jax.experimental import pallas as pl
from jax.experimental.pallas import tpu as pltpu


# ------------------------------------------------------------------
# Kernel 1: conv-as-GEMM for the backbone convs (BN folded, ReLU fused).
#   cols : (B, K, M)   K = Cin*kh*kw (padded to mult. of 8), M = Ho*Wo
#   w    : (Cout, K)   folded conv+BN weight
#   b    : (Cout, 1)   folded bias
#   out  : (B, Cout, M)  -> lane-dense stores (M on lanes), NCHW after reshape
# ------------------------------------------------------------------
def _conv_gemm_kernel(cols_ref, w_ref, b_ref, o_ref):
    y = jnp.dot(w_ref[...], cols_ref[0], preferred_element_type=jnp.float32)
    o_ref[0] = jnp.maximum(y + b_ref[...], 0.0).astype(o_ref.dtype)


def conv_gemm(cols, w, b):
    B, K, M = cols.shape
    Cout = w.shape[0]
    return pl.pallas_call(
        _conv_gemm_kernel,
        grid=(B,),
        in_specs=[pl.BlockSpec((1, K, M), lambda i: (i, 0, 0)),
                  pl.BlockSpec((Cout, K), lambda i: (0, 0)),
                  pl.BlockSpec((Cout, 1), lambda i: (0, 0))],
        out_specs=pl.BlockSpec((1, Cout, M), lambda i: (i, 0, 0)),
        out_shape=jax.ShapeDtypeStruct((B, Cout, M), jnp.float32),
        compiler_params=pltpu.CompilerParams(
            dimension_semantics=("parallel",),
            vmem_limit_bytes=64 * 1024 * 1024),
        cost_estimate=pl.CostEstimate(
            flops=2 * B * Cout * K * M, transcendentals=0,
            bytes_accessed=4 * (B * K * M + Cout * K + Cout + B * Cout * M)),
    )(cols, w, b)


def fold_bn(p):
    """Fold eval-mode BatchNorm (eps=1e-5) into conv weight/bias."""
    scale = p["gamma"] * jax.lax.rsqrt(p["var"] + 1e-5)
    w_f = p["w"] * scale[:, None, None, None]
    b_f = (p["b"] - p["mean"]) * scale + p["beta"]
    return w_f, b_f


def conv_bn_relu_gemm(x, p, padding):
    """Backbone ConvBNReLU via lane-dense im2col GEMM. NCHW in/out."""
    w_f, b_f = fold_bn(p)
    cout, cin, kh, kw = p["w"].shape
    if padding:
        x = jnp.pad(x, ((0, 0), (0, 0), (padding, padding), (padding, padding)))
    B, C, H, W = x.shape
    Ho, Wo = H - kh + 1, W - kw + 1
    # im2col in (B, K, M) layout; K order = (Cin, kh, kw), matching the
    # row-major reshape of the (Cout, Cin, kh, kw) conv weight.
    taps = [x[:, :, di:di + Ho, dj:dj + Wo] for di in range(kh) for dj in range(kw)]
    cols = jnp.stack(taps, axis=2).reshape(B, cin * kh * kw, Ho * Wo)
    w2 = w_f.reshape(cout, cin * kh * kw)
    K = cin * kh * kw
    K8 = ((K + 7) // 8) * 8
    if K8 != K:                      # pad contraction dim to a sublane multiple
        cols = jnp.pad(cols, ((0, 0), (0, K8 - K), (0, 0)))
        w2 = jnp.pad(w2, ((0, 0), (0, K8 - K)))
    out = conv_gemm(cols, w2, b_f.reshape(cout, 1))
    return out.reshape(B, cout, Ho, Wo)


# ------------------------------------------------------------------
# Kernel 2: one fused CTC block per batch element, channels x tokens layout.
# ------------------------------------------------------------------
def _ctc_block_kernel(x_ref, shift_ref, pool_ref, w1_ref, b1_ref, w2_ref, b2_ref,
                      in_w_ref, in_b_ref, out_w_ref, out_b_ref,
                      ln1_g_ref, ln1_b_ref, ff1_w_ref, ff1_b_ref,
                      ff2_w_ref, ff2_b_ref, ln2_g_ref, ln2_b_ref, o_ref,
                      *, num_head, num_layers, num_taps, eps):
    f32 = jnp.float32
    x = x_ref[0]                                   # (C, S)  channels x tokens
    C, S = x.shape

    def conv3x3(h, wt_ref, bias_ref):
        # conv(pad=1) = sum_t W_t @ (h @ Shift_t), BN folded, ReLU fused.
        acc = jnp.zeros((C, S), f32)
        for t in range(num_taps):
            shifted = jnp.dot(h, shift_ref[t], preferred_element_type=f32)
            acc = acc + jnp.dot(wt_ref[t], shifted, preferred_element_type=f32)
        return jnp.maximum(acc + bias_ref[...], 0.0)

    def layer_norm(h, g, b):                       # normalize over channel axis 0
        mu = jnp.mean(h, axis=0, keepdims=True)
        var = jnp.mean(jnp.square(h - mu), axis=0, keepdims=True)
        return (h - mu) * jax.lax.rsqrt(var + eps) * g + b

    h = conv3x3(x, w1_ref, b1_ref)

    dh = C // num_head
    scale = 1.0 / math.sqrt(dh)
    for l in range(num_layers):                    # post-norm encoder layers
        qkv = jnp.dot(in_w_ref[l], h, preferred_element_type=f32) + in_b_ref[l]
        q_rows = qkv[0:C, :].T                     # (S, C) — one tiny transpose
        out_w = out_w_ref[l]                       # (C, C)  (= out_proj.W^T)
        attn = jnp.zeros((C, S), f32)
        for hd in range(num_head):
            q = q_rows[:, hd * dh:(hd + 1) * dh]                   # (S, dh)
            k = qkv[C + hd * dh:C + (hd + 1) * dh, :]              # (dh, S)
            v = qkv[2 * C + hd * dh:2 * C + (hd + 1) * dh, :]      # (dh, S)
            s = jnp.dot(q, k, preferred_element_type=f32) * scale  # (S, S)
            m = jnp.max(s, axis=-1, keepdims=True)
            e = jnp.exp(s - m)
            p = e * pl.reciprocal(jnp.sum(e, axis=-1, keepdims=True), approx=True)
            o_h = jax.lax.dot_general(v, p, (((1,), (1,)), ((), ())),
                                      preferred_element_type=f32)  # (dh, S)
            attn = attn + jnp.dot(out_w[:, hd * dh:(hd + 1) * dh], o_h,
                                  preferred_element_type=f32)
        attn = attn + out_b_ref[l]
        h = layer_norm(h + attn, ln1_g_ref[l], ln1_b_ref[l])
        ff = jnp.maximum(jnp.dot(ff1_w_ref[l], h, preferred_element_type=f32)
                         + ff1_b_ref[l], 0.0)
        ff = jnp.dot(ff2_w_ref[l], ff, preferred_element_type=f32) + ff2_b_ref[l]
        h = layer_norm(h + ff, ln2_g_ref[l], ln2_b_ref[l])

    z = conv3x3(h, w2_ref, b2_ref)
    # residual + AvgPool2d((3,3), stride=1, pad=1, count_include_pad) as a matmul
    o_ref[0] = jnp.dot(z + x, pool_ref[...],
                       preferred_element_type=f32).astype(o_ref.dtype)


def ctc_block(x, p, shift, pool, num_head):
    """Entire CTC block in one Pallas kernel per batch element. x: (B, C, S)."""
    B, C, S = x.shape
    L = len(p["enc_layers"])
    T = shift.shape[0]
    F = p["enc_layers"][0]["ff1_w"].shape[1]

    def fold_taps(cp):
        w_f, b_f = fold_bn(cp)
        w_t = w_f.transpose(2, 3, 0, 1).reshape(T, C, C)   # (tap, Cout, Cin)
        return w_t, b_f.reshape(C, 1)

    w1, b1 = fold_taps(p["conv1"])
    w2, b2 = fold_taps(p["conv2"])

    layers = p["enc_layers"]
    in_w = jnp.stack([lp["in_w"].T for lp in layers])                 # (L,3C,C)
    in_b = jnp.stack([lp["in_b"].reshape(3 * C, 1) for lp in layers])
    out_w = jnp.stack([lp["out_w"].T for lp in layers])               # (L,C,C)
    out_b = jnp.stack([lp["out_b"].reshape(C, 1) for lp in layers])
    ff1_w = jnp.stack([lp["ff1_w"].T for lp in layers])               # (L,F,C)
    ff1_b = jnp.stack([lp["ff1_b"].reshape(F, 1) for lp in layers])
    ff2_w = jnp.stack([lp["ff2_w"].T for lp in layers])               # (L,C,F)
    ff2_b = jnp.stack([lp["ff2_b"].reshape(C, 1) for lp in layers])
    ln1_g = jnp.stack([lp["ln1_g"].reshape(C, 1) for lp in layers])
    ln1_b = jnp.stack([lp["ln1_b"].reshape(C, 1) for lp in layers])
    ln2_g = jnp.stack([lp["ln2_g"].reshape(C, 1) for lp in layers])
    ln2_b = jnp.stack([lp["ln2_b"].reshape(C, 1) for lp in layers])

    def full(*shape):
        n = len(shape)
        return pl.BlockSpec(shape, lambda i: (0,) * n)

    kern = functools.partial(_ctc_block_kernel, num_head=num_head,
                             num_layers=L, num_taps=T, eps=1e-5)
    dh = C // num_head
    flops = B * (2 * T * (2 * C * S * S + 2 * C * C * S)
                 + L * (2 * 3 * C * C * S + num_head * 4 * dh * S * S
                        + 2 * C * C * S + 4 * C * F * S)
                 + 2 * C * S * S)
    return pl.pallas_call(
        kern,
        grid=(B,),
        in_specs=[pl.BlockSpec((1, C, S), lambda i: (i, 0, 0)),
                  full(T, S, S), full(S, S),
                  full(T, C, C), full(C, 1), full(T, C, C), full(C, 1),
                  full(L, 3 * C, C), full(L, 3 * C, 1),
                  full(L, C, C), full(L, C, 1),
                  full(L, C, 1), full(L, C, 1),
                  full(L, F, C), full(L, F, 1),
                  full(L, C, F), full(L, C, 1),
                  full(L, C, 1), full(L, C, 1)],
        out_specs=pl.BlockSpec((1, C, S), lambda i: (i, 0, 0)),
        out_shape=jax.ShapeDtypeStruct((B, C, S), jnp.float32),
        compiler_params=pltpu.CompilerParams(
            dimension_semantics=("parallel",),
            vmem_limit_bytes=64 * 1024 * 1024),
        cost_estimate=pl.CostEstimate(
            flops=flops, transcendentals=B * L * num_head * S * S,
            bytes_accessed=4 * (2 * B * C * S + T * S * S + S * S)),
    )(x, shift, pool, w1, b1, w2, b2,
      in_w, in_b, out_w, out_b, ln1_g, ln1_b,
      ff1_w, ff1_b, ff2_w, ff2_b, ln2_g, ln2_b)


# ------------------------------------------------------------------
# Kernel 3: fused LayerNorm(512) + Linear(512 -> num_class).
# ------------------------------------------------------------------
def _head_kernel(x_ref, g_ref, bta_ref, w_ref, b_ref, o_ref, *, eps):
    x = x_ref[...]                                 # (B, D), D on lanes
    mu = jnp.mean(x, axis=-1, keepdims=True)
    var = jnp.mean(jnp.square(x - mu), axis=-1, keepdims=True)
    xn = (x - mu) * jax.lax.rsqrt(var + eps) * g_ref[...] + bta_ref[...]
    o_ref[...] = (jnp.dot(xn, w_ref[...], preferred_element_type=jnp.float32)
                  + b_ref[...]).astype(o_ref.dtype)


def mlp_head(x, g, bta, w, b):
    B, D = x.shape
    N = w.shape[1]
    return pl.pallas_call(
        functools.partial(_head_kernel, eps=1e-5),
        out_shape=jax.ShapeDtypeStruct((B, N), jnp.float32),
    )(x, g.reshape(1, D), bta.reshape(1, D), w, b.reshape(1, N))


# ------------------------------------------------------------------
# Constant operators for the fused CTC kernel.
# ------------------------------------------------------------------
def build_shift_and_pool(H, W):
    """3x3/pad-1 shift matrices (x @ S[t] gathers tap t with zero padding) and
    the matching 3x3 stride-1 pad-1 average-pool operator (count_include_pad)."""
    S = H * W
    shift = np.zeros((9, S, S), np.float32)
    for di in range(3):
        for dj in range(3):
            t = di * 3 + dj
            for ho in range(H):
                for wo in range(W):
                    hi, wi = ho + di - 1, wo + dj - 1
                    if 0 <= hi < H and 0 <= wi < W:
                        shift[t, hi * W + wi, ho * W + wo] = 1.0
    pool = shift.sum(axis=0) / 9.0
    return jnp.asarray(shift), jnp.asarray(pool)


# ------------------------------------------------------------------
# Full forward (eval mode: dropout = identity, BN uses running stats).
# ------------------------------------------------------------------
def net_a_forward(params, x, num_head, shift, pool):
    # backbone (size == 8): conv5 -> conv5 -> maxpool 3/3 -> CTC -> flatten
    x = conv_bn_relu_gemm(x, params["bb1"], padding=0)
    x = conv_bn_relu_gemm(x, params["bb2"], padding=0)
    B, C, H, W = x.shape
    x = x.reshape(B, C, H // 3, 3, W // 3, 3).max(axis=(3, 5))  # MaxPool2d((3,3))
    B, C, H, W = x.shape
    x = x.reshape(B, C, H * W)                   # channels x tokens layout
    for blk in params["ctc_blocks"]:
        x = ctc_block(x, blk, shift, pool, num_head)
    f = x.reshape(B, -1)                         # Rearrange 'b c h w -> b (c h w)'
    return mlp_head(f, params["mlp_ln_g"], params["mlp_ln_b"],
                    params["mlp_w"], params["mlp_b"])


# ---------------- deterministic parameter init ----------------
def _ninit(key, shape, scale=0.05):
    return scale * jax.random.normal(key, shape, dtype=jnp.float32)


def init_conv_bn(key, cin, cout, k):
    k1, k2 = jax.random.split(key)
    return dict(
        w=_ninit(k1, (cout, cin, k, k)),
        b=_ninit(k2, (cout,)),
        gamma=jnp.ones((cout,), jnp.float32),
        beta=jnp.zeros((cout,), jnp.float32),
        mean=jnp.zeros((cout,), jnp.float32),
        var=jnp.ones((cout,), jnp.float32),
    )


def init_encoder_layer(key, c, dim_ff):
    ks = jax.random.split(key, 4)
    return dict(
        in_w=_ninit(ks[0], (c, 3 * c)), in_b=jnp.zeros((3 * c,), jnp.float32),
        out_w=_ninit(ks[1], (c, c)), out_b=jnp.zeros((c,), jnp.float32),
        ff1_w=_ninit(ks[2], (c, dim_ff)), ff1_b=jnp.zeros((dim_ff,), jnp.float32),
        ff2_w=_ninit(ks[3], (dim_ff, c)), ff2_b=jnp.zeros((c,), jnp.float32),
        ln1_g=jnp.ones((c,), jnp.float32), ln1_b=jnp.zeros((c,), jnp.float32),
        ln2_g=jnp.ones((c,), jnp.float32), ln2_b=jnp.zeros((c,), jnp.float32),
    )


def init_net_params(key, num_class, num_channel, num_layers, num_blocks):
    keys = jax.random.split(key, 4 + num_blocks)
    dim_mlp = num_channel * 64          # size == 8 branch
    params = dict(
        bb1=init_conv_bn(keys[0], 3, num_channel, 5),
        bb2=init_conv_bn(keys[1], num_channel, num_channel, 5),
        ctc_blocks=[],
        mlp_ln_g=jnp.ones((dim_mlp,), jnp.float32),
        mlp_ln_b=jnp.zeros((dim_mlp,), jnp.float32),
        mlp_w=_ninit(keys[2], (dim_mlp, num_class)),
        mlp_b=jnp.zeros((num_class,), jnp.float32),
    )
    for bi in range(num_blocks):
        bk = jax.random.split(keys[4 + bi], 2 + num_layers)
        params["ctc_blocks"].append(dict(
            conv1=init_conv_bn(bk[0], num_channel, num_channel, 3),
            conv2=init_conv_bn(bk[1], num_channel, num_channel, 3),
            # dim_feedforward == num_channel in MHSA(...)
            enc_layers=[init_encoder_layer(bk[2 + li], num_channel, num_channel)
                        for li in range(num_layers)],
        ))
    return params


if __name__ == "__main__":
    # NetA(num_class=10, size=8, num_channel=8, num_head=2, num_layers=1,
    #      num_blocks=1, dropout=0.1) in eval mode; 2x3x32x32 input so the
    # backbone yields the 8x8 map implied by dim_mlp = num_channel * 64.
    num_class, num_channel, num_head, num_layers, num_blocks = 10, 8, 2, 1, 1
    root = jax.random.PRNGKey(0)
    xkey, pkey = jax.random.split(root)
    x = jax.random.normal(xkey, (2, 3, 32, 32), dtype=jnp.float32)
    params = init_net_params(pkey, num_class, num_channel, num_layers, num_blocks)
    shift, pool = build_shift_and_pool(8, 8)

    fwd = jax.jit(lambda p, xx: net_a_forward(p, xx, num_head, shift, pool))
    out = jax.block_until_ready(fwd(params, x))
    assert out.shape == (2, num_class) and out.dtype == jnp.float32
    print("KERNEL_OK")
</pallas_src>

<mosaic_0001>
module attributes {stable_mosaic.version = 11 : i64} {
  func.func @_conv_gemm_kernel(%arg0: i32, %arg1: memref<1x80x784xf32, #tpu.memory_space<vmem>>, %arg2: memref<8x80xf32, #tpu.memory_space<vmem>>, %arg3: memref<8x1xf32, #tpu.memory_space<vmem>>, %arg4: memref<1x8x784xf32, #tpu.memory_space<vmem>>) attributes {dimension_semantics = [#tpu.dimension_semantics<parallel>], iteration_bounds = array<i64: 2>, scalar_prefetch = 0 : i64, scratch_operands = 0 : i64, tpu.core_type = #tpu.core_type<tc>, window_params = [{transform_indices = @transform_0, window_bounds = array<i64: 1, 80, 784>}, {pipeline_mode = #tpu.pipeline_mode<synchronous>, transform_indices = @transform_1, window_bounds = array<i64: 8, 80>}, {pipeline_mode = #tpu.pipeline_mode<synchronous>, transform_indices = @transform_2, window_bounds = array<i64: 8, 1>}, {transform_indices = @transform_3, window_bounds = array<i64: 1, 8, 784>}]} {
    %c0 = arith.constant 0 : index
    %c0_0 = arith.constant 0 : index
    %0 = vector.load %arg2[%c0, %c0_0] : memref<8x80xf32, #tpu.memory_space<vmem>>, vector<8x80xf32>
    %c0_1 = arith.constant 0 : index
    %c0_2 = arith.constant 0 : index
    %c0_3 = arith.constant 0 : index
    %1 = vector.load %arg1[%c0_1, %c0_2, %c0_3] : memref<1x80x784xf32, #tpu.memory_space<vmem>>, vector<1x80x784xf32>
    %2 = vector.shape_cast %1 : vector<1x80x784xf32> to vector<80x784xf32>
    %cst = arith.constant dense<0.000000e+00> : vector<8x784xf32>
    %3 = tpu.matmul %0, %2, %cst {dimension_numbers = #tpu.dot_dimension_numbers<[1], [0], [0], [1], [0, 0, 1, 1], [], []>} : vector<8x80xf32>, vector<80x784xf32>, vector<8x784xf32> -> vector<8x784xf32>
    %c0_4 = arith.constant 0 : index
    %c0_5 = arith.constant 0 : index
    %4 = vector.load %arg3[%c0_4, %c0_5] : memref<8x1xf32, #tpu.memory_space<vmem>>, vector<8x1xf32>
    %5 = vector.broadcast %4 : vector<8x1xf32> to vector<8x784xf32>
    %6 = arith.addf %3, %5 : vector<8x784xf32>
    %cst_6 = arith.constant 0.000000e+00 : f32
    %7 = vector.broadcast %cst_6 : f32 to vector<8x784xf32>
    %8 = arith.maximumf %6, %7 : vector<8x784xf32>
    %c0_7 = arith.constant 0 : index
    %c0_8 = arith.constant 0 : index
    %c0_9 = arith.constant 0 : index
    %9 = vector.load %arg4[%c0_7, %c0_8, %c0_9] : memref<1x8x784xf32, #tpu.memory_space<vmem>>, vector<1x8x784xf32>
    %10 = vector.shape_cast %9 : vector<1x8x784xf32> to vector<8x784xf32>
    %11 = vector.shape_cast %8 : vector<8x784xf32> to vector<1x8x784xf32>
    tpu.vector_store %arg4[%c0_7, %c0_8, %c0_9], %11 {strides = array<i32>} : memref<1x8x784xf32, #tpu.memory_space<vmem>>, vector<1x8x784xf32>,
    return
  }
  func.func @transform_0(%arg0: i32) -> (i32, i32, i32) {
    %c0_i32 = arith.constant 0 : i32
    %c0_i32_0 = arith.constant 0 : i32
    %c0_i32_1 = arith.constant 0 : i32
    return %arg0, %c0_i32, %c0_i32_0 : i32, i32, i32
  }
  func.func @transform_1(%arg0: i32) -> (i32, i32) {
    %c0_i32 = arith.constant 0 : i32
    %c0_i32_0 = arith.constant 0 : i32
    %c0_i32_1 = arith.constant 0 : i32
    return %c0_i32, %c0_i32_0 : i32, i32
  }
  func.func @transform_2(%arg0: i32) -> (i32, i32) {
    %c0_i32 = arith.constant 0 : i32
    %c0_i32_0 = arith.constant 0 : i32
    %c0_i32_1 = arith.constant 0 : i32
    return %c0_i32, %c0_i32_0 : i32, i32
  }
  func.func @transform_3(%arg0: i32) -> (i32, i32, i32) {
    %c0_i32 = arith.constant 0 : i32
    %c0_i32_0 = arith.constant 0 : i32
    %c0_i32_1 = arith.constant 0 : i32
    return %arg0, %c0_i32, %c0_i32_0 : i32, i32, i32
  }
}

module attributes {stable_mosaic.version = 11 : i64} {
  func.func @_conv_gemm_kernel(%arg0: i32, %arg1: memref<1x200x576xf32, #tpu.memory_space<vmem>>, %arg2: memref<8x200xf32, #tpu.memory_space<vmem>>, %arg3: memref<8x1xf32, #tpu.memory_space<vmem>>, %arg4: memref<1x8x576xf32, #tpu.memory_space<vmem>>) attributes {dimension_semantics = [#tpu.dimension_semantics<parallel>], iteration_bounds = array<i64: 2>, scalar_prefetch = 0 : i64, scratch_operands = 0 : i64, tpu.core_type = #tpu.core_type<tc>, window_params = [{transform_indices = @transform_0, window_bounds = array<i64: 1, 200, 576>}, {pipeline_mode = #tpu.pipeline_mode<synchronous>, transform_indices = @transform_1, window_bounds = array<i64: 8, 200>}, {pipeline_mode = #tpu.pipeline_mode<synchronous>, transform_indices = @transform_2, window_bounds = array<i64: 8, 1>}, {transform_indices = @transform_3, window_bounds = array<i64: 1, 8, 576>}]} {
    %c0 = arith.constant 0 : index
    %c0_0 = arith.constant 0 : index
    %0 = vector.load %arg2[%c0, %c0_0] : memref<8x200xf32, #tpu.memory_space<vmem>>, vector<8x200xf32>
    %c0_1 = arith.constant 0 : index
    %c0_2 = arith.constant 0 : index
    %c0_3 = arith.constant 0 : index
    %1 = vector.load %arg1[%c0_1, %c0_2, %c0_3] : memref<1x200x576xf32, #tpu.memory_space<vmem>>, vector<1x200x576xf32>
    %2 = vector.shape_cast %1 : vector<1x200x576xf32> to vector<200x576xf32>
    %cst = arith.constant dense<0.000000e+00> : vector<8x576xf32>
    %3 = tpu.matmul %0, %2, %cst {dimension_numbers = #tpu.dot_dimension_numbers<[1], [0], [0], [1], [0, 0, 1, 1], [], []>} : vector<8x200xf32>, vector<200x576xf32>, vector<8x576xf32> -> vector<8x576xf32>
    %c0_4 = arith.constant 0 : index
    %c0_5 = arith.constant 0 : index
    %4 = vector.load %arg3[%c0_4, %c0_5] : memref<8x1xf32, #tpu.memory_space<vmem>>, vector<8x1xf32>
    %5 = vector.broadcast %4 : vector<8x1xf32> to vector<8x576xf32>
    %6 = arith.addf %3, %5 : vector<8x576xf32>
    %cst_6 = arith.constant 0.000000e+00 : f32
    %7 = vector.broadcast %cst_6 : f32 to vector<8x576xf32>
    %8 = arith.maximumf %6, %7 : vector<8x576xf32>
    %c0_7 = arith.constant 0 : index
    %c0_8 = arith.constant 0 : index
    %c0_9 = arith.constant 0 : index
    %9 = vector.load %arg4[%c0_7, %c0_8, %c0_9] : memref<1x8x576xf32, #tpu.memory_space<vmem>>, vector<1x8x576xf32>
    %10 = vector.shape_cast %9 : vector<1x8x576xf32> to vector<8x576xf32>
    %11 = vector.shape_cast %8 : vector<8x576xf32> to vector<1x8x576xf32>
    tpu.vector_store %arg4[%c0_7, %c0_8, %c0_9], %11 {strides = array<i32>} : memref<1x8x576xf32, #tpu.memory_space<vmem>>, vector<1x8x576xf32>,
    return
  }
  func.func @transform_0(%arg0: i32) -> (i32, i32, i32) {
    %c0_i32 = arith.constant 0 : i32
    %c0_i32_0 = arith.constant 0 : i32
    %c0_i32_1 = arith.constant 0 : i32
    return %arg0, %c0_i32, %c0_i32_0 : i32, i32, i32
  }
  func.func @transform_1(%arg0: i32) -> (i32, i32) {
    %c0_i32 = arith.constant 0 : i32
    %c0_i32_0 = arith.constant 0 : i32
    %c0_i32_1 = arith.constant 0 : i32
    return %c0_i32, %c0_i32_0 : i32, i32
  }
  func.func @transform_2(%arg0: i32) -> (i32, i32) {
    %c0_i32 = arith.constant 0 : i32
    %c0_i32_0 = arith.constant 0 : i32
    %c0_i32_1 = arith.constant 0 : i32
    return %c0_i32, %c0_i32_0 : i32, i32
  }
  func.func @transform_3(%arg0: i32) -> (i32, i32, i32) {
    %c0_i32 = arith.constant 0 : i32
    %c0_i32_0 = arith.constant 0 : i32
    %c0_i32_1 = arith.constant 0 : i32
    return %arg0, %c0_i32, %c0_i32_0 : i32, i32, i32
  }
}

module attributes {stable_mosaic.version = 11 : i64} {
  func.func @_ctc_block_kernel(%arg0: i32, %arg1: memref<1x8x64xf32, #tpu.memory_space<vmem>>, %arg2: memref<9x64x64xf32, #tpu.memory_space<vmem>>, %arg3: memref<64x64xf32, #tpu.memory_space<vmem>>, %arg4: memref<9x8x8xf32, #tpu.memory_space<vmem>>, %arg5: memref<8x1xf32, #tpu.memory_space<vmem>>, %arg6: memref<9x8x8xf32, #tpu.memory_space<vmem>>, %arg7: memref<8x1xf32, #tpu.memory_space<vmem>>, %arg8: memref<1x24x8xf32, #tpu.memory_space<vmem>>, %arg9: memref<1x24x1xf32, #tpu.memory_space<vmem>>, %arg10: memref<1x8x8xf32, #tpu.memory_space<vmem>>, %arg11: memref<1x8x1xf32, #tpu.memory_space<vmem>>, %arg12: memref<1x8x1xf32, #tpu.memory_space<vmem>>, %arg13: memref<1x8x1xf32, #tpu.memory_space<vmem>>, %arg14: memref<1x8x8xf32, #tpu.memory_space<vmem>>, %arg15: memref<1x8x1xf32, #tpu.memory_space<vmem>>, %arg16: memref<1x8x8xf32, #tpu.memory_space<vmem>>, %arg17: memref<1x8x1xf32, #tpu.memory_space<vmem>>, %arg18: memref<1x8x1xf32, #tpu.memory_space<vmem>>, %arg19: memref<1x8x1xf32, #tpu.memory_space<vmem>>, %arg20: memref<1x8x64xf32, #tpu.memory_space<vmem>>) attributes {dimension_semantics = [#tpu.dimension_semantics<parallel>], iteration_bounds = array<i64: 2>, scalar_prefetch = 0 : i64, scratch_operands = 0 : i64, tpu.core_type = #tpu.core_type<tc>, window_params = [{transform_indices = @transform_0, window_bounds = array<i64: 1, 8, 64>}, {pipeline_mode = #tpu.pipeline_mode<synchronous>, transform_indices = @transform_1, window_bounds = array<i64: 9, 64, 64>}, {pipeline_mode = #tpu.pipeline_mode<synchronous>, transform_indices = @transform_2, window_bounds = array<i64: 64, 64>}, {pipeline_mode = #tpu.pipeline_mode<synchronous>, transform_indices = @transform_3, window_bounds = array<i64: 9, 8, 8>}, {pipeline_mode = #tpu.pipeline_mode<synchronous>, transform_indices = @transform_4, window_bounds = array<i64: 8, 1>}, {pipeline_mode = #tpu.pipeline_mode<synchronous>, transform_indices = @transform_5, window_bounds = array<i64: 9, 8, 8>}, {pipeline_mode = #tpu.pipeline_mode<synchronous>, transform_indices = @transform_6, window_bounds = array<i64: 8, 1>}, {pipeline_mode = #tpu.pipeline_mode<synchronous>, transform_indices = @transform_7, window_bounds = array<i64: 1, 24, 8>}, {pipeline_mode = #tpu.pipeline_mode<synchronous>, transform_indices = @transform_8, window_bounds = array<i64: 1, 24, 1>}, {pipeline_mode = #tpu.pipeline_mode<synchronous>, transform_indices = @transform_9, window_bounds = array<i64: 1, 8, 8>}, {pipeline_mode = #tpu.pipeline_mode<synchronous>, transform_indices = @transform_10, window_bounds = array<i64: 1, 8, 1>}, {pipeline_mode = #tpu.pipeline_mode<synchronous>, transform_indices = @transform_11, window_bounds = array<i64: 1, 8, 1>}, {pipeline_mode = #tpu.pipeline_mode<synchronous>, transform_indices = @transform_12, window_bounds = array<i64: 1, 8, 1>}, {pipeline_mode = #tpu.pipeline_mode<synchronous>, transform_indices = @transform_13, window_bounds = array<i64: 1, 8, 8>}, {pipeline_mode = #tpu.pipeline_mode<synchronous>, transform_indices = @transform_14, window_bounds = array<i64: 1, 8, 1>}, {pipeline_mode = #tpu.pipeline_mode<synchronous>, transform_indices = @transform_15, window_bounds = array<i64: 1, 8, 8>}, {pipeline_mode = #tpu.pipeline_mode<synchronous>, transform_indices = @transform_16, window_bounds = array<i64: 1, 8, 1>}, {pipeline_mode = #tpu.pipeline_mode<synchronous>, transform_indices = @transform_17, window_bounds = array<i64: 1, 8, 1>}, {pipeline_mode = #tpu.pipeline_mode<synchronous>, transform_indices = @transform_18, window_bounds = array<i64: 1, 8, 1>}, {transform_indices = @transform_19, window_bounds = array<i64: 1, 8, 64>}]} {
    %c0 = arith.constant 0 : index
    %c0_0 = arith.constant 0 : index
    %c0_1 = arith.constant 0 : index
    %0 = vector.load %arg1[%c0, %c0_0, %c0_1] : memref<1x8x64xf32, #tpu.memory_space<vmem>>, vector<1x8x64xf32>
    %1 = vector.shape_cast %0 : vector<1x8x64xf32> to vector<8x64xf32>
    %cst = arith.constant 0.000000e+00 : f32
    %2 = vector.broadcast %cst : f32 to vector<8x64xf32>
    %c0_2 = arith.constant 0 : index
    %c0_3 = arith.constant 0 : index
    %c0_4 = arith.constant 0 : index
    %3 = vector.load %arg2[%c0_2, %c0_3, %c0_4] : memref<9x64x64xf32, #tpu.memory_space<vmem>>, vector<1x64x64xf32>
    %4 = vector.shape_cast %3 : vector<1x64x64xf32> to vector<64x64xf32>
    %cst_5 = arith.constant dense<0.000000e+00> : vector<8x64xf32>
    %5 = tpu.matmul %1, %4, %cst_5 {dimension_numbers = #tpu.dot_dimension_numbers<[1], [0], [0], [1], [0, 0, 1, 1], [], []>} : vector<8x64xf32>, vector<64x64xf32>, vector<8x64xf32> -> vector<8x64xf32>
    %c0_6 = arith.constant 0 : index
    %c0_7 = arith.constant 0 : index
    %c0_8 = arith.constant 0 : index
    %6 = vector.load %arg4[%c0_6, %c0_7, %c0_8] : memref<9x8x8xf32, #tpu.memory_space<vmem>>, vector<1x8x8xf32>
    %7 = vector.shape_cast %6 : vector<1x8x8xf32> to vector<8x8xf32>
    %cst_9 = arith.constant dense<0.000000e+00> : vector<8x64xf32>
    %8 = tpu.matmul %7, %5, %cst_9 {dimension_numbers = #tpu.dot_dimension_numbers<[1], [0], [0], [1], [0, 0, 1, 1], [], []>} : vector<8x8xf32>, vector<8x64xf32>, vector<8x64xf32> -> vector<8x64xf32>
    %9 = arith.addf %2, %8 : vector<8x64xf32>
    %c1 = arith.constant 1 : index
    %c0_10 = arith.constant 0 : index
    %c0_11 = arith.constant 0 : index
    %10 = vector.load %arg2[%c1, %c0_10, %c0_11] : memref<9x64x64xf32, #tpu.memory_space<vmem>>, vector<1x64x64xf32>
    %11 = vector.shape_cast %10 : vector<1x64x64xf32> to vector<64x64xf32>
    %cst_12 = arith.constant dense<0.000000e+00> : vector<8x64xf32>
    %12 = tpu.matmul %1, %11, %cst_12 {dimension_numbers = #tpu.dot_dimension_numbers<[1], [0], [0], [1], [0, 0, 1, 1], [], []>} : vector<8x64xf32>, vector<64x64xf32>, vector<8x64xf32> -> vector<8x64xf32>
    %c1_13 = arith.constant 1 : index
    %c0_14 = arith.constant 0 : index
    %c0_15 = arith.constant 0 : index
    %13 = vector.load %arg4[%c1_13, %c0_14, %c0_15] : memref<9x8x8xf32, #tpu.memory_space<vmem>>, vector<1x8x8xf32>
    %14 = vector.shape_cast %13 : vector<1x8x8xf32> to vector<8x8xf32>
    %cst_16 = arith.constant dense<0.000000e+00> : vector<8x64xf32>
    %15 = tpu.matmul %14, %12, %cst_16 {dimension_numbers = #tpu.dot_dimension_numbers<[1], [0], [0], [1], [0, 0, 1, 1], [], []>} : vector<8x8xf32>, vector<8x64xf32>, vector<8x64xf32> -> vector<8x64xf32>
    %16 = arith.addf %9, %15 : vector<8x64xf32>
    %c2 = arith.constant 2 : index
    %c0_17 = arith.constant 0 : index
    %c0_18 = arith.constant 0 : index
    %17 = vector.load %arg2[%c2, %c0_17, %c0_18] : memref<9x64x64xf32, #tpu.memory_space<vmem>>, vector<1x64x64xf32>
    %18 = vector.shape_cast %17 : vector<1x64x64xf32> to vector<64x64xf32>
    %cst_19 = arith.constant dense<0.000000e+00> : vector<8x64xf32>
    %19 = tpu.matmul %1, %18, %cst_19 {dimension_numbers = #tpu.dot_dimension_numbers<[1], [0], [0], [1], [0, 0, 1, 1], [], []>} : vector<8x64xf32>, vector<64x64xf32>, vector<8x64xf32> -> vector<8x64xf32>
    %c2_20 = arith.constant 2 : index
    %c0_21 = arith.constant 0 : index
    %c0_22 = arith.constant 0 : index
    %20 = vector.load %arg4[%c2_20, %c0_21, %c0_22] : memref<9x8x8xf32, #tpu.memory_space<vmem>>, vector<1x8x8xf32>
    %21 = vector.shape_cast %20 : vector<1x8x8xf32> to vector<8x8xf32>
    %cst_23 = arith.constant dense<0.000000e+00> : vector<8x64xf32>
    %22 = tpu.matmul %21, %19, %cst_23 {dimension_numbers = #tpu.dot_dimension_numbers<[1], [0], [0], [1], [0, 0, 1, 1], [], []>} : vector<8x8xf32>, vector<8x64xf32>, vector<8x64xf32> -> vector<8x64xf32>
    %23 = arith.addf %16, %22 : vector<8x64xf32>
    %c3 = arith.constant 3 : index
    %c0_24 = arith.constant 0 : index
    %c0_25 = arith.constant 0 : index
    %24 = vector.load %arg2[%c3, %c0_24, %c0_25] : memref<9x64x64xf32, #tpu.memory_space<vmem>>, vector<1x64x64xf32>
    %25 = vector.shape_cast %24 : vector<1x64x64xf32> to vector<64x64xf32>
    %cst_26 = arith.constant dense<0.000000e+00> : vector<8x64xf32>
    %26 = tpu.matmul %1, %25, %cst_26 {dimension_numbers = #tpu.dot_dimension_numbers<[1], [0], [0], [1], [0, 0, 1, 1], [], []>} : vector<8x64xf32>, vector<64x64xf32>, vector<8x64xf32> -> vector<8x64xf32>
    %c3_27 = arith.constant 3 : index
    %c0_28 = arith.constant 0 : index
    %c0_29 = arith.constant 0 : index
    %27 = vector.load %arg4[%c3_27, %c0_28, %c0_29] : memref<9x8x8xf32, #tpu.memory_space<vmem>>, vector<1x8x8xf32>
    %28 = vector.shape_cast %27 : vector<1x8x8xf32> to vector<8x8xf32>
    %cst_30 = arith.constant dense<0.000000e+00> : vector<8x64xf32>
    %29 = tpu.matmul %28, %26, %cst_30 {dimension_numbers = #tpu.dot_dimension_numbers<[1], [0], [0], [1], [0, 0, 1, 1], [], []>} : vector<8x8xf32>, vector<8x64xf32>, vector<8x64xf32> -> vector<8x64xf32>
    %30 = arith.addf %23, %29 : vector<8x64xf32>
    %c4 = arith.constant 4 : index
    %c0_31 = arith.constant 0 : index
    %c0_32 = arith.constant 0 : index
    %31 = vector.load %arg2[%c4, %c0_31, %c0_32] : memref<9x64x64xf32, #tpu.memory_space<vmem>>, vector<1x64x64xf32>
    %32 = vector.shape_cast %31 : vector<1x64x64xf32> to vector<64x64xf32>
    %cst_33 = arith.constant dense<0.000000e+00> : vector<8x64xf32>
    %33 = tpu.matmul %1, %32, %cst_33 {dimension_numbers = #tpu.dot_dimension_numbers<[1], [0], [0], [1], [0, 0, 1, 1], [], []>} : vector<8x64xf32>, vector<64x64xf32>, vector<8x64xf32> -> vector<8x64xf32>
    %c4_34 = arith.constant 4 : index
    %c0_35 = arith.constant 0 : index
    %c0_36 = arith.constant 0 : index
    %34 = vector.load %arg4[%c4_34, %c0_35, %c0_36] : memref<9x8x8xf32, #tpu.memory_space<vmem>>, vector<1x8x8xf32>
    %35 = vector.shape_cast %34 : vector<1x8x8xf32> to vector<8x8xf32>
    %cst_37 = arith.constant dense<0.000000e+00> : vector<8x64xf32>
    %36 = tpu.matmul %35, %33, %cst_37 {dimension_numbers = #tpu.dot_dimension_numbers<[1], [0], [0], [1], [0, 0, 1, 1], [], []>} : vector<8x8xf32>, vector<8x64xf32>, vector<8x64xf32> -> vector<8x64xf32>
    %37 = arith.addf %30, %36 : vector<8x64xf32>
    %c5 = arith.constant 5 : index
    %c0_38 = arith.constant 0 : index
    %c0_39 = arith.constant 0 : index
    %38 = vector.load %arg2[%c5, %c0_38, %c0_39] : memref<9x64x64xf32, #tpu.memory_space<vmem>>, vector<1x64x64xf32>
    %39 = vector.shape_cast %38 : vector<1x64x64xf32> to vector<64x64xf32>
    %cst_40 = arith.constant dense<0.000000e+00> : vector<8x64xf32>
    %40 = tpu.matmul %1, %39, %cst_40 {dimension_numbers = #tpu.dot_dimension_numbers<[1], [0], [0], [1], [0, 0, 1, 1], [], []>} : vector<8x64xf32>, vector<64x64xf32>, vector<8x64xf32> -> vector<8x64xf32>
    %c5_41 = arith.constant 5 : index
    %c0_42 = arith.constant 0 : index
    %c0_43 = arith.constant 0 : index
    %41 = vector.load %arg4[%c5_41, %c0_42, %c0_43] : memref<9x8x8xf32, #tpu.memory_space<vmem>>, vector<1x8x8xf32>
    %42 = vector.shape_cast %41 : vector<1x8x8xf32> to vector<8x8xf32>
    %cst_44 = arith.constant dense<0.000000e+00> : vector<8x64xf32>
    %43 = tpu.matmul %42, %40, %cst_44 {dimension_numbers = #tpu.dot_dimension_numbers<[1], [0], [0], [1], [0, 0, 1, 1], [], []>} : vector<8x8xf32>, vector<8x64xf32>, vector<8x64xf32> -> vector<8x64xf32>
    %44 = arith.addf %37, %43 : vector<8x64xf32>
    %c6 = arith.constant 6 : index
    %c0_45 = arith.constant 0 : index
    %c0_46 = arith.constant 0 : index
    %45 = vector.load %arg2[%c6, %c0_45, %c0_46] : memref<9x64x64xf32, #tpu.memory_space<vmem>>, vector<1x64x64xf32>
    %46 = vector.shape_cast %45 : vector<1x64x64xf32> to vector<64x64xf32>
    %cst_47 = arith.constant dense<0.000000e+00> : vector<8x64xf32>
    %47 = tpu.matmul %1, %46, %cst_47 {dimension_numbers = #tpu.dot_dimension_numbers<[1], [0], [0], [1], [0, 0, 1, 1], [], []>} : vector<8x64xf32>, vector<64x64xf32>, vector<8x64xf32> -> vector<8x64xf32>
    %c6_48 = arith.constant 6 : index
    %c0_49 = arith.constant 0 : index
    %c0_50 = arith.constant 0 : index
    %48 = vector.load %arg4[%c6_48, %c0_49, %c0_50] : memref<9x8x8xf32, #tpu.memory_space<vmem>>, vector<1x8x8xf32>
    %49 = vector.shape_cast %48 : vector<1x8x8xf32> to vector<8x8xf32>
    %cst_51 = arith.constant dense<0.000000e+00> : vector<8x64xf32>
    %50 = tpu.matmul %49, %47, %cst_51 {dimension_numbers = #tpu.dot_dimension_numbers<[1], [0], [0], [1], [0, 0, 1, 1], [], []>} : vector<8x8xf32>, vector<8x64xf32>, vector<8x64xf32> -> vector<8x64xf32>
    %51 = arith.addf %44, %50 : vector<8x64xf32>
    %c7 = arith.constant 7 : index
    %c0_52 = arith.constant 0 : index
    %c0_53 = arith.constant 0 : index
    %52 = vector.load %arg2[%c7, %c0_52, %c0_53] : memref<9x64x64xf32, #tpu.memory_space<vmem>>, vector<1x64x64xf32>
    %53 = vector.shape_cast %52 : vector<1x64x64xf32> to vector<64x64xf32>
    %cst_54 = arith.constant dense<0.000000e+00> : vector<8x64xf32>
    %54 = tpu.matmul %1, %53, %cst_54 {dimension_numbers = #tpu.dot_dimension_numbers<[1], [0], [0], [1], [0, 0, 1, 1], [], []>} : vector<8x64xf32>, vector<64x64xf32>, vector<8x64xf32> -> vector<8x64xf32>
    %c7_55 = arith.constant 7 : index
    %c0_56 = arith.constant 0 : index
    %c0_57 = arith.constant 0 : index
    %55 = vector.load %arg4[%c7_55, %c0_56, %c0_57] : memref<9x8x8xf32, #tpu.memory_space<vmem>>, vector<1x8x8xf32>
    %56 = vector.shape_cast %55 : vector<1x8x8xf32> to vector<8x8xf32>
    %cst_58 = arith.constant dense<0.000000e+00> : vector<8x64xf32>
    %57 = tpu.matmul %56, %54, %cst_58 {dimension_numbers = #tpu.dot_dimension_numbers<[1], [0], [0], [1], [0, 0, 1, 1], [], []>} : vector<8x8xf32>, vector<8x64xf32>, vector<8x64xf32> -> vector<8x64xf32>
    %58 = arith.addf %51, %57 : vector<8x64xf32>
    %c8 = arith.constant 8 : index
    %c0_59 = arith.constant 0 : index
    %c0_60 = arith.constant 0 : index
    %59 = vector.load %arg2[%c8, %c0_59, %c0_60] : memref<9x64x64xf32, #tpu.memory_space<vmem>>, vector<1x64x64xf32>
    %60 = vector.shape_cast %59 : vector<1x64x64xf32> to vector<64x64xf32>
    %cst_61 = arith.constant dense<0.000000e+00> : vector<8x64xf32>
    %61 = tpu.matmul %1, %60, %cst_61 {dimension_numbers = #tpu.dot_dimension_numbers<[1], [0], [0], [1], [0, 0, 1, 1], [], []>} : vector<8x64xf32>, vector<64x64xf32>, vector<8x64xf32> -> vector<8x64xf32>
    %c8_62 = arith.constant 8 : index
    %c0_63 = arith.constant 0 : index
    %c0_64 = arith.constant 0 : index
    %62 = vector.load %arg4[%c8_62, %c0_63, %c0_64] : memref<9x8x8xf32, #tpu.memory_space<vmem>>, vector<1x8x8xf32>
    %63 = vector.shape_cast %62 : vector<1x8x8xf32> to vector<8x8xf32>
    %cst_65 = arith.constant dense<0.000000e+00> : vector<8x64xf32>
    %64 = tpu.matmul %63, %61, %cst_65 {dimension_numbers = #tpu.dot_dimension_numbers<[1], [0], [0], [1], [0, 0, 1, 1], [], []>} : vector<8x8xf32>, vector<8x64xf32>, vector<8x64xf32> -> vector<8x64xf32>
    %65 = arith.addf %58, %64 : vector<8x64xf32>
    %c0_66 = arith.constant 0 : index
    %c0_67 = arith.constant 0 : index
    %66 = vector.load %arg5[%c0_66, %c0_67] : memref<8x1xf32, #tpu.memory_space<vmem>>, vector<8x1xf32>
    %67 = vector.broadcast %66 : vector<8x1xf32> to vector<8x64xf32>
    %68 = arith.addf %65, %67 : vector<8x64xf32>
    %cst_68 = arith.constant 0.000000e+00 : f32
    %69 = vector.broadcast %cst_68 : f32 to vector<8x64xf32>
    %70 = arith.maximumf %68, %69 : vector<8x64xf32>
    %c0_69 = arith.constant 0 : index
    %c0_70 = arith.constant 0 : index
    %c0_71 = arith.constant 0 : index
    %71 = vector.load %arg8[%c0_69, %c0_70, %c0_71] : memref<1x24x8xf32, #tpu.memory_space<vmem>>, vector<1x24x8xf32>
    %72 = vector.shape_cast %71 : vector<1x24x8xf32> to vector<24x8xf32>
    %cst_72 = arith.constant dense<0.000000e+00> : vector<24x64xf32>
    %73 = tpu.matmul %72, %70, %cst_72 {dimension_numbers = #tpu.dot_dimension_numbers<[1], [0], [0], [1], [0, 0, 1, 1], [], []>} : vector<24x8xf32>, vector<8x64xf32>, vector<24x64xf32> -> vector<24x64xf32>
    %c0_73 = arith.constant 0 : index
    %c0_74 = arith.constant 0 : index
    %c0_75 = arith.constant 0 : index
    %74 = vector.load %arg9[%c0_73, %c0_74, %c0_75] : memref<1x24x1xf32, #tpu.memory_space<vmem>>, vector<1x24x1xf32>
    %75 = vector.shape_cast %74 : vector<1x24x1xf32> to vector<24x1xf32>
    %76 = vector.broadcast %75 : vector<24x1xf32> to vector<24x64xf32>
    %77 = arith.addf %73, %76 : vector<24x64xf32>
    %78 = vector.extract_strided_slice %77 {offsets = [0, 0], sizes = [8, 64], strides = [1, 1]} : vector<24x64xf32> to vector<8x64xf32>
    %79 = tpu.transpose %78, [1, 0] : vector<8x64xf32> -> vector<64x8xf32>
    %c0_76 = arith.constant 0 : index
    %c0_77 = arith.constant 0 : index
    %c0_78 = arith.constant 0 : index
    %80 = vector.load %arg10[%c0_76, %c0_77, %c0_78] : memref<1x8x8xf32, #tpu.memory_space<vmem>>, vector<1x8x8xf32>
    %81 = vector.shape_cast %80 : vector<1x8x8xf32> to vector<8x8xf32>
    %cst_79 = arith.constant 0.000000e+00 : f32
    %82 = vector.broadcast %cst_79 : f32 to vector<8x64xf32>
    %83 = vector.extract_strided_slice %79 {offsets = [0, 0], sizes = [64, 4], strides = [1, 1]} : vector<64x8xf32> to vector<64x4xf32>
    %84 = vector.extract_strided_slice %77 {offsets = [8, 0], sizes = [4, 64], strides = [1, 1]} : vector<24x64xf32> to vector<4x64xf32>
    %85 = vector.extract_strided_slice %77 {offsets = [16, 0], sizes = [4, 64], strides = [1, 1]} : vector<24x64xf32> to vector<4x64xf32>
    %cst_80 = arith.constant dense<0.000000e+00> : vector<64x64xf32>
    %86 = tpu.matmul %83, %84, %cst_80 {dimension_numbers = #tpu.dot_dimension_numbers<[1], [0], [0], [1], [0, 0, 1, 1], [], []>} : vector<64x4xf32>, vector<4x64xf32>, vector<64x64xf32> -> vector<64x64xf32>
    %cst_81 = arith.constant 5.000000e-01 : f32
    %87 = vector.broadcast %cst_81 : f32 to vector<64x64xf32>
    %88 = arith.mulf %86, %87 : vector<64x64xf32>
    %cst_82 = arith.constant dense<0xFF800000> : vector<64xf32>
    %89 = vector.multi_reduction <maximumf>, %88, %cst_82 [1] : vector<64x64xf32> to vector<64xf32>
    %90 = vector.shape_cast %89 : vector<64xf32> to vector<64x1xf32>
    %91 = vector.broadcast %90 : vector<64x1xf32> to vector<64x64xf32>
    %92 = arith.subf %88, %91 : vector<64x64xf32>
    %93 = math.exp %92 : vector<64x64xf32>
    %cst_83 = arith.constant dense<0.000000e+00> : vector<64xf32>
    %94 = vector.multi_reduction <add>, %93, %cst_83 [1] : vector<64x64xf32> to vector<64xf32>
    %95 = vector.shape_cast %94 : vector<64xf32> to vector<64x1xf32>
    %96 = tpu.reciprocal %95 {approx = true} : vector<64x1xf32> -> vector<64x1xf32>
    %97 = vector.broadcast %96 : vector<64x1xf32> to vector<64x64xf32>
    %98 = arith.mulf %93, %97 : vector<64x64xf32>
    %cst_84 = arith.constant dense<0.000000e+00> : vector<4x64xf32>
    %99 = tpu.matmul %85, %98, %cst_84 {dimension_numbers = #tpu.dot_dimension_numbers<[1], [1], [0], [0], [0, 0, 1, 0], [], []>} : vector<4x64xf32>, vector<64x64xf32>, vector<4x64xf32> -> vector<4x64xf32>
    %100 = vector.extract_strided_slice %81 {offsets = [0, 0], sizes = [8, 4], strides = [1, 1]} : vector<8x8xf32> to vector<8x4xf32>
    %cst_85 = arith.constant dense<0.000000e+00> : vector<8x64xf32>
    %101 = tpu.matmul %100, %99, %cst_85 {dimension_numbers = #tpu.dot_dimension_numbers<[1], [0], [0], [1], [0, 0, 1, 1], [], []>} : vector<8x4xf32>, vector<4x64xf32>, vector<8x64xf32> -> vector<8x64xf32>
    %102 = arith.addf %82, %101 : vector<8x64xf32>
    %103 = vector.extract_strided_slice %79 {offsets = [0, 4], sizes = [64, 4], strides = [1, 1]} : vector<64x8xf32> to vector<64x4xf32>
    %104 = vector.extract_strided_slice %77 {offsets = [12, 0], sizes = [4, 64], strides = [1, 1]} : vector<24x64xf32> to vector<4x64xf32>
    %105 = vector.extract_strided_slice %77 {offsets = [20, 0], sizes = [4, 64], strides = [1, 1]} : vector<24x64xf32> to vector<4x64xf32>
    %cst_86 = arith.constant dense<0.000000e+00> : vector<64x64xf32>
    %106 = tpu.matmul %103, %104, %cst_86 {dimension_numbers = #tpu.dot_dimension_numbers<[1], [0], [0], [1], [0, 0, 1, 1], [], []>} : vector<64x4xf32>, vector<4x64xf32>, vector<64x64xf32> -> vector<64x64xf32>
    %cst_87 = arith.constant 5.000000e-01 : f32
    %107 = vector.broadcast %cst_87 : f32 to vector<64x64xf32>
    %108 = arith.mulf %106, %107 : vector<64x64xf32>
    %cst_88 = arith.constant dense<0xFF800000> : vector<64xf32>
    %109 = vector.multi_reduction <maximumf>, %108, %cst_88 [1] : vector<64x64xf32> to vector<64xf32>
    %110 = vector.shape_cast %109 : vector<64xf32> to vector<64x1xf32>
    %111 = vector.broadcast %110 : vector<64x1xf32> to vector<64x64xf32>
    %112 = arith.subf %108, %111 : vector<64x64xf32>
    %113 = math.exp %112 : vector<64x64xf32>
    %cst_89 = arith.constant dense<0.000000e+00> : vector<64xf32>
    %114 = vector.multi_reduction <add>, %113, %cst_89 [1] : vector<64x64xf32> to vector<64xf32>
    %115 = vector.shape_cast %114 : vector<64xf32> to vector<64x1xf32>
    %116 = tpu.reciprocal %115 {approx = true} : vector<64x1xf32> -> vector<64x1xf32>
    %117 = vector.broadcast %116 : vector<64x1xf32> to vector<64x64xf32>
    %118 = arith.mulf %113, %117 : vector<64x64xf32>
    %cst_90 = arith.constant dense<0.000000e+00> : vector<4x64xf32>
    %119 = tpu.matmul %105, %118, %cst_90 {dimension_numbers = #tpu.dot_dimension_numbers<[1], [1], [0], [0], [0, 0, 1, 0], [], []>} : vector<4x64xf32>, vector<64x64xf32>, vector<4x64xf32> -> vector<4x64xf32>
    %120 = vector.extract_strided_slice %81 {offsets = [0, 4], sizes = [8, 4], strides = [1, 1]} : vector<8x8xf32> to vector<8x4xf32>
    %cst_91 = arith.constant dense<0.000000e+00> : vector<8x64xf32>
    %121 = tpu.matmul %120, %119, %cst_91 {dimension_numbers = #tpu.dot_dimension_numbers<[1], [0], [0], [1], [0, 0, 1, 1], [], []>} : vector<8x4xf32>, vector<4x64xf32>, vector<8x64xf32> -> vector<8x64xf32>
    %122 = arith.addf %102, %121 : vector<8x64xf32>
    %c0_92 = arith.constant 0 : index
    %c0_93 = arith.constant 0 : index
    %c0_94 = arith.constant 0 : index
    %123 = vector.load %arg11[%c0_92, %c0_93, %c0_94] : memref<1x8x1xf32, #tpu.memory_space<vmem>>, vector<1x8x1xf32>
    %124 = vector.shape_cast %123 : vector<1x8x1xf32> to vector<8x1xf32>
    %125 = vector.broadcast %124 : vector<8x1xf32> to vector<8x64xf32>
    %126 = arith.addf %122, %125 : vector<8x64xf32>
    %127 = arith.addf %70, %126 : vector<8x64xf32>
    %c0_95 = arith.constant 0 : index
    %c0_96 = arith.constant 0 : index
    %c0_97 = arith.constant 0 : index
    %128 = vector.load %arg12[%c0_95, %c0_96, %c0_97] : memref<1x8x1xf32, #tpu.memory_space<vmem>>, vector<1x8x1xf32>
    %129 = vector.shape_cast %128 : vector<1x8x1xf32> to vector<8x1xf32>
    %c0_98 = arith.constant 0 : index
    %c0_99 = arith.constant 0 : index
    %c0_100 = arith.constant 0 : index
    %130 = vector.load %arg13[%c0_98, %c0_99, %c0_100] : memref<1x8x1xf32, #tpu.memory_space<vmem>>, vector<1x8x1xf32>
    %131 = vector.shape_cast %130 : vector<1x8x1xf32> to vector<8x1xf32>
    %cst_101 = arith.constant dense<0.000000e+00> : vector<64xf32>
    %132 = vector.multi_reduction <add>, %127, %cst_101 [0] : vector<8x64xf32> to vector<64xf32>
    %133 = vector.shape_cast %132 : vector<64xf32> to vector<1x64xf32>
    %cst_102 = arith.constant 8.000000e+00 : f32
    %134 = vector.broadcast %cst_102 : f32 to vector<1x64xf32>
    %135 = arith.divf %133, %134 : vector<1x64xf32>
    %136 = vector.broadcast %135 : vector<1x64xf32> to vector<8x64xf32>
    %137 = arith.subf %127, %136 : vector<8x64xf32>
    %138 = arith.mulf %137, %137 : vector<8x64xf32>
    %cst_103 = arith.constant dense<0.000000e+00> : vector<64xf32>
    %139 = vector.multi_reduction <add>, %138, %cst_103 [0] : vector<8x64xf32> to vector<64xf32>
    %140 = vector.shape_cast %139 : vector<64xf32> to vector<1x64xf32>
    %cst_104 = arith.constant 8.000000e+00 : f32
    %141 = vector.broadcast %cst_104 : f32 to vector<1x64xf32>
    %142 = arith.divf %140, %141 : vector<1x64xf32>
    %143 = vector.broadcast %135 : vector<1x64xf32> to vector<8x64xf32>
    %144 = arith.subf %127, %143 : vector<8x64xf32>
    %cst_105 = arith.constant 9.99999974E-6 : f32
    %145 = vector.broadcast %cst_105 : f32 to vector<1x64xf32>
    %146 = arith.addf %142, %145 : vector<1x64xf32>
    %147 = math.rsqrt %146 : vector<1x64xf32>
    %148 = vector.broadcast %147 : vector<1x64xf32> to vector<8x64xf32>
    %149 = arith.mulf %144, %148 : vector<8x64xf32>
    %150 = vector.broadcast %129 : vector<8x1xf32> to vector<8x64xf32>
    %151 = arith.mulf %149, %150 : vector<8x64xf32>
    %152 = vector.broadcast %131 : vector<8x1xf32> to vector<8x64xf32>
    %153 = arith.addf %151, %152 : vector<8x64xf32>
    %c0_106 = arith.constant 0 : index
    %c0_107 = arith.constant 0 : index
    %c0_108 = arith.constant 0 : index
    %154 = vector.load %arg14[%c0_106, %c0_107, %c0_108] : memref<1x8x8xf32, #tpu.memory_space<vmem>>, vector<1x8x8xf32>
    %155 = vector.shape_cast %154 : vector<1x8x8xf32> to vector<8x8xf32>
    %cst_109 = arith.constant dense<0.000000e+00> : vector<8x64xf32>
    %156 = tpu.matmul %155, %153, %cst_109 {dimension_numbers = #tpu.dot_dimension_numbers<[1], [0], [0], [1], [0, 0, 1, 1], [], []>} : vector<8x8xf32>, vector<8x64xf32>, vector<8x64xf32> -> vector<8x64xf32>
    %c0_110 = arith.constant 0 : index
    %c0_111 = arith.constant 0 : index
    %c0_112 = arith.constant 0 : index
    %157 = vector.load %arg15[%c0_110, %c0_111, %c0_112] : memref<1x8x1xf32, #tpu.memory_space<vmem>>, vector<1x8x1xf32>
    %158 = vector.shape_cast %157 : vector<1x8x1xf32> to vector<8x1xf32>
    %159 = vector.broadcast %158 : vector<8x1xf32> to vector<8x64xf32>
    %160 = arith.addf %156, %159 : vector<8x64xf32>
    %cst_113 = arith.constant 0.000000e+00 : f32
    %161 = vector.broadcast %cst_113 : f32 to vector<8x64xf32>
    %162 = arith.maximumf %160, %161 : vector<8x64xf32>
    %c0_114 = arith.constant 0 : index
    %c0_115 = arith.constant 0 : index
    %c0_116 = arith.constant 0 : index
    %163 = vector.load %arg16[%c0_114, %c0_115, %c0_116] : memref<1x8x8xf32, #tpu.memory_space<vmem>>, vector<1x8x8xf32>
    %164 = vector.shape_cast %163 : vector<1x8x8xf32> to vector<8x8xf32>
    %cst_117 = arith.constant dense<0.000000e+00> : vector<8x64xf32>
    %165 = tpu.matmul %164, %162, %cst_117 {dimension_numbers = #tpu.dot_dimension_numbers<[1], [0], [0], [1], [0, 0, 1, 1], [], []>} : vector<8x8xf32>, vector<8x64xf32>, vector<8x64xf32> -> vector<8x64xf32>
    %c0_118 = arith.constant 0 : index
    %c0_119 = arith.constant 0 : index
    %c0_120 = arith.constant 0 : index
    %166 = vector.load %arg17[%c0_118, %c0_119, %c0_120] : memref<1x8x1xf32, #tpu.memory_space<vmem>>, vector<1x8x1xf32>
    %167 = vector.shape_cast %166 : vector<1x8x1xf32> to vector<8x1xf32>
    %168 = vector.broadcast %167 : vector<8x1xf32> to vector<8x64xf32>
    %169 = arith.addf %165, %168 : vector<8x64xf32>
    %170 = arith.addf %153, %169 : vector<8x64xf32>
    %c0_121 = arith.constant 0 : index
    %c0_122 = arith.constant 0 : index
    %c0_123 = arith.constant 0 : index
    %171 = vector.load %arg18[%c0_121, %c0_122, %c0_123] : memref<1x8x1xf32, #tpu.memory_space<vmem>>, vector<1x8x1xf32>
    %172 = vector.shape_cast %171 : vector<1x8x1xf32> to vector<8x1xf32>
    %c0_124 = arith.constant 0 : index
    %c0_125 = arith.constant 0 : index
    %c0_126 = arith.constant 0 : index
    %173 = vector.load %arg19[%c0_124, %c0_125, %c0_126] : memref<1x8x1xf32, #tpu.memory_space<vmem>>, vector<1x8x1xf32>
    %174 = vector.shape_cast %173 : vector<1x8x1xf32> to vector<8x1xf32>
    %cst_127 = arith.constant dense<0.000000e+00> : vector<64xf32>
    %175 = vector.multi_reduction <add>, %170, %cst_127 [0] : vector<8x64xf32> to vector<64xf32>
    %176 = vector.shape_cast %175 : vector<64xf32> to vector<1x64xf32>
    %cst_128 = arith.constant 8.000000e+00 : f32
    %177 = vector.broadcast %cst_128 : f32 to vector<1x64xf32>
    %178 = arith.divf %176, %177 : vector<1x64xf32>
    %179 = vector.broadcast %178 : vector<1x64xf32> to vector<8x64xf32>
    %180 = arith.subf %170, %179 : vector<8x64xf32>
    %181 = arith.mulf %180, %180 : vector<8x64xf32>
    %cst_129 = arith.constant dense<0.000000e+00> : vector<64xf32>
    %182 = vector.multi_reduction <add>, %181, %cst_129 [0] : vector<8x64xf32> to vector<64xf32>
    %183 = vector.shape_cast %182 : vector<64xf32> to vector<1x64xf32>
    %cst_130 = arith.constant 8.000000e+00 : f32
    %184 = vector.broadcast %cst_130 : f32 to vector<1x64xf32>
    %185 = arith.divf %183, %184 : vector<1x64xf32>
    %186 = vector.broadcast %178 : vector<1x64xf32> to vector<8x64xf32>
    %187 = arith.subf %170, %186 : vector<8x64xf32>
    %cst_131 = arith.constant 9.99999974E-6 : f32
    %188 = vector.broadcast %cst_131 : f32 to vector<1x64xf32>
    %189 = arith.addf %185, %188 : vector<1x64xf32>
    %190 = math.rsqrt %189 : vector<1x64xf32>
    %191 = vector.broadcast %190 : vector<1x64xf32> to vector<8x64xf32>
    %192 = arith.mulf %187, %191 : vector<8x64xf32>
    %193 = vector.broadcast %172 : vector<8x1xf32> to vector<8x64xf32>
    %194 = arith.mulf %192, %193 : vector<8x64xf32>
    %195 = vector.broadcast %174 : vector<8x1xf32> to vector<8x64xf32>
    %196 = arith.addf %194, %195 : vector<8x64xf32>
    %cst_132 = arith.constant 0.000000e+00 : f32
    %197 = vector.broadcast %cst_132 : f32 to vector<8x64xf32>
    %c0_133 = arith.constant 0 : index
    %c0_134 = arith.constant 0 : index
    %c0_135 = arith.constant 0 : index
    %198 = vector.load %arg2[%c0_133, %c0_134, %c0_135] : memref<9x64x64xf32, #tpu.memory_space<vmem>>, vector<1x64x64xf32>
    %199 = vector.shape_cast %198 : vector<1x64x64xf32> to vector<64x64xf32>
    %cst_136 = arith.constant dense<0.000000e+00> : vector<8x64xf32>
    %200 = tpu.matmul %196, %199, %cst_136 {dimension_numbers = #tpu.dot_dimension_numbers<[1], [0], [0], [1], [0, 0, 1, 1], [], []>} : vector<8x64xf32>, vector<64x64xf32>, vector<8x64xf32> -> vector<8x64xf32>
    %c0_137 = arith.constant 0 : index
    %c0_138 = arith.constant 0 : index
    %c0_139 = arith.constant 0 : index
    %201 = vector.load %arg6[%c0_137, %c0_138, %c0_139] : memref<9x8x8xf32, #tpu.memory_space<vmem>>, vector<1x8x8xf32>
    %202 = vector.shape_cast %201 : vector<1x8x8xf32> to vector<8x8xf32>
    %cst_140 = arith.constant dense<0.000000e+00> : vector<8x64xf32>
    %203 = tpu.matmul %202, %200, %cst_140 {dimension_numbers = #tpu.dot_dimension_numbers<[1], [0], [0], [1], [0, 0, 1, 1], [], []>} : vector<8x8xf32>, vector<8x64xf32>, vector<8x64xf32> -> vector<8x64xf32>
    %204 = arith.addf %197, %203 : vector<8x64xf32>
    %c1_141 = arith.constant 1 : index
    %c0_142 = arith.constant 0 : index
    %c0_143 = arith.constant 0 : index
    %205 = vector.load %arg2[%c1_141, %c0_142, %c0_143] : memref<9x64x64xf32, #tpu.memory_space<vmem>>, vector<1x64x64xf32>
    %206 = vector.shape_cast %205 : vector<1x64x64xf32> to vector<64x64xf32>
    %cst_144 = arith.constant dense<0.000000e+00> : vector<8x64xf32>
    %207 = tpu.matmul %196, %206, %cst_144 {dimension_numbers = #tpu.dot_dimension_numbers<[1], [0], [0], [1], [0, 0, 1, 1], [], []>} : vector<8x64xf32>, vector<64x64xf32>, vector<8x64xf32> -> vector<8x64xf32>
    %c1_145 = arith.constant 1 : index
    %c0_146 = arith.constant 0 : index
    %c0_147 = arith.constant 0 : index
    %208 = vector.load %arg6[%c1_145, %c0_146, %c0_147] : memref<9x8x8xf32, #tpu.memory_space<vmem>>, vector<1x8x8xf32>
    %209 = vector.shape_cast %208 : vector<1x8x8xf32> to vector<8x8xf32>
    %cst_148 = arith.constant dense<0.000000e+00> : vector<8x64xf32>
    %210 = tpu.matmul %209, %207, %cst_148 {dimension_numbers = #tpu.dot_dimension_numbers<[1], [0], [0], [1], [0, 0, 1, 1], [], []>} : vector<8x8xf32>, vector<8x64xf32>, vector<8x64xf32> -> vector<8x64xf32>
    %211 = arith.addf %204, %210 : vector<8x64xf32>
    %c2_149 = arith.constant 2 : index
    %c0_150 = arith.constant 0 : index
    %c0_151 = arith.constant 0 : index
    %212 = vector.load %arg2[%c2_149, %c0_150, %c0_151] : memref<9x64x64xf32, #tpu.memory_space<vmem>>, vector<1x64x64xf32>
    %213 = vector.shape_cast %212 : vector<1x64x64xf32> to vector<64x64xf32>
    %cst_152 = arith.constant dense<0.000000e+00> : vector<8x64xf32>
    %214 = tpu.matmul %196, %213, %cst_152 {dimension_numbers = #tpu.dot_dimension_numbers<[1], [0], [0], [1], [0, 0, 1, 1], [], []>} : vector<8x64xf32>, vector<64x64xf32>, vector<8x64xf32> -> vector<8x64xf32>
    %c2_153 = arith.constant 2 : index
    %c0_154 = arith.constant 0 : index
    %c0_155 = arith.constant 0 : index
    %215 = vector.load %arg6[%c2_153, %c0_154, %c0_155] : memref<9x8x8xf32, #tpu.memory_space<vmem>>, vector<1x8x8xf32>
    %216 = vector.shape_cast %215 : vector<1x8x8xf32> to vector<8x8xf32>
    %cst_156 = arith.constant dense<0.000000e+00> : vector<8x64xf32>
    %217 = tpu.matmul %216, %214, %cst_156 {dimension_numbers = #tpu.dot_dimension_numbers<[1], [0], [0], [1], [0, 0, 1, 1], [], []>} : vector<8x8xf32>, vector<8x64xf32>, vector<8x64xf32> -> vector<8x64xf32>
    %218 = arith.addf %211, %217 : vector<8x64xf32>
    %c3_157 = arith.constant 3 : index
    %c0_158 = arith.constant 0 : index
    %c0_159 = arith.constant 0 : index
    %219 = vector.load %arg2[%c3_157, %c0_158, %c0_159] : memref<9x64x64xf32, #tpu.memory_space<vmem>>, vector<1x64x64xf32>
    %220 = vector.shape_cast %219 : vector<1x64x64xf32> to vector<64x64xf32>
    %cst_160 = arith.constant dense<0.000000e+00> : vector<8x64xf32>
    %221 = tpu.matmul %196, %220, %cst_160 {dimension_numbers = #tpu.dot_dimension_numbers<[1], [0], [0], [1], [0, 0, 1, 1], [], []>} : vector<8x64xf32>, vector<64x64xf32>, vector<8x64xf32> -> vector<8x64xf32>
    %c3_161 = arith.constant 3 : index
    %c0_162 = arith.constant 0 : index
    %c0_163 = arith.constant 0 : index
    %222 = vector.load %arg6[%c3_161, %c0_162, %c0_163] : memref<9x8x8xf32, #tpu.memory_space<vmem>>, vector<1x8x8xf32>
    %223 = vector.shape_cast %222 : vector<1x8x8xf32> to vector<8x8xf32>
    %cst_164 = arith.constant dense<0.000000e+00> : vector<8x64xf32>
    %224 = tpu.matmul %223, %221, %cst_164 {dimension_numbers = #tpu.dot_dimension_numbers<[1], [0], [0], [1], [0, 0, 1, 1], [], []>} : vector<8x8xf32>, vector<8x64xf32>, vector<8x64xf32> -> vector<8x64xf32>
    %225 = arith.addf %218, %224 : vector<8x64xf32>
    %c4_165 = arith.constant 4 : index
    %c0_166 = arith.constant 0 : index
    %c0_167 = arith.constant 0 : index
    %226 = vector.load %arg2[%c4_165, %c0_166, %c0_167] : memref<9x64x64xf32, #tpu.memory_space<vmem>>, vector<1x64x64xf32>
    %227 = vector.shape_cast %226 : vector<1x64x64xf32> to vector<64x64xf32>
    %cst_168 = arith.constant dense<0.000000e+00> : vector<8x64xf32>
    %228 = tpu.matmul %196, %227, %cst_168 {dimension_numbers = #tpu.dot_dimension_numbers<[1], [0], [0], [1], [0, 0, 1, 1], [], []>} : vector<8x64xf32>, vector<64x64xf32>, vector<8x64xf32> -> vector<8x64xf32>
    %c4_169 = arith.constant 4 : index
    %c0_170 = arith.constant 0 : index
    %c0_171 = arith.constant 0 : index
    %229 = vector.load %arg6[%c4_169, %c0_170, %c0_171] : memref<9x8x8xf32, #tpu.memory_space<vmem>>, vector<1x8x8xf32>
    %230 = vector.shape_cast %229 : vector<1x8x8xf32> to vector<8x8xf32>
    %cst_172 = arith.constant dense<0.000000e+00> : vector<8x64xf32>
    %231 = tpu.matmul %230, %228, %cst_172 {dimension_numbers = #tpu.dot_dimension_numbers<[1], [0], [0], [1], [0, 0, 1, 1], [], []>} : vector<8x8xf32>, vector<8x64xf32>, vector<8x64xf32> -> vector<8x64xf32>
    %232 = arith.addf %225, %231 : vector<8x64xf32>
    %c5_173 = arith.constant 5 : index
    %c0_174 = arith.constant 0 : index
    %c0_175 = arith.constant 0 : index
    %233 = vector.load %arg2[%c5_173, %c0_174, %c0_175] : memref<9x64x64xf32, #tpu.memory_space<vmem>>, vector<1x64x64xf32>
    %234 = vector.shape_cast %233 : vector<1x64x64xf32> to vector<64x64xf32>
    %cst_176 = arith.constant dense<0.000000e+00> : vector<8x64xf32>
    %235 = tpu.matmul %196, %234, %cst_176 {dimension_numbers = #tpu.dot_dimension_numbers<[1], [0], [0], [1], [0, 0, 1, 1], [], []>} : vector<8x64xf32>, vector<64x64xf32>, vector<8x64xf32> -> vector<8x64xf32>
    %c5_177 = arith.constant 5 : index
    %c0_178 = arith.constant 0 : index
    %c0_179 = arith.constant 0 : index
    %236 = vector.load %arg6[%c5_177, %c0_178, %c0_179] : memref<9x8x8xf32, #tpu.memory_space<vmem>>, vector<1x8x8xf32>
    %237 = vector.shape_cast %236 : vector<1x8x8xf32> to vector<8x8xf32>
    %cst_180 = arith.constant dense<0.000000e+00> : vector<8x64xf32>
    %238 = tpu.matmul %237, %235, %cst_180 {dimension_numbers = #tpu.dot_dimension_numbers<[1], [0], [0], [1], [0, 0, 1, 1], [], []>} : vector<8x8xf32>, vector<8x64xf32>, vector<8x64xf32> -> vector<8x64xf32>
    %239 = arith.addf %232, %238 : vector<8x64xf32>
    %c6_181 = arith.constant 6 : index
    %c0_182 = arith.constant 0 : index
    %c0_183 = arith.constant 0 : index
    %240 = vector.load %arg2[%c6_181, %c0_182, %c0_183] : memref<9x64x64xf32, #tpu.memory_space<vmem>>, vector<1x64x64xf32>
    %241 = vector.shape_cast %240 : vector<1x64x64xf32> to vector<64x64xf32>
    %cst_184 = arith.constant dense<0.000000e+00> : vector<8x64xf32>
    %242 = tpu.matmul %196, %241, %cst_184 {dimension_numbers = #tpu.dot_dimension_numbers<[1], [0], [0], [1], [0, 0, 1, 1], [], []>} : vector<8x64xf32>, vector<64x64xf32>, vector<8x64xf32> -> vector<8x64xf32>
    %c6_185 = arith.constant 6 : index
    %c0_186 = arith.constant 0 : index
    %c0_187 = arith.constant 0 : index
    %243 = vector.load %arg6[%c6_185, %c0_186, %c0_187] : memref<9x8x8xf32, #tpu.memory_space<vmem>>, vector<1x8x8xf32>
    %244 = vector.shape_cast %243 : vector<1x8x8xf32> to vector<8x8xf32>
    %cst_188 = arith.constant dense<0.000000e+00> : vector<8x64xf32>
    %245 = tpu.matmul %244, %242, %cst_188 {dimension_numbers = #tpu.dot_dimension_numbers<[1], [0], [0], [1], [0, 0, 1, 1], [], []>} : vector<8x8xf32>, vector<8x64xf32>, vector<8x64xf32> -> vector<8x64xf32>
    %246 = arith.addf %239, %245 : vector<8x64xf32>
    %c7_189 = arith.constant 7 : index
    %c0_190 = arith.constant 0 : index
    %c0_191 = arith.constant 0 : index
    %247 = vector.load %arg2[%c7_189, %c0_190, %c0_191] : memref<9x64x64xf32, #tpu.memory_space<vmem>>, vector<1x64x64xf32>
    %248 = vector.shape_cast %247 : vector<1x64x64xf32> to vector<64x64xf32>
    %cst_192 = arith.constant dense<0.000000e+00> : vector<8x64xf32>
    %249 = tpu.matmul %196, %248, %cst_192 {dimension_numbers = #tpu.dot_dimension_numbers<[1], [0], [0], [1], [0, 0, 1, 1], [], []>} : vector<8x64xf32>, vector<64x64xf32>, vector<8x64xf32> -> vector<8x64xf32>
    %c7_193 = arith.constant 7 : index
    %c0_194 = arith.constant 0 : index
    %c0_195 = arith.constant 0 : index
    %250 = vector.load %arg6[%c7_193, %c0_194, %c0_195] : memref<9x8x8xf32, #tpu.memory_space<vmem>>, vector<1x8x8xf32>
    %251 = vector.shape_cast %250 : vector<1x8x8xf32> to vector<8x8xf32>
    %cst_196 = arith.constant dense<0.000000e+00> : vector<8x64xf32>
    %252 = tpu.matmul %251, %249, %cst_196 {dimension_numbers = #tpu.dot_dimension_numbers<[1], [0], [0], [1], [0, 0, 1, 1], [], []>} : vector<8x8xf32>, vector<8x64xf32>, vector<8x64xf32> -> vector<8x64xf32>
    %253 = arith.addf %246, %252 : vector<8x64xf32>
    %c8_197 = arith.constant 8 : index
    %c0_198 = arith.constant 0 : index
    %c0_199 = arith.constant 0 : index
    %254 = vector.load %arg2[%c8_197, %c0_198, %c0_199] : memref<9x64x64xf32, #tpu.memory_space<vmem>>, vector<1x64x64xf32>
    %255 = vector.shape_cast %254 : vector<1x64x64xf32> to vector<64x64xf32>
    %cst_200 = arith.constant dense<0.000000e+00> : vector<8x64xf32>
    %256 = tpu.matmul %196, %255, %cst_200 {dimension_numbers = #tpu.dot_dimension_numbers<[1], [0], [0], [1], [0, 0, 1, 1], [], []>} : vector<8x64xf32>, vector<64x64xf32>, vector<8x64xf32> -> vector<8x64xf32>
    %c8_201 = arith.constant 8 : index
    %c0_202 = arith.constant 0 : index
    %c0_203 = arith.constant 0 : index
    %257 = vector.load %arg6[%c8_201, %c0_202, %c0_203] : memref<9x8x8xf32, #tpu.memory_space<vmem>>, vector<1x8x8xf32>
    %258 = vector.shape_cast %257 : vector<1x8x8xf32> to vector<8x8xf32>
    %cst_204 = arith.constant dense<0.000000e+00> : vector<8x64xf32>
    %259 = tpu.matmul %258, %256, %cst_204 {dimension_numbers = #tpu.dot_dimension_numbers<[1], [0], [0], [1], [0, 0, 1, 1], [], []>} : vector<8x8xf32>, vector<8x64xf32>, vector<8x64xf32> -> vector<8x64xf32>
    %260 = arith.addf %253, %259 : vector<8x64xf32>
    %c0_205 = arith.constant 0 : index
    %c0_206 = arith.constant 0 : index
    %261 = vector.load %arg7[%c0_205, %c0_206] : memref<8x1xf32, #tpu.memory_space<vmem>>, vector<8x1xf32>
    %262 = vector.broadcast %261 : vector<8x1xf32> to vector<8x64xf32>
    %263 = arith.addf %260, %262 : vector<8x64xf32>
    %cst_207 = arith.constant 0.000000e+00 : f32
    %264 = vector.broadcast %cst_207 : f32 to vector<8x64xf32>
    %265 = arith.maximumf %263, %264 : vector<8x64xf32>
    %266 = arith.addf %265, %1 : vector<8x64xf32>
    %c0_208 = arith.constant 0 : index
    %c0_209 = arith.constant 0 : index
    %267 = vector.load %arg3[%c0_208, %c0_209] : memref<64x64xf32, #tpu.memory_space<vmem>>, vector<64x64xf32>
    %cst_210 = arith.constant dense<0.000000e+00> : vector<8x64xf32>
    %268 = tpu.matmul %266, %267, %cst_210 {dimension_numbers = #tpu.dot_dimension_numbers<[1], [0], [0], [1], [0, 0, 1, 1], [], []>} : vector<8x64xf32>, vector<64x64xf32>, vector<8x64xf32> -> vector<8x64xf32>
    %c0_211 = arith.constant 0 : index
    %c0_212 = arith.constant 0 : index
    %c0_213 = arith.constant 0 : index
    %269 = vector.load %arg20[%c0_211, %c0_212, %c0_213] : memref<1x8x64xf32, #tpu.memory_space<vmem>>, vector<1x8x64xf32>
    %270 = vector.shape_cast %269 : vector<1x8x64xf32> to vector<8x64xf32>
    %271 = vector.shape_cast %268 : vector<8x64xf32> to vector<1x8x64xf32>
    tpu.vector_store %arg20[%c0_211, %c0_212, %c0_213], %271 {strides = array<i32>} : memref<1x8x64xf32, #tpu.memory_space<vmem>>, vector<1x8x64xf32>,
    return
  }
  func.func @transform_0(%arg0: i32) -> (i32, i32, i32) {
    %c0_i32 = arith.constant 0 : i32
    %c0_i32_0 = arith.constant 0 : i32
    %c0_i32_1 = arith.constant 0 : i32
    return %arg0, %c0_i32, %c0_i32_0 : i32, i32, i32
  }
  func.func @transform_1(%arg0: i32) -> (i32, i32, i32) {
    %c0_i32 = arith.constant 0 : i32
    %c0_i32_0 = arith.constant 0 : i32
    %c0_i32_1 = arith.constant 0 : i32
    %c0_i32_2 = arith.constant 0 : i32
    return %c0_i32, %c0_i32_0, %c0_i32_1 : i32, i32, i32
  }
  func.func @transform_2(%arg0: i32) -> (i32, i32) {
    %c0_i32 = arith.constant 0 : i32
    %c0_i32_0 = arith.constant 0 : i32
    %c0_i32_1 = arith.constant 0 : i32
    return %c0_i32, %c0_i32_0 : i32, i32
  }
  func.func @transform_3(%arg0: i32) -> (i32, i32, i32) {
    %c0_i32 = arith.constant 0 : i32
    %c0_i32_0 = arith.constant 0 : i32
    %c0_i32_1 = arith.constant 0 : i32
    %c0_i32_2 = arith.constant 0 : i32
    return %c0_i32, %c0_i32_0, %c0_i32_1 : i32, i32, i32
  }
  func.func @transform_4(%arg0: i32) -> (i32, i32) {
    %c0_i32 = arith.constant 0 : i32
    %c0_i32_0 = arith.constant 0 : i32
    %c0_i32_1 = arith.constant 0 : i32
    return %c0_i32, %c0_i32_0 : i32, i32
  }
  func.func @transform_5(%arg0: i32) -> (i32, i32, i32) {
    %c0_i32 = arith.constant 0 : i32
    %c0_i32_0 = arith.constant 0 : i32
    %c0_i32_1 = arith.constant 0 : i32
    %c0_i32_2 = arith.constant 0 : i32
    return %c0_i32, %c0_i32_0, %c0_i32_1 : i32, i32, i32
  }
  func.func @transform_6(%arg0: i32) -> (i32, i32) {
    %c0_i32 = arith.constant 0 : i32
    %c0_i32_0 = arith.constant 0 : i32
    %c0_i32_1 = arith.constant 0 : i32
    return %c0_i32, %c0_i32_0 : i32, i32
  }
  func.func @transform_7(%arg0: i32) -> (i32, i32, i32) {
    %c0_i32 = arith.constant 0 : i32
    %c0_i32_0 = arith.constant 0 : i32
    %c0_i32_1 = arith.constant 0 : i32
    %c0_i32_2 = arith.constant 0 : i32
    return %c0_i32, %c0_i32_0, %c0_i32_1 : i32, i32, i32
  }
  func.func @transform_8(%arg0: i32) -> (i32, i32, i32) {
    %c0_i32 = arith.constant 0 : i32
    %c0_i32_0 = arith.constant 0 : i32
    %c0_i32_1 = arith.constant 0 : i32
    %c0_i32_2 = arith.constant 0 : i32
    return %c0_i32, %c0_i32_0, %c0_i32_1 : i32, i32, i32
  }
  func.func @transform_9(%arg0: i32) -> (i32, i32, i32) {
    %c0_i32 = arith.constant 0 : i32
    %c0_i32_0 = arith.constant 0 : i32
    %c0_i32_1 = arith.constant 0 : i32
    %c0_i32_2 = arith.constant 0 : i32
    return %c0_i32, %c0_i32_0, %c0_i32_1 : i32, i32, i32
  }
  func.func @transform_10(%arg0: i32) -> (i32, i32, i32) {
    %c0_i32 = arith.constant 0 : i32
    %c0_i32_0 = arith.constant 0 : i32
    %c0_i32_1 = arith.constant 0 : i32
    %c0_i32_2 = arith.constant 0 : i32
    return %c0_i32, %c0_i32_0, %c0_i32_1 : i32, i32, i32
  }
  func.func @transform_11(%arg0: i32) -> (i32, i32, i32) {
    %c0_i32 = arith.constant 0 : i32
    %c0_i32_0 = arith.constant 0 : i32
    %c0_i32_1 = arith.constant 0 : i32
    %c0_i32_2 = arith.constant 0 : i32
    return %c0_i32, %c0_i32_0, %c0_i32_1 : i32, i32, i32
  }
  func.func @transform_12(%arg0: i32) -> (i32, i32, i32) {
    %c0_i32 = arith.constant 0 : i32
    %c0_i32_0 = arith.constant 0 : i32
    %c0_i32_1 = arith.constant 0 : i32
    %c0_i32_2 = arith.constant 0 : i32
    return %c0_i32, %c0_i32_0, %c0_i32_1 : i32, i32, i32
  }
  func.func @transform_13(%arg0: i32) -> (i32, i32, i32) {
    %c0_i32 = arith.constant 0 : i32
    %c0_i32_0 = arith.constant 0 : i32
    %c0_i32_1 = arith.constant 0 : i32
    %c0_i32_2 = arith.constant 0 : i32
    return %c0_i32, %c0_i32_0, %c0_i32_1 : i32, i32, i32
  }
  func.func @transform_14(%arg0: i32) -> (i32, i32, i32) {
    %c0_i32 = arith.constant 0 : i32
    %c0_i32_0 = arith.constant 0 : i32
    %c0_i32_1 = arith.constant 0 : i32
    %c0_i32_2 = arith.constant 0 : i32
    return %c0_i32, %c0_i32_0, %c0_i32_1 : i32, i32, i32
  }
  func.func @transform_15(%arg0: i32) -> (i32, i32, i32) {
    %c0_i32 = arith.constant 0 : i32
    %c0_i32_0 = arith.constant 0 : i32
    %c0_i32_1 = arith.constant 0 : i32
    %c0_i32_2 = arith.constant 0 : i32
    return %c0_i32, %c0_i32_0, %c0_i32_1 : i32, i32, i32
  }
  func.func @transform_16(%arg0: i32) -> (i32, i32, i32) {
    %c0_i32 = arith.constant 0 : i32
    %c0_i32_0 = arith.constant 0 : i32
    %c0_i32_1 = arith.constant 0 : i32
    %c0_i32_2 = arith.constant 0 : i32
    return %c0_i32, %c0_i32_0, %c0_i32_1 : i32, i32, i32
  }
  func.func @transform_17(%arg0: i32) -> (i32, i32, i32) {
    %c0_i32 = arith.constant 0 : i32
    %c0_i32_0 = arith.constant 0 : i32
    %c0_i32_1 = arith.constant 0 : i32
    %c0_i32_2 = arith.constant 0 : i32
    return %c0_i32, %c0_i32_0, %c0_i32_1 : i32, i32, i32
  }
  func.func @transform_18(%arg0: i32) -> (i32, i32, i32) {
    %c0_i32 = arith.constant 0 : i32
    %c0_i32_0 = arith.constant 0 : i32
    %c0_i32_1 = arith.constant 0 : i32
    %c0_i32_2 = arith.constant 0 : i32
    return %c0_i32, %c0_i32_0, %c0_i32_1 : i32, i32, i32
  }
  func.func @transform_19(%arg0: i32) -> (i32, i32, i32) {
    %c0_i32 = arith.constant 0 : i32
    %c0_i32_0 = arith.constant 0 : i32
    %c0_i32_1 = arith.constant 0 : i32
    return %arg0, %c0_i32, %c0_i32_0 : i32, i32, i32
  }
}

module attributes {stable_mosaic.version = 11 : i64} {
  func.func @_head_kernel(%arg0: memref<2x512xf32, #tpu.memory_space<vmem>>, %arg1: memref<1x512xf32, #tpu.memory_space<vmem>>, %arg2: memref<1x512xf32, #tpu.memory_space<vmem>>, %arg3: memref<512x10xf32, #tpu.memory_space<vmem>>, %arg4: memref<1x10xf32, #tpu.memory_space<vmem>>, %arg5: memref<2x10xf32, #tpu.memory_space<vmem>>) attributes {dimension_semantics = [], scalar_prefetch = 0 : i64, scratch_operands = 0 : i64, tpu.core_type = #tpu.core_type<tc>} {
    %c0 = arith.constant 0 : index
    %c0_0 = arith.constant 0 : index
    %0 = vector.load %arg0[%c0, %c0_0] : memref<2x512xf32, #tpu.memory_space<vmem>>, vector<2x512xf32>
    %cst = arith.constant dense<0.000000e+00> : vector<2xf32>
    %1 = vector.multi_reduction <add>, %0, %cst [1] : vector<2x512xf32> to vector<2xf32>
    %2 = vector.shape_cast %1 : vector<2xf32> to vector<2x1xf32>
    %cst_1 = arith.constant 5.120000e+02 : f32
    %3 = vector.broadcast %cst_1 : f32 to vector<2x1xf32>
    %4 = arith.divf %2, %3 : vector<2x1xf32>
    %5 = vector.broadcast %4 : vector<2x1xf32> to vector<2x512xf32>
    %6 = arith.subf %0, %5 : vector<2x512xf32>
    %7 = arith.mulf %6, %6 : vector<2x512xf32>
    %cst_2 = arith.constant dense<0.000000e+00> : vector<2xf32>
    %8 = vector.multi_reduction <add>, %7, %cst_2 [1] : vector<2x512xf32> to vector<2xf32>
    %9 = vector.shape_cast %8 : vector<2xf32> to vector<2x1xf32>
    %cst_3 = arith.constant 5.120000e+02 : f32
    %10 = vector.broadcast %cst_3 : f32 to vector<2x1xf32>
    %11 = arith.divf %9, %10 : vector<2x1xf32>
    %12 = vector.broadcast %4 : vector<2x1xf32> to vector<2x512xf32>
    %13 = arith.subf %0, %12 : vector<2x512xf32>
    %cst_4 = arith.constant 9.99999974E-6 : f32
    %14 = vector.broadcast %cst_4 : f32 to vector<2x1xf32>
    %15 = arith.addf %11, %14 : vector<2x1xf32>
    %16 = math.rsqrt %15 : vector<2x1xf32>
    %17 = vector.broadcast %16 : vector<2x1xf32> to vector<2x512xf32>
    %18 = arith.mulf %13, %17 : vector<2x512xf32>
    %c0_5 = arith.constant 0 : index
    %c0_6 = arith.constant 0 : index
    %19 = vector.load %arg1[%c0_5, %c0_6] : memref<1x512xf32, #tpu.memory_space<vmem>>, vector<1x512xf32>
    %20 = vector.broadcast %19 : vector<1x512xf32> to vector<2x512xf32>
    %21 = arith.mulf %18, %20 : vector<2x512xf32>
    %c0_7 = arith.constant 0 : index
    %c0_8 = arith.constant 0 : index
    %22 = vector.load %arg2[%c0_7, %c0_8] : memref<1x512xf32, #tpu.memory_space<vmem>>, vector<1x512xf32>
    %23 = vector.broadcast %22 : vector<1x512xf32> to vector<2x512xf32>
    %24 = arith.addf %21, %23 : vector<2x512xf32>
    %c0_9 = arith.constant 0 : index
    %c0_10 = arith.constant 0 : index
    %25 = vector.load %arg3[%c0_9, %c0_10] : memref<512x10xf32, #tpu.memory_space<vmem>>, vector<512x10xf32>
    %cst_11 = arith.constant dense<0.000000e+00> : vector<2x10xf32>
    %26 = tpu.matmul %24, %25, %cst_11 {dimension_numbers = #tpu.dot_dimension_numbers<[1], [0], [0], [1], [0, 0, 1, 1], [], []>} : vector<2x512xf32>, vector<512x10xf32>, vector<2x10xf32> -> vector<2x10xf32>
    %c0_12 = arith.constant 0 : index
    %c0_13 = arith.constant 0 : index
    %27 = vector.load %arg4[%c0_12, %c0_13] : memref<1x10xf32, #tpu.memory_space<vmem>>, vector<1x10xf32>
    %28 = vector.broadcast %27 : vector<1x10xf32> to vector<2x10xf32>
    %29 = arith.addf %26, %28 : vector<2x10xf32>
    %c0_14 = arith.constant 0 : index
    %c0_15 = arith.constant 0 : index
    %30 = vector.load %arg5[%c0_14, %c0_15] : memref<2x10xf32, #tpu.memory_space<vmem>>, vector<2x10xf32>
    tpu.vector_store %arg5[%c0_14, %c0_15], %29 {strides = array<i32>} : memref<2x10xf32, #tpu.memory_space<vmem>>, vector<2x10xf32>,
    return
  }
}

</mosaic_0001>

<llo_original>
// kernel: _lambda_.4
$region0: #{_lambda_.4}
  #allocation0 [shape = 'u32[]', space=smem, size = 0x4, offset = 0x4, fixed_abs, tag = 'smem constant byte address 0x4 - core index']
  #allocation1 [shape = 'u32[144,128]{1,0:T(1,128)}', space=vmem, size = 0x12000, scoped, tag = 'internal scratch']
  %s0 = inlined_call_operand.vmem [shape: f32[2,80,784], index: 0, kind: input, shape index: {}]
  %s1 = inlined_call_operand.vmem [shape: f32[8,80], index: 1, kind: input, shape index: {}]
  %s2 = inlined_call_operand.vmem [shape: f32[8,1], index: 2, kind: input, shape index: {}]
  %s3 = inlined_call_operand.vmem [shape: f32[2,8,784], index: 3, kind: output, shape index: {}]
  %s4 = sld [smem:[#allocation0]]
  $region45: #{_lambda_.4} parent=0
    _
  %s6 = ssub.s32 1, %s4
  %s7 = scalar_select 0, %s6, %s4
  loop: start=0, step=1, limit=4
  $region2: #{_lambda_.4} parent=0 // loop_pre_header
    _
  $region3: #{_lambda_.4} parent=0 // loop_header
    %s9 = sphi 0, %s13
    %p10 = scmp.ge.s32.totalorder %s9, 4
    %s19 = sphi 0, %s21
    %s22 = sphi 0, %s19
    %s23 = sphi 0, %s22
    %s39 = sphi 0, %s23
    %s43 = sphi 0, %s43
    %s45 = sphi 0, %s43
    %s46 = sphi 0, %s45
    %s60 = sphi 0, %s46
    %s64 = sphi 0, %s64
    %s66 = sphi 0, %s64
    %s67 = sphi 0, %s66
    %s81 = sphi 0, %s67
    %s87 = sphi 0, %s89
    %s90 = sphi 0, %s87
    %s91 = sphi 0, %s90
    %s107 = sphi 0, %s91
  $region4: #{_lambda_.4} parent=0 // loop_header_branch
    %12 = sbr.rel (%p10) target = $region8
  $region5: #{_lambda_.4} parent=0 // loop_body
    %s14 = ssub.s32 %s9, 1
    %s15 = ssub.s32 %s9, 2
    %s16 = sadd.s32 %s9, 1
    %s17 = ssub.s32 %s9, %s16
    %p18 = scmp.eq.s32.totalorder %s17, 0
    %s20 = sadd.s32 %s19, 1
    %s21 = scalar_select %p18, %s19, %s20
    %p24 = pneg %p18
    %p25 = scmp.eq.s32.totalorder %s9, 1
    %p26 = por %p24, %p25
    %p27 = scmp.ne.s32.totalorder %s19, %s22
    %p28 = scmp.eq.s32.totalorder %s9, 0
    %p29 = por %p27, %p28
    %p30 = scmp.ne.s32.totalorder %s19, %s22
    %p31 = scmp.eq.s32.totalorder %s14, 1
    %p32 = por %p30, %p31
    %p33 = scmp.ne.s32.totalorder %s22, %s23
    %p34 = scmp.eq.s32.totalorder %s14, 0
    %p35 = por %p33, %p34
    %p36 = scmp.ne.s32.totalorder %s22, %s23
    %p37 = scmp.eq.s32.totalorder %s15, 1
    %p38 = por %p36, %p37
    %p40 = scmp.ne.s32.totalorder %s23, %s39
    %p41 = scmp.eq.s32.totalorder %s15, 0
    %p42 = por %p40, %p41
    %s44 = sadd.s32 %s43, 1
    %p47 = scmp.eq.s32.totalorder %s9, 1
    %p48 = scmp.ne.s32.totalorder %s43, %s45
    %p49 = scmp.eq.s32.totalorder %s9, 0
    %p50 = por %p48, %p49
    %p51 = scmp.ne.s32.totalorder %s43, %s45
    %p52 = scmp.eq.s32.totalorder %s14, 1
    %p53 = por %p51, %p52
    %p54 = scmp.ne.s32.totalorder %s45, %s46
    %p55 = scmp.eq.s32.totalorder %s14, 0
    %p56 = por %p54, %p55
    %p57 = scmp.ne.s32.totalorder %s45, %s46
    %p58 = scmp.eq.s32.totalorder %s15, 1
    %p59 = por %p57, %p58
    %p61 = scmp.ne.s32.totalorder %s46, %s60
    %p62 = scmp.eq.s32.totalorder %s15, 0
    %p63 = por %p61, %p62
    %s65 = sadd.s32 %s64, 1
    %p68 = scmp.eq.s32.totalorder %s9, 1
    %p69 = scmp.ne.s32.totalorder %s64, %s66
    %p70 = scmp.eq.s32.totalorder %s9, 0
    %p71 = por %p69, %p70
    %p72 = scmp.ne.s32.totalorder %s64, %s66
    %p73 = scmp.eq.s32.totalorder %s14, 1
    %p74 = por %p72, %p73
    %p75 = scmp.ne.s32.totalorder %s66, %s67
    %p76 = scmp.eq.s32.totalorder %s14, 0
    %p77 = por %p75, %p76
    %p78 = scmp.ne.s32.totalorder %s66, %s67
    %p79 = scmp.eq.s32.totalorder %s15, 1
    %p80 = por %p78, %p79
    %p82 = scmp.ne.s32.totalorder %s67, %s81
    %p83 = scmp.eq.s32.totalorder %s15, 0
    %p84 = por %p82, %p83
    %s85 = ssub.s32 %s9, %s16
    %p86 = scmp.eq.s32.totalorder %s85, 0
    %s88 = sadd.s32 %s87, 1
    %s89 = scalar_select %p86, %s87, %s88
    %p92 = pneg %p86
    %p93 = scmp.eq.s32.totalorder %s9, 1
    %p94 = por %p92, %p93
    %p95 = scmp.ne.s32.totalorder %s87, %s90
    %p96 = scmp.eq.s32.totalorder %s9, 0
    %p97 = por %p95, %p96
    %p98 = scmp.ne.s32.totalorder %s87, %s90
    %p99 = scmp.eq.s32.totalorder %s14, 1
    %p100 = por %p98, %p99
    %p101 = scmp.ne.s32.totalorder %s90, %s91
    %p102 = scmp.eq.s32.totalorder %s14, 0
    %p103 = por %p101, %p102
    %p104 = scmp.ne.s32.totalorder %s90, %s91
    %p105 = scmp.eq.s32.totalorder %s15, 1
    %p106 = por %p104, %p105
    %p108 = scmp.ne.s32.totalorder %s91, %s107
    %p109 = scmp.eq.s32.totalorder %s15, 0
    %p110 = por %p108, %p109
    %p111 = scmp.le.s32.totalorder 1, %s9
    %p112 = scmp.lt.s32.totalorder %s9, 3
    %p113 = pnand %p111, %p112
    %p114 = pneg %p113
    // Predicated region
    $region9: #{_lambda_.4} parent=5 // pred_check
      _
    $region10: #{_lambda_.4} parent=5 // pred_check_branch
      %116 = sbr.rel (%p113) target = $region12
    $region11: #{_lambda_.4} parent=5 // pred_region
      %s117 = ssub.s32 %s9, 1
      // Predicated region
      $region13: #{_lambda_.4} parent=11 // pred_check
        %p118 = pneg %p56
      $region14: #{_lambda_.4} parent=11 // pred_check_branch
        %120 = sbr.rel (%p118) target = $region16
      $region15: #{_lambda_.4} parent=11 // pred_region
        _
      $region16: #{_lambda_.4} parent=11 // pred_fallthru
        _
      // Predicated region
      $region17: #{_lambda_.4} parent=11 // pred_check
        %p121 = pneg %p77
      $region18: #{_lambda_.4} parent=11 // pred_check_branch
        %123 = sbr.rel (%p121) target = $region20
      $region19: #{_lambda_.4} parent=11 // pred_region
        _
      $region20: #{_lambda_.4} parent=11 // pred_fallthru
        _
    $region12: #{_lambda_.4} parent=5 // pred_fallthru
      _
    %p124 = scmp.lt.s32.totalorder %s9, 2
    // Predicated region
    $region21: #{_lambda_.4} parent=5 // pred_check
      %p125 = pneg %p124
    $region22: #{_lambda_.4} parent=5 // pred_check_branch
      %127 = sbr.rel (%p125) target = $region24
    $region23: #{_lambda_.4} parent=5 // pred_region
      // Predicated region
      $region25: #{_lambda_.4} parent=23 // pred_check
        %p128 = pneg %p29
      $region26: #{_lambda_.4} parent=23 // pred_check_branch
        %130 = sbr.rel (%p128) target = $region28
      $region27: #{_lambda_.4} parent=23 // pred_region
        %p131 = scmp.lt.s32.totalorder %s9, 1
        %s132 = scalar_select %p131, %s9, 1
        %s133 = smul.addr %s132, 70
        %s134 = smul.addr %s133, 8
        %s135 = scalar_lea.vmem %s0, %s134
      $region28: #{_lambda_.4} parent=23 // pred_fallthru
        _
    $region24: #{_lambda_.4} parent=5 // pred_fallthru
      _
    %p136 = scmp.le.s32.totalorder 1, %s9
    %p137 = scmp.lt.s32.totalorder %s9, 3
    %p138 = pnand %p136, %p137
    %p139 = pneg %p138
    // Predicated region
    $region29: #{_lambda_.4} parent=5 // pred_check
      _
    $region30: #{_lambda_.4} parent=5 // pred_check_branch
      %141 = sbr.rel (%p138) target = $region32
    $region31: #{_lambda_.4} parent=5 // pred_region
      %s142 = ssub.s32 %s9, 1
      %p143 = scmp.lt.s32.totalorder %s14, 1
      %s144 = scalar_select %p143, %s14, 1
      %s145 = smul.addr %s144, 70
      %s146 = smul.addr %s145, 8
      %s147 = scalar_lea.vmem %s0, %s146
      %p148 = pneg %p35
      %p149 = pneg %p32
      %p150 = pneg %p56
      %p151 = pneg %p53
      %p152 = pneg %p77
      %p153 = pneg %p74
      %p154 = pneg %p103
      %p155 = pneg %p100
      %p156 = scmp.lt.s32.totalorder %s14, 1
      %s157 = scalar_select %p156, %s14, 1
      %s158 = smul.addr %s157, 7
      %s159 = smul.addr %s158, 8
      %s160 = scalar_lea.vmem %s3, %s159
      %p161 = scmp.lt.s32.totalorder %s14, 1
      %s162 = scalar_select %p161, %s14, 1
      %s163 = smul.addr %s162, 70
      %s164 = smul.addr %s163, 8
      %s165 = scalar_lea.vmem %s0, %s164
      %p166 = scmp.lt.s32.totalorder %s14, 1
      %s167 = scalar_select %p166, %s14, 1
      %s168 = smul.addr %s167, 7
      %s169 = smul.addr %s168, 8
      %s170 = scalar_lea.vmem %s3, %s169
      %v171 = vld [vmem:[%s1] sm:$0xff]
      %v172 = vld [vmem:[%s165] sm:$0xff]
      %v173 = vld [vmem:[%s165 + $0x8] sm:$0xff]
      %v174 = vld [vmem:[%s165 + $0x10] sm:$0xff]
      %v175 = vld [vmem:[%s165 + $0x18] sm:$0xff]
      %v176 = vld [vmem:[%s165 + $0x20] sm:$0xff]
      %v177 = vld [vmem:[%s165 + $0x28] sm:$0xff]
      %v178 = vld [vmem:[%s165 + $0x30] sm:$0xff]
      %v179 = vld [vmem:[%s165 + $0x38] sm:$0xff]
      %v180 = vld [vmem:[%s165 + $0x40] sm:$0xff]
      %v181 = vld [vmem:[%s165 + $0x48] sm:$0xff]
      %v182 = vld [vmem:[%s165 + $0x50] sm:$0xff]
      %v183 = vld [vmem:[%s165 + $0x58] sm:$0xff]
      %v184 = vld [vmem:[%s165 + $0x60] sm:$0xff]
      %v185 = vld [vmem:[%s165 + $0x68] sm:$0xff]
      %v186 = vld [vmem:[%s165 + $0x70] sm:$0xff]
      %v187 = vld [vmem:[%s165 + $0x78] sm:$0xff]
      %v188 = vld [vmem:[%s165 + $0x80] sm:$0xff]
      %v189 = vld [vmem:[%s165 + $0x88] sm:$0xff]
      %v190 = vld [vmem:[%s165 + $0x90] sm:$0xff]
      %v191 = vld [vmem:[%s165 + $0x98] sm:$0xff]
      %v192 = vld [vmem:[%s165 + $0xa0] sm:$0xff]
      %v193 = vld [vmem:[%s165 + $0xa8] sm:$0xff]
      %v194 = vld [vmem:[%s165 + $0xb0] sm:$0xff]
      %v195 = vld [vmem:[%s165 + $0xb8] sm:$0xff]
      %v196 = vld [vmem:[%s165 + $0xc0] sm:$0xff]
      %v197 = vld [vmem:[%s165 + $0xc8] sm:$0xff]
      %v198 = vld [vmem:[%s165 + $0xd0] sm:$0xff]
      %v199 = vld [vmem:[%s165 + $0xd8] sm:$0xff]
      %v200 = vld [vmem:[%s165 + $0xe0] sm:$0xff]
      %v201 = vld [vmem:[%s165 + $0xe8] sm:$0xff]
      %v202 = vld [vmem:[%s165 + $0xf0] sm:$0xff]
      %v203 = vld [vmem:[%s165 + $0xf8] sm:$0xff]
      %v204 = vld [vmem:[%s165 + $0x100] sm:$0xff]
      %v205 = vld [vmem:[%s165 + $0x108] sm:$0xff]
      %v206 = vld [vmem:[%s165 + $0x110] sm:$0xff]
      %v207 = vld [vmem:[%s165 + $0x118] sm:$0xff]
      %v208 = vld [vmem:[%s165 + $0x120] sm:$0xff]
      %v209 = vld [vmem:[%s165 + $0x128] sm:$0xff]
      %v210 = vld [vmem:[%s165 + $0x130] sm:$0xff]
      %v211 = vld [vmem:[%s165 + $0x138] sm:$0xff]
      %v212 = vld [vmem:[%s165 + $0x140] sm:$0xff]
      %v213 = vld [vmem:[%s165 + $0x148] sm:$0xff]
      %v214 = vld [vmem:[%s165 + $0x150] sm:$0xff]
      %v215 = vld [vmem:[%s165 + $0x158] sm:$0xff]
      %v216 = vld [vmem:[%s165 + $0x160] sm:$0xff]
      %v217 = vld [vmem:[%s165 + $0x168] sm:$0xff]
      %v218 = vld [vmem:[%s165 + $0x170] sm:$0xff]
      %v219 = vld [vmem:[%s165 + $0x178] sm:$0xff]
      %v220 = vld [vmem:[%s165 + $0x180] sm:$0xff]
      %v221 = vld [vmem:[%s165 + $0x188] sm:$0xff]
      %v222 = vld [vmem:[%s165 + $0x190] sm:$0xff]
      %v223 = vld [vmem:[%s165 + $0x198] sm:$0xff]
      %v224 = vld [vmem:[%s165 + $0x1a0] sm:$0xff]
      %v225 = vld [vmem:[%s165 + $0x1a8] sm:$0xff]
      %v226 = vld [vmem:[%s165 + $0x1b0] sm:$0xff]
      %v227 = vld [vmem:[%s165 + $0x1b8] sm:$0xff]
      %v228 = vld [vmem:[%s165 + $0x1c0] sm:$0xff]
      %v229 = vld [vmem:[%s165 + $0x1c8] sm:$0xff]
      %v230 = vld [vmem:[%s165 + $0x1d0] sm:$0xff]
      %v231 = vld [vmem:[%s165 + $0x1d8] sm:$0xff]
      %v232 = vld [vmem:[%s165 + $0x1e0] sm:$0xff]
      %v233 = vld [vmem:[%s165 + $0x1e8] sm:$0xff]
      %v234 = vld [vmem:[%s165 + $0x1f0] sm:$0xff]
      %v235 = vld [vmem:[%s165 + $0x1f8] sm:$0xff]
      %v236 = vld [vmem:[%s165 + $0x200] sm:$0xff]
      %v237 = vld [vmem:[%s165 + $0x208] sm:$0xff]
      %v238 = vld [vmem:[%s165 + $0x210] sm:$0xff]
      %v239 = vld [vmem:[%s165 + $0x218] sm:$0xff]
      %v240 = vld [vmem:[%s165 + $0x220] sm:$0xff]
      %v241 = vld [vmem:[%s165 + $0x228] sm:$0xff]
      %v242 = vld [vmem:[%s2] sm:$0xff]
      %244 = vset.pattern.permute.xlu0 0
      %245 = vperm.xlu0 %244, %v242
      %v246 = vpop.permute.xlu0 %245
      %vm248 = vcmask 654336
      %v250 = vsel %vm248, %v171, 0
      %252 = vmatprep.subr.mxu0 0.0
      %253 = vmatpush1.msra.mxu0 0.0
      %254 = vmatprep.subr.mxu0 0.0
      %255 = vmatpush1.msra.mxu0 0.0
      %256 = vmatprep.subr.mxu0 0.0
      %257 = vmatpush1.msra.mxu0 0.0
      %258 = vmatprep.subr.mxu0 0.0
      %259 = vmatpush1.msra.mxu0 0.0
      %260 = vmatprep.subr.mxu0 0.0
      %261 = vmatpush1.msra.mxu0 0.0
      %262 = vmatprep.subr.mxu0 0.0
      %263 = vmatpush1.msra.mxu0 0.0
      %264 = vmatprep.subr.mxu0 %v236
      %265 = vmatpush1.msra.mxu0 %v235
      %266 = vmatprep.subr.mxu0 %v229
      %267 = vmatpush1.msra.mxu0 %v228
      %268 = vmatprep.subr.mxu0 %v222
      %269 = vmatpush1.msra.mxu0 %v221
      %270 = vmatprep.subr.mxu0 %v215
      %271 = vmatpush1.msra.mxu0 %v214
      %272 = vmatprep.subr.mxu0 %v208
      %273 = vmatpush1.msra.mxu0 %v207
      %274 = vmatprep.subr.mxu0 %v201
      %275 = vmatpush1.msra.mxu0 %v200
      %276 = vmatprep.subr.mxu0 %v194
      %277 = vmatpush1.msra.mxu0 %v193
      %278 = vmatprep.subr.mxu0 %v187
      %279 = vmatpush1.msra.mxu0 %v186
      %280 = vmatprep.subr.mxu0 %v180
      %281 = vmatpush1.msra.mxu0 %v179
      %282 = vmatprep.subr.mxu0 %v173
      %283 = vmatpush1.msra.mxu0 %v172
      %284 = vmatprep.subr.mxu0 0.0
      %285 = vmatpush2.msra.mxu0 0.0
      %286 = vmatprep.subr.mxu0 0.0
      %287 = vmatpush2.msra.mxu0 0.0
      %288 = vmatprep.subr.mxu0 0.0
      %289 = vmatpush2.msra.mxu0 0.0
      %290 = vmatprep.subr.mxu0 0.0
      %291 = vmatpush2.msra.mxu0 0.0
      %292 = vmatprep.subr.mxu0 0.0
      %293 = vmatpush2.msra.mxu0 0.0
      %294 = vmatprep.subr.mxu0 0.0
      %295 = vmatpush2.msra.mxu0 0.0
      %296 = vmatprep.subr.mxu0 0.0
      %297 = vmatpush2.msra.mxu0 0.0
      %298 = vmatprep.subr.mxu0 0.0
      %299 = vmatpush2.msra.mxu0 0.0
      %300 = vmatprep.subr.mxu0 0.0
      %301 = vmatpush2.msra.mxu0 0.0
      %302 = vmatprep.subr.mxu0 0.0
      %303 = vmatpush2.msra.mxu0 0.0
      %304 = vmatprep.subr.mxu0 0.0
      %305 = vmatpush2.msra.mxu0 0.0
      %306 = vmatprep.subr.mxu0 0.0
      %307 = vmatpush2.msra.mxu0 0.0
      %308 = vmatprep.subr.mxu0 0.0
      %309 = vmatpush2.msra.mxu0 0.0
      %310 = vmatprep.subr.mxu0 0.0
      %311 = vmatpush2.msra.mxu0 0.0
      %312 = vmatprep.subr.mxu0 0.0
      %313 = vmatpush2.msra.mxu0 0.0
      %314 = vmatprep.subr.mxu0 0.0
      %315 = vmatpush2.msra.mxu0 0.0
      %316 = vmatprep.mubr.f32.mxu0 0.0
      %317 = vmatmul.mubr.f32.gmra.mxu0 %v250
      %v318 = vpop.f32.mrf.mxu0
      %v319 = vadd.f32 %v246, %v318
      %v320 = vpop.f32.mrf.mxu0
      %v321 = vadd.f32 %v246, %v320
      %322 = vdwg.mxu0
      %323 = vmatprep.subr.mxu0 0.0
      %324 = vmatpush1.msra.mxu0 0.0
      %325 = vmatprep.subr.mxu0 0.0
      %326 = vmatpush1.msra.mxu0 0.0
      %327 = vmatprep.subr.mxu0 0.0
      %328 = vmatpush1.msra.mxu0 0.0
      %329 = vmatprep.subr.mxu0 0.0
      %330 = vmatpush1.msra.mxu0 0.0
      %331 = vmatprep.subr.mxu0 0.0
      %332 = vmatpush1.msra.mxu0 0.0
      %333 = vmatprep.subr.mxu0 0.0
      %334 = vmatpush1.msra.mxu0 0.0
      %335 = vmatprep.subr.mxu0 %v238
      %336 = vmatpush1.msra.mxu0 %v237
      %337 = vmatprep.subr.mxu0 %v231
      %338 = vmatpush1.msra.mxu0 %v230
      %339 = vmatprep.subr.mxu0 %v224
      %340 = vmatpush1.msra.mxu0 %v223
      %341 = vmatprep.subr.mxu0 %v217
      %342 = vmatpush1.msra.mxu0 %v216
      %343 = vmatprep.subr.mxu0 %v210
      %344 = vmatpush1.msra.mxu0 %v209
      %345 = vmatprep.subr.mxu0 %v203
      %346 = vmatpush1.msra.mxu0 %v202
      %347 = vmatprep.subr.mxu0 %v196
      %348 = vmatpush1.msra.mxu0 %v195
      %349 = vmatprep.subr.mxu0 %v189
      %350 = vmatpush1.msra.mxu0 %v188
      %351 = vmatprep.subr.mxu0 %v182
      %352 = vmatpush1.msra.mxu0 %v181
      %353 = vmatprep.subr.mxu0 %v175
      %354 = vmatpush1.msra.mxu0 %v174
      %355 = vmatprep.subr.mxu0 0.0
      %356 = vmatpush2.msra.mxu0 0.0
      %357 = vmatprep.subr.mxu0 0.0
      %358 = vmatpush2.msra.mxu0 0.0
      %359 = vmatprep.subr.mxu0 0.0
      %360 = vmatpush2.msra.mxu0 0.0
      %361 = vmatprep.subr.mxu0 0.0
      %362 = vmatpush2.msra.mxu0 0.0
      %363 = vmatprep.subr.mxu0 0.0
      %364 = vmatpush2.msra.mxu0 0.0
      %365 = vmatprep.subr.mxu0 0.0
      %366 = vmatpush2.msra.mxu0 0.0
      %367 = vmatprep.subr.mxu0 0.0
      %368 = vmatpush2.msra.mxu0 0.0
      %369 = vmatprep.subr.mxu0 0.0
      %370 = vmatpush2.msra.mxu0 0.0
      %371 = vmatprep.subr.mxu0 0.0
      %372 = vmatpush2.msra.mxu0 0.0
      %373 = vmatprep.subr.mxu0 0.0
      %374 = vmatpush2.msra.mxu0 0.0
      %375 = vmatprep.subr.mxu0 0.0
      %376 = vmatpush2.msra.mxu0 0.0
      %377 = vmatprep.subr.mxu0 0.0
      %378 = vmatpush2.msra.mxu0 0.0
      %379 = vmatprep.subr.mxu0 0.0
      %380 = vmatpush2.msra.mxu0 0.0
      %381 = vmatprep.subr.mxu0 0.0
      %382 = vmatpush2.msra.mxu0 0.0
      %383 = vmatprep.subr.mxu0 0.0
      %384 = vmatpush2.msra.mxu0 0.0
      %385 = vmatprep.subr.mxu0 0.0
      %386 = vmatpush2.msra.mxu0 0.0
      %387 = vmatprep.mubr.f32.mxu0 0.0
      %388 = vmatmul.mubr.f32.gmra.mxu0 %v250
      %v389 = vpop.f32.mrf.mxu0
      %v390 = vadd.f32 %v246, %v389
      %v391 = vpop.f32.mrf.mxu0
      %v392 = vadd.f32 %v246, %v391
      %393 = vdwg.mxu0
      %394 = vmatprep.subr.mxu0 0.0
      %395 = vmatpush1.msra.mxu0 0.0
      %396 = vmatprep.subr.mxu0 0.0
      %397 = vmatpush1.msra.mxu0 0.0
      %398 = vmatprep.subr.mxu0 0.0
      %399 = vmatpush1.msra.mxu0 0.0
      %400 = vmatprep.subr.mxu0 0.0
      %401 = vmatpush1.msra.mxu0 0.0
      %402 = vmatprep.subr.mxu0 0.0
      %403 = vmatpush1.msra.mxu0 0.0
      %404 = vmatprep.subr.mxu0 0.0
      %405 = vmatpush1.msra.mxu0 0.0
      %406 = vmatprep.subr.mxu0 %v240
      %407 = vmatpush1.msra.mxu0 %v239
      %408 = vmatprep.subr.mxu0 %v233
      %409 = vmatpush1.msra.mxu0 %v232
      %410 = vmatprep.subr.mxu0 %v226
      %411 = vmatpush1.msra.mxu0 %v225
      %412 = vmatprep.subr.mxu0 %v219
      %413 = vmatpush1.msra.mxu0 %v218
      %414 = vmatprep.subr.mxu0 %v212
      %415 = vmatpush1.msra.mxu0 %v211
      %416 = vmatprep.subr.mxu0 %v205
      %417 = vmatpush1.msra.mxu0 %v204
      %418 = vmatprep.subr.mxu0 %v198
      %419 = vmatpush1.msra.mxu0 %v197
      %420 = vmatprep.subr.mxu0 %v191
      %421 = vmatpush1.msra.mxu0 %v190
      %422 = vmatprep.subr.mxu0 %v184
      %423 = vmatpush1.msra.mxu0 %v183
      %424 = vmatprep.subr.mxu0 %v177
      %425 = vmatpush1.msra.mxu0 %v176
      %426 = vmatprep.subr.mxu0 0.0
      %427 = vmatpush2.msra.mxu0 0.0
      %428 = vmatprep.subr.mxu0 0.0
      %429 = vmatpush2.msra.mxu0 0.0
      %430 = vmatprep.subr.mxu0 0.0
      %431 = vmatpush2.msra.mxu0 0.0
      %432 = vmatprep.subr.mxu0 0.0
      %433 = vmatpush2.msra.mxu0 0.0
      %434 = vmatprep.subr.mxu0 0.0
      %435 = vmatpush2.msra.mxu0 0.0
      %436 = vmatprep.subr.mxu0 0.0
      %437 = vmatpush2.msra.mxu0 0.0
      %438 = vmatprep.subr.mxu0 0.0
      %439 = vmatpush2.msra.mxu0 0.0
      %440 = vmatprep.subr.mxu0 0.0
      %441 = vmatpush2.msra.mxu0 0.0
      %442 = vmatprep.subr.mxu0 0.0
      %443 = vmatpush2.msra.mxu0 0.0
      %444 = vmatprep.subr.mxu0 0.0
      %445 = vmatpush2.msra.mxu0 0.0
      %446 = vmatprep.subr.mxu0 0.0
      %447 = vmatpush2.msra.mxu0 0.0
      %448 = vmatprep.subr.mxu0 0.0
      %449 = vmatpush2.msra.mxu0 0.0
      %450 = vmatprep.subr.mxu0 0.0
      %451 = vmatpush2.msra.mxu0 0.0
      %452 = vmatprep.subr.mxu0 0.0
      %453 = vmatpush2.msra.mxu0 0.0
      %454 = vmatprep.subr.mxu0 0.0
      %455 = vmatpush2.msra.mxu0 0.0
      %456 = vmatprep.subr.mxu0 0.0
      %457 = vmatpush2.msra.mxu0 0.0
      %458 = vmatprep.mubr.f32.mxu0 0.0
      %459 = vmatmul.mubr.f32.gmra.mxu0 %v250
      %v460 = vpop.f32.mrf.mxu0
      %v461 = vadd.f32 %v246, %v460
      %v462 = vpop.f32.mrf.mxu0
      %v463 = vadd.f32 %v246, %v462
      %464 = vdwg.mxu0
      %465 = vmatprep.subr.mxu0 0.0
      %466 = vmatpush1.msra.mxu0 0.0
      %467 = vmatprep.subr.mxu0 0.0
      %468 = vmatpush1.msra.mxu0 0.0
      %469 = vmatprep.subr.mxu0 0.0
      %470 = vmatpush1.msra.mxu0 0.0
      %471 = vmatprep.subr.mxu0 0.0
      %472 = vmatpush1.msra.mxu0 0.0
      %473 = vmatprep.subr.mxu0 0.0
      %474 = vmatpush1.msra.mxu0 0.0
      %475 = vmatprep.subr.mxu0 0.0
      %476 = vmatpush1.msra.mxu0 0.0
      %477 = vmatprep.subr.mxu0 0.0
      %478 = vmatpush1.msra.mxu0 %v241
      %479 = vmatprep.subr.mxu0 0.0
      %480 = vmatpush1.msra.mxu0 %v234
      %481 = vmatprep.subr.mxu0 0.0
      %482 = vmatpush1.msra.mxu0 %v227
      %483 = vmatprep.subr.mxu0 0.0
      %484 = vmatpush1.msra.mxu0 %v220
      %485 = vmatprep.subr.mxu0 0.0
      %486 = vmatpush1.msra.mxu0 %v213
      %487 = vmatprep.subr.mxu0 0.0
      %488 = vmatpush1.msra.mxu0 %v206
      %489 = vmatprep.subr.mxu0 0.0
      %490 = vmatpush1.msra.mxu0 %v199
      %491 = vmatprep.subr.mxu0 0.0
      %492 = vmatpush1.msra.mxu0 %v192
      %493 = vmatprep.subr.mxu0 0.0
      %494 = vmatpush1.msra.mxu0 %v185
      %495 = vmatprep.subr.mxu0 0.0
      %496 = vmatpush1.msra.mxu0 %v178
      %497 = vmatprep.subr.mxu0 0.0
      %498 = vmatpush2.msra.mxu0 0.0
      %499 = vmatprep.subr.mxu0 0.0
      %500 = vmatpush2.msra.mxu0 0.0
      %501 = vmatprep.subr.mxu0 0.0
      %502 = vmatpush2.msra.mxu0 0.0
      %503 = vmatprep.subr.mxu0 0.0
      %504 = vmatpush2.msra.mxu0 0.0
      %505 = vmatprep.subr.mxu0 0.0
      %506 = vmatpush2.msra.mxu0 0.0
      %507 = vmatprep.subr.mxu0 0.0
      %508 = vmatpush2.msra.mxu0 0.0
      %509 = vmatprep.subr.mxu0 0.0
      %510 = vmatpush2.msra.mxu0 0.0
      %511 = vmatprep.subr.mxu0 0.0
      %512 = vmatpush2.msra.mxu0 0.0
      %513 = vmatprep.subr.mxu0 0.0
      %514 = vmatpush2.msra.mxu0 0.0
      %515 = vmatprep.subr.mxu0 0.0
      %516 = vmatpush2.msra.mxu0 0.0
      %517 = vmatprep.subr.mxu0 0.0
      %518 = vmatpush2.msra.mxu0 0.0
      %519 = vmatprep.subr.mxu0 0.0
      %520 = vmatpush2.msra.mxu0 0.0
      %521 = vmatprep.subr.mxu0 0.0
      %522 = vmatpush2.msra.mxu0 0.0
      %523 = vmatprep.subr.mxu0 0.0
      %524 = vmatpush2.msra.mxu0 0.0
      %525 = vmatprep.subr.mxu0 0.0
      %526 = vmatpush2.msra.mxu0 0.0
      %527 = vmatprep.subr.mxu0 0.0
      %528 = vmatpush2.msra.mxu0 0.0
      %529 = vmatprep.mubr.f32.mxu0 0.0
      %530 = vmatmul.mubr.f32.gmra.mxu0 %v250
      %v531 = vpop.f32.mrf.mxu0
      %v532 = vadd.f32 %v246, %v531
      %v533 = vpop.f32.mrf.mxu0
      %534 = vdwg.mxu0
      %v535 = vmax.f32 %v319, 0.0
      %v536 = vmax.f32 %v321, 0.0
      %v537 = vmax.f32 %v390, 0.0
      %v538 = vmax.f32 %v392, 0.0
      %v539 = vmax.f32 %v461, 0.0
      %v540 = vmax.f32 %v463, 0.0
      %v541 = vmax.f32 %v532, 0.0
      %542 = vst [vmem:[%s170] sm:$0xff] %v535
      %543 = vst [vmem:[%s170 + $0x8] sm:$0xff] %v536
      %544 = vst [vmem:[%s170 + $0x10] sm:$0xff] %v537
      %545 = vst [vmem:[%s170 + $0x18] sm:$0xff] %v538
      %546 = vst [vmem:[%s170 + $0x20] sm:$0xff] %v539
      %547 = vst [vmem:[%s170 + $0x28] sm:$0xff] %v540
      %vm548 = vcmask 130048
      %549 = vst.msk [vmem:[%s170 + $0x30] sm:$0xff] %vm548, %v541
      %p550 = scmp.lt.s32.totalorder %s14, 1
      %s551 = scalar_select %p550, %s14, 1
      %s552 = smul.addr %s551, 7
      %s553 = smul.addr %s552, 8
      %s554 = scalar_lea.vmem %s3, %s553
      // Predicated region
      $region33: #{_lambda_.4} parent=31 // pred_check
        %p555 = pneg %p100
      $region34: #{_lambda_.4} parent=31 // pred_check_branch
        %557 = sbr.rel (%p555) target = $region36
      $region35: #{_lambda_.4} parent=31 // pred_region
        _
      $region36: #{_lambda_.4} parent=31 // pred_fallthru
        _
    $region32: #{_lambda_.4} parent=5 // pred_fallthru
      _
    %p558 = scmp.le.s32.totalorder 2, %s9
    // Predicated region
    $region37: #{_lambda_.4} parent=5 // pred_check
      %p559 = pneg %p558
    $region38: #{_lambda_.4} parent=5 // pred_check_branch
      %561 = sbr.rel (%p559) target = $region40
    $region39: #{_lambda_.4} parent=5 // pred_region
      %s562 = ssub.s32 %s9, 2
      // Predicated region
      $region41: #{_lambda_.4} parent=39 // pred_check
        %p563 = pneg %p106
      $region42: #{_lambda_.4} parent=39 // pred_check_branch
        %565 = sbr.rel (%p563) target = $region44
      $region43: #{_lambda_.4} parent=39 // pred_region
        %p566 = scmp.lt.s32.totalorder %s15, 1
        %s567 = scalar_select %p566, %s15, 1
        %s568 = smul.addr %s567, 7
        %s569 = smul.addr %s568, 8
        %s570 = scalar_lea.vmem %s3, %s569
      $region44: #{_lambda_.4} parent=39 // pred_fallthru
        _
    $region40: #{_lambda_.4} parent=5 // pred_fallthru
      _
  $region6: #{_lambda_.4} parent=0 // loop_footer
    %s13 = sadd.s32 1, %s9
  $region7: #{_lambda_.4} parent=0 // loop_footer_branch
    %8 = sbr.rel target = $region3
  $region8: #{_lambda_.4} parent=0 // loop_exit
    _

// kernel: _lambda_.5
$region0: #{_lambda_.5}
  #allocation0 [shape = 'u32[]', space=smem, size = 0x4, offset = 0x4, fixed_abs, tag = 'smem constant byte address 0x4 - core index']
  #allocation1 [shape = 'u32[144,128]{1,0:T(1,128)}', space=vmem, size = 0x12000, scoped, tag = 'internal scratch']
  %s0 = inlined_call_operand.vmem [shape: f32[2,200,576], index: 0, kind: input, shape index: {}]
  %s1 = inlined_call_operand.vmem [shape: f32[8,200], index: 1, kind: input, shape index: {}]
  %s2 = inlined_call_operand.vmem [shape: f32[8,1], index: 2, kind: input, shape index: {}]
  %s3 = inlined_call_operand.vmem [shape: f32[2,8,576], index: 3, kind: output, shape index: {}]
  %s4 = sld [smem:[#allocation0]]
  $region45: #{_lambda_.5} parent=0
    _
  %s6 = ssub.s32 1, %s4
  %s7 = scalar_select 0, %s6, %s4
  loop: start=0, step=1, limit=4
  $region2: #{_lambda_.5} parent=0 // loop_pre_header
    _
  $region3: #{_lambda_.5} parent=0 // loop_header
    %s9 = sphi 0, %s13
    %p10 = scmp.ge.s32.totalorder %s9, 4
    %s19 = sphi 0, %s21
    %s22 = sphi 0, %s19
    %s23 = sphi 0, %s22
    %s39 = sphi 0, %s23
    %s43 = sphi 0, %s43
    %s45 = sphi 0, %s43
    %s46 = sphi 0, %s45
    %s60 = sphi 0, %s46
    %s64 = sphi 0, %s64
    %s66 = sphi 0, %s64
    %s67 = sphi 0, %s66
    %s81 = sphi 0, %s67
    %s87 = sphi 0, %s89
    %s90 = sphi 0, %s87
    %s91 = sphi 0, %s90
    %s107 = sphi 0, %s91
  $region4: #{_lambda_.5} parent=0 // loop_header_branch
    %12 = sbr.rel (%p10) target = $region8
  $region5: #{_lambda_.5} parent=0 // loop_body
    %s14 = ssub.s32 %s9, 1
    %s15 = ssub.s32 %s9, 2
    %s16 = sadd.s32 %s9, 1
    %s17 = ssub.s32 %s9, %s16
    %p18 = scmp.eq.s32.totalorder %s17, 0
    %s20 = sadd.s32 %s19, 1
    %s21 = scalar_select %p18, %s19, %s20
    %p24 = pneg %p18
    %p25 = scmp.eq.s32.totalorder %s9, 1
    %p26 = por %p24, %p25
    %p27 = scmp.ne.s32.totalorder %s19, %s22
    %p28 = scmp.eq.s32.totalorder %s9, 0
    %p29 = por %p27, %p28
    %p30 = scmp.ne.s32.totalorder %s19, %s22
    %p31 = scmp.eq.s32.totalorder %s14, 1
    %p32 = por %p30, %p31
    %p33 = scmp.ne.s32.totalorder %s22, %s23
    %p34 = scmp.eq.s32.totalorder %s14, 0
    %p35 = por %p33, %p34
    %p36 = scmp.ne.s32.totalorder %s22, %s23
    %p37 = scmp.eq.s32.totalorder %s15, 1
    %p38 = por %p36, %p37
    %p40 = scmp.ne.s32.totalorder %s23, %s39
    %p41 = scmp.eq.s32.totalorder %s15, 0
    %p42 = por %p40, %p41
    %s44 = sadd.s32 %s43, 1
    %p47 = scmp.eq.s32.totalorder %s9, 1
    %p48 = scmp.ne.s32.totalorder %s43, %s45
    %p49 = scmp.eq.s32.totalorder %s9, 0
    %p50 = por %p48, %p49
    %p51 = scmp.ne.s32.totalorder %s43, %s45
    %p52 = scmp.eq.s32.totalorder %s14, 1
    %p53 = por %p51, %p52
    %p54 = scmp.ne.s32.totalorder %s45, %s46
    %p55 = scmp.eq.s32.totalorder %s14, 0
    %p56 = por %p54, %p55
    %p57 = scmp.ne.s32.totalorder %s45, %s46
    %p58 = scmp.eq.s32.totalorder %s15, 1
    %p59 = por %p57, %p58
    %p61 = scmp.ne.s32.totalorder %s46, %s60
    %p62 = scmp.eq.s32.totalorder %s15, 0
    %p63 = por %p61, %p62
    %s65 = sadd.s32 %s64, 1
    %p68 = scmp.eq.s32.totalorder %s9, 1
    %p69 = scmp.ne.s32.totalorder %s64, %s66
    %p70 = scmp.eq.s32.totalorder %s9, 0
    %p71 = por %p69, %p70
    %p72 = scmp.ne.s32.totalorder %s64, %s66
    %p73 = scmp.eq.s32.totalorder %s14, 1
    %p74 = por %p72, %p73
    %p75 = scmp.ne.s32.totalorder %s66, %s67
    %p76 = scmp.eq.s32.totalorder %s14, 0
    %p77 = por %p75, %p76
    %p78 = scmp.ne.s32.totalorder %s66, %s67
    %p79 = scmp.eq.s32.totalorder %s15, 1
    %p80 = por %p78, %p79
    %p82 = scmp.ne.s32.totalorder %s67, %s81
    %p83 = scmp.eq.s32.totalorder %s15, 0
    %p84 = por %p82, %p83
    %s85 = ssub.s32 %s9, %s16
    %p86 = scmp.eq.s32.totalorder %s85, 0
    %s88 = sadd.s32 %s87, 1
    %s89 = scalar_select %p86, %s87, %s88
    %p92 = pneg %p86
    %p93 = scmp.eq.s32.totalorder %s9, 1
    %p94 = por %p92, %p93
    %p95 = scmp.ne.s32.totalorder %s87, %s90
    %p96 = scmp.eq.s32.totalorder %s9, 0
    %p97 = por %p95, %p96
    %p98 = scmp.ne.s32.totalorder %s87, %s90
    %p99 = scmp.eq.s32.totalorder %s14, 1
    %p100 = por %p98, %p99
    %p101 = scmp.ne.s32.totalorder %s90, %s91
    %p102 = scmp.eq.s32.totalorder %s14, 0
    %p103 = por %p101, %p102
    %p104 = scmp.ne.s32.totalorder %s90, %s91
    %p105 = scmp.eq.s32.totalorder %s15, 1
    %p106 = por %p104, %p105
    %p108 = scmp.ne.s32.totalorder %s91, %s107
    %p109 = scmp.eq.s32.totalorder %s15, 0
    %p110 = por %p108, %p109
    %p111 = scmp.le.s32.totalorder 1, %s9
    %p112 = scmp.lt.s32.totalorder %s9, 3
    %p113 = pnand %p111, %p112
    %p114 = pneg %p113
    // Predicated region
    $region9: #{_lambda_.5} parent=5 // pred_check
      _
    $region10: #{_lambda_.5} parent=5 // pred_check_branch
      %116 = sbr.rel (%p113) target = $region12
    $region11: #{_lambda_.5} parent=5 // pred_region
      %s117 = ssub.s32 %s9, 1
      // Predicated region
      $region13: #{_lambda_.5} parent=11 // pred_check
        %p118 = pneg %p56
      $region14: #{_lambda_.5} parent=11 // pred_check_branch
        %120 = sbr.rel (%p118) target = $region16
      $region15: #{_lambda_.5} parent=11 // pred_region
        _
      $region16: #{_lambda_.5} parent=11 // pred_fallthru
        _
      // Predicated region
      $region17: #{_lambda_.5} parent=11 // pred_check
        %p121 = pneg %p77
      $region18: #{_lambda_.5} parent=11 // pred_check_branch
        %123 = sbr.rel (%p121) target = $region20
      $region19: #{_lambda_.5} parent=11 // pred_region
        _
      $region20: #{_lambda_.5} parent=11 // pred_fallthru
        _
    $region12: #{_lambda_.5} parent=5 // pred_fallthru
      _
    %p124 = scmp.lt.s32.totalorder %s9, 2
    // Predicated region
    $region21: #{_lambda_.5} parent=5 // pred_check
      %p125 = pneg %p124
    $region22: #{_lambda_.5} parent=5 // pred_check_branch
      %127 = sbr.rel (%p125) target = $region24
    $region23: #{_lambda_.5} parent=5 // pred_region
      // Predicated region
      $region25: #{_lambda_.5} parent=23 // pred_check
        %p128 = pneg %p29
      $region26: #{_lambda_.5} parent=23 // pred_check_branch
        %130 = sbr.rel (%p128) target = $region28
      $region27: #{_lambda_.5} parent=23 // pred_region
        %p131 = scmp.lt.s32.totalorder %s9, 1
        %s132 = scalar_select %p131, %s9, 1
        %s133 = smul.addr %s132, 125
        %s134 = smul.addr %s133, 8
        %s135 = scalar_lea.vmem %s0, %s134
      $region28: #{_lambda_.5} parent=23 // pred_fallthru
        _
    $region24: #{_lambda_.5} parent=5 // pred_fallthru
      _
    %p136 = scmp.le.s32.totalorder 1, %s9
    %p137 = scmp.lt.s32.totalorder %s9, 3
    %p138 = pnand %p136, %p137
    %p139 = pneg %p138
    // Predicated region
    $region29: #{_lambda_.5} parent=5 // pred_check
      _
    $region30: #{_lambda_.5} parent=5 // pred_check_branch
      %141 = sbr.rel (%p138) target = $region32
    $region31: #{_lambda_.5} parent=5 // pred_region
      %s142 = ssub.s32 %s9, 1
      %p143 = scmp.lt.s32.totalorder %s14, 1
      %s144 = scalar_select %p143, %s14, 1
      %s145 = smul.addr %s144, 125
      %s146 = smul.addr %s145, 8
      %s147 = scalar_lea.vmem %s0, %s146
      %p148 = pneg %p35
      %p149 = pneg %p32
      %p150 = pneg %p56
      %p151 = pneg %p53
      %p152 = pneg %p77
      %p153 = pneg %p74
      %p154 = pneg %p103
      %p155 = pneg %p100
      %p156 = scmp.lt.s32.totalorder %s14, 1
      %s157 = scalar_select %p156, %s14, 1
      %s158 = smul.addr %s157, 5
      %s159 = smul.addr %s158, 8
      %s160 = scalar_lea.vmem %s3, %s159
      %p161 = scmp.lt.s32.totalorder %s14, 1
      %s162 = scalar_select %p161, %s14, 1
      %s163 = smul.addr %s162, 125
      %s164 = smul.addr %s163, 8
      %s165 = scalar_lea.vmem %s0, %s164
      %p166 = scmp.lt.s32.totalorder %s14, 1
      %s167 = scalar_select %p166, %s14, 1
      %s168 = smul.addr %s167, 5
      %s169 = smul.addr %s168, 8
      %s170 = scalar_lea.vmem %s3, %s169
      %v171 = vld [vmem:[%s1] sm:$0xff]
      %v172 = vld [vmem:[%s1 + $0x8] sm:$0xff]
      %v173 = vld [vmem:[%s165] sm:$0xff]
      %v174 = vld [vmem:[%s165 + $0x8] sm:$0xff]
      %v175 = vld [vmem:[%s165 + $0x10] sm:$0xff]
      %v176 = vld [vmem:[%s165 + $0x18] sm:$0xff]
      %v177 = vld [vmem:[%s165 + $0x20] sm:$0xff]
      %v178 = vld [vmem:[%s165 + $0x28] sm:$0xff]
      %v179 = vld [vmem:[%s165 + $0x30] sm:$0xff]
      %v180 = vld [vmem:[%s165 + $0x38] sm:$0xff]
      %v181 = vld [vmem:[%s165 + $0x40] sm:$0xff]
      %v182 = vld [vmem:[%s165 + $0x48] sm:$0xff]
      %v183 = vld [vmem:[%s165 + $0x50] sm:$0xff]
      %v184 = vld [vmem:[%s165 + $0x58] sm:$0xff]
      %v185 = vld [vmem:[%s165 + $0x60] sm:$0xff]
      %v186 = vld [vmem:[%s165 + $0x68] sm:$0xff]
      %v187 = vld [vmem:[%s165 + $0x70] sm:$0xff]
      %v188 = vld [vmem:[%s165 + $0x78] sm:$0xff]
      %v189 = vld [vmem:[%s165 + $0x80] sm:$0xff]
      %v190 = vld [vmem:[%s165 + $0x88] sm:$0xff]
      %v191 = vld [vmem:[%s165 + $0x90] sm:$0xff]
      %v192 = vld [vmem:[%s165 + $0x98] sm:$0xff]
      %v193 = vld [vmem:[%s165 + $0xa0] sm:$0xff]
      %v194 = vld [vmem:[%s165 + $0xa8] sm:$0xff]
      %v195 = vld [vmem:[%s165 + $0xb0] sm:$0xff]
      %v196 = vld [vmem:[%s165 + $0xb8] sm:$0xff]
      %v197 = vld [vmem:[%s165 + $0xc0] sm:$0xff]
      %v198 = vld [vmem:[%s165 + $0xc8] sm:$0xff]
      %v199 = vld [vmem:[%s165 + $0xd0] sm:$0xff]
      %v200 = vld [vmem:[%s165 + $0xd8] sm:$0xff]
      %v201 = vld [vmem:[%s165 + $0xe0] sm:$0xff]
      %v202 = vld [vmem:[%s165 + $0xe8] sm:$0xff]
      %v203 = vld [vmem:[%s165 + $0xf0] sm:$0xff]
      %v204 = vld [vmem:[%s165 + $0xf8] sm:$0xff]
      %v205 = vld [vmem:[%s165 + $0x100] sm:$0xff]
      %v206 = vld [vmem:[%s165 + $0x108] sm:$0xff]
      %v207 = vld [vmem:[%s165 + $0x110] sm:$0xff]
      %v208 = vld [vmem:[%s165 + $0x118] sm:$0xff]
      %v209 = vld [vmem:[%s165 + $0x120] sm:$0xff]
      %v210 = vld [vmem:[%s165 + $0x128] sm:$0xff]
      %v211 = vld [vmem:[%s165 + $0x130] sm:$0xff]
      %v212 = vld [vmem:[%s165 + $0x138] sm:$0xff]
      %v213 = vld [vmem:[%s165 + $0x140] sm:$0xff]
      %v214 = vld [vmem:[%s165 + $0x148] sm:$0xff]
      %v215 = vld [vmem:[%s165 + $0x150] sm:$0xff]
      %v216 = vld [vmem:[%s165 + $0x158] sm:$0xff]
      %v217 = vld [vmem:[%s165 + $0x160] sm:$0xff]
      %v218 = vld [vmem:[%s165 + $0x168] sm:$0xff]
      %v219 = vld [vmem:[%s165 + $0x170] sm:$0xff]
      %v220 = vld [vmem:[%s165 + $0x178] sm:$0xff]
      %v221 = vld [vmem:[%s165 + $0x180] sm:$0xff]
      %v222 = vld [vmem:[%s165 + $0x188] sm:$0xff]
      %v223 = vld [vmem:[%s165 + $0x190] sm:$0xff]
      %v224 = vld [vmem:[%s165 + $0x198] sm:$0xff]
      %v225 = vld [vmem:[%s165 + $0x1a0] sm:$0xff]
      %v226 = vld [vmem:[%s165 + $0x1a8] sm:$0xff]
      %v227 = vld [vmem:[%s165 + $0x1b0] sm:$0xff]
      %v228 = vld [vmem:[%s165 + $0x1b8] sm:$0xff]
      %v229 = vld [vmem:[%s165 + $0x1c0] sm:$0xff]
      %v230 = vld [vmem:[%s165 + $0x1c8] sm:$0xff]
      %v231 = vld [vmem:[%s165 + $0x1d0] sm:$0xff]
      %v232 = vld [vmem:[%s165 + $0x1d8] sm:$0xff]
      %v233 = vld [vmem:[%s165 + $0x1e0] sm:$0xff]
      %v234 = vld [vmem:[%s165 + $0x1e8] sm:$0xff]
      %v235 = vld [vmem:[%s165 + $0x1f0] sm:$0xff]
      %v236 = vld [vmem:[%s165 + $0x1f8] sm:$0xff]
      %v237 = vld [vmem:[%s165 + $0x200] sm:$0xff]
      %v238 = vld [vmem:[%s165 + $0x208] sm:$0xff]
      %v239 = vld [vmem:[%s165 + $0x210] sm:$0xff]
      %v240 = vld [vmem:[%s165 + $0x218] sm:$0xff]
      %v241 = vld [vmem:[%s165 + $0x220] sm:$0xff]
      %v242 = vld [vmem:[%s165 + $0x228] sm:$0xff]
      %v243 = vld [vmem:[%s165 + $0x230] sm:$0xff]
      %v244 = vld [vmem:[%s165 + $0x238] sm:$0xff]
      %v245 = vld [vmem:[%s165 + $0x240] sm:$0xff]
      %v246 = vld [vmem:[%s165 + $0x248] sm:$0xff]
      %v247 = vld [vmem:[%s165 + $0x250] sm:$0xff]
      %v248 = vld [vmem:[%s165 + $0x258] sm:$0xff]
      %v249 = vld [vmem:[%s165 + $0x260] sm:$0xff]
      %v250 = vld [vmem:[%s165 + $0x268] sm:$0xff]
      %v251 = vld [vmem:[%s165 + $0x270] sm:$0xff]
      %v252 = vld [vmem:[%s165 + $0x278] sm:$0xff]
      %v253 = vld [vmem:[%s165 + $0x280] sm:$0xff]
      %v254 = vld [vmem:[%s165 + $0x288] sm:$0xff]
      %v255 = vld [vmem:[%s165 + $0x290] sm:$0xff]
      %v256 = vld [vmem:[%s165 + $0x298] sm:$0xff]
      %v257 = vld [vmem:[%s165 + $0x2a0] sm:$0xff]
      %v258 = vld [vmem:[%s165 + $0x2a8] sm:$0xff]
      %v259 = vld [vmem:[%s165 + $0x2b0] sm:$0xff]
      %v260 = vld [vmem:[%s165 + $0x2b8] sm:$0xff]
      %v261 = vld [vmem:[%s165 + $0x2c0] sm:$0xff]
      %v262 = vld [vmem:[%s165 + $0x2c8] sm:$0xff]
      %v263 = vld [vmem:[%s165 + $0x2d0] sm:$0xff]
      %v264 = vld [vmem:[%s165 + $0x2d8] sm:$0xff]
      %v265 = vld [vmem:[%s165 + $0x2e0] sm:$0xff]
      %v266 = vld [vmem:[%s165 + $0x2e8] sm:$0xff]
      %v267 = vld [vmem:[%s165 + $0x2f0] sm:$0xff]
      %v268 = vld [vmem:[%s165 + $0x2f8] sm:$0xff]
      %v269 = vld [vmem:[%s165 + $0x300] sm:$0xff]
      %v270 = vld [vmem:[%s165 + $0x308] sm:$0xff]
      %v271 = vld [vmem:[%s165 + $0x310] sm:$0xff]
      %v272 = vld [vmem:[%s165 + $0x318] sm:$0xff]
      %v273 = vld [vmem:[%s165 + $0x320] sm:$0xff]
      %v274 = vld [vmem:[%s165 + $0x328] sm:$0xff]
      %v275 = vld [vmem:[%s165 + $0x330] sm:$0xff]
      %v276 = vld [vmem:[%s165 + $0x338] sm:$0xff]
      %v277 = vld [vmem:[%s165 + $0x340] sm:$0xff]
      %v278 = vld [vmem:[%s165 + $0x348] sm:$0xff]
      %v279 = vld [vmem:[%s165 + $0x350] sm:$0xff]
      %v280 = vld [vmem:[%s165 + $0x358] sm:$0xff]
      %v281 = vld [vmem:[%s165 + $0x360] sm:$0xff]
      %v282 = vld [vmem:[%s165 + $0x368] sm:$0xff]
      %v283 = vld [vmem:[%s165 + $0x370] sm:$0xff]
      %v284 = vld [vmem:[%s165 + $0x378] sm:$0xff]
      %v285 = vld [vmem:[%s165 + $0x380] sm:$0xff]
      %v286 = vld [vmem:[%s165 + $0x388] sm:$0xff]
      %v287 = vld [vmem:[%s165 + $0x390] sm:$0xff]
      %v288 = vld [vmem:[%s165 + $0x398] sm:$0xff]
      %v289 = vld [vmem:[%s165 + $0x3a0] sm:$0xff]
      %v290 = vld [vmem:[%s165 + $0x3a8] sm:$0xff]
      %v291 = vld [vmem:[%s165 + $0x3b0] sm:$0xff]
      %v292 = vld [vmem:[%s165 + $0x3b8] sm:$0xff]
      %v293 = vld [vmem:[%s165 + $0x3c0] sm:$0xff]
      %v294 = vld [vmem:[%s165 + $0x3c8] sm:$0xff]
      %v295 = vld [vmem:[%s165 + $0x3d0] sm:$0xff]
      %v296 = vld [vmem:[%s165 + $0x3d8] sm:$0xff]
      %v297 = vld [vmem:[%s165 + $0x3e0] sm:$0xff]
      %v298 = vld [vmem:[%s2] sm:$0xff]
      %300 = vset.pattern.permute.xlu0 0
      %301 = vperm.xlu0 %300, %v298
      %v302 = vpop.permute.xlu0 %301
      %vm304 = vcmask 588800
      %v306 = vsel %vm304, %v172, 0
      %308 = vmatprep.subr.mxu0 %v249
      %309 = vmatpush1.msra.mxu0 %v248
      %310 = vmatprep.subr.mxu0 %v244
      %311 = vmatpush1.msra.mxu0 %v243
      %312 = vmatprep.subr.mxu0 %v239
      %313 = vmatpush1.msra.mxu0 %v238
      %314 = vmatprep.subr.mxu0 %v234
      %315 = vmatpush1.msra.mxu0 %v233
      %316 = vmatprep.subr.mxu0 %v229
      %317 = vmatpush1.msra.mxu0 %v228
      %318 = vmatprep.subr.mxu0 %v224
      %319 = vmatpush1.msra.mxu0 %v223
      %320 = vmatprep.subr.mxu0 %v219
      %321 = vmatpush1.msra.mxu0 %v218
      %322 = vmatprep.subr.mxu0 %v214
      %323 = vmatpush1.msra.mxu0 %v213
      %324 = vmatprep.subr.mxu0 %v209
      %325 = vmatpush1.msra.mxu0 %v208
      %326 = vmatprep.subr.mxu0 %v204
      %327 = vmatpush1.msra.mxu0 %v203
      %328 = vmatprep.subr.mxu0 %v199
      %329 = vmatpush1.msra.mxu0 %v198
      %330 = vmatprep.subr.mxu0 %v194
      %331 = vmatpush1.msra.mxu0 %v193
      %332 = vmatprep.subr.mxu0 %v189
      %333 = vmatpush1.msra.mxu0 %v188
      %334 = vmatprep.subr.mxu0 %v184
      %335 = vmatpush1.msra.mxu0 %v183
      %336 = vmatprep.subr.mxu0 %v179
      %337 = vmatpush1.msra.mxu0 %v178
      %338 = vmatprep.subr.mxu0 %v174
      %339 = vmatpush1.msra.mxu0 %v173
      %340 = vmatprep.subr.mxu0 0.0
      %341 = vmatpush2.msra.mxu0 0.0
      %342 = vmatprep.subr.mxu0 0.0
      %343 = vmatpush2.msra.mxu0 0.0
      %344 = vmatprep.subr.mxu0 0.0
      %345 = vmatpush2.msra.mxu0 0.0
      %346 = vmatprep.subr.mxu0 0.0
      %347 = vmatpush2.msra.mxu0 0.0
      %348 = vmatprep.subr.mxu0 0.0
      %349 = vmatpush2.msra.mxu0 0.0
      %350 = vmatprep.subr.mxu0 0.0
      %351 = vmatpush2.msra.mxu0 0.0
      %352 = vmatprep.subr.mxu0 0.0
      %353 = vmatpush2.msra.mxu0 0.0
      %354 = vmatprep.subr.mxu0 %v294
      %355 = vmatpush2.msra.mxu0 %v293
      %356 = vmatprep.subr.mxu0 %v289
      %357 = vmatpush2.msra.mxu0 %v288
      %358 = vmatprep.subr.mxu0 %v284
      %359 = vmatpush2.msra.mxu0 %v283
      %360 = vmatprep.subr.mxu0 %v279
      %361 = vmatpush2.msra.mxu0 %v278
      %362 = vmatprep.subr.mxu0 %v274
      %363 = vmatpush2.msra.mxu0 %v273
      %364 = vmatprep.subr.mxu0 %v269
      %365 = vmatpush2.msra.mxu0 %v268
      %366 = vmatprep.subr.mxu0 %v264
      %367 = vmatpush2.msra.mxu0 %v263
      %368 = vmatprep.subr.mxu0 %v259
      %369 = vmatpush2.msra.mxu0 %v258
      %370 = vmatprep.subr.mxu0 %v254
      %371 = vmatpush2.msra.mxu0 %v253
      %372 = vmatprep.mubr.f32.mxu0 %v306
      %373 = vmatmul.mubr.f32.gmra.mxu0 %v171
      %v374 = vpop.f32.mrf.mxu0
      %v375 = vadd.f32 %v302, %v374
      %v376 = vpop.f32.mrf.mxu0
      %v377 = vadd.f32 %v302, %v376
      %378 = vdwg.mxu0
      %379 = vmatprep.subr.mxu0 %v251
      %380 = vmatpush1.msra.mxu0 %v250
      %381 = vmatprep.subr.mxu0 %v246
      %382 = vmatpush1.msra.mxu0 %v245
      %383 = vmatprep.subr.mxu0 %v241
      %384 = vmatpush1.msra.mxu0 %v240
      %385 = vmatprep.subr.mxu0 %v236
      %386 = vmatpush1.msra.mxu0 %v235
      %387 = vmatprep.subr.mxu0 %v231
      %388 = vmatpush1.msra.mxu0 %v230
      %389 = vmatprep.subr.mxu0 %v226
      %390 = vmatpush1.msra.mxu0 %v225
      %391 = vmatprep.subr.mxu0 %v221
      %392 = vmatpush1.msra.mxu0 %v220
      %393 = vmatprep.subr.mxu0 %v216
      %394 = vmatpush1.msra.mxu0 %v215
      %395 = vmatprep.subr.mxu0 %v211
      %396 = vmatpush1.msra.mxu0 %v210
      %397 = vmatprep.subr.mxu0 %v206
      %398 = vmatpush1.msra.mxu0 %v205
      %399 = vmatprep.subr.mxu0 %v201
      %400 = vmatpush1.msra.mxu0 %v200
      %401 = vmatprep.subr.mxu0 %v196
      %402 = vmatpush1.msra.mxu0 %v195
      %403 = vmatprep.subr.mxu0 %v191
      %404 = vmatpush1.msra.mxu0 %v190
      %405 = vmatprep.subr.mxu0 %v186
      %406 = vmatpush1.msra.mxu0 %v185
      %407 = vmatprep.subr.mxu0 %v181
      %408 = vmatpush1.msra.mxu0 %v180
      %409 = vmatprep.subr.mxu0 %v176
      %410 = vmatpush1.msra.mxu0 %v175
      %411 = vmatprep.subr.mxu0 0.0
      %412 = vmatpush2.msra.mxu0 0.0
      %413 = vmatprep.subr.mxu0 0.0
      %414 = vmatpush2.msra.mxu0 0.0
      %415 = vmatprep.subr.mxu0 0.0
      %416 = vmatpush2.msra.mxu0 0.0
      %417 = vmatprep.subr.mxu0 0.0
      %418 = vmatpush2.msra.mxu0 0.0
      %419 = vmatprep.subr.mxu0 0.0
      %420 = vmatpush2.msra.mxu0 0.0
      %421 = vmatprep.subr.mxu0 0.0
      %422 = vmatpush2.msra.mxu0 0.0
      %423 = vmatprep.subr.mxu0 0.0
      %424 = vmatpush2.msra.mxu0 0.0
      %425 = vmatprep.subr.mxu0 %v296
      %426 = vmatpush2.msra.mxu0 %v295
      %427 = vmatprep.subr.mxu0 %v291
      %428 = vmatpush2.msra.mxu0 %v290
      %429 = vmatprep.subr.mxu0 %v286
      %430 = vmatpush2.msra.mxu0 %v285
      %431 = vmatprep.subr.mxu0 %v281
      %432 = vmatpush2.msra.mxu0 %v280
      %433 = vmatprep.subr.mxu0 %v276
      %434 = vmatpush2.msra.mxu0 %v275
      %435 = vmatprep.subr.mxu0 %v271
      %436 = vmatpush2.msra.mxu0 %v270
      %437 = vmatprep.subr.mxu0 %v266
      %438 = vmatpush2.msra.mxu0 %v265
      %439 = vmatprep.subr.mxu0 %v261
      %440 = vmatpush2.msra.mxu0 %v260
      %441 = vmatprep.subr.mxu0 %v256
      %442 = vmatpush2.msra.mxu0 %v255
      %443 = vmatprep.mubr.f32.mxu0 %v306
      %444 = vmatmul.mubr.f32.gmra.mxu0 %v171
      %v445 = vpop.f32.mrf.mxu0
      %v446 = vadd.f32 %v302, %v445
      %v447 = vpop.f32.mrf.mxu0
      %v448 = vadd.f32 %v302, %v447
      %449 = vdwg.mxu0
      %450 = vmatprep.subr.mxu0 0.0
      %451 = vmatpush1.msra.mxu0 %v252
      %452 = vmatprep.subr.mxu0 0.0
      %453 = vmatpush1.msra.mxu0 %v247
      %454 = vmatprep.subr.mxu0 0.0
      %455 = vmatpush1.msra.mxu0 %v242
      %456 = vmatprep.subr.mxu0 0.0
      %457 = vmatpush1.msra.mxu0 %v237
      %458 = vmatprep.subr.mxu0 0.0
      %459 = vmatpush1.msra.mxu0 %v232
      %460 = vmatprep.subr.mxu0 0.0
      %461 = vmatpush1.msra.mxu0 %v227
      %462 = vmatprep.subr.mxu0 0.0
      %463 = vmatpush1.msra.mxu0 %v222
      %464 = vmatprep.subr.mxu0 0.0
      %465 = vmatpush1.msra.mxu0 %v217
      %466 = vmatprep.subr.mxu0 0.0
      %467 = vmatpush1.msra.mxu0 %v212
      %468 = vmatprep.subr.mxu0 0.0
      %469 = vmatpush1.msra.mxu0 %v207
      %470 = vmatprep.subr.mxu0 0.0
      %471 = vmatpush1.msra.mxu0 %v202
      %472 = vmatprep.subr.mxu0 0.0
      %473 = vmatpush1.msra.mxu0 %v197
      %474 = vmatprep.subr.mxu0 0.0
      %475 = vmatpush1.msra.mxu0 %v192
      %476 = vmatprep.subr.mxu0 0.0
      %477 = vmatpush1.msra.mxu0 %v187
      %478 = vmatprep.subr.mxu0 0.0
      %479 = vmatpush1.msra.mxu0 %v182
      %480 = vmatprep.subr.mxu0 0.0
      %481 = vmatpush1.msra.mxu0 %v177
      %482 = vmatprep.subr.mxu0 0.0
      %483 = vmatpush2.msra.mxu0 0.0
      %484 = vmatprep.subr.mxu0 0.0
      %485 = vmatpush2.msra.mxu0 0.0
      %486 = vmatprep.subr.mxu0 0.0
      %487 = vmatpush2.msra.mxu0 0.0
      %488 = vmatprep.subr.mxu0 0.0
      %489 = vmatpush2.msra.mxu0 0.0
      %490 = vmatprep.subr.mxu0 0.0
      %491 = vmatpush2.msra.mxu0 0.0
      %492 = vmatprep.subr.mxu0 0.0
      %493 = vmatpush2.msra.mxu0 0.0
      %494 = vmatprep.subr.mxu0 0.0
      %495 = vmatpush2.msra.mxu0 0.0
      %496 = vmatprep.subr.mxu0 0.0
      %497 = vmatpush2.msra.mxu0 %v297
      %498 = vmatprep.subr.mxu0 0.0
      %499 = vmatpush2.msra.mxu0 %v292
      %500 = vmatprep.subr.mxu0 0.0
      %501 = vmatpush2.msra.mxu0 %v287
      %502 = vmatprep.subr.mxu0 0.0
      %503 = vmatpush2.msra.mxu0 %v282
      %504 = vmatprep.subr.mxu0 0.0
      %505 = vmatpush2.msra.mxu0 %v277
      %506 = vmatprep.subr.mxu0 0.0
      %507 = vmatpush2.msra.mxu0 %v272
      %508 = vmatprep.subr.mxu0 0.0
      %509 = vmatpush2.msra.mxu0 %v267
      %510 = vmatprep.subr.mxu0 0.0
      %511 = vmatpush2.msra.mxu0 %v262
      %512 = vmatprep.subr.mxu0 0.0
      %513 = vmatpush2.msra.mxu0 %v257
      %514 = vmatprep.mubr.f32.mxu0 %v306
      %515 = vmatmul.mubr.f32.gmra.mxu0 %v171
      %v516 = vpop.f32.mrf.mxu0
      %v517 = vadd.f32 %v302, %v516
      %v518 = vpop.f32.mrf.mxu0
      %519 = vdwg.mxu0
      %v520 = vmax.f32 %v375, 0.0
      %v521 = vmax.f32 %v377, 0.0
      %v522 = vmax.f32 %v446, 0.0
      %v523 = vmax.f32 %v448, 0.0
      %v524 = vmax.f32 %v517, 0.0
      %525 = vst [vmem:[%s170] sm:$0xff] %v520
      %526 = vst [vmem:[%s170 + $0x8] sm:$0xff] %v521
      %527 = vst [vmem:[%s170 + $0x10] sm:$0xff] %v522
      %528 = vst [vmem:[%s170 + $0x18] sm:$0xff] %v523
      %vm529 = vcmask 523264
      %530 = vst.msk [vmem:[%s170 + $0x20] sm:$0xff] %vm529, %v524
      %p531 = scmp.lt.s32.totalorder %s14, 1
      %s532 = scalar_select %p531, %s14, 1
      %s533 = smul.addr %s532, 5
      %s534 = smul.addr %s533, 8
      %s535 = scalar_lea.vmem %s3, %s534
      // Predicated region
      $region33: #{_lambda_.5} parent=31 // pred_check
        %p536 = pneg %p100
      $region34: #{_lambda_.5} parent=31 // pred_check_branch
        %538 = sbr.rel (%p536) target = $region36
      $region35: #{_lambda_.5} parent=31 // pred_region
        _
      $region36: #{_lambda_.5} parent=31 // pred_fallthru
        _
    $region32: #{_lambda_.5} parent=5 // pred_fallthru
      _
    %p539 = scmp.le.s32.totalorder 2, %s9
    // Predicated region
    $region37: #{_lambda_.5} parent=5 // pred_check
      %p540 = pneg %p539
    $region38: #{_lambda_.5} parent=5 // pred_check_branch
      %542 = sbr.rel (%p540) target = $region40
    $region39: #{_lambda_.5} parent=5 // pred_region
      %s543 = ssub.s32 %s9, 2
      // Predicated region
      $region41: #{_lambda_.5} parent=39 // pred_check
        %p544 = pneg %p106
      $region42: #{_lambda_.5} parent=39 // pred_check_branch
        %546 = sbr.rel (%p544) target = $region44
      $region43: #{_lambda_.5} parent=39 // pred_region
        %p547 = scmp.lt.s32.totalorder %s15, 1
        %s548 = scalar_select %p547, %s15, 1
        %s549 = smul.addr %s548, 5
        %s550 = smul.addr %s549, 8
        %s551 = scalar_lea.vmem %s3, %s550
      $region44: #{_lambda_.5} parent=39 // pred_fallthru
        _
    $region40: #{_lambda_.5} parent=5 // pred_fallthru
      _
  $region6: #{_lambda_.5} parent=0 // loop_footer
    %s13 = sadd.s32 1, %s9
  $region7: #{_lambda_.5} parent=0 // loop_footer_branch
    %8 = sbr.rel target = $region3
  $region8: #{_lambda_.5} parent=0 // loop_exit
    _

// kernel: _lambda_.7
$region0: #{_lambda_.7}
  #allocation0 [shape = 'u32[]', space=smem, size = 0x4, offset = 0x4, fixed_abs, tag = 'smem constant byte address 0x4 - core index']
  #allocation1 [shape = 'u32[144,128]{1,0:T(1,128)}', space=vmem, size = 0x12000, scoped, tag = 'internal scratch']
  %s0 = inlined_call_operand.vmem [shape: f32[2,512], index: 0, kind: input, shape index: {}]
  %s1 = inlined_call_operand.vmem [shape: f32[1,512], index: 1, kind: input, shape index: {}]
  %s2 = inlined_call_operand.vmem [shape: f32[1,512], index: 2, kind: input, shape index: {}]
  %s3 = inlined_call_operand.vmem [shape: f32[512,10], index: 3, kind: input, shape index: {}]
  %s4 = inlined_call_operand.vmem [shape: f32[1,10], index: 4, kind: input, shape index: {}]
  %s5 = inlined_call_operand.hbm [shape: f32[2,10], index: 5, kind: output, shape index: {}]
  %s6 = sld [smem:[#allocation0]]
  $region30: #{_lambda_.7} parent=0
    _
  %s8 = ssub.s32 1, %s6
  %s9 = scalar_select 0, %s8, %s6
  $region1: #{_lambda_.7} parent=0
    #allocation2 [shape = 'u8[1024]{0}', space=vmem, size = 0x400, scoped, tag = 'output window, operand 0, single buffered']
    #allocation3 [shape = 's32[1]{0}', space=sflag, size = 0x4, scoped, tag = 'scoped memory for _lambda_.7']
    %10 = vsyncpa [#allocation3], 0
    // Predicated region
    $region2: #{_lambda_.7} parent=1 // pred_check
      _
    $region3: #{_lambda_.7} parent=1 // pred_check_branch
      %12 = sbr.rel (0) target = $region5
    $region4: #{_lambda_.7} parent=1 // pred_region
      _
    $region5: #{_lambda_.7} parent=1 // pred_fallthru
      _
    // Predicated region
    $region6: #{_lambda_.7} parent=1 // pred_check
      _
    $region7: #{_lambda_.7} parent=1 // pred_check_branch
      %14 = sbr.rel (0) target = $region9
    $region8: #{_lambda_.7} parent=1 // pred_region
      _
    $region9: #{_lambda_.7} parent=1 // pred_fallthru
      _
    // Predicated region
    $region10: #{_lambda_.7} parent=1 // pred_check
      _
    $region11: #{_lambda_.7} parent=1 // pred_check_branch
      %16 = sbr.rel (0) target = $region13
    $region12: #{_lambda_.7} parent=1 // pred_region
      _
    $region13: #{_lambda_.7} parent=1 // pred_fallthru
      _
    // Predicated region
    $region14: #{_lambda_.7} parent=1 // pred_check
      _
    $region15: #{_lambda_.7} parent=1 // pred_check_branch
      %18 = sbr.rel (0) target = $region17
    $region16: #{_lambda_.7} parent=1 // pred_region
      _
    $region17: #{_lambda_.7} parent=1 // pred_fallthru
      _
    // Predicated region
    $region18: #{_lambda_.7} parent=1 // pred_check
      _
    $region19: #{_lambda_.7} parent=1 // pred_check_branch
      %20 = sbr.rel (0) target = $region21
    $region20: #{_lambda_.7} parent=1 // pred_region
      _
    $region21: #{_lambda_.7} parent=1 // pred_fallthru
      _
    %v21 = vld [vmem:[%s0] sm:$0xff]
    %v23 = vcombine.high %v21, %v21
    %v25 = vunpack.c.l.s4 1983009808
    %v26 = vunpack.c.0.s8 %v25
    %v27 = vlaneseq
    %v28 = vshrl.u32 %v27, 7
    %v29 = vsub.s32 %v26, %v28
    %v30 = vrot.slane %v21, %v29
    %v32 = vunpack.c.l.s4 1983009808
    %v33 = vunpack.c.0.s8 %v32
    %v34 = vlaneseq
    %v35 = vshrl.u32 %v34, 7
    %v36 = vsub.s32 %v33, %v35
    %v37 = vrot.slane %v23, %v36
    %v38 = vcombine.high %v30, %v30
    %v39 = vcombine.high %v37, %v37
    %vm44 = vcmask 1041408
    %v45 = vsel %vm44, %v30, 0.0
    %v46 = vsel %vm44, %v38, 0.0
    %v47 = vadd.f32 %v45, %v46
    %v48 = vsel %vm44, %v37, 0.0
    %v49 = vadd.f32 %v47, %v48
    %v50 = vsel %vm44, %v39, 0.0
    %v51 = vadd.f32 %v49, %v50
    %52 = vadd.xlane.f32.xlu0 %v51
    %v53 = vpop.xlane.xlu0 %52
    %v54 = vrcp.pop 512.0
    %v55 = vmul.f32 %v53, %v54
    %v58 = vunpack.c.l.s4 269488144
    %v59 = vunpack.c.0.s8 %v58
    %v60 = vlaneseq
    %v61 = vshrl.u32 %v60, 7
    %v62 = vsub.s32 %v59, %v61
    %v63 = vrot.slane %v55, %v62
    %v65 = vsub.f32 %v21, %v63
    %v66 = vmul.f32 %v65, %v65
    %v68 = vcombine.high %v66, %v66
    %v70 = vunpack.c.l.s4 1983009808
    %v71 = vunpack.c.0.s8 %v70
    %v72 = vlaneseq
    %v73 = vshrl.u32 %v72, 7
    %v74 = vsub.s32 %v71, %v73
    %v75 = vrot.slane %v66, %v74
    %v77 = vunpack.c.l.s4 1983009808
    %v78 = vunpack.c.0.s8 %v77
    %v79 = vlaneseq
    %v80 = vshrl.u32 %v79, 7
    %v81 = vsub.s32 %v78, %v80
    %v82 = vrot.slane %v68, %v81
    %v83 = vcombine.high %v75, %v75
    %v84 = vcombine.high %v82, %v82
    %v89 = vsel %vm44, %v75, 0.0
    %v90 = vsel %vm44, %v83, 0.0
    %v91 = vadd.f32 %v89, %v90
    %v92 = vsel %vm44, %v82, 0.0
    %v93 = vadd.f32 %v91, %v92
    %v94 = vsel %vm44, %v84, 0.0
    %v95 = vadd.f32 %v93, %v94
    %96 = vadd.xlane.f32.xlu0 %v95
    %v97 = vpop.xlane.xlu0 %96
    %v98 = vmul.f32 %v97, %v54
    %v99 = vadd.f32 %v98, 1e-05
    %v100 = vrsqrt.pop %v99
    %v103 = vunpack.c.l.s4 269488144
    %v104 = vunpack.c.0.s8 %v103
    %v105 = vlaneseq
    %v106 = vshrl.u32 %v105, 7
    %v107 = vsub.s32 %v104, %v106
    %v108 = vrot.slane %v100, %v107
    %v110 = vmul.f32 %v65, %v108
    %v111 = vld [vmem:[%s1] sm:$0xf]
    %v113 = vlaneseq
    %v114 = vshrl.u32 %v113, 7
    %v115 = vsub.s32 0, %v114
    %v116 = vrot.slane %v111, %v115
    %v117 = vlaneseq
    %v118 = vshrl.u32 %v117, 7
    %v119 = vsub.s32 1, %v118
    %v120 = vrot.slane %v111, %v119
    %v121 = vlaneseq
    %v122 = vshrl.u32 %v121, 7
    %v123 = vsub.s32 2, %v122
    %v124 = vrot.slane %v111, %v123
    %v125 = vlaneseq
    %v126 = vshrl.u32 %v125, 7
    %v127 = vsub.s32 3, %v126
    %v128 = vrot.slane %v111, %v127
    %v129 = vcombine.low %v116, %v120
    %v130 = vcombine.low %v124, %v128
    %v132 = vunpack.c.l.s4 1983009808
    %v133 = vunpack.c.0.s8 %v132
    %v134 = vlaneseq
    %v135 = vshrl.u32 %v134, 7
    %v136 = vsub.s32 %v133, %v135
    %v137 = vrot.slane %v129, %v136
    %v139 = vunpack.c.l.s4 1983009808
    %v140 = vunpack.c.0.s8 %v139
    %v141 = vlaneseq
    %v142 = vshrl.u32 %v141, 7
    %v143 = vsub.s32 %v140, %v142
    %v144 = vrot.slane %v130, %v143
    %v145 = vcombine.low %v137, %v144
    %v147 = vmul.f32 %v110, %v145
    %v148 = vld [vmem:[%s2] sm:$0xf]
    %v150 = vlaneseq
    %v151 = vshrl.u32 %v150, 7
    %v152 = vsub.s32 0, %v151
    %v153 = vrot.slane %v148, %v152
    %v154 = vlaneseq
    %v155 = vshrl.u32 %v154, 7
    %v156 = vsub.s32 1, %v155
    %v157 = vrot.slane %v148, %v156
    %v158 = vlaneseq
    %v159 = vshrl.u32 %v158, 7
    %v160 = vsub.s32 2, %v159
    %v161 = vrot.slane %v148, %v160
    %v162 = vlaneseq
    %v163 = vshrl.u32 %v162, 7
    %v164 = vsub.s32 3, %v163
    %v165 = vrot.slane %v148, %v164
    %v166 = vcombine.low %v153, %v157
    %v167 = vcombine.low %v161, %v165
    %v169 = vunpack.c.l.s4 1983009808
    %v170 = vunpack.c.0.s8 %v169
    %v171 = vlaneseq
    %v172 = vshrl.u32 %v171, 7
    %v173 = vsub.s32 %v170, %v172
    %v174 = vrot.slane %v166, %v173
    %v176 = vunpack.c.l.s4 1983009808
    %v177 = vunpack.c.0.s8 %v176
    %v178 = vlaneseq
    %v179 = vshrl.u32 %v178, 7
    %v180 = vsub.s32 %v177, %v179
    %v181 = vrot.slane %v167, %v180
    %v182 = vcombine.low %v174, %v181
    %v184 = vadd.f32 %v147, %v182
    %v185 = vld [vmem:[%s3] sm:$0xff]
    %v186 = vld [vmem:[%s3 + $0x8] sm:$0xff]
    %v187 = vld [vmem:[%s3 + $0x10] sm:$0xff]
    %v188 = vld [vmem:[%s3 + $0x18] sm:$0xff]
    %v189 = vld [vmem:[%s3 + $0x20] sm:$0xff]
    %v190 = vld [vmem:[%s3 + $0x28] sm:$0xff]
    %v191 = vld [vmem:[%s3 + $0x30] sm:$0xff]
    %v192 = vld [vmem:[%s3 + $0x38] sm:$0xff]
    %v193 = vld [vmem:[%s3 + $0x40] sm:$0xff]
    %v194 = vld [vmem:[%s3 + $0x48] sm:$0xff]
    %v195 = vld [vmem:[%s3 + $0x50] sm:$0xff]
    %v196 = vld [vmem:[%s3 + $0x58] sm:$0xff]
    %v197 = vld [vmem:[%s3 + $0x60] sm:$0xff]
    %v198 = vld [vmem:[%s3 + $0x68] sm:$0xff]
    %v199 = vld [vmem:[%s3 + $0x70] sm:$0xff]
    %v200 = vld [vmem:[%s3 + $0x78] sm:$0xff]
    %v201 = vld [vmem:[%s3 + $0x80] sm:$0xff]
    %v202 = vld [vmem:[%s3 + $0x88] sm:$0xff]
    %v203 = vld [vmem:[%s3 + $0x90] sm:$0xff]
    %v204 = vld [vmem:[%s3 + $0x98] sm:$0xff]
    %v205 = vld [vmem:[%s3 + $0xa0] sm:$0xff]
    %v206 = vld [vmem:[%s3 + $0xa8] sm:$0xff]
    %v207 = vld [vmem:[%s3 + $0xb0] sm:$0xff]
    %v208 = vld [vmem:[%s3 + $0xb8] sm:$0xff]
    %v209 = vld [vmem:[%s3 + $0xc0] sm:$0xff]
    %v210 = vld [vmem:[%s3 + $0xc8] sm:$0xff]
    %v211 = vld [vmem:[%s3 + $0xd0] sm:$0xff]
    %v212 = vld [vmem:[%s3 + $0xd8] sm:$0xff]
    %v213 = vld [vmem:[%s3 + $0xe0] sm:$0xff]
    %v214 = vld [vmem:[%s3 + $0xe8] sm:$0xff]
    %v215 = vld [vmem:[%s3 + $0xf0] sm:$0xff]
    %v216 = vld [vmem:[%s3 + $0xf8] sm:$0xff]
    %v217 = vld [vmem:[%s3 + $0x100] sm:$0xff]
    %v218 = vld [vmem:[%s3 + $0x108] sm:$0xff]
    %v219 = vld [vmem:[%s3 + $0x110] sm:$0xff]
    %v220 = vld [vmem:[%s3 + $0x118] sm:$0xff]
    %v221 = vld [vmem:[%s3 + $0x120] sm:$0xff]
    %v222 = vld [vmem:[%s3 + $0x128] sm:$0xff]
    %v223 = vld [vmem:[%s3 + $0x130] sm:$0xff]
    %v224 = vld [vmem:[%s3 + $0x138] sm:$0xff]
    %v225 = vld [vmem:[%s3 + $0x140] sm:$0xff]
    %v226 = vld [vmem:[%s3 + $0x148] sm:$0xff]
    %v227 = vld [vmem:[%s3 + $0x150] sm:$0xff]
    %v228 = vld [vmem:[%s3 + $0x158] sm:$0xff]
    %v229 = vld [vmem:[%s3 + $0x160] sm:$0xff]
    %v230 = vld [vmem:[%s3 + $0x168] sm:$0xff]
    %v231 = vld [vmem:[%s3 + $0x170] sm:$0xff]
    %v232 = vld [vmem:[%s3 + $0x178] sm:$0xff]
    %v233 = vld [vmem:[%s3 + $0x180] sm:$0xff]
    %v234 = vld [vmem:[%s3 + $0x188] sm:$0xff]
    %v235 = vld [vmem:[%s3 + $0x190] sm:$0xff]
    %v236 = vld [vmem:[%s3 + $0x198] sm:$0xff]
    %v237 = vld [vmem:[%s3 + $0x1a0] sm:$0xff]
    %v238 = vld [vmem:[%s3 + $0x1a8] sm:$0xff]
    %v239 = vld [vmem:[%s3 + $0x1b0] sm:$0xff]
    %v240 = vld [vmem:[%s3 + $0x1b8] sm:$0xff]
    %v241 = vld [vmem:[%s3 + $0x1c0] sm:$0xff]
    %v242 = vld [vmem:[%s3 + $0x1c8] sm:$0xff]
    %v243 = vld [vmem:[%s3 + $0x1d0] sm:$0xff]
    %v244 = vld [vmem:[%s3 + $0x1d8] sm:$0xff]
    %v245 = vld [vmem:[%s3 + $0x1e0] sm:$0xff]
    %v246 = vld [vmem:[%s3 + $0x1e8] sm:$0xff]
    %v247 = vld [vmem:[%s3 + $0x1f0] sm:$0xff]
    %v248 = vld [vmem:[%s3 + $0x1f8] sm:$0xff]
    %v249 = vld [vmem:[%s4] sm:$0x1]
    %v251 = vlaneseq
    %v252 = vshrl.u32 %v251, 7
    %v253 = vsub.s32 0, %v252
    %v254 = vrot.slane %v249, %v253
    %v257 = vcombine.high %v184, %v184
    %v259 = vunpack.c.l.s4 1983009808
    %v260 = vunpack.c.0.s8 %v259
    %v261 = vlaneseq
    %v262 = vshrl.u32 %v261, 7
    %v263 = vsub.s32 %v260, %v262
    %v264 = vrot.slane %v184, %v263
    %v266 = vunpack.c.l.s4 1983009808
    %v267 = vunpack.c.0.s8 %v266
    %v268 = vlaneseq
    %v269 = vshrl.u32 %v268, 7
    %v270 = vsub.s32 %v267, %v269
    %v271 = vrot.slane %v257, %v270
    %v272 = vcombine.high %v264, %v264
    %v273 = vcombine.high %v271, %v271
    %278 = vmatprep.subr.mxu0 0.0
    %279 = vmatpush1.msra.mxu0 %v200
    %280 = vmatprep.subr.mxu0 0.0
    %281 = vmatpush1.msra.mxu0 %v199
    %282 = vmatprep.subr.mxu0 0.0
    %283 = vmatpush1.msra.mxu0 %v198
    %284 = vmatprep.subr.mxu0 0.0
    %285 = vmatpush1.msra.mxu0 %v197
    %286 = vmatprep.subr.mxu0 0.0
    %287 = vmatpush1.msra.mxu0 %v196
    %288 = vmatprep.subr.mxu0 0.0
    %289 = vmatpush1.msra.mxu0 %v195
    %290 = vmatprep.subr.mxu0 0.0
    %291 = vmatpush1.msra.mxu0 %v194
    %292 = vmatprep.subr.mxu0 0.0
    %293 = vmatpush1.msra.mxu0 %v193
    %294 = vmatprep.subr.mxu0 0.0
    %295 = vmatpush1.msra.mxu0 %v192
    %296 = vmatprep.subr.mxu0 0.0
    %297 = vmatpush1.msra.mxu0 %v191
    %298 = vmatprep.subr.mxu0 0.0
    %299 = vmatpush1.msra.mxu0 %v190
    %300 = vmatprep.subr.mxu0 0.0
    %301 = vmatpush1.msra.mxu0 %v189
    %302 = vmatprep.subr.mxu0 0.0
    %303 = vmatpush1.msra.mxu0 %v188
    %304 = vmatprep.subr.mxu0 0.0
    %305 = vmatpush1.msra.mxu0 %v187
    %306 = vmatprep.subr.mxu0 0.0
    %307 = vmatpush1.msra.mxu0 %v186
    %308 = vmatprep.subr.mxu0 0.0
    %309 = vmatpush1.msra.mxu0 %v185
    %310 = vmatprep.subr.mxu0 0.0
    %311 = vmatpush2.msra.mxu0 %v216
    %312 = vmatprep.subr.mxu0 0.0
    %313 = vmatpush2.msra.mxu0 %v215
    %314 = vmatprep.subr.mxu0 0.0
    %315 = vmatpush2.msra.mxu0 %v214
    %316 = vmatprep.subr.mxu0 0.0
    %317 = vmatpush2.msra.mxu0 %v213
    %318 = vmatprep.subr.mxu0 0.0
    %319 = vmatpush2.msra.mxu0 %v212
    %320 = vmatprep.subr.mxu0 0.0
    %321 = vmatpush2.msra.mxu0 %v211
    %322 = vmatprep.subr.mxu0 0.0
    %323 = vmatpush2.msra.mxu0 %v210
    %324 = vmatprep.subr.mxu0 0.0
    %325 = vmatpush2.msra.mxu0 %v209
    %326 = vmatprep.subr.mxu0 0.0
    %327 = vmatpush2.msra.mxu0 %v208
    %328 = vmatprep.subr.mxu0 0.0
    %329 = vmatpush2.msra.mxu0 %v207
    %330 = vmatprep.subr.mxu0 0.0
    %331 = vmatpush2.msra.mxu0 %v206
    %332 = vmatprep.subr.mxu0 0.0
    %333 = vmatpush2.msra.mxu0 %v205
    %334 = vmatprep.subr.mxu0 0.0
    %335 = vmatpush2.msra.mxu0 %v204
    %336 = vmatprep.subr.mxu0 0.0
    %337 = vmatpush2.msra.mxu0 %v203
    %338 = vmatprep.subr.mxu0 0.0
    %339 = vmatpush2.msra.mxu0 %v202
    %340 = vmatprep.subr.mxu0 0.0
    %341 = vmatpush2.msra.mxu0 %v201
    %342 = vmatprep.mubr.f32.mxu0 %v272
    %343 = vmatmul.mubr.f32.gmra.mxu0 %v264
    %v344 = vpop.f32.mrf.mxu0
    %v345 = vadd.f32 %v254, %v344
    %v346 = vpop.f32.mrf.mxu0
    %347 = vdwg.mxu0
    %348 = vmatprep.subr.mxu0 0.0
    %349 = vmatpush1.msra.mxu0 %v232
    %350 = vmatprep.subr.mxu0 0.0
    %351 = vmatpush1.msra.mxu0 %v231
    %352 = vmatprep.subr.mxu0 0.0
    %353 = vmatpush1.msra.mxu0 %v230
    %354 = vmatprep.subr.mxu0 0.0
    %355 = vmatpush1.msra.mxu0 %v229
    %356 = vmatprep.subr.mxu0 0.0
    %357 = vmatpush1.msra.mxu0 %v228
    %358 = vmatprep.subr.mxu0 0.0
    %359 = vmatpush1.msra.mxu0 %v227
    %360 = vmatprep.subr.mxu0 0.0
    %361 = vmatpush1.msra.mxu0 %v226
    %362 = vmatprep.subr.mxu0 0.0
    %363 = vmatpush1.msra.mxu0 %v225
    %364 = vmatprep.subr.mxu0 0.0
    %365 = vmatpush1.msra.mxu0 %v224
    %366 = vmatprep.subr.mxu0 0.0
    %367 = vmatpush1.msra.mxu0 %v223
    %368 = vmatprep.subr.mxu0 0.0
    %369 = vmatpush1.msra.mxu0 %v222
    %370 = vmatprep.subr.mxu0 0.0
    %371 = vmatpush1.msra.mxu0 %v221
    %372 = vmatprep.subr.mxu0 0.0
    %373 = vmatpush1.msra.mxu0 %v220
    %374 = vmatprep.subr.mxu0 0.0
    %375 = vmatpush1.msra.mxu0 %v219
    %376 = vmatprep.subr.mxu0 0.0
    %377 = vmatpush1.msra.mxu0 %v218
    %378 = vmatprep.subr.mxu0 0.0
    %379 = vmatpush1.msra.mxu0 %v217
    %380 = vmatprep.subr.mxu0 0.0
    %381 = vmatpush2.msra.mxu0 %v248
    %382 = vmatprep.subr.mxu0 0.0
    %383 = vmatpush2.msra.mxu0 %v247
    %384 = vmatprep.subr.mxu0 0.0
    %385 = vmatpush2.msra.mxu0 %v246
    %386 = vmatprep.subr.mxu0 0.0
    %387 = vmatpush2.msra.mxu0 %v245
    %388 = vmatprep.subr.mxu0 0.0
    %389 = vmatpush2.msra.mxu0 %v244
    %390 = vmatprep.subr.mxu0 0.0
    %391 = vmatpush2.msra.mxu0 %v243
    %392 = vmatprep.subr.mxu0 0.0
    %393 = vmatpush2.msra.mxu0 %v242
    %394 = vmatprep.subr.mxu0 0.0
    %395 = vmatpush2.msra.mxu0 %v241
    %396 = vmatprep.subr.mxu0 0.0
    %397 = vmatpush2.msra.mxu0 %v240
    %398 = vmatprep.subr.mxu0 0.0
    %399 = vmatpush2.msra.mxu0 %v239
    %400 = vmatprep.subr.mxu0 0.0
    %401 = vmatpush2.msra.mxu0 %v238
    %402 = vmatprep.subr.mxu0 0.0
    %403 = vmatpush2.msra.mxu0 %v237
    %404 = vmatprep.subr.mxu0 0.0
    %405 = vmatpush2.msra.mxu0 %v236
    %406 = vmatprep.subr.mxu0 0.0
    %407 = vmatpush2.msra.mxu0 %v235
    %408 = vmatprep.subr.mxu0 0.0
    %409 = vmatpush2.msra.mxu0 %v234
    %410 = vmatprep.subr.mxu0 0.0
    %411 = vmatpush2.msra.mxu0 %v233
    %412 = vmatprep.mubr.f32.mxu0 %v273
    %413 = vmatmul.mubr.f32.gmra.mxu0 %v271
    %v414 = vpop.f32.mrf.mxu0
    %v415 = vadd.f32 %v345, %v414
    %v416 = vpop.f32.mrf.mxu0
    %417 = vdwg.mxu0
    %vm418 = vcmask 74752
    %419 = vst.msk [vmem:[#allocation2] sm:$0x3] %vm418, %v415
    // Predicated region
    $region22: #{_lambda_.7} parent=1 // pred_check
      _
    $region23: #{_lambda_.7} parent=1 // pred_check_branch
      %421 = sbr.rel (0) target = $region25
    $region24: #{_lambda_.7} parent=1 // pred_region
      %s423 = ssub.s32 32, 32
      %424 = vsyncadd [#allocation3], %s423
      %s426 = sshll.u32 [#allocation2], 4
      %s427 = int_to_ptr.vmem [resolvable:$true] %s426
      %429 = dma.vmem_to_hbm [thread:$0]  %s427, 32, %s5, [#allocation3]
    $region25: #{_lambda_.7} parent=1 // pred_fallthru
      _
    // Predicated region
    $region26: #{_lambda_.7} parent=1 // pred_check
      _
    $region27: #{_lambda_.7} parent=1 // pred_check_branch
      %431 = sbr.rel (0) target = $region29
    $region28: #{_lambda_.7} parent=1 // pred_region
      %432 = dma.done [#allocation3], 32
    $region29: #{_lambda_.7} parent=1 // pred_fallthru
      _
    %433 = vsyncpa [#allocation3], 1

// kernel: _lambda_.6
$region0: #{_lambda_.6}
  #allocation0 [shape = 'u32[]', space=smem, size = 0x4, offset = 0x4, fixed_abs, tag = 'smem constant byte address 0x4 - core index']
  #allocation1 [shape = 'u32[144,128]{1,0:T(1,128)}', space=vmem, size = 0x12000, scoped, tag = 'internal scratch']
  %s0 = inlined_call_operand.vmem [shape: f32[2,8,64], index: 0, kind: input, shape index: {}]
  %s1 = inlined_call_operand.vmem [shape: f32[9,64,64], index: 1, kind: input, shape index: {}]
  %s2 = inlined_call_operand.vmem [shape: f32[64,64], index: 2, kind: input, shape index: {}]
  %s3 = inlined_call_operand.vmem [shape: f32[9,8,8], index: 3, kind: input, shape index: {}]
  %s4 = inlined_call_operand.vmem [shape: f32[8,1], index: 4, kind: input, shape index: {}]
  %s5 = inlined_call_operand.vmem [shape: f32[9,8,8], index: 5, kind: input, shape index: {}]
  %s6 = inlined_call_operand.vmem [shape: f32[8,1], index: 6, kind: input, shape index: {}]
  %s7 = inlined_call_operand.vmem [shape: f32[1,24,8], index: 7, kind: input, shape index: {}]
  %s8 = inlined_call_operand.vmem [shape: f32[1,24,1], index: 8, kind: input, shape index: {}]
  %s9 = inlined_call_operand.vmem [shape: f32[1,8,8], index: 9, kind: input, shape index: {}]
  %s10 = inlined_call_operand.vmem [shape: f32[1,8,1], index: 10, kind: input, shape index: {}]
  %s11 = inlined_call_operand.vmem [shape: f32[1,8,1], index: 11, kind: input, shape index: {}]
  %s12 = inlined_call_operand.vmem [shape: f32[1,8,1], index: 12, kind: input, shape index: {}]
  %s13 = inlined_call_operand.vmem [shape: f32[1,8,8], index: 13, kind: input, shape index: {}]
  %s14 = inlined_call_operand.vmem [shape: f32[1,8,1], index: 14, kind: input, shape index: {}]
  %s15 = inlined_call_operand.vmem [shape: f32[1,8,8], index: 15, kind: input, shape index: {}]
  %s16 = inlined_call_operand.vmem [shape: f32[1,8,1], index: 16, kind: input, shape index: {}]
  %s17 = inlined_call_operand.vmem [shape: f32[1,8,1], index: 17, kind: input, shape index: {}]
  %s18 = inlined_call_operand.vmem [shape: f32[1,8,1], index: 18, kind: input, shape index: {}]
  %s19 = inlined_call_operand.vmem [shape: f32[2,8,64], index: 19, kind: output, shape index: {}]
  %s20 = sld [smem:[#allocation0]]
  $region109: #{_lambda_.6} parent=0
    _
  %s22 = ssub.s32 1, %s20
  %s23 = scalar_select 0, %s22, %s20
  loop: start=0, step=1, limit=4
  $region2: #{_lambda_.6} parent=0 // loop_pre_header
    _
  $region3: #{_lambda_.6} parent=0 // loop_header
    %s25 = sphi 0, %s29
    %p26 = scmp.ge.s32.totalorder %s25, 4
    %s35 = sphi 0, %s37
    %s38 = sphi 0, %s35
    %s39 = sphi 0, %s38
    %s55 = sphi 0, %s39
    %s59 = sphi 0, %s59
    %s61 = sphi 0, %s59
    %s62 = sphi 0, %s61
    %s76 = sphi 0, %s62
    %s80 = sphi 0, %s80
    %s82 = sphi 0, %s80
    %s83 = sphi 0, %s82
    %s97 = sphi 0, %s83
    %s101 = sphi 0, %s101
    %s103 = sphi 0, %s101
    %s104 = sphi 0, %s103
    %s118 = sphi 0, %s104
    %s122 = sphi 0, %s122
    %s124 = sphi 0, %s122
    %s125 = sphi 0, %s124
    %s139 = sphi 0, %s125
    %s143 = sphi 0, %s143
    %s145 = sphi 0, %s143
    %s146 = sphi 0, %s145
    %s160 = sphi 0, %s146
    %s164 = sphi 0, %s164
    %s166 = sphi 0, %s164
    %s167 = sphi 0, %s166
    %s181 = sphi 0, %s167
    %s185 = sphi 0, %s185
    %s187 = sphi 0, %s185
    %s188 = sphi 0, %s187
    %s202 = sphi 0, %s188
    %s206 = sphi 0, %s206
    %s208 = sphi 0, %s206
    %s209 = sphi 0, %s208
    %s223 = sphi 0, %s209
    %s227 = sphi 0, %s227
    %s229 = sphi 0, %s227
    %s230 = sphi 0, %s229
    %s244 = sphi 0, %s230
    %s248 = sphi 0, %s248
    %s250 = sphi 0, %s248
    %s251 = sphi 0, %s250
    %s265 = sphi 0, %s251
    %s269 = sphi 0, %s269
    %s271 = sphi 0, %s269
    %s272 = sphi 0, %s271
    %s286 = sphi 0, %s272
    %s290 = sphi 0, %s290
    %s292 = sphi 0, %s290
    %s293 = sphi 0, %s292
    %s307 = sphi 0, %s293
    %s311 = sphi 0, %s311
    %s313 = sphi 0, %s311
    %s314 = sphi 0, %s313
    %s328 = sphi 0, %s314
    %s332 = sphi 0, %s332
    %s334 = sphi 0, %s332
    %s335 = sphi 0, %s334
    %s349 = sphi 0, %s335
    %s353 = sphi 0, %s353
    %s355 = sphi 0, %s353
    %s356 = sphi 0, %s355
    %s370 = sphi 0, %s356
    %s374 = sphi 0, %s374
    %s376 = sphi 0, %s374
    %s377 = sphi 0, %s376
    %s391 = sphi 0, %s377
    %s395 = sphi 0, %s395
    %s397 = sphi 0, %s395
    %s398 = sphi 0, %s397
    %s412 = sphi 0, %s398
    %s416 = sphi 0, %s416
    %s418 = sphi 0, %s416
    %s419 = sphi 0, %s418
    %s433 = sphi 0, %s419
    %s439 = sphi 0, %s441
    %s442 = sphi 0, %s439
    %s443 = sphi 0, %s442
    %s459 = sphi 0, %s443
  $region4: #{_lambda_.6} parent=0 // loop_header_branch
    %28 = sbr.rel (%p26) target = $region8
  $region5: #{_lambda_.6} parent=0 // loop_body
    %s30 = ssub.s32 %s25, 1
    %s31 = ssub.s32 %s25, 2
    %s32 = sadd.s32 %s25, 1
    %s33 = ssub.s32 %s25, %s32
    %p34 = scmp.eq.s32.totalorder %s33, 0
    %s36 = sadd.s32 %s35, 1
    %s37 = scalar_select %p34, %s35, %s36
    %p40 = pneg %p34
    %p41 = scmp.eq.s32.totalorder %s25, 1
    %p42 = por %p40, %p41
    %p43 = scmp.ne.s32.totalorder %s35, %s38
    %p44 = scmp.eq.s32.totalorder %s25, 0
    %p45 = por %p43, %p44
    %p46 = scmp.ne.s32.totalorder %s35, %s38
    %p47 = scmp.eq.s32.totalorder %s30, 1
    %p48 = por %p46, %p47
    %p49 = scmp.ne.s32.totalorder %s38, %s39
    %p50 = scmp.eq.s32.totalorder %s30, 0
    %p51 = por %p49, %p50
    %p52 = scmp.ne.s32.totalorder %s38, %s39
    %p53 = scmp.eq.s32.totalorder %s31, 1
    %p54 = por %p52, %p53
    %p56 = scmp.ne.s32.totalorder %s39, %s55
    %p57 = scmp.eq.s32.totalorder %s31, 0
    %p58 = por %p56, %p57
    %s60 = sadd.s32 %s59, 1
    %p63 = scmp.eq.s32.totalorder %s25, 1
    %p64 = scmp.ne.s32.totalorder %s59, %s61
    %p65 = scmp.eq.s32.totalorder %s25, 0
    %p66 = por %p64, %p65
    %p67 = scmp.ne.s32.totalorder %s59, %s61
    %p68 = scmp.eq.s32.totalorder %s30, 1
    %p69 = por %p67, %p68
    %p70 = scmp.ne.s32.totalorder %s61, %s62
    %p71 = scmp.eq.s32.totalorder %s30, 0
    %p72 = por %p70, %p71
    %p73 = scmp.ne.s32.totalorder %s61, %s62
    %p74 = scmp.eq.s32.totalorder %s31, 1
    %p75 = por %p73, %p74
    %p77 = scmp.ne.s32.totalorder %s62, %s76
    %p78 = scmp.eq.s32.totalorder %s31, 0
    %p79 = por %p77, %p78
    %s81 = sadd.s32 %s80, 1
    %p84 = scmp.eq.s32.totalorder %s25, 1
    %p85 = scmp.ne.s32.totalorder %s80, %s82
    %p86 = scmp.eq.s32.totalorder %s25, 0
    %p87 = por %p85, %p86
    %p88 = scmp.ne.s32.totalorder %s80, %s82
    %p89 = scmp.eq.s32.totalorder %s30, 1
    %p90 = por %p88, %p89
    %p91 = scmp.ne.s32.totalorder %s82, %s83
    %p92 = scmp.eq.s32.totalorder %s30, 0
    %p93 = por %p91, %p92
    %p94 = scmp.ne.s32.totalorder %s82, %s83
    %p95 = scmp.eq.s32.totalorder %s31, 1
    %p96 = por %p94, %p95
    %p98 = scmp.ne.s32.totalorder %s83, %s97
    %p99 = scmp.eq.s32.totalorder %s31, 0
    %p100 = por %p98, %p99
    %s102 = sadd.s32 %s101, 1
    %p105 = scmp.eq.s32.totalorder %s25, 1
    %p106 = scmp.ne.s32.totalorder %s101, %s103
    %p107 = scmp.eq.s32.totalorder %s25, 0
    %p108 = por %p106, %p107
    %p109 = scmp.ne.s32.totalorder %s101, %s103
    %p110 = scmp.eq.s32.totalorder %s30, 1
    %p111 = por %p109, %p110
    %p112 = scmp.ne.s32.totalorder %s103, %s104
    %p113 = scmp.eq.s32.totalorder %s30, 0
    %p114 = por %p112, %p113
    %p115 = scmp.ne.s32.totalorder %s103, %s104
    %p116 = scmp.eq.s32.totalorder %s31, 1
    %p117 = por %p115, %p116
    %p119 = scmp.ne.s32.totalorder %s104, %s118
    %p120 = scmp.eq.s32.totalorder %s31, 0
    %p121 = por %p119, %p120
    %s123 = sadd.s32 %s122, 1
    %p126 = scmp.eq.s32.totalorder %s25, 1
    %p127 = scmp.ne.s32.totalorder %s122, %s124
    %p128 = scmp.eq.s32.totalorder %s25, 0
    %p129 = por %p127, %p128
    %p130 = scmp.ne.s32.totalorder %s122, %s124
    %p131 = scmp.eq.s32.totalorder %s30, 1
    %p132 = por %p130, %p131
    %p133 = scmp.ne.s32.totalorder %s124, %s125
    %p134 = scmp.eq.s32.totalorder %s30, 0
    %p135 = por %p133, %p134
    %p136 = scmp.ne.s32.totalorder %s124, %s125
    %p137 = scmp.eq.s32.totalorder %s31, 1
    %p138 = por %p136, %p137
    %p140 = scmp.ne.s32.totalorder %s125, %s139
    %p141 = scmp.eq.s32.totalorder %s31, 0
    %p142 = por %p140, %p141
    %s144 = sadd.s32 %s143, 1
    %p147 = scmp.eq.s32.totalorder %s25, 1
    %p148 = scmp.ne.s32.totalorder %s143, %s145
    %p149 = scmp.eq.s32.totalorder %s25, 0
    %p150 = por %p148, %p149
    %p151 = scmp.ne.s32.totalorder %s143, %s145
    %p152 = scmp.eq.s32.totalorder %s30, 1
    %p153 = por %p151, %p152
    %p154 = scmp.ne.s32.totalorder %s145, %s146
    %p155 = scmp.eq.s32.totalorder %s30, 0
    %p156 = por %p154, %p155
    %p157 = scmp.ne.s32.totalorder %s145, %s146
    %p158 = scmp.eq.s32.totalorder %s31, 1
    %p159 = por %p157, %p158
    %p161 = scmp.ne.s32.totalorder %s146, %s160
    %p162 = scmp.eq.s32.totalorder %s31, 0
    %p163 = por %p161, %p162
    %s165 = sadd.s32 %s164, 1
    %p168 = scmp.eq.s32.totalorder %s25, 1
    %p169 = scmp.ne.s32.totalorder %s164, %s166
    %p170 = scmp.eq.s32.totalorder %s25, 0
    %p171 = por %p169, %p170
    %p172 = scmp.ne.s32.totalorder %s164, %s166
    %p173 = scmp.eq.s32.totalorder %s30, 1
    %p174 = por %p172, %p173
    %p175 = scmp.ne.s32.totalorder %s166, %s167
    %p176 = scmp.eq.s32.totalorder %s30, 0
    %p177 = por %p175, %p176
    %p178 = scmp.ne.s32.totalorder %s166, %s167
    %p179 = scmp.eq.s32.totalorder %s31, 1
    %p180 = por %p178, %p179
    %p182 = scmp.ne.s32.totalorder %s167, %s181
    %p183 = scmp.eq.s32.totalorder %s31, 0
    %p184 = por %p182, %p183
    %s186 = sadd.s32 %s185, 1
    %p189 = scmp.eq.s32.totalorder %s25, 1
    %p190 = scmp.ne.s32.totalorder %s185, %s187
    %p191 = scmp.eq.s32.totalorder %s25, 0
    %p192 = por %p190, %p191
    %p193 = scmp.ne.s32.totalorder %s185, %s187
    %p194 = scmp.eq.s32.totalorder %s30, 1
    %p195 = por %p193, %p194
    %p196 = scmp.ne.s32.totalorder %s187, %s188
    %p197 = scmp.eq.s32.totalorder %s30, 0
    %p198 = por %p196, %p197
    %p199 = scmp.ne.s32.totalorder %s187, %s188
    %p200 = scmp.eq.s32.totalorder %s31, 1
    %p201 = por %p199, %p200
    %p203 = scmp.ne.s32.totalorder %s188, %s202
    %p204 = scmp.eq.s32.totalorder %s31, 0
    %p205 = por %p203, %p204
    %s207 = sadd.s32 %s206, 1
    %p210 = scmp.eq.s32.totalorder %s25, 1
    %p211 = scmp.ne.s32.totalorder %s206, %s208
    %p212 = scmp.eq.s32.totalorder %s25, 0
    %p213 = por %p211, %p212
    %p214 = scmp.ne.s32.totalorder %s206, %s208
    %p215 = scmp.eq.s32.totalorder %s30, 1
    %p216 = por %p214, %p215
    %p217 = scmp.ne.s32.totalorder %s208, %s209
    %p218 = scmp.eq.s32.totalorder %s30, 0
    %p219 = por %p217, %p218
    %p220 = scmp.ne.s32.totalorder %s208, %s209
    %p221 = scmp.eq.s32.totalorder %s31, 1
    %p222 = por %p220, %p221
    %p224 = scmp.ne.s32.totalorder %s209, %s223
    %p225 = scmp.eq.s32.totalorder %s31, 0
    %p226 = por %p224, %p225
    %s228 = sadd.s32 %s227, 1
    %p231 = scmp.eq.s32.totalorder %s25, 1
    %p232 = scmp.ne.s32.totalorder %s227, %s229
    %p233 = scmp.eq.s32.totalorder %s25, 0
    %p234 = por %p232, %p233
    %p235 = scmp.ne.s32.totalorder %s227, %s229
    %p236 = scmp.eq.s32.totalorder %s30, 1
    %p237 = por %p235, %p236
    %p238 = scmp.ne.s32.totalorder %s229, %s230
    %p239 = scmp.eq.s32.totalorder %s30, 0
    %p240 = por %p238, %p239
    %p241 = scmp.ne.s32.totalorder %s229, %s230
    %p242 = scmp.eq.s32.totalorder %s31, 1
    %p243 = por %p241, %p242
    %p245 = scmp.ne.s32.totalorder %s230, %s244
    %p246 = scmp.eq.s32.totalorder %s31, 0
    %p247 = por %p245, %p246
    %s249 = sadd.s32 %s248, 1
    %p252 = scmp.eq.s32.totalorder %s25, 1
    %p253 = scmp.ne.s32.totalorder %s248, %s250
    %p254 = scmp.eq.s32.totalorder %s25, 0
    %p255 = por %p253, %p254
    %p256 = scmp.ne.s32.totalorder %s248, %s250
    %p257 = scmp.eq.s32.totalorder %s30, 1
    %p258 = por %p256, %p257
    %p259 = scmp.ne.s32.totalorder %s250, %s251
    %p260 = scmp.eq.s32.totalorder %s30, 0
    %p261 = por %p259, %p260
    %p262 = scmp.ne.s32.totalorder %s250, %s251
    %p263 = scmp.eq.s32.totalorder %s31, 1
    %p264 = por %p262, %p263
    %p266 = scmp.ne.s32.totalorder %s251, %s265
    %p267 = scmp.eq.s32.totalorder %s31, 0
    %p268 = por %p266, %p267
    %s270 = sadd.s32 %s269, 1
    %p273 = scmp.eq.s32.totalorder %s25, 1
    %p274 = scmp.ne.s32.totalorder %s269, %s271
    %p275 = scmp.eq.s32.totalorder %s25, 0
    %p276 = por %p274, %p275
    %p277 = scmp.ne.s32.totalorder %s269, %s271
    %p278 = scmp.eq.s32.totalorder %s30, 1
    %p279 = por %p277, %p278
    %p280 = scmp.ne.s32.totalorder %s271, %s272
    %p281 = scmp.eq.s32.totalorder %s30, 0
    %p282 = por %p280, %p281
    %p283 = scmp.ne.s32.totalorder %s271, %s272
    %p284 = scmp.eq.s32.totalorder %s31, 1
    %p285 = por %p283, %p284
    %p287 = scmp.ne.s32.totalorder %s272, %s286
    %p288 = scmp.eq.s32.totalorder %s31, 0
    %p289 = por %p287, %p288
    %s291 = sadd.s32 %s290, 1
    %p294 = scmp.eq.s32.totalorder %s25, 1
    %p295 = scmp.ne.s32.totalorder %s290, %s292
    %p296 = scmp.eq.s32.totalorder %s25, 0
    %p297 = por %p295, %p296
    %p298 = scmp.ne.s32.totalorder %s290, %s292
    %p299 = scmp.eq.s32.totalorder %s30, 1
    %p300 = por %p298, %p299
    %p301 = scmp.ne.s32.totalorder %s292, %s293
    %p302 = scmp.eq.s32.totalorder %s30, 0
    %p303 = por %p301, %p302
    %p304 = scmp.ne.s32.totalorder %s292, %s293
    %p305 = scmp.eq.s32.totalorder %s31, 1
    %p306 = por %p304, %p305
    %p308 = scmp.ne.s32.totalorder %s293, %s307
    %p309 = scmp.eq.s32.totalorder %s31, 0
    %p310 = por %p308, %p309
    %s312 = sadd.s32 %s311, 1
    %p315 = scmp.eq.s32.totalorder %s25, 1
    %p316 = scmp.ne.s32.totalorder %s311, %s313
    %p317 = scmp.eq.s32.totalorder %s25, 0
    %p318 = por %p316, %p317
    %p319 = scmp.ne.s32.totalorder %s311, %s313
    %p320 = scmp.eq.s32.totalorder %s30, 1
    %p321 = por %p319, %p320
    %p322 = scmp.ne.s32.totalorder %s313, %s314
    %p323 = scmp.eq.s32.totalorder %s30, 0
    %p324 = por %p322, %p323
    %p325 = scmp.ne.s32.totalorder %s313, %s314
    %p326 = scmp.eq.s32.totalorder %s31, 1
    %p327 = por %p325, %p326
    %p329 = scmp.ne.s32.totalorder %s314, %s328
    %p330 = scmp.eq.s32.totalorder %s31, 0
    %p331 = por %p329, %p330
    %s333 = sadd.s32 %s332, 1
    %p336 = scmp.eq.s32.totalorder %s25, 1
    %p337 = scmp.ne.s32.totalorder %s332, %s334
    %p338 = scmp.eq.s32.totalorder %s25, 0
    %p339 = por %p337, %p338
    %p340 = scmp.ne.s32.totalorder %s332, %s334
    %p341 = scmp.eq.s32.totalorder %s30, 1
    %p342 = por %p340, %p341
    %p343 = scmp.ne.s32.totalorder %s334, %s335
    %p344 = scmp.eq.s32.totalorder %s30, 0
    %p345 = por %p343, %p344
    %p346 = scmp.ne.s32.totalorder %s334, %s335
    %p347 = scmp.eq.s32.totalorder %s31, 1
    %p348 = por %p346, %p347
    %p350 = scmp.ne.s32.totalorder %s335, %s349
    %p351 = scmp.eq.s32.totalorder %s31, 0
    %p352 = por %p350, %p351
    %s354 = sadd.s32 %s353, 1
    %p357 = scmp.eq.s32.totalorder %s25, 1
    %p358 = scmp.ne.s32.totalorder %s353, %s355
    %p359 = scmp.eq.s32.totalorder %s25, 0
    %p360 = por %p358, %p359
    %p361 = scmp.ne.s32.totalorder %s353, %s355
    %p362 = scmp.eq.s32.totalorder %s30, 1
    %p363 = por %p361, %p362
    %p364 = scmp.ne.s32.totalorder %s355, %s356
    %p365 = scmp.eq.s32.totalorder %s30, 0
    %p366 = por %p364, %p365
    %p367 = scmp.ne.s32.totalorder %s355, %s356
    %p368 = scmp.eq.s32.totalorder %s31, 1
    %p369 = por %p367, %p368
    %p371 = scmp.ne.s32.totalorder %s356, %s370
    %p372 = scmp.eq.s32.totalorder %s31, 0
    %p373 = por %p371, %p372
    %s375 = sadd.s32 %s374, 1
    %p378 = scmp.eq.s32.totalorder %s25, 1
    %p379 = scmp.ne.s32.totalorder %s374, %s376
    %p380 = scmp.eq.s32.totalorder %s25, 0
    %p381 = por %p379, %p380
    %p382 = scmp.ne.s32.totalorder %s374, %s376
    %p383 = scmp.eq.s32.totalorder %s30, 1
    %p384 = por %p382, %p383
    %p385 = scmp.ne.s32.totalorder %s376, %s377
    %p386 = scmp.eq.s32.totalorder %s30, 0
    %p387 = por %p385, %p386
    %p388 = scmp.ne.s32.totalorder %s376, %s377
    %p389 = scmp.eq.s32.totalorder %s31, 1
    %p390 = por %p388, %p389
    %p392 = scmp.ne.s32.totalorder %s377, %s391
    %p393 = scmp.eq.s32.totalorder %s31, 0
    %p394 = por %p392, %p393
    %s396 = sadd.s32 %s395, 1
    %p399 = scmp.eq.s32.totalorder %s25, 1
    %p400 = scmp.ne.s32.totalorder %s395, %s397
    %p401 = scmp.eq.s32.totalorder %s25, 0
    %p402 = por %p400, %p401
    %p403 = scmp.ne.s32.totalorder %s395, %s397
    %p404 = scmp.eq.s32.totalorder %s30, 1
    %p405 = por %p403, %p404
    %p406 = scmp.ne.s32.totalorder %s397, %s398
    %p407 = scmp.eq.s32.totalorder %s30, 0
    %p408 = por %p406, %p407
    %p409 = scmp.ne.s32.totalorder %s397, %s398
    %p410 = scmp.eq.s32.totalorder %s31, 1
    %p411 = por %p409, %p410
    %p413 = scmp.ne.s32.totalorder %s398, %s412
    %p414 = scmp.eq.s32.totalorder %s31, 0
    %p415 = por %p413, %p414
    %s417 = sadd.s32 %s416, 1
    %p420 = scmp.eq.s32.totalorder %s25, 1
    %p421 = scmp.ne.s32.totalorder %s416, %s418
    %p422 = scmp.eq.s32.totalorder %s25, 0
    %p423 = por %p421, %p422
    %p424 = scmp.ne.s32.totalorder %s416, %s418
    %p425 = scmp.eq.s32.totalorder %s30, 1
    %p426 = por %p424, %p425
    %p427 = scmp.ne.s32.totalorder %s418, %s419
    %p428 = scmp.eq.s32.totalorder %s30, 0
    %p429 = por %p427, %p428
    %p430 = scmp.ne.s32.totalorder %s418, %s419
    %p431 = scmp.eq.s32.totalorder %s31, 1
    %p432 = por %p430, %p431
    %p434 = scmp.ne.s32.totalorder %s419, %s433
    %p435 = scmp.eq.s32.totalorder %s31, 0
    %p436 = por %p434, %p435
    %s437 = ssub.s32 %s25, %s32
    %p438 = scmp.eq.s32.totalorder %s437, 0
    %s440 = sadd.s32 %s439, 1
    %s441 = scalar_select %p438, %s439, %s440
    %p444 = pneg %p438
    %p445 = scmp.eq.s32.totalorder %s25, 1
    %p446 = por %p444, %p445
    %p447 = scmp.ne.s32.totalorder %s439, %s442
    %p448 = scmp.eq.s32.totalorder %s25, 0
    %p449 = por %p447, %p448
    %p450 = scmp.ne.s32.totalorder %s439, %s442
    %p451 = scmp.eq.s32.totalorder %s30, 1
    %p452 = por %p450, %p451
    %p453 = scmp.ne.s32.totalorder %s442, %s443
    %p454 = scmp.eq.s32.totalorder %s30, 0
    %p455 = por %p453, %p454
    %p456 = scmp.ne.s32.totalorder %s442, %s443
    %p457 = scmp.eq.s32.totalorder %s31, 1
    %p458 = por %p456, %p457
    %p460 = scmp.ne.s32.totalorder %s443, %s459
    %p461 = scmp.eq.s32.totalorder %s31, 0
    %p462 = por %p460, %p461
    %p463 = scmp.le.s32.totalorder 1, %s25
    %p464 = scmp.lt.s32.totalorder %s25, 3
    %p465 = pnand %p463, %p464
    %p466 = pneg %p465
    // Predicated region
    $region9: #{_lambda_.6} parent=5 // pred_check
      _
    $region10: #{_lambda_.6} parent=5 // pred_check_branch
      %468 = sbr.rel (%p465) target = $region12
    $region11: #{_lambda_.6} parent=5 // pred_region
      %s469 = ssub.s32 %s25, 1
      // Predicated region
      $region13: #{_lambda_.6} parent=11 // pred_check
        %p470 = pneg %p72
      $region14: #{_lambda_.6} parent=11 // pred_check_branch
        %472 = sbr.rel (%p470) target = $region16
      $region15: #{_lambda_.6} parent=11 // pred_region
        _
      $region16: #{_lambda_.6} parent=11 // pred_fallthru
        _
      // Predicated region
      $region17: #{_lambda_.6} parent=11 // pred_check
        %p473 = pneg %p93
      $region18: #{_lambda_.6} parent=11 // pred_check_branch
        %475 = sbr.rel (%p473) target = $region20
      $region19: #{_lambda_.6} parent=11 // pred_region
        _
      $region20: #{_lambda_.6} parent=11 // pred_fallthru
        _
      // Predicated region
      $region21: #{_lambda_.6} parent=11 // pred_check
        %p476 = pneg %p114
      $region22: #{_lambda_.6} parent=11 // pred_check_branch
        %478 = sbr.rel (%p476) target = $region24
      $region23: #{_lambda_.6} parent=11 // pred_region
        _
      $region24: #{_lambda_.6} parent=11 // pred_fallthru
        _
      // Predicated region
      $region25: #{_lambda_.6} parent=11 // pred_check
        %p479 = pneg %p135
      $region26: #{_lambda_.6} parent=11 // pred_check_branch
        %481 = sbr.rel (%p479) target = $region28
      $region27: #{_lambda_.6} parent=11 // pred_region
        _
      $region28: #{_lambda_.6} parent=11 // pred_fallthru
        _
      // Predicated region
      $region29: #{_lambda_.6} parent=11 // pred_check
        %p482 = pneg %p156
      $region30: #{_lambda_.6} parent=11 // pred_check_branch
        %484 = sbr.rel (%p482) target = $region32
      $region31: #{_lambda_.6} parent=11 // pred_region
        _
      $region32: #{_lambda_.6} parent=11 // pred_fallthru
        _
      // Predicated region
      $region33: #{_lambda_.6} parent=11 // pred_check
        %p485 = pneg %p177
      $region34: #{_lambda_.6} parent=11 // pred_check_branch
        %487 = sbr.rel (%p485) target = $region36
      $region35: #{_lambda_.6} parent=11 // pred_region
        _
      $region36: #{_lambda_.6} parent=11 // pred_fallthru
        _
      // Predicated region
      $region37: #{_lambda_.6} parent=11 // pred_check
        %p488 = pneg %p198
      $region38: #{_lambda_.6} parent=11 // pred_check_branch
        %490 = sbr.rel (%p488) target = $region40
      $region39: #{_lambda_.6} parent=11 // pred_region
        _
      $region40: #{_lambda_.6} parent=11 // pred_fallthru
        _
      // Predicated region
      $region41: #{_lambda_.6} parent=11 // pred_check
        %p491 = pneg %p219
      $region42: #{_lambda_.6} parent=11 // pred_check_branch
        %493 = sbr.rel (%p491) target = $region44
      $region43: #{_lambda_.6} parent=11 // pred_region
        _
      $region44: #{_lambda_.6} parent=11 // pred_fallthru
        _
      // Predicated region
      $region45: #{_lambda_.6} parent=11 // pred_check
        %p494 = pneg %p240
      $region46: #{_lambda_.6} parent=11 // pred_check_branch
        %496 = sbr.rel (%p494) target = $region48
      $region47: #{_lambda_.6} parent=11 // pred_region
        _
      $region48: #{_lambda_.6} parent=11 // pred_fallthru
        _
      // Predicated region
      $region49: #{_lambda_.6} parent=11 // pred_check
        %p497 = pneg %p261
      $region50: #{_lambda_.6} parent=11 // pred_check_branch
        %499 = sbr.rel (%p497) target = $region52
      $region51: #{_lambda_.6} parent=11 // pred_region
        _
      $region52: #{_lambda_.6} parent=11 // pred_fallthru
        _
      // Predicated region
      $region53: #{_lambda_.6} parent=11 // pred_check
        %p500 = pneg %p282
      $region54: #{_lambda_.6} parent=11 // pred_check_branch
        %502 = sbr.rel (%p500) target = $region56
      $region55: #{_lambda_.6} parent=11 // pred_region
        _
      $region56: #{_lambda_.6} parent=11 // pred_fallthru
        _
      // Predicated region
      $region57: #{_lambda_.6} parent=11 // pred_check
        %p503 = pneg %p303
      $region58: #{_lambda_.6} parent=11 // pred_check_branch
        %505 = sbr.rel (%p503) target = $region60
      $region59: #{_lambda_.6} parent=11 // pred_region
        _
      $region60: #{_lambda_.6} parent=11 // pred_fallthru
        _
      // Predicated region
      $region61: #{_lambda_.6} parent=11 // pred_check
        %p506 = pneg %p324
      $region62: #{_lambda_.6} parent=11 // pred_check_branch
        %508 = sbr.rel (%p506) target = $region64
      $region63: #{_lambda_.6} parent=11 // pred_region
        _
      $region64: #{_lambda_.6} parent=11 // pred_fallthru
        _
      // Predicated region
      $region65: #{_lambda_.6} parent=11 // pred_check
        %p509 = pneg %p345
      $region66: #{_lambda_.6} parent=11 // pred_check_branch
        %511 = sbr.rel (%p509) target = $region68
      $region67: #{_lambda_.6} parent=11 // pred_region
        _
      $region68: #{_lambda_.6} parent=11 // pred_fallthru
        _
      // Predicated region
      $region69: #{_lambda_.6} parent=11 // pred_check
        %p512 = pneg %p366
      $region70: #{_lambda_.6} parent=11 // pred_check_branch
        %514 = sbr.rel (%p512) target = $region72
      $region71: #{_lambda_.6} parent=11 // pred_region
        _
      $region72: #{_lambda_.6} parent=11 // pred_fallthru
        _
      // Predicated region
      $region73: #{_lambda_.6} parent=11 // pred_check
        %p515 = pneg %p387
      $region74: #{_lambda_.6} parent=11 // pred_check_branch
        %517 = sbr.rel (%p515) target = $region76
      $region75: #{_lambda_.6} parent=11 // pred_region
        _
      $region76: #{_lambda_.6} parent=11 // pred_fallthru
        _
      // Predicated region
      $region77: #{_lambda_.6} parent=11 // pred_check
        %p518 = pneg %p408
      $region78: #{_lambda_.6} parent=11 // pred_check_branch
        %520 = sbr.rel (%p518) target = $region80
      $region79: #{_lambda_.6} parent=11 // pred_region
        _
      $region80: #{_lambda_.6} parent=11 // pred_fallthru
        _
      // Predicated region
      $region81: #{_lambda_.6} parent=11 // pred_check
        %p521 = pneg %p429
      $region82: #{_lambda_.6} parent=11 // pred_check_branch
        %523 = sbr.rel (%p521) target = $region84
      $region83: #{_lambda_.6} parent=11 // pred_region
        _
      $region84: #{_lambda_.6} parent=11 // pred_fallthru
        _
    $region12: #{_lambda_.6} parent=5 // pred_fallthru
      _
    %p524 = scmp.lt.s32.totalorder %s25, 2
    // Predicated region
    $region85: #{_lambda_.6} parent=5 // pred_check
      %p525 = pneg %p524
    $region86: #{_lambda_.6} parent=5 // pred_check_branch
      %527 = sbr.rel (%p525) target = $region88
    $region87: #{_lambda_.6} parent=5 // pred_region
      // Predicated region
      $region89: #{_lambda_.6} parent=87 // pred_check
        %p528 = pneg %p45
      $region90: #{_lambda_.6} parent=87 // pred_check_branch
        %530 = sbr.rel (%p528) target = $region92
      $region91: #{_lambda_.6} parent=87 // pred_region
        %p531 = scmp.lt.s32.totalorder %s25, 1
        %s532 = scalar_select %p531, %s25, 1
        %s533 = smul.addr %s532, 8
        %s534 = scalar_lea.vmem %s0, %s533
      $region92: #{_lambda_.6} parent=87 // pred_fallthru
        _
    $region88: #{_lambda_.6} parent=5 // pred_fallthru
      _
    %p535 = scmp.le.s32.totalorder 1, %s25
    %p536 = scmp.lt.s32.totalorder %s25, 3
    %p537 = pnand %p535, %p536
    %p538 = pneg %p537
    // Predicated region
    $region93: #{_lambda_.6} parent=5 // pred_check
      _
    $region94: #{_lambda_.6} parent=5 // pred_check_branch
      %540 = sbr.rel (%p537) target = $region96
    $region95: #{_lambda_.6} parent=5 // pred_region
      %s541 = ssub.s32 %s25, 1
      %p542 = scmp.lt.s32.totalorder %s30, 1
      %s543 = scalar_select %p542, %s30, 1
      %s544 = smul.addr %s543, 8
      %s545 = scalar_lea.vmem %s0, %s544
      %p546 = pneg %p51
      %p547 = pneg %p48
      %p548 = pneg %p72
      %p549 = pneg %p69
      %p550 = pneg %p93
      %p551 = pneg %p90
      %p552 = pneg %p114
      %p553 = pneg %p111
      %p554 = pneg %p135
      %p555 = pneg %p132
      %p556 = pneg %p156
      %p557 = pneg %p153
      %p558 = pneg %p177
      %p559 = pneg %p174
      %p560 = pneg %p198
      %p561 = pneg %p195
      %p562 = pneg %p219
      %p563 = pneg %p216
      %p564 = pneg %p240
      %p565 = pneg %p237
      %p566 = pneg %p261
      %p567 = pneg %p258
      %p568 = pneg %p282
      %p569 = pneg %p279
      %p570 = pneg %p303
      %p571 = pneg %p300
      %p572 = pneg %p324
      %p573 = pneg %p321
      %p574 = pneg %p345
      %p575 = pneg %p342
      %p576 = pneg %p366
      %p577 = pneg %p363
      %p578 = pneg %p387
      %p579 = pneg %p384
      %p580 = pneg %p408
      %p581 = pneg %p405
      %p582 = pneg %p429
      %p583 = pneg %p426
      %p584 = pneg %p455
      %p585 = pneg %p452
      %p586 = scmp.lt.s32.totalorder %s30, 1
      %s587 = scalar_select %p586, %s30, 1
      %s588 = smul.addr %s587, 8
      %s589 = scalar_lea.vmem %s19, %s588
      %p590 = scmp.lt.s32.totalorder %s30, 1
      %s591 = scalar_select %p590, %s30, 1
      %s592 = smul.addr %s591, 8
      %s593 = scalar_lea.vmem %s0, %s592
      %p594 = scmp.lt.s32.totalorder %s30, 1
      %s595 = scalar_select %p594, %s30, 1
      %s596 = smul.addr %s595, 8
      %s597 = scalar_lea.vmem %s19, %s596
      %v598 = vld [vmem:[%s593] sm:$0xff]
      %v599 = vld [vmem:[%s1] sm:$0xff]
      %v600 = vld [vmem:[%s1 + $0x8] sm:$0xff]
      %v601 = vld [vmem:[%s1 + $0x10] sm:$0xff]
      %v602 = vld [vmem:[%s1 + $0x18] sm:$0xff]
      %v603 = vld [vmem:[%s1 + $0x20] sm:$0xff]
      %v604 = vld [vmem:[%s1 + $0x28] sm:$0xff]
      %v605 = vld [vmem:[%s1 + $0x30] sm:$0xff]
      %v606 = vld [vmem:[%s1 + $0x38] sm:$0xff]
      %vm607 = vcmask 523264
      %v609 = vsel %vm607, %v598, 0
      %611 = vmatprep.subr.mxu0 0.0
      %612 = vmatpush1.msra.mxu0 0.0
      %613 = vmatprep.subr.mxu0 0.0
      %614 = vmatpush1.msra.mxu0 0.0
      %615 = vmatprep.subr.mxu0 0.0
      %616 = vmatpush1.msra.mxu0 0.0
      %617 = vmatprep.subr.mxu0 0.0
      %618 = vmatpush1.msra.mxu0 0.0
      %619 = vmatprep.subr.mxu0 0.0
      %620 = vmatpush1.msra.mxu0 0.0
      %621 = vmatprep.subr.mxu0 0.0
      %622 = vmatpush1.msra.mxu0 0.0
      %623 = vmatprep.subr.mxu0 0.0
      %624 = vmatpush1.msra.mxu0 0.0
      %625 = vmatprep.subr.mxu0 0.0
      %626 = vmatpush1.msra.mxu0 0.0
      %627 = vmatprep.subr.mxu0 0.0
      %628 = vmatpush1.msra.mxu0 %v606
      %629 = vmatprep.subr.mxu0 0.0
      %630 = vmatpush1.msra.mxu0 %v605
      %631 = vmatprep.subr.mxu0 0.0
      %632 = vmatpush1.msra.mxu0 %v604
      %633 = vmatprep.subr.mxu0 0.0
      %634 = vmatpush1.msra.mxu0 %v603
      %635 = vmatprep.subr.mxu0 0.0
      %636 = vmatpush1.msra.mxu0 %v602
      %637 = vmatprep.subr.mxu0 0.0
      %638 = vmatpush1.msra.mxu0 %v601
      %639 = vmatprep.subr.mxu0 0.0
      %640 = vmatpush1.msra.mxu0 %v600
      %641 = vmatprep.subr.mxu0 0.0
      %642 = vmatpush1.msra.mxu0 %v599
      %643 = vmatprep.subr.mxu0 0.0
      %644 = vmatpush2.msra.mxu0 0.0
      %645 = vmatprep.subr.mxu0 0.0
      %646 = vmatpush2.msra.mxu0 0.0
      %647 = vmatprep.subr.mxu0 0.0
      %648 = vmatpush2.msra.mxu0 0.0
      %649 = vmatprep.subr.mxu0 0.0
      %650 = vmatpush2.msra.mxu0 0.0
      %651 = vmatprep.subr.mxu0 0.0
      %652 = vmatpush2.msra.mxu0 0.0
      %653 = vmatprep.subr.mxu0 0.0
      %654 = vmatpush2.msra.mxu0 0.0
      %655 = vmatprep.subr.mxu0 0.0
      %656 = vmatpush2.msra.mxu0 0.0
      %657 = vmatprep.subr.mxu0 0.0
      %658 = vmatpush2.msra.mxu0 0.0
      %659 = vmatprep.subr.mxu0 0.0
      %660 = vmatpush2.msra.mxu0 0.0
      %661 = vmatprep.subr.mxu0 0.0
      %662 = vmatpush2.msra.mxu0 0.0
      %663 = vmatprep.subr.mxu0 0.0
      %664 = vmatpush2.msra.mxu0 0.0
      %665 = vmatprep.subr.mxu0 0.0
      %666 = vmatpush2.msra.mxu0 0.0
      %667 = vmatprep.subr.mxu0 0.0
      %668 = vmatpush2.msra.mxu0 0.0
      %669 = vmatprep.subr.mxu0 0.0
      %670 = vmatpush2.msra.mxu0 0.0
      %671 = vmatprep.subr.mxu0 0.0
      %672 = vmatpush2.msra.mxu0 0.0
      %673 = vmatprep.subr.mxu0 0.0
      %674 = vmatpush2.msra.mxu0 0.0
      %675 = vmatprep.mubr.f32.mxu0 0.0
      %676 = vmatmul.mubr.f32.gmra.mxu0 %v609
      %v677 = vpop.f32.mrf.mxu0
      %v678 = vadd.f32 0.0, %v677
      %v679 = vpop.f32.mrf.mxu0
      %680 = vdwg.mxu0
      %v681 = vld [vmem:[%s3] sm:$0xff]
      %s682 = scalar_lea.vmem %s1, 64
      %v683 = vld [vmem:[%s682] sm:$0xff]
      %v684 = vld [vmem:[%s682 + $0x8] sm:$0xff]
      %v685 = vld [vmem:[%s682 + $0x10] sm:$0xff]
      %v686 = vld [vmem:[%s682 + $0x18] sm:$0xff]
      %v687 = vld [vmem:[%s682 + $0x20] sm:$0xff]
      %v688 = vld [vmem:[%s682 + $0x28] sm:$0xff]
      %v689 = vld [vmem:[%s682 + $0x30] sm:$0xff]
      %v690 = vld [vmem:[%s682 + $0x38] sm:$0xff]
      %691 = vmatprep.subr.mxu0 0.0
      %692 = vmatpush1.msra.mxu0 0.0
      %693 = vmatprep.subr.mxu0 0.0
      %694 = vmatpush1.msra.mxu0 0.0
      %695 = vmatprep.subr.mxu0 0.0
      %696 = vmatpush1.msra.mxu0 0.0
      %697 = vmatprep.subr.mxu0 0.0
      %698 = vmatpush1.msra.mxu0 0.0
      %699 = vmatprep.subr.mxu0 0.0
      %700 = vmatpush1.msra.mxu0 0.0
      %701 = vmatprep.subr.mxu0 0.0
      %702 = vmatpush1.msra.mxu0 0.0
      %703 = vmatprep.subr.mxu0 0.0
      %704 = vmatpush1.msra.mxu0 0.0
      %705 = vmatprep.subr.mxu0 0.0
      %706 = vmatpush1.msra.mxu0 0.0
      %707 = vmatprep.subr.mxu0 0.0
      %708 = vmatpush1.msra.mxu0 %v690
      %709 = vmatprep.subr.mxu0 0.0
      %710 = vmatpush1.msra.mxu0 %v689
      %711 = vmatprep.subr.mxu0 0.0
      %712 = vmatpush1.msra.mxu0 %v688
      %713 = vmatprep.subr.mxu0 0.0
      %714 = vmatpush1.msra.mxu0 %v687
      %715 = vmatprep.subr.mxu0 0.0
      %716 = vmatpush1.msra.mxu0 %v686
      %717 = vmatprep.subr.mxu0 0.0
      %718 = vmatpush1.msra.mxu0 %v685
      %719 = vmatprep.subr.mxu0 0.0
      %720 = vmatpush1.msra.mxu0 %v684
      %721 = vmatprep.subr.mxu0 0.0
      %722 = vmatpush1.msra.mxu0 %v683
      %723 = vmatprep.subr.mxu0 0.0
      %724 = vmatpush2.msra.mxu0 0.0
      %725 = vmatprep.subr.mxu0 0.0
      %726 = vmatpush2.msra.mxu0 0.0
      %727 = vmatprep.subr.mxu0 0.0
      %728 = vmatpush2.msra.mxu0 0.0
      %729 = vmatprep.subr.mxu0 0.0
      %730 = vmatpush2.msra.mxu0 0.0
      %731 = vmatprep.subr.mxu0 0.0
      %732 = vmatpush2.msra.mxu0 0.0
      %733 = vmatprep.subr.mxu0 0.0
      %734 = vmatpush2.msra.mxu0 0.0
      %735 = vmatprep.subr.mxu0 0.0
      %736 = vmatpush2.msra.mxu0 0.0
      %737 = vmatprep.subr.mxu0 0.0
      %738 = vmatpush2.msra.mxu0 0.0
      %739 = vmatprep.subr.mxu0 0.0
      %740 = vmatpush2.msra.mxu0 0.0
      %741 = vmatprep.subr.mxu0 0.0
      %742 = vmatpush2.msra.mxu0 0.0
      %743 = vmatprep.subr.mxu0 0.0
      %744 = vmatpush2.msra.mxu0 0.0
      %745 = vmatprep.subr.mxu0 0.0
      %746 = vmatpush2.msra.mxu0 0.0
      %747 = vmatprep.subr.mxu0 0.0
      %748 = vmatpush2.msra.mxu0 0.0
      %749 = vmatprep.subr.mxu0 0.0
      %750 = vmatpush2.msra.mxu0 0.0
      %751 = vmatprep.subr.mxu0 0.0
      %752 = vmatpush2.msra.mxu0 0.0
      %753 = vmatprep.subr.mxu0 0.0
      %754 = vmatpush2.msra.mxu0 0.0
      %755 = vmatprep.mubr.f32.mxu0 0.0
      %756 = vmatmul.mubr.f32.gmra.mxu0 %v609
      %v757 = vpop.f32.mrf.mxu0
      %v758 = vadd.f32 0.0, %v757
      %v759 = vpop.f32.mrf.mxu0
      %760 = vdwg.mxu0
      %s761 = scalar_lea.vmem %s3, 8
      %v762 = vld [vmem:[%s761] sm:$0xff]
      %vm763 = vcmask 64512
      %v765 = vsel %vm763, %v762, 0
      %767 = vmatprep.subr.mxu0 0.0
      %768 = vmatpush1.msra.mxu0 0.0
      %769 = vmatprep.subr.mxu0 0.0
      %770 = vmatpush1.msra.mxu0 0.0
      %771 = vmatprep.subr.mxu0 0.0
      %772 = vmatpush1.msra.mxu0 0.0
      %773 = vmatprep.subr.mxu0 0.0
      %774 = vmatpush1.msra.mxu0 0.0
      %775 = vmatprep.subr.mxu0 0.0
      %776 = vmatpush1.msra.mxu0 0.0
      %777 = vmatprep.subr.mxu0 0.0
      %778 = vmatpush1.msra.mxu0 0.0
      %779 = vmatprep.subr.mxu0 0.0
      %780 = vmatpush1.msra.mxu0 0.0
      %781 = vmatprep.subr.mxu0 0.0
      %782 = vmatpush1.msra.mxu0 0.0
      %783 = vmatprep.subr.mxu0 0.0
      %784 = vmatpush1.msra.mxu0 0.0
      %785 = vmatprep.subr.mxu0 0.0
      %786 = vmatpush1.msra.mxu0 0.0
      %787 = vmatprep.subr.mxu0 0.0
      %788 = vmatpush1.msra.mxu0 0.0
      %789 = vmatprep.subr.mxu0 0.0
      %790 = vmatpush1.msra.mxu0 0.0
      %791 = vmatprep.subr.mxu0 0.0
      %792 = vmatpush1.msra.mxu0 0.0
      %793 = vmatprep.subr.mxu0 0.0
      %794 = vmatpush1.msra.mxu0 0.0
      %795 = vmatprep.subr.mxu0 0.0
      %796 = vmatpush1.msra.mxu0 0.0
      %797 = vmatprep.subr.mxu0 0.0
      %798 = vmatpush1.msra.mxu0 %v758
      %799 = vmatprep.subr.mxu0 0.0
      %800 = vmatpush2.msra.mxu0 0.0
      %801 = vmatprep.subr.mxu0 0.0
      %802 = vmatpush2.msra.mxu0 0.0
      %803 = vmatprep.subr.mxu0 0.0
      %804 = vmatpush2.msra.mxu0 0.0
      %805 = vmatprep.subr.mxu0 0.0
      %806 = vmatpush2.msra.mxu0 0.0
      %807 = vmatprep.subr.mxu0 0.0
      %808 = vmatpush2.msra.mxu0 0.0
      %809 = vmatprep.subr.mxu0 0.0
      %810 = vmatpush2.msra.mxu0 0.0
      %811 = vmatprep.subr.mxu0 0.0
      %812 = vmatpush2.msra.mxu0 0.0
      %813 = vmatprep.subr.mxu0 0.0
      %814 = vmatpush2.msra.mxu0 0.0
      %815 = vmatprep.subr.mxu0 0.0
      %816 = vmatpush2.msra.mxu0 0.0
      %817 = vmatprep.subr.mxu0 0.0
      %818 = vmatpush2.msra.mxu0 0.0
      %819 = vmatprep.subr.mxu0 0.0
      %820 = vmatpush2.msra.mxu0 0.0
      %821 = vmatprep.subr.mxu0 0.0
      %822 = vmatpush2.msra.mxu0 0.0
      %823 = vmatprep.subr.mxu0 0.0
      %824 = vmatpush2.msra.mxu0 0.0
      %825 = vmatprep.subr.mxu0 0.0
      %826 = vmatpush2.msra.mxu0 0.0
      %827 = vmatprep.subr.mxu0 0.0
      %828 = vmatpush2.msra.mxu0 0.0
      %829 = vmatprep.subr.mxu0 0.0
      %830 = vmatpush2.msra.mxu0 0.0
      %831 = vmatprep.mubr.f32.mxu0 0.0
      %832 = vmatmul.mubr.f32.gmra.mxu0 %v765
      %v833 = vpop.f32.mrf.mxu0
      %v834 = vadd.f32 0.0, %v833
      %v835 = vpop.f32.mrf.mxu0
      %836 = vdwg.mxu0
      %v838 = vsel %vm763, %v681, 0
      %840 = vmatprep.subr.mxu0 0.0
      %841 = vmatpush1.msra.mxu0 0.0
      %842 = vmatprep.subr.mxu0 0.0
      %843 = vmatpush1.msra.mxu0 0.0
      %844 = vmatprep.subr.mxu0 0.0
      %845 = vmatpush1.msra.mxu0 0.0
      %846 = vmatprep.subr.mxu0 0.0
      %847 = vmatpush1.msra.mxu0 0.0
      %848 = vmatprep.subr.mxu0 0.0
      %849 = vmatpush1.msra.mxu0 0.0
      %850 = vmatprep.subr.mxu0 0.0
      %851 = vmatpush1.msra.mxu0 0.0
      %852 = vmatprep.subr.mxu0 0.0
      %853 = vmatpush1.msra.mxu0 0.0
      %854 = vmatprep.subr.mxu0 0.0
      %855 = vmatpush1.msra.mxu0 0.0
      %856 = vmatprep.subr.mxu0 0.0
      %857 = vmatpush1.msra.mxu0 0.0
      %858 = vmatprep.subr.mxu0 0.0
      %859 = vmatpush1.msra.mxu0 0.0
      %860 = vmatprep.subr.mxu0 0.0
      %861 = vmatpush1.msra.mxu0 0.0
      %862 = vmatprep.subr.mxu0 0.0
      %863 = vmatpush1.msra.mxu0 0.0
      %864 = vmatprep.subr.mxu0 0.0
      %865 = vmatpush1.msra.mxu0 0.0
      %866 = vmatprep.subr.mxu0 0.0
      %867 = vmatpush1.msra.mxu0 0.0
      %868 = vmatprep.subr.mxu0 0.0
      %869 = vmatpush1.msra.mxu0 0.0
      %870 = vmatprep.subr.mxu0 0.0
      %871 = vmatpush1.msra.mxu0 %v678
      %872 = vmatprep.subr.mxu0 0.0
      %873 = vmatpush2.msra.mxu0 0.0
      %874 = vmatprep.subr.mxu0 0.0
      %875 = vmatpush2.msra.mxu0 0.0
      %876 = vmatprep.subr.mxu0 0.0
      %877 = vmatpush2.msra.mxu0 0.0
      %878 = vmatprep.subr.mxu0 0.0
      %879 = vmatpush2.msra.mxu0 0.0
      %880 = vmatprep.subr.mxu0 0.0
      %881 = vmatpush2.msra.mxu0 0.0
      %882 = vmatprep.subr.mxu0 0.0
      %883 = vmatpush2.msra.mxu0 0.0
      %884 = vmatprep.subr.mxu0 0.0
      %885 = vmatpush2.msra.mxu0 0.0
      %886 = vmatprep.subr.mxu0 0.0
      %887 = vmatpush2.msra.mxu0 0.0
      %888 = vmatprep.subr.mxu0 0.0
      %889 = vmatpush2.msra.mxu0 0.0
      %890 = vmatprep.subr.mxu0 0.0
      %891 = vmatpush2.msra.mxu0 0.0
      %892 = vmatprep.subr.mxu0 0.0
      %893 = vmatpush2.msra.mxu0 0.0
      %894 = vmatprep.subr.mxu0 0.0
      %895 = vmatpush2.msra.mxu0 0.0
      %896 = vmatprep.subr.mxu0 0.0
      %897 = vmatpush2.msra.mxu0 0.0
      %898 = vmatprep.subr.mxu0 0.0
      %899 = vmatpush2.msra.mxu0 0.0
      %900 = vmatprep.subr.mxu0 0.0
      %901 = vmatpush2.msra.mxu0 0.0
      %902 = vmatprep.subr.mxu0 0.0
      %903 = vmatpush2.msra.mxu0 0.0
      %904 = vmatprep.mubr.f32.mxu0 0.0
      %905 = vmatmul.mubr.f32.gmra.mxu0 %v838
      %v906 = vpop.f32.mrf.mxu0
      %v907 = vadd.f32 %v834, %v906
      %v908 = vpop.f32.mrf.mxu0
      %909 = vdwg.mxu0
      %s910 = scalar_lea.vmem %s1, 128
      %v911 = vld [vmem:[%s910] sm:$0xff]
      %v912 = vld [vmem:[%s910 + $0x8] sm:$0xff]
      %v913 = vld [vmem:[%s910 + $0x10] sm:$0xff]
      %v914 = vld [vmem:[%s910 + $0x18] sm:$0xff]
      %v915 = vld [vmem:[%s910 + $0x20] sm:$0xff]
      %v916 = vld [vmem:[%s910 + $0x28] sm:$0xff]
      %v917 = vld [vmem:[%s910 + $0x30] sm:$0xff]
      %v918 = vld [vmem:[%s910 + $0x38] sm:$0xff]
      %919 = vmatprep.subr.mxu0 0.0
      %920 = vmatpush1.msra.mxu0 0.0
      %921 = vmatprep.subr.mxu0 0.0
      %922 = vmatpush1.msra.mxu0 0.0
      %923 = vmatprep.subr.mxu0 0.0
      %924 = vmatpush1.msra.mxu0 0.0
      %925 = vmatprep.subr.mxu0 0.0
      %926 = vmatpush1.msra.mxu0 0.0
      %927 = vmatprep.subr.mxu0 0.0
      %928 = vmatpush1.msra.mxu0 0.0
      %929 = vmatprep.subr.mxu0 0.0
      %930 = vmatpush1.msra.mxu0 0.0
      %931 = vmatprep.subr.mxu0 0.0
      %932 = vmatpush1.msra.mxu0 0.0
      %933 = vmatprep.subr.mxu0 0.0
      %934 = vmatpush1.msra.mxu0 0.0
      %935 = vmatprep.subr.mxu0 0.0
      %936 = vmatpush1.msra.mxu0 %v918
      %937 = vmatprep.subr.mxu0 0.0
      %938 = vmatpush1.msra.mxu0 %v917
      %939 = vmatprep.subr.mxu0 0.0
      %940 = vmatpush1.msra.mxu0 %v916
      %941 = vmatprep.subr.mxu0 0.0
      %942 = vmatpush1.msra.mxu0 %v915
      %943 = vmatprep.subr.mxu0 0.0
      %944 = vmatpush1.msra.mxu0 %v914
      %945 = vmatprep.subr.mxu0 0.0
      %946 = vmatpush1.msra.mxu0 %v913
      %947 = vmatprep.subr.mxu0 0.0
      %948 = vmatpush1.msra.mxu0 %v912
      %949 = vmatprep.subr.mxu0 0.0
      %950 = vmatpush1.msra.mxu0 %v911
      %951 = vmatprep.subr.mxu0 0.0
      %952 = vmatpush2.msra.mxu0 0.0
      %953 = vmatprep.subr.mxu0 0.0
      %954 = vmatpush2.msra.mxu0 0.0
      %955 = vmatprep.subr.mxu0 0.0
      %956 = vmatpush2.msra.mxu0 0.0
      %957 = vmatprep.subr.mxu0 0.0
      %958 = vmatpush2.msra.mxu0 0.0
      %959 = vmatprep.subr.mxu0 0.0
      %960 = vmatpush2.msra.mxu0 0.0
      %961 = vmatprep.subr.mxu0 0.0
      %962 = vmatpush2.msra.mxu0 0.0
      %963 = vmatprep.subr.mxu0 0.0
      %964 = vmatpush2.msra.mxu0 0.0
      %965 = vmatprep.subr.mxu0 0.0
      %966 = vmatpush2.msra.mxu0 0.0
      %967 = vmatprep.subr.mxu0 0.0
      %968 = vmatpush2.msra.mxu0 0.0
      %969 = vmatprep.subr.mxu0 0.0
      %970 = vmatpush2.msra.mxu0 0.0
      %971 = vmatprep.subr.mxu0 0.0
      %972 = vmatpush2.msra.mxu0 0.0
      %973 = vmatprep.subr.mxu0 0.0
      %974 = vmatpush2.msra.mxu0 0.0
      %975 = vmatprep.subr.mxu0 0.0
      %976 = vmatpush2.msra.mxu0 0.0
      %977 = vmatprep.subr.mxu0 0.0
      %978 = vmatpush2.msra.mxu0 0.0
      %979 = vmatprep.subr.mxu0 0.0
      %980 = vmatpush2.msra.mxu0 0.0
      %981 = vmatprep.subr.mxu0 0.0
      %982 = vmatpush2.msra.mxu0 0.0
      %983 = vmatprep.mubr.f32.mxu0 0.0
      %984 = vmatmul.mubr.f32.gmra.mxu0 %v609
      %v985 = vpop.f32.mrf.mxu0
      %v986 = vadd.f32 0.0, %v985
      %v987 = vpop.f32.mrf.mxu0
      %988 = vdwg.mxu0
      %s989 = scalar_lea.vmem %s3, 16
      %v990 = vld [vmem:[%s989] sm:$0xff]
      %v992 = vsel %vm763, %v990, 0
      %994 = vmatprep.subr.mxu0 0.0
      %995 = vmatpush1.msra.mxu0 0.0
      %996 = vmatprep.subr.mxu0 0.0
      %997 = vmatpush1.msra.mxu0 0.0
      %998 = vmatprep.subr.mxu0 0.0
      %999 = vmatpush1.msra.mxu0 0.0
      %1000 = vmatprep.subr.mxu0 0.0
      %1001 = vmatpush1.msra.mxu0 0.0
      %1002 = vmatprep.subr.mxu0 0.0
      %1003 = vmatpush1.msra.mxu0 0.0
      %1004 = vmatprep.subr.mxu0 0.0
      %1005 = vmatpush1.msra.mxu0 0.0
      %1006 = vmatprep.subr.mxu0 0.0
      %1007 = vmatpush1.msra.mxu0 0.0
      %1008 = vmatprep.subr.mxu0 0.0
      %1009 = vmatpush1.msra.mxu0 0.0
      %1010 = vmatprep.subr.mxu0 0.0
      %1011 = vmatpush1.msra.mxu0 0.0
      %1012 = vmatprep.subr.mxu0 0.0
      %1013 = vmatpush1.msra.mxu0 0.0
      %1014 = vmatprep.subr.mxu0 0.0
      %1015 = vmatpush1.msra.mxu0 0.0
      %1016 = vmatprep.subr.mxu0 0.0
      %1017 = vmatpush1.msra.mxu0 0.0
      %1018 = vmatprep.subr.mxu0 0.0
      %1019 = vmatpush1.msra.mxu0 0.0
      %1020 = vmatprep.subr.mxu0 0.0
      %1021 = vmatpush1.msra.mxu0 0.0
      %1022 = vmatprep.subr.mxu0 0.0
      %1023 = vmatpush1.msra.mxu0 0.0
      %1024 = vmatprep.subr.mxu0 0.0
      %1025 = vmatpush1.msra.mxu0 %v986
      %1026 = vmatprep.subr.mxu0 0.0
      %1027 = vmatpush2.msra.mxu0 0.0
      %1028 = vmatprep.subr.mxu0 0.0
      %1029 = vmatpush2.msra.mxu0 0.0
      %1030 = vmatprep.subr.mxu0 0.0
      %1031 = vmatpush2.msra.mxu0 0.0
      %1032 = vmatprep.subr.mxu0 0.0
      %1033 = vmatpush2.msra.mxu0 0.0
      %1034 = vmatprep.subr.mxu0 0.0
      %1035 = vmatpush2.msra.mxu0 0.0
      %1036 = vmatprep.subr.mxu0 0.0
      %1037 = vmatpush2.msra.mxu0 0.0
      %1038 = vmatprep.subr.mxu0 0.0
      %1039 = vmatpush2.msra.mxu0 0.0
      %1040 = vmatprep.subr.mxu0 0.0
      %1041 = vmatpush2.msra.mxu0 0.0
      %1042 = vmatprep.subr.mxu0 0.0
      %1043 = vmatpush2.msra.mxu0 0.0
      %1044 = vmatprep.subr.mxu0 0.0
      %1045 = vmatpush2.msra.mxu0 0.0
      %1046 = vmatprep.subr.mxu0 0.0
      %1047 = vmatpush2.msra.mxu0 0.0
      %1048 = vmatprep.subr.mxu0 0.0
      %1049 = vmatpush2.msra.mxu0 0.0
      %1050 = vmatprep.subr.mxu0 0.0
      %1051 = vmatpush2.msra.mxu0 0.0
      %1052 = vmatprep.subr.mxu0 0.0
      %1053 = vmatpush2.msra.mxu0 0.0
      %1054 = vmatprep.subr.mxu0 0.0
      %1055 = vmatpush2.msra.mxu0 0.0
      %1056 = vmatprep.subr.mxu0 0.0
      %1057 = vmatpush2.msra.mxu0 0.0
      %1058 = vmatprep.mubr.f32.mxu0 0.0
      %1059 = vmatmul.mubr.f32.gmra.mxu0 %v992
      %v1060 = vpop.f32.mrf.mxu0
      %v1061 = vadd.f32 0.0, %v1060
      %v1062 = vpop.f32.mrf.mxu0
      %1063 = vdwg.mxu0
      %v1064 = vadd.f32 %v907, %v1061
      %s1065 = scalar_lea.vmem %s1, 192
      %v1066 = vld [vmem:[%s1065] sm:$0xff]
      %v1067 = vld [vmem:[%s1065 + $0x8] sm:$0xff]
      %v1068 = vld [vmem:[%s1065 + $0x10] sm:$0xff]
      %v1069 = vld [vmem:[%s1065 + $0x18] sm:$0xff]
      %v1070 = vld [vmem:[%s1065 + $0x20] sm:$0xff]
      %v1071 = vld [vmem:[%s1065 + $0x28] sm:$0xff]
      %v1072 = vld [vmem:[%s1065 + $0x30] sm:$0xff]
      %v1073 = vld [vmem:[%s1065 + $0x38] sm:$0xff]
      %1074 = vmatprep.subr.mxu0 0.0
      %1075 = vmatpush1.msra.mxu0 0.0
      %1076 = vmatprep.subr.mxu0 0.0
      %1077 = vmatpush1.msra.mxu0 0.0
      %1078 = vmatprep.subr.mxu0 0.0
      %1079 = vmatpush1.msra.mxu0 0.0
      %1080 = vmatprep.subr.mxu0 0.0
      %1081 = vmatpush1.msra.mxu0 0.0
      %1082 = vmatprep.subr.mxu0 0.0
      %1083 = vmatpush1.msra.mxu0 0.0
      %1084 = vmatprep.subr.mxu0 0.0
      %1085 = vmatpush1.msra.mxu0 0.0
      %1086 = vmatprep.subr.mxu0 0.0
      %1087 = vmatpush1.msra.mxu0 0.0
      %1088 = vmatprep.subr.mxu0 0.0
      %1089 = vmatpush1.msra.mxu0 0.0
      %1090 = vmatprep.subr.mxu0 0.0
      %1091 = vmatpush1.msra.mxu0 %v1073
      %1092 = vmatprep.subr.mxu0 0.0
      %1093 = vmatpush1.msra.mxu0 %v1072
      %1094 = vmatprep.subr.mxu0 0.0
      %1095 = vmatpush1.msra.mxu0 %v1071
      %1096 = vmatprep.subr.mxu0 0.0
      %1097 = vmatpush1.msra.mxu0 %v1070
      %1098 = vmatprep.subr.mxu0 0.0
      %1099 = vmatpush1.msra.mxu0 %v1069
      %1100 = vmatprep.subr.mxu0 0.0
      %1101 = vmatpush1.msra.mxu0 %v1068
      %1102 = vmatprep.subr.mxu0 0.0
      %1103 = vmatpush1.msra.mxu0 %v1067
      %1104 = vmatprep.subr.mxu0 0.0
      %1105 = vmatpush1.msra.mxu0 %v1066
      %1106 = vmatprep.subr.mxu0 0.0
      %1107 = vmatpush2.msra.mxu0 0.0
      %1108 = vmatprep.subr.mxu0 0.0
      %1109 = vmatpush2.msra.mxu0 0.0
      %1110 = vmatprep.subr.mxu0 0.0
      %1111 = vmatpush2.msra.mxu0 0.0
      %1112 = vmatprep.subr.mxu0 0.0
      %1113 = vmatpush2.msra.mxu0 0.0
      %1114 = vmatprep.subr.mxu0 0.0
      %1115 = vmatpush2.msra.mxu0 0.0
      %1116 = vmatprep.subr.mxu0 0.0
      %1117 = vmatpush2.msra.mxu0 0.0
      %1118 = vmatprep.subr.mxu0 0.0
      %1119 = vmatpush2.msra.mxu0 0.0
      %1120 = vmatprep.subr.mxu0 0.0
      %1121 = vmatpush2.msra.mxu0 0.0
      %1122 = vmatprep.subr.mxu0 0.0
      %1123 = vmatpush2.msra.mxu0 0.0
      %1124 = vmatprep.subr.mxu0 0.0
      %1125 = vmatpush2.msra.mxu0 0.0
      %1126 = vmatprep.subr.mxu0 0.0
      %1127 = vmatpush2.msra.mxu0 0.0
      %1128 = vmatprep.subr.mxu0 0.0
      %1129 = vmatpush2.msra.mxu0 0.0
      %1130 = vmatprep.subr.mxu0 0.0
      %1131 = vmatpush2.msra.mxu0 0.0
      %1132 = vmatprep.subr.mxu0 0.0
      %1133 = vmatpush2.msra.mxu0 0.0
      %1134 = vmatprep.subr.mxu0 0.0
      %1135 = vmatpush2.msra.mxu0 0.0
      %1136 = vmatprep.subr.mxu0 0.0
      %1137 = vmatpush2.msra.mxu0 0.0
      %1138 = vmatprep.mubr.f32.mxu0 0.0
      %1139 = vmatmul.mubr.f32.gmra.mxu0 %v609
      %v1140 = vpop.f32.mrf.mxu0
      %v1141 = vadd.f32 0.0, %v1140
      %v1142 = vpop.f32.mrf.mxu0
      %1143 = vdwg.mxu0
      %s1144 = scalar_lea.vmem %s3, 24
      %v1145 = vld [vmem:[%s1144] sm:$0xff]
      %v1147 = vsel %vm763, %v1145, 0
      %1149 = vmatprep.subr.mxu0 0.0
      %1150 = vmatpush1.msra.mxu0 0.0
      %1151 = vmatprep.subr.mxu0 0.0
      %1152 = vmatpush1.msra.mxu0 0.0
      %1153 = vmatprep.subr.mxu0 0.0
      %1154 = vmatpush1.msra.mxu0 0.0
      %1155 = vmatprep.subr.mxu0 0.0
      %1156 = vmatpush1.msra.mxu0 0.0
      %1157 = vmatprep.subr.mxu0 0.0
      %1158 = vmatpush1.msra.mxu0 0.0
      %1159 = vmatprep.subr.mxu0 0.0
      %1160 = vmatpush1.msra.mxu0 0.0
      %1161 = vmatprep.subr.mxu0 0.0
      %1162 = vmatpush1.msra.mxu0 0.0
      %1163 = vmatprep.subr.mxu0 0.0
      %1164 = vmatpush1.msra.mxu0 0.0
      %1165 = vmatprep.subr.mxu0 0.0
      %1166 = vmatpush1.msra.mxu0 0.0
      %1167 = vmatprep.subr.mxu0 0.0
      %1168 = vmatpush1.msra.mxu0 0.0
      %1169 = vmatprep.subr.mxu0 0.0
      %1170 = vmatpush1.msra.mxu0 0.0
      %1171 = vmatprep.subr.mxu0 0.0
      %1172 = vmatpush1.msra.mxu0 0.0
      %1173 = vmatprep.subr.mxu0 0.0
      %1174 = vmatpush1.msra.mxu0 0.0
      %1175 = vmatprep.subr.mxu0 0.0
      %1176 = vmatpush1.msra.mxu0 0.0
      %1177 = vmatprep.subr.mxu0 0.0
      %1178 = vmatpush1.msra.mxu0 0.0
      %1179 = vmatprep.subr.mxu0 0.0
      %1180 = vmatpush1.msra.mxu0 %v1141
      %1181 = vmatprep.subr.mxu0 0.0
      %1182 = vmatpush2.msra.mxu0 0.0
      %1183 = vmatprep.subr.mxu0 0.0
      %1184 = vmatpush2.msra.mxu0 0.0
      %1185 = vmatprep.subr.mxu0 0.0
      %1186 = vmatpush2.msra.mxu0 0.0
      %1187 = vmatprep.subr.mxu0 0.0
      %1188 = vmatpush2.msra.mxu0 0.0
      %1189 = vmatprep.subr.mxu0 0.0
      %1190 = vmatpush2.msra.mxu0 0.0
      %1191 = vmatprep.subr.mxu0 0.0
      %1192 = vmatpush2.msra.mxu0 0.0
      %1193 = vmatprep.subr.mxu0 0.0
      %1194 = vmatpush2.msra.mxu0 0.0
      %1195 = vmatprep.subr.mxu0 0.0
      %1196 = vmatpush2.msra.mxu0 0.0
      %1197 = vmatprep.subr.mxu0 0.0
      %1198 = vmatpush2.msra.mxu0 0.0
      %1199 = vmatprep.subr.mxu0 0.0
      %1200 = vmatpush2.msra.mxu0 0.0
      %1201 = vmatprep.subr.mxu0 0.0
      %1202 = vmatpush2.msra.mxu0 0.0
      %1203 = vmatprep.subr.mxu0 0.0
      %1204 = vmatpush2.msra.mxu0 0.0
      %1205 = vmatprep.subr.mxu0 0.0
      %1206 = vmatpush2.msra.mxu0 0.0
      %1207 = vmatprep.subr.mxu0 0.0
      %1208 = vmatpush2.msra.mxu0 0.0
      %1209 = vmatprep.subr.mxu0 0.0
      %1210 = vmatpush2.msra.mxu0 0.0
      %1211 = vmatprep.subr.mxu0 0.0
      %1212 = vmatpush2.msra.mxu0 0.0
      %1213 = vmatprep.mubr.f32.mxu0 0.0
      %1214 = vmatmul.mubr.f32.gmra.mxu0 %v1147
      %v1215 = vpop.f32.mrf.mxu0
      %v1216 = vadd.f32 0.0, %v1215
      %v1217 = vpop.f32.mrf.mxu0
      %1218 = vdwg.mxu0
      %v1219 = vadd.f32 %v1064, %v1216
      %s1220 = scalar_lea.vmem %s1, 256
      %v1221 = vld [vmem:[%s1220] sm:$0xff]
      %v1222 = vld [vmem:[%s1220 + $0x8] sm:$0xff]
      %v1223 = vld [vmem:[%s1220 + $0x10] sm:$0xff]
      %v1224 = vld [vmem:[%s1220 + $0x18] sm:$0xff]
      %v1225 = vld [vmem:[%s1220 + $0x20] sm:$0xff]
      %v1226 = vld [vmem:[%s1220 + $0x28] sm:$0xff]
      %v1227 = vld [vmem:[%s1220 + $0x30] sm:$0xff]
      %v1228 = vld [vmem:[%s1220 + $0x38] sm:$0xff]
      %1229 = vmatprep.subr.mxu0 0.0
      %1230 = vmatpush1.msra.mxu0 0.0
      %1231 = vmatprep.subr.mxu0 0.0
      %1232 = vmatpush1.msra.mxu0 0.0
      %1233 = vmatprep.subr.mxu0 0.0
      %1234 = vmatpush1.msra.mxu0 0.0
      %1235 = vmatprep.subr.mxu0 0.0
      %1236 = vmatpush1.msra.mxu0 0.0
      %1237 = vmatprep.subr.mxu0 0.0
      %1238 = vmatpush1.msra.mxu0 0.0
      %1239 = vmatprep.subr.mxu0 0.0
      %1240 = vmatpush1.msra.mxu0 0.0
      %1241 = vmatprep.subr.mxu0 0.0
      %1242 = vmatpush1.msra.mxu0 0.0
      %1243 = vmatprep.subr.mxu0 0.0
      %1244 = vmatpush1.msra.mxu0 0.0
      %1245 = vmatprep.subr.mxu0 0.0
      %1246 = vmatpush1.msra.mxu0 %v1228
      %1247 = vmatprep.subr.mxu0 0.0
      %1248 = vmatpush1.msra.mxu0 %v1227
      %1249 = vmatprep.subr.mxu0 0.0
      %1250 = vmatpush1.msra.mxu0 %v1226
      %1251 = vmatprep.subr.mxu0 0.0
      %1252 = vmatpush1.msra.mxu0 %v1225
      %1253 = vmatprep.subr.mxu0 0.0
      %1254 = vmatpush1.msra.mxu0 %v1224
      %1255 = vmatprep.subr.mxu0 0.0
      %1256 = vmatpush1.msra.mxu0 %v1223
      %1257 = vmatprep.subr.mxu0 0.0
      %1258 = vmatpush1.msra.mxu0 %v1222
      %1259 = vmatprep.subr.mxu0 0.0
      %1260 = vmatpush1.msra.mxu0 %v1221
      %1261 = vmatprep.subr.mxu0 0.0
      %1262 = vmatpush2.msra.mxu0 0.0
      %1263 = vmatprep.subr.mxu0 0.0
      %1264 = vmatpush2.msra.mxu0 0.0
      %1265 = vmatprep.subr.mxu0 0.0
      %1266 = vmatpush2.msra.mxu0 0.0
      %1267 = vmatprep.subr.mxu0 0.0
      %1268 = vmatpush2.msra.mxu0 0.0
      %1269 = vmatprep.subr.mxu0 0.0
      %1270 = vmatpush2.msra.mxu0 0.0
      %1271 = vmatprep.subr.mxu0 0.0
      %1272 = vmatpush2.msra.mxu0 0.0
      %1273 = vmatprep.subr.mxu0 0.0
      %1274 = vmatpush2.msra.mxu0 0.0
      %1275 = vmatprep.subr.mxu0 0.0
      %1276 = vmatpush2.msra.mxu0 0.0
      %1277 = vmatprep.subr.mxu0 0.0
      %1278 = vmatpush2.msra.mxu0 0.0
      %1279 = vmatprep.subr.mxu0 0.0
      %1280 = vmatpush2.msra.mxu0 0.0
      %1281 = vmatprep.subr.mxu0 0.0
      %1282 = vmatpush2.msra.mxu0 0.0
      %1283 = vmatprep.subr.mxu0 0.0
      %1284 = vmatpush2.msra.mxu0 0.0
      %1285 = vmatprep.subr.mxu0 0.0
      %1286 = vmatpush2.msra.mxu0 0.0
      %1287 = vmatprep.subr.mxu0 0.0
      %1288 = vmatpush2.msra.mxu0 0.0
      %1289 = vmatprep.subr.mxu0 0.0
      %1290 = vmatpush2.msra.mxu0 0.0
      %1291 = vmatprep.subr.mxu0 0.0
      %1292 = vmatpush2.msra.mxu0 0.0
      %1293 = vmatprep.mubr.f32.mxu0 0.0
      %1294 = vmatmul.mubr.f32.gmra.mxu0 %v609
      %v1295 = vpop.f32.mrf.mxu0
      %v1296 = vadd.f32 0.0, %v1295
      %v1297 = vpop.f32.mrf.mxu0
      %1298 = vdwg.mxu0
      %s1299 = scalar_lea.vmem %s3, 32
      %v1300 = vld [vmem:[%s1299] sm:$0xff]
      %v1302 = vsel %vm763, %v1300, 0
      %1304 = vmatprep.subr.mxu0 0.0
      %1305 = vmatpush1.msra.mxu0 0.0
      %1306 = vmatprep.subr.mxu0 0.0
      %1307 = vmatpush1.msra.mxu0 0.0
      %1308 = vmatprep.subr.mxu0 0.0
      %1309 = vmatpush1.msra.mxu0 0.0
      %1310 = vmatprep.subr.mxu0 0.0
      %1311 = vmatpush1.msra.mxu0 0.0
      %1312 = vmatprep.subr.mxu0 0.0
      %1313 = vmatpush1.msra.mxu0 0.0
      %1314 = vmatprep.subr.mxu0 0.0
      %1315 = vmatpush1.msra.mxu0 0.0
      %1316 = vmatprep.subr.mxu0 0.0
      %1317 = vmatpush1.msra.mxu0 0.0
      %1318 = vmatprep.subr.mxu0 0.0
      %1319 = vmatpush1.msra.mxu0 0.0
      %1320 = vmatprep.subr.mxu0 0.0
      %1321 = vmatpush1.msra.mxu0 0.0
      %1322 = vmatprep.subr.mxu0 0.0
      %1323 = vmatpush1.msra.mxu0 0.0
      %1324 = vmatprep.subr.mxu0 0.0
      %1325 = vmatpush1.msra.mxu0 0.0
      %1326 = vmatprep.subr.mxu0 0.0
      %1327 = vmatpush1.msra.mxu0 0.0
      %1328 = vmatprep.subr.mxu0 0.0
      %1329 = vmatpush1.msra.mxu0 0.0
      %1330 = vmatprep.subr.mxu0 0.0
      %1331 = vmatpush1.msra.mxu0 0.0
      %1332 = vmatprep.subr.mxu0 0.0
      %1333 = vmatpush1.msra.mxu0 0.0
      %1334 = vmatprep.subr.mxu0 0.0
      %1335 = vmatpush1.msra.mxu0 %v1296
      %1336 = vmatprep.subr.mxu0 0.0
      %1337 = vmatpush2.msra.mxu0 0.0
      %1338 = vmatprep.subr.mxu0 0.0
      %1339 = vmatpush2.msra.mxu0 0.0
      %1340 = vmatprep.subr.mxu0 0.0
      %1341 = vmatpush2.msra.mxu0 0.0
      %1342 = vmatprep.subr.mxu0 0.0
      %1343 = vmatpush2.msra.mxu0 0.0
      %1344 = vmatprep.subr.mxu0 0.0
      %1345 = vmatpush2.msra.mxu0 0.0
      %1346 = vmatprep.subr.mxu0 0.0
      %1347 = vmatpush2.msra.mxu0 0.0
      %1348 = vmatprep.subr.mxu0 0.0
      %1349 = vmatpush2.msra.mxu0 0.0
      %1350 = vmatprep.subr.mxu0 0.0
      %1351 = vmatpush2.msra.mxu0 0.0
      %1352 = vmatprep.subr.mxu0 0.0
      %1353 = vmatpush2.msra.mxu0 0.0
      %1354 = vmatprep.subr.mxu0 0.0
      %1355 = vmatpush2.msra.mxu0 0.0
      %1356 = vmatprep.subr.mxu0 0.0
      %1357 = vmatpush2.msra.mxu0 0.0
      %1358 = vmatprep.subr.mxu0 0.0
      %1359 = vmatpush2.msra.mxu0 0.0
      %1360 = vmatprep.subr.mxu0 0.0
      %1361 = vmatpush2.msra.mxu0 0.0
      %1362 = vmatprep.subr.mxu0 0.0
      %1363 = vmatpush2.msra.mxu0 0.0
      %1364 = vmatprep.subr.mxu0 0.0
      %1365 = vmatpush2.msra.mxu0 0.0
      %1366 = vmatprep.subr.mxu0 0.0
      %1367 = vmatpush2.msra.mxu0 0.0
      %1368 = vmatprep.mubr.f32.mxu0 0.0
      %1369 = vmatmul.mubr.f32.gmra.mxu0 %v1302
      %v1370 = vpop.f32.mrf.mxu0
      %v1371 = vadd.f32 0.0, %v1370
      %v1372 = vpop.f32.mrf.mxu0
      %1373 = vdwg.mxu0
      %v1374 = vadd.f32 %v1219, %v1371
      %s1375 = scalar_lea.vmem %s1, 320
      %v1376 = vld [vmem:[%s1375] sm:$0xff]
      %v1377 = vld [vmem:[%s1375 + $0x8] sm:$0xff]
      %v1378 = vld [vmem:[%s1375 + $0x10] sm:$0xff]
      %v1379 = vld [vmem:[%s1375 + $0x18] sm:$0xff]
      %v1380 = vld [vmem:[%s1375 + $0x20] sm:$0xff]
      %v1381 = vld [vmem:[%s1375 + $0x28] sm:$0xff]
      %v1382 = vld [vmem:[%s1375 + $0x30] sm:$0xff]
      %v1383 = vld [vmem:[%s1375 + $0x38] sm:$0xff]
      %1384 = vmatprep.subr.mxu0 0.0
      %1385 = vmatpush1.msra.mxu0 0.0
      %1386 = vmatprep.subr.mxu0 0.0
      %1387 = vmatpush1.msra.mxu0 0.0
      %1388 = vmatprep.subr.mxu0 0.0
      %1389 = vmatpush1.msra.mxu0 0.0
      %1390 = vmatprep.subr.mxu0 0.0
      %1391 = vmatpush1.msra.mxu0 0.0
      %1392 = vmatprep.subr.mxu0 0.0
      %1393 = vmatpush1.msra.mxu0 0.0
      %1394 = vmatprep.subr.mxu0 0.0
      %1395 = vmatpush1.msra.mxu0 0.0
      %1396 = vmatprep.subr.mxu0 0.0
      %1397 = vmatpush1.msra.mxu0 0.0
      %1398 = vmatprep.subr.mxu0 0.0
      %1399 = vmatpush1.msra.mxu0 0.0
      %1400 = vmatprep.subr.mxu0 0.0
      %1401 = vmatpush1.msra.mxu0 %v1383
      %1402 = vmatprep.subr.mxu0 0.0
      %1403 = vmatpush1.msra.mxu0 %v1382
      %1404 = vmatprep.subr.mxu0 0.0
      %1405 = vmatpush1.msra.mxu0 %v1381
      %1406 = vmatprep.subr.mxu0 0.0
      %1407 = vmatpush1.msra.mxu0 %v1380
      %1408 = vmatprep.subr.mxu0 0.0
      %1409 = vmatpush1.msra.mxu0 %v1379
      %1410 = vmatprep.subr.mxu0 0.0
      %1411 = vmatpush1.msra.mxu0 %v1378
      %1412 = vmatprep.subr.mxu0 0.0
      %1413 = vmatpush1.msra.mxu0 %v1377
      %1414 = vmatprep.subr.mxu0 0.0
      %1415 = vmatpush1.msra.mxu0 %v1376
      %1416 = vmatprep.subr.mxu0 0.0
      %1417 = vmatpush2.msra.mxu0 0.0
      %1418 = vmatprep.subr.mxu0 0.0
      %1419 = vmatpush2.msra.mxu0 0.0
      %1420 = vmatprep.subr.mxu0 0.0
      %1421 = vmatpush2.msra.mxu0 0.0
      %1422 = vmatprep.subr.mxu0 0.0
      %1423 = vmatpush2.msra.mxu0 0.0
      %1424 = vmatprep.subr.mxu0 0.0
      %1425 = vmatpush2.msra.mxu0 0.0
      %1426 = vmatprep.subr.mxu0 0.0
      %1427 = vmatpush2.msra.mxu0 0.0
      %1428 = vmatprep.subr.mxu0 0.0
      %1429 = vmatpush2.msra.mxu0 0.0
      %1430 = vmatprep.subr.mxu0 0.0
      %1431 = vmatpush2.msra.mxu0 0.0
      %1432 = vmatprep.subr.mxu0 0.0
      %1433 = vmatpush2.msra.mxu0 0.0
      %1434 = vmatprep.subr.mxu0 0.0
      %1435 = vmatpush2.msra.mxu0 0.0
      %1436 = vmatprep.subr.mxu0 0.0
      %1437 = vmatpush2.msra.mxu0 0.0
      %1438 = vmatprep.subr.mxu0 0.0
      %1439 = vmatpush2.msra.mxu0 0.0
      %1440 = vmatprep.subr.mxu0 0.0
      %1441 = vmatpush2.msra.mxu0 0.0
      %1442 = vmatprep.subr.mxu0 0.0
      %1443 = vmatpush2.msra.mxu0 0.0
      %1444 = vmatprep.subr.mxu0 0.0
      %1445 = vmatpush2.msra.mxu0 0.0
      %1446 = vmatprep.subr.mxu0 0.0
      %1447 = vmatpush2.msra.mxu0 0.0
      %1448 = vmatprep.mubr.f32.mxu0 0.0
      %1449 = vmatmul.mubr.f32.gmra.mxu0 %v609
      %v1450 = vpop.f32.mrf.mxu0
      %v1451 = vadd.f32 0.0, %v1450
      %v1452 = vpop.f32.mrf.mxu0
      %1453 = vdwg.mxu0
      %s1454 = scalar_lea.vmem %s3, 40
      %v1455 = vld [vmem:[%s1454] sm:$0xff]
      %v1457 = vsel %vm763, %v1455, 0
      %1459 = vmatprep.subr.mxu0 0.0
      %1460 = vmatpush1.msra.mxu0 0.0
      %1461 = vmatprep.subr.mxu0 0.0
      %1462 = vmatpush1.msra.mxu0 0.0
      %1463 = vmatprep.subr.mxu0 0.0
      %1464 = vmatpush1.msra.mxu0 0.0
      %1465 = vmatprep.subr.mxu0 0.0
      %1466 = vmatpush1.msra.mxu0 0.0
      %1467 = vmatprep.subr.mxu0 0.0
      %1468 = vmatpush1.msra.mxu0 0.0
      %1469 = vmatprep.subr.mxu0 0.0
      %1470 = vmatpush1.msra.mxu0 0.0
      %1471 = vmatprep.subr.mxu0 0.0
      %1472 = vmatpush1.msra.mxu0 0.0
      %1473 = vmatprep.subr.mxu0 0.0
      %1474 = vmatpush1.msra.mxu0 0.0
      %1475 = vmatprep.subr.mxu0 0.0
      %1476 = vmatpush1.msra.mxu0 0.0
      %1477 = vmatprep.subr.mxu0 0.0
      %1478 = vmatpush1.msra.mxu0 0.0
      %1479 = vmatprep.subr.mxu0 0.0
      %1480 = vmatpush1.msra.mxu0 0.0
      %1481 = vmatprep.subr.mxu0 0.0
      %1482 = vmatpush1.msra.mxu0 0.0
      %1483 = vmatprep.subr.mxu0 0.0
      %1484 = vmatpush1.msra.mxu0 0.0
      %1485 = vmatprep.subr.mxu0 0.0
      %1486 = vmatpush1.msra.mxu0 0.0
      %1487 = vmatprep.subr.mxu0 0.0
      %1488 = vmatpush1.msra.mxu0 0.0
      %1489 = vmatprep.subr.mxu0 0.0
      %1490 = vmatpush1.msra.mxu0 %v1451
      %1491 = vmatprep.subr.mxu0 0.0
      %1492 = vmatpush2.msra.mxu0 0.0
      %1493 = vmatprep.subr.mxu0 0.0
      %1494 = vmatpush2.msra.mxu0 0.0
      %1495 = vmatprep.subr.mxu0 0.0
      %1496 = vmatpush2.msra.mxu0 0.0
      %1497 = vmatprep.subr.mxu0 0.0
      %1498 = vmatpush2.msra.mxu0 0.0
      %1499 = vmatprep.subr.mxu0 0.0
      %1500 = vmatpush2.msra.mxu0 0.0
      %1501 = vmatprep.subr.mxu0 0.0
      %1502 = vmatpush2.msra.mxu0 0.0
      %1503 = vmatprep.subr.mxu0 0.0
      %1504 = vmatpush2.msra.mxu0 0.0
      %1505 = vmatprep.subr.mxu0 0.0
      %1506 = vmatpush2.msra.mxu0 0.0
      %1507 = vmatprep.subr.mxu0 0.0
      %1508 = vmatpush2.msra.mxu0 0.0
      %1509 = vmatprep.subr.mxu0 0.0
      %1510 = vmatpush2.msra.mxu0 0.0
      %1511 = vmatprep.subr.mxu0 0.0
      %1512 = vmatpush2.msra.mxu0 0.0
      %1513 = vmatprep.subr.mxu0 0.0
      %1514 = vmatpush2.msra.mxu0 0.0
      %1515 = vmatprep.subr.mxu0 0.0
      %1516 = vmatpush2.msra.mxu0 0.0
      %1517 = vmatprep.subr.mxu0 0.0
      %1518 = vmatpush2.msra.mxu0 0.0
      %1519 = vmatprep.subr.mxu0 0.0
      %1520 = vmatpush2.msra.mxu0 0.0
      %1521 = vmatprep.subr.mxu0 0.0
      %1522 = vmatpush2.msra.mxu0 0.0
      %1523 = vmatprep.mubr.f32.mxu0 0.0
      %1524 = vmatmul.mubr.f32.gmra.mxu0 %v1457
      %v1525 = vpop.f32.mrf.mxu0
      %v1526 = vadd.f32 0.0, %v1525
      %v1527 = vpop.f32.mrf.mxu0
      %1528 = vdwg.mxu0
      %v1529 = vadd.f32 %v1374, %v1526
      %s1530 = scalar_lea.vmem %s1, 384
      %v1531 = vld [vmem:[%s1530] sm:$0xff]
      %v1532 = vld [vmem:[%s1530 + $0x8] sm:$0xff]
      %v1533 = vld [vmem:[%s1530 + $0x10] sm:$0xff]
      %v1534 = vld [vmem:[%s1530 + $0x18] sm:$0xff]
      %v1535 = vld [vmem:[%s1530 + $0x20] sm:$0xff]
      %v1536 = vld [vmem:[%s1530 + $0x28] sm:$0xff]
      %v1537 = vld [vmem:[%s1530 + $0x30] sm:$0xff]
      %v1538 = vld [vmem:[%s1530 + $0x38] sm:$0xff]
      %1539 = vmatprep.subr.mxu0 0.0
      %1540 = vmatpush1.msra.mxu0 0.0
      %1541 = vmatprep.subr.mxu0 0.0
      %1542 = vmatpush1.msra.mxu0 0.0
      %1543 = vmatprep.subr.mxu0 0.0
      %1544 = vmatpush1.msra.mxu0 0.0
      %1545 = vmatprep.subr.mxu0 0.0
      %1546 = vmatpush1.msra.mxu0 0.0
      %1547 = vmatprep.subr.mxu0 0.0
      %1548 = vmatpush1.msra.mxu0 0.0
      %1549 = vmatprep.subr.mxu0 0.0
      %1550 = vmatpush1.msra.mxu0 0.0
      %1551 = vmatprep.subr.mxu0 0.0
      %1552 = vmatpush1.msra.mxu0 0.0
      %1553 = vmatprep.subr.mxu0 0.0
      %1554 = vmatpush1.msra.mxu0 0.0
      %1555 = vmatprep.subr.mxu0 0.0
      %1556 = vmatpush1.msra.mxu0 %v1538
      %1557 = vmatprep.subr.mxu0 0.0
      %1558 = vmatpush1.msra.mxu0 %v1537
      %1559 = vmatprep.subr.mxu0 0.0
      %1560 = vmatpush1.msra.mxu0 %v1536
      %1561 = vmatprep.subr.mxu0 0.0
      %1562 = vmatpush1.msra.mxu0 %v1535
      %1563 = vmatprep.subr.mxu0 0.0
      %1564 = vmatpush1.msra.mxu0 %v1534
      %1565 = vmatprep.subr.mxu0 0.0
      %1566 = vmatpush1.msra.mxu0 %v1533
      %1567 = vmatprep.subr.mxu0 0.0
      %1568 = vmatpush1.msra.mxu0 %v1532
      %1569 = vmatprep.subr.mxu0 0.0
      %1570 = vmatpush1.msra.mxu0 %v1531
      %1571 = vmatprep.subr.mxu0 0.0
      %1572 = vmatpush2.msra.mxu0 0.0
      %1573 = vmatprep.subr.mxu0 0.0
      %1574 = vmatpush2.msra.mxu0 0.0
      %1575 = vmatprep.subr.mxu0 0.0
      %1576 = vmatpush2.msra.mxu0 0.0
      %1577 = vmatprep.subr.mxu0 0.0
      %1578 = vmatpush2.msra.mxu0 0.0
      %1579 = vmatprep.subr.mxu0 0.0
      %1580 = vmatpush2.msra.mxu0 0.0
      %1581 = vmatprep.subr.mxu0 0.0
      %1582 = vmatpush2.msra.mxu0 0.0
      %1583 = vmatprep.subr.mxu0 0.0
      %1584 = vmatpush2.msra.mxu0 0.0
      %1585 = vmatprep.subr.mxu0 0.0
      %1586 = vmatpush2.msra.mxu0 0.0
      %1587 = vmatprep.subr.mxu0 0.0
      %1588 = vmatpush2.msra.mxu0 0.0
      %1589 = vmatprep.subr.mxu0 0.0
      %1590 = vmatpush2.msra.mxu0 0.0
      %1591 = vmatprep.subr.mxu0 0.0
      %1592 = vmatpush2.msra.mxu0 0.0
      %1593 = vmatprep.subr.mxu0 0.0
      %1594 = vmatpush2.msra.mxu0 0.0
      %1595 = vmatprep.subr.mxu0 0.0
      %1596 = vmatpush2.msra.mxu0 0.0
      %1597 = vmatprep.subr.mxu0 0.0
      %1598 = vmatpush2.msra.mxu0 0.0
      %1599 = vmatprep.subr.mxu0 0.0
      %1600 = vmatpush2.msra.mxu0 0.0
      %1601 = vmatprep.subr.mxu0 0.0
      %1602 = vmatpush2.msra.mxu0 0.0
      %1603 = vmatprep.mubr.f32.mxu0 0.0
      %1604 = vmatmul.mubr.f32.gmra.mxu0 %v609
      %v1605 = vpop.f32.mrf.mxu0
      %v1606 = vadd.f32 0.0, %v1605
      %v1607 = vpop.f32.mrf.mxu0
      %1608 = vdwg.mxu0
      %s1609 = scalar_lea.vmem %s3, 48
      %v1610 = vld [vmem:[%s1609] sm:$0xff]
      %v1612 = vsel %vm763, %v1610, 0
      %1614 = vmatprep.subr.mxu0 0.0
      %1615 = vmatpush1.msra.mxu0 0.0
      %1616 = vmatprep.subr.mxu0 0.0
      %1617 = vmatpush1.msra.mxu0 0.0
      %1618 = vmatprep.subr.mxu0 0.0
      %1619 = vmatpush1.msra.mxu0 0.0
      %1620 = vmatprep.subr.mxu0 0.0
      %1621 = vmatpush1.msra.mxu0 0.0
      %1622 = vmatprep.subr.mxu0 0.0
      %1623 = vmatpush1.msra.mxu0 0.0
      %1624 = vmatprep.subr.mxu0 0.0
      %1625 = vmatpush1.msra.mxu0 0.0
      %1626 = vmatprep.subr.mxu0 0.0
      %1627 = vmatpush1.msra.mxu0 0.0
      %1628 = vmatprep.subr.mxu0 0.0
      %1629 = vmatpush1.msra.mxu0 0.0
      %1630 = vmatprep.subr.mxu0 0.0
      %1631 = vmatpush1.msra.mxu0 0.0
      %1632 = vmatprep.subr.mxu0 0.0
      %1633 = vmatpush1.msra.mxu0 0.0
      %1634 = vmatprep.subr.mxu0 0.0
      %1635 = vmatpush1.msra.mxu0 0.0
      %1636 = vmatprep.subr.mxu0 0.0
      %1637 = vmatpush1.msra.mxu0 0.0
      %1638 = vmatprep.subr.mxu0 0.0
      %1639 = vmatpush1.msra.mxu0 0.0
      %1640 = vmatprep.subr.mxu0 0.0
      %1641 = vmatpush1.msra.mxu0 0.0
      %1642 = vmatprep.subr.mxu0 0.0
      %1643 = vmatpush1.msra.mxu0 0.0
      %1644 = vmatprep.subr.mxu0 0.0
      %1645 = vmatpush1.msra.mxu0 %v1606
      %1646 = vmatprep.subr.mxu0 0.0
      %1647 = vmatpush2.msra.mxu0 0.0
      %1648 = vmatprep.subr.mxu0 0.0
      %1649 = vmatpush2.msra.mxu0 0.0
      %1650 = vmatprep.subr.mxu0 0.0
      %1651 = vmatpush2.msra.mxu0 0.0
      %1652 = vmatprep.subr.mxu0 0.0
      %1653 = vmatpush2.msra.mxu0 0.0
      %1654 = vmatprep.subr.mxu0 0.0
      %1655 = vmatpush2.msra.mxu0 0.0
      %1656 = vmatprep.subr.mxu0 0.0
      %1657 = vmatpush2.msra.mxu0 0.0
      %1658 = vmatprep.subr.mxu0 0.0
      %1659 = vmatpush2.msra.mxu0 0.0
      %1660 = vmatprep.subr.mxu0 0.0
      %1661 = vmatpush2.msra.mxu0 0.0
      %1662 = vmatprep.subr.mxu0 0.0
      %1663 = vmatpush2.msra.mxu0 0.0
      %1664 = vmatprep.subr.mxu0 0.0
      %1665 = vmatpush2.msra.mxu0 0.0
      %1666 = vmatprep.subr.mxu0 0.0
      %1667 = vmatpush2.msra.mxu0 0.0
      %1668 = vmatprep.subr.mxu0 0.0
      %1669 = vmatpush2.msra.mxu0 0.0
      %1670 = vmatprep.subr.mxu0 0.0
      %1671 = vmatpush2.msra.mxu0 0.0
      %1672 = vmatprep.subr.mxu0 0.0
      %1673 = vmatpush2.msra.mxu0 0.0
      %1674 = vmatprep.subr.mxu0 0.0
      %1675 = vmatpush2.msra.mxu0 0.0
      %1676 = vmatprep.subr.mxu0 0.0
      %1677 = vmatpush2.msra.mxu0 0.0
      %1678 = vmatprep.mubr.f32.mxu0 0.0
      %1679 = vmatmul.mubr.f32.gmra.mxu0 %v1612
      %v1680 = vpop.f32.mrf.mxu0
      %v1681 = vadd.f32 0.0, %v1680
      %v1682 = vpop.f32.mrf.mxu0
      %1683 = vdwg.mxu0
      %v1684 = vadd.f32 %v1529, %v1681
      %s1685 = scalar_lea.vmem %s1, 448
      %v1686 = vld [vmem:[%s1685] sm:$0xff]
      %v1687 = vld [vmem:[%s1685 + $0x8] sm:$0xff]
      %v1688 = vld [vmem:[%s1685 + $0x10] sm:$0xff]
      %v1689 = vld [vmem:[%s1685 + $0x18] sm:$0xff]
      %v1690 = vld [vmem:[%s1685 + $0x20] sm:$0xff]
      %v1691 = vld [vmem:[%s1685 + $0x28] sm:$0xff]
      %v1692 = vld [vmem:[%s1685 + $0x30] sm:$0xff]
      %v1693 = vld [vmem:[%s1685 + $0x38] sm:$0xff]
      %1694 = vmatprep.subr.mxu0 0.0
      %1695 = vmatpush1.msra.mxu0 0.0
      %1696 = vmatprep.subr.mxu0 0.0
      %1697 = vmatpush1.msra.mxu0 0.0
      %1698 = vmatprep.subr.mxu0 0.0
      %1699 = vmatpush1.msra.mxu0 0.0
      %1700 = vmatprep.subr.mxu0 0.0
      %1701 = vmatpush1.msra.mxu0 0.0
      %1702 = vmatprep.subr.mxu0 0.0
      %1703 = vmatpush1.msra.mxu0 0.0
      %1704 = vmatprep.subr.mxu0 0.0
      %1705 = vmatpush1.msra.mxu0 0.0
      %1706 = vmatprep.subr.mxu0 0.0
      %1707 = vmatpush1.msra.mxu0 0.0
      %1708 = vmatprep.subr.mxu0 0.0
      %1709 = vmatpush1.msra.mxu0 0.0
      %1710 = vmatprep.subr.mxu0 0.0
      %1711 = vmatpush1.msra.mxu0 %v1693
      %1712 = vmatprep.subr.mxu0 0.0
      %1713 = vmatpush1.msra.mxu0 %v1692
      %1714 = vmatprep.subr.mxu0 0.0
      %1715 = vmatpush1.msra.mxu0 %v1691
      %1716 = vmatprep.subr.mxu0 0.0
      %1717 = vmatpush1.msra.mxu0 %v1690
      %1718 = vmatprep.subr.mxu0 0.0
      %1719 = vmatpush1.msra.mxu0 %v1689
      %1720 = vmatprep.subr.mxu0 0.0
      %1721 = vmatpush1.msra.mxu0 %v1688
      %1722 = vmatprep.subr.mxu0 0.0
      %1723 = vmatpush1.msra.mxu0 %v1687
      %1724 = vmatprep.subr.mxu0 0.0
      %1725 = vmatpush1.msra.mxu0 %v1686
      %1726 = vmatprep.subr.mxu0 0.0
      %1727 = vmatpush2.msra.mxu0 0.0
      %1728 = vmatprep.subr.mxu0 0.0
      %1729 = vmatpush2.msra.mxu0 0.0
      %1730 = vmatprep.subr.mxu0 0.0
      %1731 = vmatpush2.msra.mxu0 0.0
      %1732 = vmatprep.subr.mxu0 0.0
      %1733 = vmatpush2.msra.mxu0 0.0
      %1734 = vmatprep.subr.mxu0 0.0
      %1735 = vmatpush2.msra.mxu0 0.0
      %1736 = vmatprep.subr.mxu0 0.0
      %1737 = vmatpush2.msra.mxu0 0.0
      %1738 = vmatprep.subr.mxu0 0.0
      %1739 = vmatpush2.msra.mxu0 0.0
      %1740 = vmatprep.subr.mxu0 0.0
      %1741 = vmatpush2.msra.mxu0 0.0
      %1742 = vmatprep.subr.mxu0 0.0
      %1743 = vmatpush2.msra.mxu0 0.0
      %1744 = vmatprep.subr.mxu0 0.0
      %1745 = vmatpush2.msra.mxu0 0.0
      %1746 = vmatprep.subr.mxu0 0.0
      %1747 = vmatpush2.msra.mxu0 0.0
      %1748 = vmatprep.subr.mxu0 0.0
      %1749 = vmatpush2.msra.mxu0 0.0
      %1750 = vmatprep.subr.mxu0 0.0
      %1751 = vmatpush2.msra.mxu0 0.0
      %1752 = vmatprep.subr.mxu0 0.0
      %1753 = vmatpush2.msra.mxu0 0.0
      %1754 = vmatprep.subr.mxu0 0.0
      %1755 = vmatpush2.msra.mxu0 0.0
      %1756 = vmatprep.subr.mxu0 0.0
      %1757 = vmatpush2.msra.mxu0 0.0
      %1758 = vmatprep.mubr.f32.mxu0 0.0
      %1759 = vmatmul.mubr.f32.gmra.mxu0 %v609
      %v1760 = vpop.f32.mrf.mxu0
      %v1761 = vadd.f32 0.0, %v1760
      %v1762 = vpop.f32.mrf.mxu0
      %1763 = vdwg.mxu0
      %s1764 = scalar_lea.vmem %s3, 56
      %v1765 = vld [vmem:[%s1764] sm:$0xff]
      %v1767 = vsel %vm763, %v1765, 0
      %1769 = vmatprep.subr.mxu0 0.0
      %1770 = vmatpush1.msra.mxu0 0.0
      %1771 = vmatprep.subr.mxu0 0.0
      %1772 = vmatpush1.msra.mxu0 0.0
      %1773 = vmatprep.subr.mxu0 0.0
      %1774 = vmatpush1.msra.mxu0 0.0
      %1775 = vmatprep.subr.mxu0 0.0
      %1776 = vmatpush1.msra.mxu0 0.0
      %1777 = vmatprep.subr.mxu0 0.0
      %1778 = vmatpush1.msra.mxu0 0.0
      %1779 = vmatprep.subr.mxu0 0.0
      %1780 = vmatpush1.msra.mxu0 0.0
      %1781 = vmatprep.subr.mxu0 0.0
      %1782 = vmatpush1.msra.mxu0 0.0
      %1783 = vmatprep.subr.mxu0 0.0
      %1784 = vmatpush1.msra.mxu0 0.0
      %1785 = vmatprep.subr.mxu0 0.0
      %1786 = vmatpush1.msra.mxu0 0.0
      %1787 = vmatprep.subr.mxu0 0.0
      %1788 = vmatpush1.msra.mxu0 0.0
      %1789 = vmatprep.subr.mxu0 0.0
      %1790 = vmatpush1.msra.mxu0 0.0
      %1791 = vmatprep.subr.mxu0 0.0
      %1792 = vmatpush1.msra.mxu0 0.0
      %1793 = vmatprep.subr.mxu0 0.0
      %1794 = vmatpush1.msra.mxu0 0.0
      %1795 = vmatprep.subr.mxu0 0.0
      %1796 = vmatpush1.msra.mxu0 0.0
      %1797 = vmatprep.subr.mxu0 0.0
      %1798 = vmatpush1.msra.mxu0 0.0
      %1799 = vmatprep.subr.mxu0 0.0
      %1800 = vmatpush1.msra.mxu0 %v1761
      %1801 = vmatprep.subr.mxu0 0.0
      %1802 = vmatpush2.msra.mxu0 0.0
      %1803 = vmatprep.subr.mxu0 0.0
      %1804 = vmatpush2.msra.mxu0 0.0
      %1805 = vmatprep.subr.mxu0 0.0
      %1806 = vmatpush2.msra.mxu0 0.0
      %1807 = vmatprep.subr.mxu0 0.0
      %1808 = vmatpush2.msra.mxu0 0.0
      %1809 = vmatprep.subr.mxu0 0.0
      %1810 = vmatpush2.msra.mxu0 0.0
      %1811 = vmatprep.subr.mxu0 0.0
      %1812 = vmatpush2.msra.mxu0 0.0
      %1813 = vmatprep.subr.mxu0 0.0
      %1814 = vmatpush2.msra.mxu0 0.0
      %1815 = vmatprep.subr.mxu0 0.0
      %1816 = vmatpush2.msra.mxu0 0.0
      %1817 = vmatprep.subr.mxu0 0.0
      %1818 = vmatpush2.msra.mxu0 0.0
      %1819 = vmatprep.subr.mxu0 0.0
      %1820 = vmatpush2.msra.mxu0 0.0
      %1821 = vmatprep.subr.mxu0 0.0
      %1822 = vmatpush2.msra.mxu0 0.0
      %1823 = vmatprep.subr.mxu0 0.0
      %1824 = vmatpush2.msra.mxu0 0.0
      %1825 = vmatprep.subr.mxu0 0.0
      %1826 = vmatpush2.msra.mxu0 0.0
      %1827 = vmatprep.subr.mxu0 0.0
      %1828 = vmatpush2.msra.mxu0 0.0
      %1829 = vmatprep.subr.mxu0 0.0
      %1830 = vmatpush2.msra.mxu0 0.0
      %1831 = vmatprep.subr.mxu0 0.0
      %1832 = vmatpush2.msra.mxu0 0.0
      %1833 = vmatprep.mubr.f32.mxu0 0.0
      %1834 = vmatmul.mubr.f32.gmra.mxu0 %v1767
      %v1835 = vpop.f32.mrf.mxu0
      %v1836 = vadd.f32 0.0, %v1835
      %v1837 = vpop.f32.mrf.mxu0
      %1838 = vdwg.mxu0
      %v1839 = vadd.f32 %v1684, %v1836
      %s1840 = scalar_lea.vmem %s1, 512
      %v1841 = vld [vmem:[%s1840] sm:$0xff]
      %v1842 = vld [vmem:[%s1840 + $0x8] sm:$0xff]
      %v1843 = vld [vmem:[%s1840 + $0x10] sm:$0xff]
      %v1844 = vld [vmem:[%s1840 + $0x18] sm:$0xff]
      %v1845 = vld [vmem:[%s1840 + $0x20] sm:$0xff]
      %v1846 = vld [vmem:[%s1840 + $0x28] sm:$0xff]
      %v1847 = vld [vmem:[%s1840 + $0x30] sm:$0xff]
      %v1848 = vld [vmem:[%s1840 + $0x38] sm:$0xff]
      %1849 = vmatprep.subr.mxu0 0.0
      %1850 = vmatpush1.msra.mxu0 0.0
      %1851 = vmatprep.subr.mxu0 0.0
      %1852 = vmatpush1.msra.mxu0 0.0
      %1853 = vmatprep.subr.mxu0 0.0
      %1854 = vmatpush1.msra.mxu0 0.0
      %1855 = vmatprep.subr.mxu0 0.0
      %1856 = vmatpush1.msra.mxu0 0.0
      %1857 = vmatprep.subr.mxu0 0.0
      %1858 = vmatpush1.msra.mxu0 0.0
      %1859 = vmatprep.subr.mxu0 0.0
      %1860 = vmatpush1.msra.mxu0 0.0
      %1861 = vmatprep.subr.mxu0 0.0
      %1862 = vmatpush1.msra.mxu0 0.0
      %1863 = vmatprep.subr.mxu0 0.0
      %1864 = vmatpush1.msra.mxu0 0.0
      %1865 = vmatprep.subr.mxu0 0.0
      %1866 = vmatpush1.msra.mxu0 %v1848
      %1867 = vmatprep.subr.mxu0 0.0
      %1868 = vmatpush1.msra.mxu0 %v1847
      %1869 = vmatprep.subr.mxu0 0.0
      %1870 = vmatpush1.msra.mxu0 %v1846
      %1871 = vmatprep.subr.mxu0 0.0
      %1872 = vmatpush1.msra.mxu0 %v1845
      %1873 = vmatprep.subr.mxu0 0.0
      %1874 = vmatpush1.msra.mxu0 %v1844
      %1875 = vmatprep.subr.mxu0 0.0
      %1876 = vmatpush1.msra.mxu0 %v1843
      %1877 = vmatprep.subr.mxu0 0.0
      %1878 = vmatpush1.msra.mxu0 %v1842
      %1879 = vmatprep.subr.mxu0 0.0
      %1880 = vmatpush1.msra.mxu0 %v1841
      %1881 = vmatprep.subr.mxu0 0.0
      %1882 = vmatpush2.msra.mxu0 0.0
      %1883 = vmatprep.subr.mxu0 0.0
      %1884 = vmatpush2.msra.mxu0 0.0
      %1885 = vmatprep.subr.mxu0 0.0
      %1886 = vmatpush2.msra.mxu0 0.0
      %1887 = vmatprep.subr.mxu0 0.0
      %1888 = vmatpush2.msra.mxu0 0.0
      %1889 = vmatprep.subr.mxu0 0.0
      %1890 = vmatpush2.msra.mxu0 0.0
      %1891 = vmatprep.subr.mxu0 0.0
      %1892 = vmatpush2.msra.mxu0 0.0
      %1893 = vmatprep.subr.mxu0 0.0
      %1894 = vmatpush2.msra.mxu0 0.0
      %1895 = vmatprep.subr.mxu0 0.0
      %1896 = vmatpush2.msra.mxu0 0.0
      %1897 = vmatprep.subr.mxu0 0.0
      %1898 = vmatpush2.msra.mxu0 0.0
      %1899 = vmatprep.subr.mxu0 0.0
      %1900 = vmatpush2.msra.mxu0 0.0
      %1901 = vmatprep.subr.mxu0 0.0
      %1902 = vmatpush2.msra.mxu0 0.0
      %1903 = vmatprep.subr.mxu0 0.0
      %1904 = vmatpush2.msra.mxu0 0.0
      %1905 = vmatprep.subr.mxu0 0.0
      %1906 = vmatpush2.msra.mxu0 0.0
      %1907 = vmatprep.subr.mxu0 0.0
      %1908 = vmatpush2.msra.mxu0 0.0
      %1909 = vmatprep.subr.mxu0 0.0
      %1910 = vmatpush2.msra.mxu0 0.0
      %1911 = vmatprep.subr.mxu0 0.0
      %1912 = vmatpush2.msra.mxu0 0.0
      %1913 = vmatprep.mubr.f32.mxu0 0.0
      %1914 = vmatmul.mubr.f32.gmra.mxu0 %v609
      %v1915 = vpop.f32.mrf.mxu0
      %v1916 = vadd.f32 0.0, %v1915
      %v1917 = vpop.f32.mrf.mxu0
      %1918 = vdwg.mxu0
      %s1919 = scalar_lea.vmem %s3, 64
      %v1920 = vld [vmem:[%s1919] sm:$0xff]
      %v1922 = vsel %vm763, %v1920, 0
      %1924 = vmatprep.subr.mxu0 0.0
      %1925 = vmatpush1.msra.mxu0 0.0
      %1926 = vmatprep.subr.mxu0 0.0
      %1927 = vmatpush1.msra.mxu0 0.0
      %1928 = vmatprep.subr.mxu0 0.0
      %1929 = vmatpush1.msra.mxu0 0.0
      %1930 = vmatprep.subr.mxu0 0.0
      %1931 = vmatpush1.msra.mxu0 0.0
      %1932 = vmatprep.subr.mxu0 0.0
      %1933 = vmatpush1.msra.mxu0 0.0
      %1934 = vmatprep.subr.mxu0 0.0
      %1935 = vmatpush1.msra.mxu0 0.0
      %1936 = vmatprep.subr.mxu0 0.0
      %1937 = vmatpush1.msra.mxu0 0.0
      %1938 = vmatprep.subr.mxu0 0.0
      %1939 = vmatpush1.msra.mxu0 0.0
      %1940 = vmatprep.subr.mxu0 0.0
      %1941 = vmatpush1.msra.mxu0 0.0
      %1942 = vmatprep.subr.mxu0 0.0
      %1943 = vmatpush1.msra.mxu0 0.0
      %1944 = vmatprep.subr.mxu0 0.0
      %1945 = vmatpush1.msra.mxu0 0.0
      %1946 = vmatprep.subr.mxu0 0.0
      %1947 = vmatpush1.msra.mxu0 0.0
      %1948 = vmatprep.subr.mxu0 0.0
      %1949 = vmatpush1.msra.mxu0 0.0
      %1950 = vmatprep.subr.mxu0 0.0
      %1951 = vmatpush1.msra.mxu0 0.0
      %1952 = vmatprep.subr.mxu0 0.0
      %1953 = vmatpush1.msra.mxu0 0.0
      %1954 = vmatprep.subr.mxu0 0.0
      %1955 = vmatpush1.msra.mxu0 %v1916
      %1956 = vmatprep.subr.mxu0 0.0
      %1957 = vmatpush2.msra.mxu0 0.0
      %1958 = vmatprep.subr.mxu0 0.0
      %1959 = vmatpush2.msra.mxu0 0.0
      %1960 = vmatprep.subr.mxu0 0.0
      %1961 = vmatpush2.msra.mxu0 0.0
      %1962 = vmatprep.subr.mxu0 0.0
      %1963 = vmatpush2.msra.mxu0 0.0
      %1964 = vmatprep.subr.mxu0 0.0
      %1965 = vmatpush2.msra.mxu0 0.0
      %1966 = vmatprep.subr.mxu0 0.0
      %1967 = vmatpush2.msra.mxu0 0.0
      %1968 = vmatprep.subr.mxu0 0.0
      %1969 = vmatpush2.msra.mxu0 0.0
      %1970 = vmatprep.subr.mxu0 0.0
      %1971 = vmatpush2.msra.mxu0 0.0
      %1972 = vmatprep.subr.mxu0 0.0
      %1973 = vmatpush2.msra.mxu0 0.0
      %1974 = vmatprep.subr.mxu0 0.0
      %1975 = vmatpush2.msra.mxu0 0.0
      %1976 = vmatprep.subr.mxu0 0.0
      %1977 = vmatpush2.msra.mxu0 0.0
      %1978 = vmatprep.subr.mxu0 0.0
      %1979 = vmatpush2.msra.mxu0 0.0
      %1980 = vmatprep.subr.mxu0 0.0
      %1981 = vmatpush2.msra.mxu0 0.0
      %1982 = vmatprep.subr.mxu0 0.0
      %1983 = vmatpush2.msra.mxu0 0.0
      %1984 = vmatprep.subr.mxu0 0.0
      %1985 = vmatpush2.msra.mxu0 0.0
      %1986 = vmatprep.subr.mxu0 0.0
      %1987 = vmatpush2.msra.mxu0 0.0
      %1988 = vmatprep.mubr.f32.mxu0 0.0
      %1989 = vmatmul.mubr.f32.gmra.mxu0 %v1922
      %v1990 = vpop.f32.mrf.mxu0
      %v1991 = vadd.f32 0.0, %v1990
      %v1992 = vpop.f32.mrf.mxu0
      %1993 = vdwg.mxu0
      %v1994 = vadd.f32 %v1839, %v1991
      %v1995 = vld [vmem:[%s4] sm:$0xff]
      %1997 = vset.pattern.permute.xlu0 0
      %1998 = vperm.xlu0 %1997, %v1995
      %v1999 = vpop.permute.xlu0 %1998
      %v2001 = vadd.f32 %v1994, %v1999
      %v2002 = vmax.f32 %v2001, 0.0
      %v2003 = vld [vmem:[%s7] sm:$0xff]
      %v2004 = vld [vmem:[%s7 + $0x8] sm:$0xff]
      %v2005 = vld [vmem:[%s7 + $0x10] sm:$0xff]
      %v2006 = vld [vmem:[%s8] sm:$0xff]
      %v2007 = vld [vmem:[%s8 + $0x8] sm:$0xff]
      %v2008 = vld [vmem:[%s8 + $0x10] sm:$0xff]
      %2010 = vset.pattern.permute.xlu0 0
      %2011 = vperm.xlu0 %2010, %v2006
      %v2012 = vpop.permute.xlu0 %2011
      %2015 = vset.pattern.permute.xlu0 0
      %2016 = vperm.xlu0 %2015, %v2007
      %v2017 = vpop.permute.xlu0 %2016
      %2020 = vset.pattern.permute.xlu0 0
      %2021 = vperm.xlu0 %2020, %v2008
      %v2022 = vpop.permute.xlu0 %2021
      %v2025 = vsel %vm763, %v2003, 0
      %v2028 = vsel %vm763, %v2004, 0
      %v2031 = vsel %vm763, %v2005, 0
      %2033 = vmatprep.subr.mxu0 0.0
      %2034 = vmatpush1.msra.mxu0 0.0
      %2035 = vmatprep.subr.mxu0 0.0
      %2036 = vmatpush1.msra.mxu0 0.0
      %2037 = vmatprep.subr.mxu0 0.0
      %2038 = vmatpush1.msra.mxu0 0.0
      %2039 = vmatprep.subr.mxu0 0.0
      %2040 = vmatpush1.msra.mxu0 0.0
      %2041 = vmatprep.subr.mxu0 0.0
      %2042 = vmatpush1.msra.mxu0 0.0
      %2043 = vmatprep.subr.mxu0 0.0
      %2044 = vmatpush1.msra.mxu0 0.0
      %2045 = vmatprep.subr.mxu0 0.0
      %2046 = vmatpush1.msra.mxu0 0.0
      %2047 = vmatprep.subr.mxu0 0.0
      %2048 = vmatpush1.msra.mxu0 0.0
      %2049 = vmatprep.subr.mxu0 0.0
      %2050 = vmatpush1.msra.mxu0 0.0
      %2051 = vmatprep.subr.mxu0 0.0
      %2052 = vmatpush1.msra.mxu0 0.0
      %2053 = vmatprep.subr.mxu0 0.0
      %2054 = vmatpush1.msra.mxu0 0.0
      %2055 = vmatprep.subr.mxu0 0.0
      %2056 = vmatpush1.msra.mxu0 0.0
      %2057 = vmatprep.subr.mxu0 0.0
      %2058 = vmatpush1.msra.mxu0 0.0
      %2059 = vmatprep.subr.mxu0 0.0
      %2060 = vmatpush1.msra.mxu0 0.0
      %2061 = vmatprep.subr.mxu0 0.0
      %2062 = vmatpush1.msra.mxu0 0.0
      %2063 = vmatprep.subr.mxu0 0.0
      %2064 = vmatpush1.msra.mxu0 %v2002
      %2065 = vmatprep.subr.mxu0 0.0
      %2066 = vmatpush2.msra.mxu0 0.0
      %2067 = vmatprep.subr.mxu0 0.0
      %2068 = vmatpush2.msra.mxu0 0.0
      %2069 = vmatprep.subr.mxu0 0.0
      %2070 = vmatpush2.msra.mxu0 0.0
      %2071 = vmatprep.subr.mxu0 0.0
      %2072 = vmatpush2.msra.mxu0 0.0
      %2073 = vmatprep.subr.mxu0 0.0
      %2074 = vmatpush2.msra.mxu0 0.0
      %2075 = vmatprep.subr.mxu0 0.0
      %2076 = vmatpush2.msra.mxu0 0.0
      %2077 = vmatprep.subr.mxu0 0.0
      %2078 = vmatpush2.msra.mxu0 0.0
      %2079 = vmatprep.subr.mxu0 0.0
      %2080 = vmatpush2.msra.mxu0 0.0
      %2081 = vmatprep.subr.mxu0 0.0
      %2082 = vmatpush2.msra.mxu0 0.0
      %2083 = vmatprep.subr.mxu0 0.0
      %2084 = vmatpush2.msra.mxu0 0.0
      %2085 = vmatprep.subr.mxu0 0.0
      %2086 = vmatpush2.msra.mxu0 0.0
      %2087 = vmatprep.subr.mxu0 0.0
      %2088 = vmatpush2.msra.mxu0 0.0
      %2089 = vmatprep.subr.mxu0 0.0
      %2090 = vmatpush2.msra.mxu0 0.0
      %2091 = vmatprep.subr.mxu0 0.0
      %2092 = vmatpush2.msra.mxu0 0.0
      %2093 = vmatprep.subr.mxu0 0.0
      %2094 = vmatpush2.msra.mxu0 0.0
      %2095 = vmatprep.subr.mxu0 0.0
      %2096 = vmatpush2.msra.mxu0 0.0
      %2097 = vmatprep.mubr.f32.mxu0 0.0
      %2098 = vmatmul.mubr.f32.gmra.mxu0 %v2025
      %v2099 = vpop.f32.mrf.mxu0
      %v2100 = vadd.f32 %v2012, %v2099
      %v2101 = vpop.f32.mrf.mxu0
      %2102 = vmatprep.mubr.f32.mxu0 0.0
      %2103 = vmatmul.mubr.f32.gmra.mxu0 %v2028
      %v2104 = vpop.f32.mrf.mxu0
      %v2105 = vadd.f32 %v2017, %v2104
      %v2106 = vpop.f32.mrf.mxu0
      %2107 = vmatprep.mubr.f32.mxu0 0.0
      %2108 = vmatmul.mubr.f32.gmra.mxu0 %v2031
      %v2109 = vpop.f32.mrf.mxu0
      %v2110 = vadd.f32 %v2022, %v2109
      %v2111 = vpop.f32.mrf.mxu0
      %2112 = vdwg.mxu0
      %2113 = vxpose.xlu0.b32.start [1/16] %v2100, 128
      %2114 = vxpose.xlu0.b32.cont [2/16] 0.0, 128
      %2115 = vxpose.xlu0.b32.cont [3/16] 0.0, 128
      %2116 = vxpose.xlu0.b32.cont [4/16] 0.0, 128
      %2117 = vxpose.xlu0.b32.cont [5/16] 0.0, 128
      %2118 = vxpose.xlu0.b32.cont [6/16] 0.0, 128
      %2119 = vxpose.xlu0.b32.cont [7/16] 0.0, 128
      %2120 = vxpose.xlu0.b32.cont [8/16] 0.0, 128
      %2121 = vxpose.xlu0.b32.cont [9/16] 0.0, 128
      %2122 = vxpose.xlu0.b32.cont [10/16] 0.0, 128
      %2123 = vxpose.xlu0.b32.cont [11/16] 0.0, 128
      %2124 = vxpose.xlu0.b32.cont [12/16] 0.0, 128
      %2125 = vxpose.xlu0.b32.cont [13/16] 0.0, 128
      %2126 = vxpose.xlu0.b32.cont [14/16] 0.0, 128
      %2127 = vxpose.xlu0.b32.cont [15/16] 0.0, 128
      %2128 = vxpose.xlu0.b32.end [16/16] 0.0, 128
      %v2129 = vpop.trf.xlu0
      %v2130 = vpop.trf.xlu0
      %v2131 = vpop.trf.xlu0
      %v2132 = vpop.trf.xlu0
      %v2133 = vpop.trf.xlu0
      %v2134 = vpop.trf.xlu0
      %v2135 = vpop.trf.xlu0
      %v2136 = vpop.trf.xlu0
      %v2137 = vpop.trf.xlu0
      %v2138 = vpop.trf.xlu0
      %v2139 = vpop.trf.xlu0
      %v2140 = vpop.trf.xlu0
      %v2141 = vpop.trf.xlu0
      %v2142 = vpop.trf.xlu0
      %v2143 = vpop.trf.xlu0
      %v2144 = vpop.trf.xlu0
      %v2145 = vld [vmem:[%s9] sm:$0xff]
      %vm2146 = vcmask 31744
      %v2148 = vsel %vm2146, %v2129, 0
      %v2151 = vsel %vm2146, %v2130, 0
      %v2154 = vsel %vm2146, %v2131, 0
      %v2157 = vsel %vm2146, %v2132, 0
      %v2160 = vsel %vm2146, %v2133, 0
      %v2163 = vsel %vm2146, %v2134, 0
      %v2166 = vsel %vm2146, %v2135, 0
      %v2169 = vsel %vm2146, %v2136, 0
      %vm2171 = vcmask 1043456
      %v2173 = vsel %vm2171, %v2105, 0
      %2175 = vmatprep.subr.mxu0 0.0
      %2176 = vmatpush1.msra.mxu0 0.0
      %2177 = vmatprep.subr.mxu0 0.0
      %2178 = vmatpush1.msra.mxu0 0.0
      %2179 = vmatprep.subr.mxu0 0.0
      %2180 = vmatpush1.msra.mxu0 0.0
      %2181 = vmatprep.subr.mxu0 0.0
      %2182 = vmatpush1.msra.mxu0 0.0
      %2183 = vmatprep.subr.mxu0 0.0
      %2184 = vmatpush1.msra.mxu0 0.0
      %2185 = vmatprep.subr.mxu0 0.0
      %2186 = vmatpush1.msra.mxu0 0.0
      %2187 = vmatprep.subr.mxu0 0.0
      %2188 = vmatpush1.msra.mxu0 0.0
      %2189 = vmatprep.subr.mxu0 0.0
      %2190 = vmatpush1.msra.mxu0 0.0
      %2191 = vmatprep.subr.mxu0 0.0
      %2192 = vmatpush1.msra.mxu0 0.0
      %2193 = vmatprep.subr.mxu0 0.0
      %2194 = vmatpush1.msra.mxu0 0.0
      %2195 = vmatprep.subr.mxu0 0.0
      %2196 = vmatpush1.msra.mxu0 0.0
      %2197 = vmatprep.subr.mxu0 0.0
      %2198 = vmatpush1.msra.mxu0 0.0
      %2199 = vmatprep.subr.mxu0 0.0
      %2200 = vmatpush1.msra.mxu0 0.0
      %2201 = vmatprep.subr.mxu0 0.0
      %2202 = vmatpush1.msra.mxu0 0.0
      %2203 = vmatprep.subr.mxu0 0.0
      %2204 = vmatpush1.msra.mxu0 0.0
      %2205 = vmatprep.subr.mxu0 0.0
      %2206 = vmatpush1.msra.mxu0 %v2173
      %2207 = vmatprep.subr.mxu0 0.0
      %2208 = vmatpush2.msra.mxu0 0.0
      %2209 = vmatprep.subr.mxu0 0.0
      %2210 = vmatpush2.msra.mxu0 0.0
      %2211 = vmatprep.subr.mxu0 0.0
      %2212 = vmatpush2.msra.mxu0 0.0
      %2213 = vmatprep.subr.mxu0 0.0
      %2214 = vmatpush2.msra.mxu0 0.0
      %2215 = vmatprep.subr.mxu0 0.0
      %2216 = vmatpush2.msra.mxu0 0.0
      %2217 = vmatprep.subr.mxu0 0.0
      %2218 = vmatpush2.msra.mxu0 0.0
      %2219 = vmatprep.subr.mxu0 0.0
      %2220 = vmatpush2.msra.mxu0 0.0
      %2221 = vmatprep.subr.mxu0 0.0
      %2222 = vmatpush2.msra.mxu0 0.0
      %2223 = vmatprep.subr.mxu0 0.0
      %2224 = vmatpush2.msra.mxu0 0.0
      %2225 = vmatprep.subr.mxu0 0.0
      %2226 = vmatpush2.msra.mxu0 0.0
      %2227 = vmatprep.subr.mxu0 0.0
      %2228 = vmatpush2.msra.mxu0 0.0
      %2229 = vmatprep.subr.mxu0 0.0
      %2230 = vmatpush2.msra.mxu0 0.0
      %2231 = vmatprep.subr.mxu0 0.0
      %2232 = vmatpush2.msra.mxu0 0.0
      %2233 = vmatprep.subr.mxu0 0.0
      %2234 = vmatpush2.msra.mxu0 0.0
      %2235 = vmatprep.subr.mxu0 0.0
      %2236 = vmatpush2.msra.mxu0 0.0
      %2237 = vmatprep.subr.mxu0 0.0
      %2238 = vmatpush2.msra.mxu0 0.0
      %2239 = vmatprep.mubr.f32.mxu0 0.0
      %2240 = vmatmul.mubr.f32.gmra.mxu0 %v2148
      %v2241 = vpop.f32.mrf.mxu0
      %v2242 = vadd.f32 0.0, %v2241
      %v2243 = vpop.f32.mrf.mxu0
      %2244 = vmatprep.mubr.f32.mxu0 0.0
      %2245 = vmatmul.mubr.f32.gmra.mxu0 %v2151
      %v2246 = vpop.f32.mrf.mxu0
      %v2247 = vadd.f32 0.0, %v2246
      %v2248 = vpop.f32.mrf.mxu0
      %2249 = vmatprep.mubr.f32.mxu0 0.0
      %2250 = vmatmul.mubr.f32.gmra.mxu0 %v2154
      %v2251 = vpop.f32.mrf.mxu0
      %v2252 = vadd.f32 0.0, %v2251
      %v2253 = vpop.f32.mrf.mxu0
      %2254 = vmatprep.mubr.f32.mxu0 0.0
      %2255 = vmatmul.mubr.f32.gmra.mxu0 %v2157
      %v2256 = vpop.f32.mrf.mxu0
      %v2257 = vadd.f32 0.0, %v2256
      %v2258 = vpop.f32.mrf.mxu0
      %2259 = vmatprep.mubr.f32.mxu0 0.0
      %2260 = vmatmul.mubr.f32.gmra.mxu0 %v2160
      %v2261 = vpop.f32.mrf.mxu0
      %v2262 = vadd.f32 0.0, %v2261
      %v2263 = vpop.f32.mrf.mxu0
      %2264 = vmatprep.mubr.f32.mxu0 0.0
      %2265 = vmatmul.mubr.f32.gmra.mxu0 %v2163
      %v2266 = vpop.f32.mrf.mxu0
      %v2267 = vadd.f32 0.0, %v2266
      %v2268 = vpop.f32.mrf.mxu0
      %2269 = vmatprep.mubr.f32.mxu0 0.0
      %2270 = vmatmul.mubr.f32.gmra.mxu0 %v2166
      %v2271 = vpop.f32.mrf.mxu0
      %v2272 = vadd.f32 0.0, %v2271
      %v2273 = vpop.f32.mrf.mxu0
      %2274 = vmatprep.mubr.f32.mxu0 0.0
      %2275 = vmatmul.mubr.f32.gmra.mxu0 %v2169
      %v2276 = vpop.f32.mrf.mxu0
      %v2277 = vadd.f32 0.0, %v2276
      %v2278 = vpop.f32.mrf.mxu0
      %2279 = vdwg.mxu0
      %v2280 = vmul.f32 %v2242, 0.5
      %v2281 = vmul.f32 %v2247, 0.5
      %v2282 = vmul.f32 %v2252, 0.5
      %v2283 = vmul.f32 %v2257, 0.5
      %v2284 = vmul.f32 %v2262, 0.5
      %v2285 = vmul.f32 %v2267, 0.5
      %v2286 = vmul.f32 %v2272, 0.5
      %v2287 = vmul.f32 %v2277, 0.5
      %v2288 = vsel %vm607, %v2280, -inf
      %2289 = vmax.xlane.f32.xlu0 %v2288
      %v2290 = vpop.xlane.xlu0 %2289
      %v2291 = vsel %vm607, %v2281, -inf
      %2292 = vmax.xlane.f32.xlu0 %v2291
      %v2293 = vpop.xlane.xlu0 %2292
      %v2294 = vsel %vm607, %v2282, -inf
      %2295 = vmax.xlane.f32.xlu0 %v2294
      %v2296 = vpop.xlane.xlu0 %2295
      %v2297 = vsel %vm607, %v2283, -inf
      %2298 = vmax.xlane.f32.xlu0 %v2297
      %v2299 = vpop.xlane.xlu0 %2298
      %v2300 = vsel %vm607, %v2284, -inf
      %2301 = vmax.xlane.f32.xlu0 %v2300
      %v2302 = vpop.xlane.xlu0 %2301
      %v2303 = vsel %vm607, %v2285, -inf
      %2304 = vmax.xlane.f32.xlu0 %v2303
      %v2305 = vpop.xlane.xlu0 %2304
      %v2306 = vsel %vm607, %v2286, -inf
      %2307 = vmax.xlane.f32.xlu0 %v2306
      %v2308 = vpop.xlane.xlu0 %2307
      %v2309 = vsel %vm607, %v2287, -inf
      %2310 = vmax.xlane.f32.xlu0 %v2309
      %v2311 = vpop.xlane.xlu0 %2310
      %v2312 = vsub.f32 %v2280, %v2290
      %v2313 = vsub.f32 %v2281, %v2293
      %v2314 = vsub.f32 %v2282, %v2296
      %v2315 = vsub.f32 %v2283, %v2299
      %v2316 = vsub.f32 %v2284, %v2302
      %v2317 = vsub.f32 %v2285, %v2305
      %v2318 = vsub.f32 %v2286, %v2308
      %v2319 = vsub.f32 %v2287, %v2311
      %v2320 = vmul.f32 %v2312, 1.442695
      %v2321 = vpow.pop %v2320
      %v2322 = vmul.f32 %v2313, 1.442695
      %v2323 = vpow.pop %v2322
      %v2324 = vmul.f32 %v2314, 1.442695
      %v2325 = vpow.pop %v2324
      %v2326 = vmul.f32 %v2315, 1.442695
      %v2327 = vpow.pop %v2326
      %v2328 = vmul.f32 %v2316, 1.442695
      %v2329 = vpow.pop %v2328
      %v2330 = vmul.f32 %v2317, 1.442695
      %v2331 = vpow.pop %v2330
      %v2332 = vmul.f32 %v2318, 1.442695
      %v2333 = vpow.pop %v2332
      %v2334 = vmul.f32 %v2319, 1.442695
      %v2335 = vpow.pop %v2334
      %v2336 = vsel %vm607, %v2321, 0.0
      %2337 = vadd.xlane.f32.xlu0 %v2336
      %v2338 = vpop.xlane.xlu0 %2337
      %v2339 = vsel %vm607, %v2323, 0.0
      %2340 = vadd.xlane.f32.xlu0 %v2339
      %v2341 = vpop.xlane.xlu0 %2340
      %v2342 = vsel %vm607, %v2325, 0.0
      %2343 = vadd.xlane.f32.xlu0 %v2342
      %v2344 = vpop.xlane.xlu0 %2343
      %v2345 = vsel %vm607, %v2327, 0.0
      %2346 = vadd.xlane.f32.xlu0 %v2345
      %v2347 = vpop.xlane.xlu0 %2346
      %v2348 = vsel %vm607, %v2329, 0.0
      %2349 = vadd.xlane.f32.xlu0 %v2348
      %v2350 = vpop.xlane.xlu0 %2349
      %v2351 = vsel %vm607, %v2331, 0.0
      %2352 = vadd.xlane.f32.xlu0 %v2351
      %v2353 = vpop.xlane.xlu0 %2352
      %v2354 = vsel %vm607, %v2333, 0.0
      %2355 = vadd.xlane.f32.xlu0 %v2354
      %v2356 = vpop.xlane.xlu0 %2355
      %v2357 = vsel %vm607, %v2335, 0.0
      %2358 = vadd.xlane.f32.xlu0 %v2357
      %v2359 = vpop.xlane.xlu0 %2358
      %v2360 = vrcp.pop %v2338
      %v2361 = vrcp.pop %v2341
      %v2362 = vrcp.pop %v2344
      %v2363 = vrcp.pop %v2347
      %v2364 = vrcp.pop %v2350
      %v2365 = vrcp.pop %v2353
      %v2366 = vrcp.pop %v2356
      %v2367 = vrcp.pop %v2359
      %v2368 = vmul.f32 %v2321, %v2360
      %v2369 = vmul.f32 %v2323, %v2361
      %v2370 = vmul.f32 %v2325, %v2362
      %v2371 = vmul.f32 %v2327, %v2363
      %v2372 = vmul.f32 %v2329, %v2364
      %v2373 = vmul.f32 %v2331, %v2365
      %v2374 = vmul.f32 %v2333, %v2366
      %v2375 = vmul.f32 %v2335, %v2367
      %v2377 = vsel %vm607, %v2110, 0
      %v2380 = vsel %vm607, %v2368, 0
      %v2383 = vsel %vm607, %v2369, 0
      %v2386 = vsel %vm607, %v2370, 0
      %v2389 = vsel %vm607, %v2371, 0
      %v2392 = vsel %vm607, %v2372, 0
      %v2395 = vsel %vm607, %v2373, 0
      %v2398 = vsel %vm607, %v2374, 0
      %v2401 = vsel %vm607, %v2375, 0
      %2403 = vmatprep.subr.mxu0 0.0
      %2404 = vmatpush1.xpose.msra.mxu0 0.0
      %2405 = vmatprep.subr.mxu0 0.0
      %2406 = vmatpush1.xpose.msra.mxu0 0.0
      %2407 = vmatprep.subr.mxu0 0.0
      %2408 = vmatpush1.xpose.msra.mxu0 0.0
      %2409 = vmatprep.subr.mxu0 0.0
      %2410 = vmatpush1.xpose.msra.mxu0 0.0
      %2411 = vmatprep.subr.mxu0 0.0
      %2412 = vmatpush1.xpose.msra.mxu0 0.0
      %2413 = vmatprep.subr.mxu0 0.0
      %2414 = vmatpush1.xpose.msra.mxu0 0.0
      %2415 = vmatprep.subr.mxu0 0.0
      %2416 = vmatpush1.xpose.msra.mxu0 0.0
      %2417 = vmatprep.subr.mxu0 0.0
      %2418 = vmatpush1.xpose.msra.mxu0 0.0
      %2419 = vmatprep.subr.mxu0 0.0
      %2420 = vmatpush1.xpose.msra.mxu0 %v2401
      %2421 = vmatprep.subr.mxu0 0.0
      %2422 = vmatpush1.xpose.msra.mxu0 %v2398
      %2423 = vmatprep.subr.mxu0 0.0
      %2424 = vmatpush1.xpose.msra.mxu0 %v2395
      %2425 = vmatprep.subr.mxu0 0.0
      %2426 = vmatpush1.xpose.msra.mxu0 %v2392
      %2427 = vmatprep.subr.mxu0 0.0
      %2428 = vmatpush1.xpose.msra.mxu0 %v2389
      %2429 = vmatprep.subr.mxu0 0.0
      %2430 = vmatpush1.xpose.msra.mxu0 %v2386
      %2431 = vmatprep.subr.mxu0 0.0
      %2432 = vmatpush1.xpose.msra.mxu0 %v2383
      %2433 = vmatprep.subr.mxu0 0.0
      %2434 = vmatpush1.xpose.msra.mxu0 %v2380
      %2435 = vmatprep.subr.mxu0 0.0
      %2436 = vmatpush2.xpose.msra.mxu0 0.0
      %2437 = vmatprep.subr.mxu0 0.0
      %2438 = vmatpush2.xpose.msra.mxu0 0.0
      %2439 = vmatprep.subr.mxu0 0.0
      %2440 = vmatpush2.xpose.msra.mxu0 0.0
      %2441 = vmatprep.subr.mxu0 0.0
      %2442 = vmatpush2.xpose.msra.mxu0 0.0
      %2443 = vmatprep.subr.mxu0 0.0
      %2444 = vmatpush2.xpose.msra.mxu0 0.0
      %2445 = vmatprep.subr.mxu0 0.0
      %2446 = vmatpush2.xpose.msra.mxu0 0.0
      %2447 = vmatprep.subr.mxu0 0.0
      %2448 = vmatpush2.xpose.msra.mxu0 0.0
      %2449 = vmatprep.subr.mxu0 0.0
      %2450 = vmatpush2.xpose.msra.mxu0 0.0
      %2451 = vmatprep.subr.mxu0 0.0
      %2452 = vmatpush2.xpose.msra.mxu0 0.0
      %2453 = vmatprep.subr.mxu0 0.0
      %2454 = vmatpush2.xpose.msra.mxu0 0.0
      %2455 = vmatprep.subr.mxu0 0.0
      %2456 = vmatpush2.xpose.msra.mxu0 0.0
      %2457 = vmatprep.subr.mxu0 0.0
      %2458 = vmatpush2.xpose.msra.mxu0 0.0
      %2459 = vmatprep.subr.mxu0 0.0
      %2460 = vmatpush2.xpose.msra.mxu0 0.0
      %2461 = vmatprep.subr.mxu0 0.0
      %2462 = vmatpush2.xpose.msra.mxu0 0.0
      %2463 = vmatprep.subr.mxu0 0.0
      %2464 = vmatpush2.xpose.msra.mxu0 0.0
      %2465 = vmatprep.subr.mxu0 0.0
      %2466 = vmatpush2.xpose.msra.mxu0 0.0
      %2467 = vmatprep.mubr.f32.mxu0 0.0
      %2468 = vmatmul.mubr.f32.gmra.mxu0 %v2377
      %v2469 = vpop.f32.mrf.mxu0
      %v2470 = vadd.f32 0.0, %v2469
      %v2471 = vpop.f32.mrf.mxu0
      %2472 = vdwg.mxu0
      %2473 = vrot.lane.b32.xlu0 %v2129, 124
      %v2474 = vpop.permute.xlu0 %2473
      %2475 = vrot.lane.b32.xlu0 %v2130, 124
      %v2476 = vpop.permute.xlu0 %2475
      %2477 = vrot.lane.b32.xlu0 %v2131, 124
      %v2478 = vpop.permute.xlu0 %2477
      %2479 = vrot.lane.b32.xlu0 %v2132, 124
      %v2480 = vpop.permute.xlu0 %2479
      %2481 = vrot.lane.b32.xlu0 %v2133, 124
      %v2482 = vpop.permute.xlu0 %2481
      %2483 = vrot.lane.b32.xlu0 %v2134, 124
      %v2484 = vpop.permute.xlu0 %2483
      %2485 = vrot.lane.b32.xlu0 %v2135, 124
      %v2486 = vpop.permute.xlu0 %2485
      %2487 = vrot.lane.b32.xlu0 %v2136, 124
      %v2488 = vpop.permute.xlu0 %2487
      %v2489 = vrot.slane %v2105, 4
      %v2490 = vsel %vm2146, %v2474, 0
      %v2492 = vsel %vm2146, %v2476, 0
      %v2494 = vsel %vm2146, %v2478, 0
      %v2496 = vsel %vm2146, %v2480, 0
      %v2498 = vsel %vm2146, %v2482, 0
      %v2500 = vsel %vm2146, %v2484, 0
      %v2502 = vsel %vm2146, %v2486, 0
      %v2504 = vsel %vm2146, %v2488, 0
      %v2506 = vsel %vm2171, %v2489, 0
      %2508 = vmatprep.subr.mxu0 0.0
      %2509 = vmatpush1.msra.mxu0 0.0
      %2510 = vmatprep.subr.mxu0 0.0
      %2511 = vmatpush1.msra.mxu0 0.0
      %2512 = vmatprep.subr.mxu0 0.0
      %2513 = vmatpush1.msra.mxu0 0.0
      %2514 = vmatprep.subr.mxu0 0.0
      %2515 = vmatpush1.msra.mxu0 0.0
      %2516 = vmatprep.subr.mxu0 0.0
      %2517 = vmatpush1.msra.mxu0 0.0
      %2518 = vmatprep.subr.mxu0 0.0
      %2519 = vmatpush1.msra.mxu0 0.0
      %2520 = vmatprep.subr.mxu0 0.0
      %2521 = vmatpush1.msra.mxu0 0.0
      %2522 = vmatprep.subr.mxu0 0.0
      %2523 = vmatpush1.msra.mxu0 0.0
      %2524 = vmatprep.subr.mxu0 0.0
      %2525 = vmatpush1.msra.mxu0 0.0
      %2526 = vmatprep.subr.mxu0 0.0
      %2527 = vmatpush1.msra.mxu0 0.0
      %2528 = vmatprep.subr.mxu0 0.0
      %2529 = vmatpush1.msra.mxu0 0.0
      %2530 = vmatprep.subr.mxu0 0.0
      %2531 = vmatpush1.msra.mxu0 0.0
      %2532 = vmatprep.subr.mxu0 0.0
      %2533 = vmatpush1.msra.mxu0 0.0
      %2534 = vmatprep.subr.mxu0 0.0
      %2535 = vmatpush1.msra.mxu0 0.0
      %2536 = vmatprep.subr.mxu0 0.0
      %2537 = vmatpush1.msra.mxu0 0.0
      %2538 = vmatprep.subr.mxu0 0.0
      %2539 = vmatpush1.msra.mxu0 %v2506
      %2540 = vmatprep.subr.mxu0 0.0
      %2541 = vmatpush2.msra.mxu0 0.0
      %2542 = vmatprep.subr.mxu0 0.0
      %2543 = vmatpush2.msra.mxu0 0.0
      %2544 = vmatprep.subr.mxu0 0.0
      %2545 = vmatpush2.msra.mxu0 0.0
      %2546 = vmatprep.subr.mxu0 0.0
      %2547 = vmatpush2.msra.mxu0 0.0
      %2548 = vmatprep.subr.mxu0 0.0
      %2549 = vmatpush2.msra.mxu0 0.0
      %2550 = vmatprep.subr.mxu0 0.0
      %2551 = vmatpush2.msra.mxu0 0.0
      %2552 = vmatprep.subr.mxu0 0.0
      %2553 = vmatpush2.msra.mxu0 0.0
      %2554 = vmatprep.subr.mxu0 0.0
      %2555 = vmatpush2.msra.mxu0 0.0
      %2556 = vmatprep.subr.mxu0 0.0
      %2557 = vmatpush2.msra.mxu0 0.0
      %2558 = vmatprep.subr.mxu0 0.0
      %2559 = vmatpush2.msra.mxu0 0.0
      %2560 = vmatprep.subr.mxu0 0.0
      %2561 = vmatpush2.msra.mxu0 0.0
      %2562 = vmatprep.subr.mxu0 0.0
      %2563 = vmatpush2.msra.mxu0 0.0
      %2564 = vmatprep.subr.mxu0 0.0
      %2565 = vmatpush2.msra.mxu0 0.0
      %2566 = vmatprep.subr.mxu0 0.0
      %2567 = vmatpush2.msra.mxu0 0.0
      %2568 = vmatprep.subr.mxu0 0.0
      %2569 = vmatpush2.msra.mxu0 0.0
      %2570 = vmatprep.subr.mxu0 0.0
      %2571 = vmatpush2.msra.mxu0 0.0
      %2572 = vmatprep.mubr.f32.mxu0 0.0
      %2573 = vmatmul.mubr.f32.gmra.mxu0 %v2490
      %v2574 = vpop.f32.mrf.mxu0
      %v2575 = vadd.f32 0.0, %v2574
      %v2576 = vpop.f32.mrf.mxu0
      %2577 = vmatprep.mubr.f32.mxu0 0.0
      %2578 = vmatmul.mubr.f32.gmra.mxu0 %v2492
      %v2579 = vpop.f32.mrf.mxu0
      %v2580 = vadd.f32 0.0, %v2579
      %v2581 = vpop.f32.mrf.mxu0
      %2582 = vmatprep.mubr.f32.mxu0 0.0
      %2583 = vmatmul.mubr.f32.gmra.mxu0 %v2494
      %v2584 = vpop.f32.mrf.mxu0
      %v2585 = vadd.f32 0.0, %v2584
      %v2586 = vpop.f32.mrf.mxu0
      %2587 = vmatprep.mubr.f32.mxu0 0.0
      %2588 = vmatmul.mubr.f32.gmra.mxu0 %v2496
      %v2589 = vpop.f32.mrf.mxu0
      %v2590 = vadd.f32 0.0, %v2589
      %v2591 = vpop.f32.mrf.mxu0
      %2592 = vmatprep.mubr.f32.mxu0 0.0
      %2593 = vmatmul.mubr.f32.gmra.mxu0 %v2498
      %v2594 = vpop.f32.mrf.mxu0
      %v2595 = vadd.f32 0.0, %v2594
      %v2596 = vpop.f32.mrf.mxu0
      %2597 = vmatprep.mubr.f32.mxu0 0.0
      %2598 = vmatmul.mubr.f32.gmra.mxu0 %v2500
      %v2599 = vpop.f32.mrf.mxu0
      %v2600 = vadd.f32 0.0, %v2599
      %v2601 = vpop.f32.mrf.mxu0
      %2602 = vmatprep.mubr.f32.mxu0 0.0
      %2603 = vmatmul.mubr.f32.gmra.mxu0 %v2502
      %v2604 = vpop.f32.mrf.mxu0
      %v2605 = vadd.f32 0.0, %v2604
      %v2606 = vpop.f32.mrf.mxu0
      %2607 = vmatprep.mubr.f32.mxu0 0.0
      %2608 = vmatmul.mubr.f32.gmra.mxu0 %v2504
      %v2609 = vpop.f32.mrf.mxu0
      %v2610 = vadd.f32 0.0, %v2609
      %v2611 = vpop.f32.mrf.mxu0
      %2612 = vdwg.mxu0
      %v2613 = vmul.f32 %v2575, 0.5
      %v2614 = vmul.f32 %v2580, 0.5
      %v2615 = vmul.f32 %v2585, 0.5
      %v2616 = vmul.f32 %v2590, 0.5
      %v2617 = vmul.f32 %v2595, 0.5
      %v2618 = vmul.f32 %v2600, 0.5
      %v2619 = vmul.f32 %v2605, 0.5
      %v2620 = vmul.f32 %v2610, 0.5
      %v2621 = vsel %vm607, %v2613, -inf
      %2622 = vmax.xlane.f32.xlu0 %v2621
      %v2623 = vpop.xlane.xlu0 %2622
      %v2624 = vsel %vm607, %v2614, -inf
      %2625 = vmax.xlane.f32.xlu0 %v2624
      %v2626 = vpop.xlane.xlu0 %2625
      %v2627 = vsel %vm607, %v2615, -inf
      %2628 = vmax.xlane.f32.xlu0 %v2627
      %v2629 = vpop.xlane.xlu0 %2628
      %v2630 = vsel %vm607, %v2616, -inf
      %2631 = vmax.xlane.f32.xlu0 %v2630
      %v2632 = vpop.xlane.xlu0 %2631
      %v2633 = vsel %vm607, %v2617, -inf
      %2634 = vmax.xlane.f32.xlu0 %v2633
      %v2635 = vpop.xlane.xlu0 %2634
      %v2636 = vsel %vm607, %v2618, -inf
      %2637 = vmax.xlane.f32.xlu0 %v2636
      %v2638 = vpop.xlane.xlu0 %2637
      %v2639 = vsel %vm607, %v2619, -inf
      %2640 = vmax.xlane.f32.xlu0 %v2639
      %v2641 = vpop.xlane.xlu0 %2640
      %v2642 = vsel %vm607, %v2620, -inf
      %2643 = vmax.xlane.f32.xlu0 %v2642
      %v2644 = vpop.xlane.xlu0 %2643
      %v2645 = vsub.f32 %v2613, %v2623
      %v2646 = vsub.f32 %v2614, %v2626
      %v2647 = vsub.f32 %v2615, %v2629
      %v2648 = vsub.f32 %v2616, %v2632
      %v2649 = vsub.f32 %v2617, %v2635
      %v2650 = vsub.f32 %v2618, %v2638
      %v2651 = vsub.f32 %v2619, %v2641
      %v2652 = vsub.f32 %v2620, %v2644
      %v2653 = vmul.f32 %v2645, 1.442695
      %v2654 = vpow.pop %v2653
      %v2655 = vmul.f32 %v2646, 1.442695
      %v2656 = vpow.pop %v2655
      %v2657 = vmul.f32 %v2647, 1.442695
      %v2658 = vpow.pop %v2657
      %v2659 = vmul.f32 %v2648, 1.442695
      %v2660 = vpow.pop %v2659
      %v2661 = vmul.f32 %v2649, 1.442695
      %v2662 = vpow.pop %v2661
      %v2663 = vmul.f32 %v2650, 1.442695
      %v2664 = vpow.pop %v2663
      %v2665 = vmul.f32 %v2651, 1.442695
      %v2666 = vpow.pop %v2665
      %v2667 = vmul.f32 %v2652, 1.442695
      %v2668 = vpow.pop %v2667
      %v2669 = vsel %vm607, %v2654, 0.0
      %2670 = vadd.xlane.f32.xlu0 %v2669
      %v2671 = vpop.xlane.xlu0 %2670
      %v2672 = vsel %vm607, %v2656, 0.0
      %2673 = vadd.xlane.f32.xlu0 %v2672
      %v2674 = vpop.xlane.xlu0 %2673
      %v2675 = vsel %vm607, %v2658, 0.0
      %2676 = vadd.xlane.f32.xlu0 %v2675
      %v2677 = vpop.xlane.xlu0 %2676
      %v2678 = vsel %vm607, %v2660, 0.0
      %2679 = vadd.xlane.f32.xlu0 %v2678
      %v2680 = vpop.xlane.xlu0 %2679
      %v2681 = vsel %vm607, %v2662, 0.0
      %2682 = vadd.xlane.f32.xlu0 %v2681
      %v2683 = vpop.xlane.xlu0 %2682
      %v2684 = vsel %vm607, %v2664, 0.0
      %2685 = vadd.xlane.f32.xlu0 %v2684
      %v2686 = vpop.xlane.xlu0 %2685
      %v2687 = vsel %vm607, %v2666, 0.0
      %2688 = vadd.xlane.f32.xlu0 %v2687
      %v2689 = vpop.xlane.xlu0 %2688
      %v2690 = vsel %vm607, %v2668, 0.0
      %2691 = vadd.xlane.f32.xlu0 %v2690
      %v2692 = vpop.xlane.xlu0 %2691
      %v2693 = vrcp.pop %v2671
      %v2694 = vrcp.pop %v2674
      %v2695 = vrcp.pop %v2677
      %v2696 = vrcp.pop %v2680
      %v2697 = vrcp.pop %v2683
      %v2698 = vrcp.pop %v2686
      %v2699 = vrcp.pop %v2689
      %v2700 = vrcp.pop %v2692
      %v2701 = vmul.f32 %v2654, %v2693
      %v2702 = vmul.f32 %v2656, %v2694
      %v2703 = vmul.f32 %v2658, %v2695
      %v2704 = vmul.f32 %v2660, %v2696
      %v2705 = vmul.f32 %v2662, %v2697
      %v2706 = vmul.f32 %v2664, %v2698
      %v2707 = vmul.f32 %v2666, %v2699
      %v2708 = vmul.f32 %v2668, %v2700
      %v2709 = vrot.slane %v2110, 4
      %v2710 = vsel %vm607, %v2709, 0
      %v2713 = vsel %vm607, %v2701, 0
      %v2716 = vsel %vm607, %v2702, 0
      %v2719 = vsel %vm607, %v2703, 0
      %v2722 = vsel %vm607, %v2704, 0
      %v2725 = vsel %vm607, %v2705, 0
      %v2728 = vsel %vm607, %v2706, 0
      %v2731 = vsel %vm607, %v2707, 0
      %v2734 = vsel %vm607, %v2708, 0
      %2736 = vmatprep.subr.mxu0 0.0
      %2737 = vmatpush1.xpose.msra.mxu0 0.0
      %2738 = vmatprep.subr.mxu0 0.0
      %2739 = vmatpush1.xpose.msra.mxu0 0.0
      %2740 = vmatprep.subr.mxu0 0.0
      %2741 = vmatpush1.xpose.msra.mxu0 0.0
      %2742 = vmatprep.subr.mxu0 0.0
      %2743 = vmatpush1.xpose.msra.mxu0 0.0
      %2744 = vmatprep.subr.mxu0 0.0
      %2745 = vmatpush1.xpose.msra.mxu0 0.0
      %2746 = vmatprep.subr.mxu0 0.0
      %2747 = vmatpush1.xpose.msra.mxu0 0.0
      %2748 = vmatprep.subr.mxu0 0.0
      %2749 = vmatpush1.xpose.msra.mxu0 0.0
      %2750 = vmatprep.subr.mxu0 0.0
      %2751 = vmatpush1.xpose.msra.mxu0 0.0
      %2752 = vmatprep.subr.mxu0 0.0
      %2753 = vmatpush1.xpose.msra.mxu0 %v2734
      %2754 = vmatprep.subr.mxu0 0.0
      %2755 = vmatpush1.xpose.msra.mxu0 %v2731
      %2756 = vmatprep.subr.mxu0 0.0
      %2757 = vmatpush1.xpose.msra.mxu0 %v2728
      %2758 = vmatprep.subr.mxu0 0.0
      %2759 = vmatpush1.xpose.msra.mxu0 %v2725
      %2760 = vmatprep.subr.mxu0 0.0
      %2761 = vmatpush1.xpose.msra.mxu0 %v2722
      %2762 = vmatprep.subr.mxu0 0.0
      %2763 = vmatpush1.xpose.msra.mxu0 %v2719
      %2764 = vmatprep.subr.mxu0 0.0
      %2765 = vmatpush1.xpose.msra.mxu0 %v2716
      %2766 = vmatprep.subr.mxu0 0.0
      %2767 = vmatpush1.xpose.msra.mxu0 %v2713
      %2768 = vmatprep.subr.mxu0 0.0
      %2769 = vmatpush2.xpose.msra.mxu0 0.0
      %2770 = vmatprep.subr.mxu0 0.0
      %2771 = vmatpush2.xpose.msra.mxu0 0.0
      %2772 = vmatprep.subr.mxu0 0.0
      %2773 = vmatpush2.xpose.msra.mxu0 0.0
      %2774 = vmatprep.subr.mxu0 0.0
      %2775 = vmatpush2.xpose.msra.mxu0 0.0
      %2776 = vmatprep.subr.mxu0 0.0
      %2777 = vmatpush2.xpose.msra.mxu0 0.0
      %2778 = vmatprep.subr.mxu0 0.0
      %2779 = vmatpush2.xpose.msra.mxu0 0.0
      %2780 = vmatprep.subr.mxu0 0.0
      %2781 = vmatpush2.xpose.msra.mxu0 0.0
      %2782 = vmatprep.subr.mxu0 0.0
      %2783 = vmatpush2.xpose.msra.mxu0 0.0
      %2784 = vmatprep.subr.mxu0 0.0
      %2785 = vmatpush2.xpose.msra.mxu0 0.0
      %2786 = vmatprep.subr.mxu0 0.0
      %2787 = vmatpush2.xpose.msra.mxu0 0.0
      %2788 = vmatprep.subr.mxu0 0.0
      %2789 = vmatpush2.xpose.msra.mxu0 0.0
      %2790 = vmatprep.subr.mxu0 0.0
      %2791 = vmatpush2.xpose.msra.mxu0 0.0
      %2792 = vmatprep.subr.mxu0 0.0
      %2793 = vmatpush2.xpose.msra.mxu0 0.0
      %2794 = vmatprep.subr.mxu0 0.0
      %2795 = vmatpush2.xpose.msra.mxu0 0.0
      %2796 = vmatprep.subr.mxu0 0.0
      %2797 = vmatpush2.xpose.msra.mxu0 0.0
      %2798 = vmatprep.subr.mxu0 0.0
      %2799 = vmatpush2.xpose.msra.mxu0 0.0
      %2800 = vmatprep.mubr.f32.mxu0 0.0
      %2801 = vmatmul.mubr.f32.gmra.mxu0 %v2710
      %v2802 = vpop.f32.mrf.mxu0
      %v2803 = vadd.f32 0.0, %v2802
      %v2804 = vpop.f32.mrf.mxu0
      %2805 = vdwg.mxu0
      %2807 = vrot.lane.b32.xlu0 %v2145, 124
      %v2808 = vpop.permute.xlu0 %2807
      %v2809 = vsel %vm2146, %v2808, 0
      %v2812 = vsel %vm2171, %v2803, 0
      %2814 = vmatprep.subr.mxu0 0.0
      %2815 = vmatpush1.msra.mxu0 0.0
      %2816 = vmatprep.subr.mxu0 0.0
      %2817 = vmatpush1.msra.mxu0 0.0
      %2818 = vmatprep.subr.mxu0 0.0
      %2819 = vmatpush1.msra.mxu0 0.0
      %2820 = vmatprep.subr.mxu0 0.0
      %2821 = vmatpush1.msra.mxu0 0.0
      %2822 = vmatprep.subr.mxu0 0.0
      %2823 = vmatpush1.msra.mxu0 0.0
      %2824 = vmatprep.subr.mxu0 0.0
      %2825 = vmatpush1.msra.mxu0 0.0
      %2826 = vmatprep.subr.mxu0 0.0
      %2827 = vmatpush1.msra.mxu0 0.0
      %2828 = vmatprep.subr.mxu0 0.0
      %2829 = vmatpush1.msra.mxu0 0.0
      %2830 = vmatprep.subr.mxu0 0.0
      %2831 = vmatpush1.msra.mxu0 0.0
      %2832 = vmatprep.subr.mxu0 0.0
      %2833 = vmatpush1.msra.mxu0 0.0
      %2834 = vmatprep.subr.mxu0 0.0
      %2835 = vmatpush1.msra.mxu0 0.0
      %2836 = vmatprep.subr.mxu0 0.0
      %2837 = vmatpush1.msra.mxu0 0.0
      %2838 = vmatprep.subr.mxu0 0.0
      %2839 = vmatpush1.msra.mxu0 0.0
      %2840 = vmatprep.subr.mxu0 0.0
      %2841 = vmatpush1.msra.mxu0 0.0
      %2842 = vmatprep.subr.mxu0 0.0
      %2843 = vmatpush1.msra.mxu0 0.0
      %2844 = vmatprep.subr.mxu0 0.0
      %2845 = vmatpush1.msra.mxu0 %v2812
      %2846 = vmatprep.subr.mxu0 0.0
      %2847 = vmatpush2.msra.mxu0 0.0
      %2848 = vmatprep.subr.mxu0 0.0
      %2849 = vmatpush2.msra.mxu0 0.0
      %2850 = vmatprep.subr.mxu0 0.0
      %2851 = vmatpush2.msra.mxu0 0.0
      %2852 = vmatprep.subr.mxu0 0.0
      %2853 = vmatpush2.msra.mxu0 0.0
      %2854 = vmatprep.subr.mxu0 0.0
      %2855 = vmatpush2.msra.mxu0 0.0
      %2856 = vmatprep.subr.mxu0 0.0
      %2857 = vmatpush2.msra.mxu0 0.0
      %2858 = vmatprep.subr.mxu0 0.0
      %2859 = vmatpush2.msra.mxu0 0.0
      %2860 = vmatprep.subr.mxu0 0.0
      %2861 = vmatpush2.msra.mxu0 0.0
      %2862 = vmatprep.subr.mxu0 0.0
      %2863 = vmatpush2.msra.mxu0 0.0
      %2864 = vmatprep.subr.mxu0 0.0
      %2865 = vmatpush2.msra.mxu0 0.0
      %2866 = vmatprep.subr.mxu0 0.0
      %2867 = vmatpush2.msra.mxu0 0.0
      %2868 = vmatprep.subr.mxu0 0.0
      %2869 = vmatpush2.msra.mxu0 0.0
      %2870 = vmatprep.subr.mxu0 0.0
      %2871 = vmatpush2.msra.mxu0 0.0
      %2872 = vmatprep.subr.mxu0 0.0
      %2873 = vmatpush2.msra.mxu0 0.0
      %2874 = vmatprep.subr.mxu0 0.0
      %2875 = vmatpush2.msra.mxu0 0.0
      %2876 = vmatprep.subr.mxu0 0.0
      %2877 = vmatpush2.msra.mxu0 0.0
      %2878 = vmatprep.mubr.f32.mxu0 0.0
      %2879 = vmatmul.mubr.f32.gmra.mxu0 %v2809
      %v2880 = vpop.f32.mrf.mxu0
      %v2881 = vadd.f32 0.0, %v2880
      %v2882 = vpop.f32.mrf.mxu0
      %2883 = vdwg.mxu0
      %v2884 = vsel %vm2146, %v2145, 0
      %v2887 = vsel %vm2171, %v2470, 0
      %2889 = vmatprep.subr.mxu0 0.0
      %2890 = vmatpush1.msra.mxu0 0.0
      %2891 = vmatprep.subr.mxu0 0.0
      %2892 = vmatpush1.msra.mxu0 0.0
      %2893 = vmatprep.subr.mxu0 0.0
      %2894 = vmatpush1.msra.mxu0 0.0
      %2895 = vmatprep.subr.mxu0 0.0
      %2896 = vmatpush1.msra.mxu0 0.0
      %2897 = vmatprep.subr.mxu0 0.0
      %2898 = vmatpush1.msra.mxu0 0.0
      %2899 = vmatprep.subr.mxu0 0.0
      %2900 = vmatpush1.msra.mxu0 0.0
      %2901 = vmatprep.subr.mxu0 0.0
      %2902 = vmatpush1.msra.mxu0 0.0
      %2903 = vmatprep.subr.mxu0 0.0
      %2904 = vmatpush1.msra.mxu0 0.0
      %2905 = vmatprep.subr.mxu0 0.0
      %2906 = vmatpush1.msra.mxu0 0.0
      %2907 = vmatprep.subr.mxu0 0.0
      %2908 = vmatpush1.msra.mxu0 0.0
      %2909 = vmatprep.subr.mxu0 0.0
      %2910 = vmatpush1.msra.mxu0 0.0
      %2911 = vmatprep.subr.mxu0 0.0
      %2912 = vmatpush1.msra.mxu0 0.0
      %2913 = vmatprep.subr.mxu0 0.0
      %2914 = vmatpush1.msra.mxu0 0.0
      %2915 = vmatprep.subr.mxu0 0.0
      %2916 = vmatpush1.msra.mxu0 0.0
      %2917 = vmatprep.subr.mxu0 0.0
      %2918 = vmatpush1.msra.mxu0 0.0
      %2919 = vmatprep.subr.mxu0 0.0
      %2920 = vmatpush1.msra.mxu0 %v2887
      %2921 = vmatprep.subr.mxu0 0.0
      %2922 = vmatpush2.msra.mxu0 0.0
      %2923 = vmatprep.subr.mxu0 0.0
      %2924 = vmatpush2.msra.mxu0 0.0
      %2925 = vmatprep.subr.mxu0 0.0
      %2926 = vmatpush2.msra.mxu0 0.0
      %2927 = vmatprep.subr.mxu0 0.0
      %2928 = vmatpush2.msra.mxu0 0.0
      %2929 = vmatprep.subr.mxu0 0.0
      %2930 = vmatpush2.msra.mxu0 0.0
      %2931 = vmatprep.subr.mxu0 0.0
      %2932 = vmatpush2.msra.mxu0 0.0
      %2933 = vmatprep.subr.mxu0 0.0
      %2934 = vmatpush2.msra.mxu0 0.0
      %2935 = vmatprep.subr.mxu0 0.0
      %2936 = vmatpush2.msra.mxu0 0.0
      %2937 = vmatprep.subr.mxu0 0.0
      %2938 = vmatpush2.msra.mxu0 0.0
      %2939 = vmatprep.subr.mxu0 0.0
      %2940 = vmatpush2.msra.mxu0 0.0
      %2941 = vmatprep.subr.mxu0 0.0
      %2942 = vmatpush2.msra.mxu0 0.0
      %2943 = vmatprep.subr.mxu0 0.0
      %2944 = vmatpush2.msra.mxu0 0.0
      %2945 = vmatprep.subr.mxu0 0.0
      %2946 = vmatpush2.msra.mxu0 0.0
      %2947 = vmatprep.subr.mxu0 0.0
      %2948 = vmatpush2.msra.mxu0 0.0
      %2949 = vmatprep.subr.mxu0 0.0
      %2950 = vmatpush2.msra.mxu0 0.0
      %2951 = vmatprep.subr.mxu0 0.0
      %2952 = vmatpush2.msra.mxu0 0.0
      %2953 = vmatprep.mubr.f32.mxu0 0.0
      %2954 = vmatmul.mubr.f32.gmra.mxu0 %v2884
      %v2955 = vpop.f32.mrf.mxu0
      %v2956 = vadd.f32 %v2881, %v2955
      %v2957 = vpop.f32.mrf.mxu0
      %2958 = vdwg.mxu0
      %v2959 = vld [vmem:[%s10] sm:$0xff]
      %2961 = vset.pattern.permute.xlu0 0
      %2962 = vperm.xlu0 %2961, %v2959
      %v2963 = vpop.permute.xlu0 %2962
      %v2965 = vadd.f32 %v2956, %v2963
      %v2966 = vadd.f32 %v2002, %v2965
      %v2967 = vld [vmem:[%s11] sm:$0xff]
      %v2968 = vld [vmem:[%s12] sm:$0xff]
      %v2969 = vsel %vm607, %v2966, 0.0
      %v2970 = vrot.slane %v2969, 4
      %v2971 = vadd.f32 %v2969, %v2970
      %v2972 = vrot.slane %v2971, 2
      %v2973 = vadd.f32 %v2971, %v2972
      %v2974 = vrot.slane %v2973, 1
      %v2975 = vadd.f32 %v2973, %v2974
      %v2976 = vrcp.pop 8.0
      %v2977 = vmul.f32 %v2975, %v2976
      %v2978 = vsub.f32 %v2966, %v2977
      %v2979 = vmul.f32 %v2978, %v2978
      %v2980 = vsel %vm607, %v2979, 0.0
      %v2981 = vrot.slane %v2980, 4
      %v2982 = vadd.f32 %v2980, %v2981
      %v2983 = vrot.slane %v2982, 2
      %v2984 = vadd.f32 %v2982, %v2983
      %v2985 = vrot.slane %v2984, 1
      %v2986 = vadd.f32 %v2984, %v2985
      %v2987 = vmul.f32 %v2986, %v2976
      %v2988 = vadd.f32 %v2987, 1e-05
      %v2989 = vrsqrt.pop %v2988
      %v2990 = vmul.f32 %v2978, %v2989
      %2992 = vset.pattern.permute.xlu0 0
      %2993 = vperm.xlu0 %2992, %v2967
      %v2994 = vpop.permute.xlu0 %2993
      %v2996 = vmul.f32 %v2990, %v2994
      %2998 = vset.pattern.permute.xlu0 0
      %2999 = vperm.xlu0 %2998, %v2968
      %v3000 = vpop.permute.xlu0 %2999
      %v3002 = vadd.f32 %v2996, %v3000
      %v3003 = vld [vmem:[%s13] sm:$0xff]
      %v3004 = vld [vmem:[%s14] sm:$0xff]
      %3006 = vset.pattern.permute.xlu0 0
      %3007 = vperm.xlu0 %3006, %v3004
      %v3008 = vpop.permute.xlu0 %3007
      %v3011 = vsel %vm763, %v3003, 0
      %3013 = vmatprep.subr.mxu0 0.0
      %3014 = vmatpush1.msra.mxu0 0.0
      %3015 = vmatprep.subr.mxu0 0.0
      %3016 = vmatpush1.msra.mxu0 0.0
      %3017 = vmatprep.subr.mxu0 0.0
      %3018 = vmatpush1.msra.mxu0 0.0
      %3019 = vmatprep.subr.mxu0 0.0
      %3020 = vmatpush1.msra.mxu0 0.0
      %3021 = vmatprep.subr.mxu0 0.0
      %3022 = vmatpush1.msra.mxu0 0.0
      %3023 = vmatprep.subr.mxu0 0.0
      %3024 = vmatpush1.msra.mxu0 0.0
      %3025 = vmatprep.subr.mxu0 0.0
      %3026 = vmatpush1.msra.mxu0 0.0
      %3027 = vmatprep.subr.mxu0 0.0
      %3028 = vmatpush1.msra.mxu0 0.0
      %3029 = vmatprep.subr.mxu0 0.0
      %3030 = vmatpush1.msra.mxu0 0.0
      %3031 = vmatprep.subr.mxu0 0.0
      %3032 = vmatpush1.msra.mxu0 0.0
      %3033 = vmatprep.subr.mxu0 0.0
      %3034 = vmatpush1.msra.mxu0 0.0
      %3035 = vmatprep.subr.mxu0 0.0
      %3036 = vmatpush1.msra.mxu0 0.0
      %3037 = vmatprep.subr.mxu0 0.0
      %3038 = vmatpush1.msra.mxu0 0.0
      %3039 = vmatprep.subr.mxu0 0.0
      %3040 = vmatpush1.msra.mxu0 0.0
      %3041 = vmatprep.subr.mxu0 0.0
      %3042 = vmatpush1.msra.mxu0 0.0
      %3043 = vmatprep.subr.mxu0 0.0
      %3044 = vmatpush1.msra.mxu0 %v3002
      %3045 = vmatprep.subr.mxu0 0.0
      %3046 = vmatpush2.msra.mxu0 0.0
      %3047 = vmatprep.subr.mxu0 0.0
      %3048 = vmatpush2.msra.mxu0 0.0
      %3049 = vmatprep.subr.mxu0 0.0
      %3050 = vmatpush2.msra.mxu0 0.0
      %3051 = vmatprep.subr.mxu0 0.0
      %3052 = vmatpush2.msra.mxu0 0.0
      %3053 = vmatprep.subr.mxu0 0.0
      %3054 = vmatpush2.msra.mxu0 0.0
      %3055 = vmatprep.subr.mxu0 0.0
      %3056 = vmatpush2.msra.mxu0 0.0
      %3057 = vmatprep.subr.mxu0 0.0
      %3058 = vmatpush2.msra.mxu0 0.0
      %3059 = vmatprep.subr.mxu0 0.0
      %3060 = vmatpush2.msra.mxu0 0.0
      %3061 = vmatprep.subr.mxu0 0.0
      %3062 = vmatpush2.msra.mxu0 0.0
      %3063 = vmatprep.subr.mxu0 0.0
      %3064 = vmatpush2.msra.mxu0 0.0
      %3065 = vmatprep.subr.mxu0 0.0
      %3066 = vmatpush2.msra.mxu0 0.0
      %3067 = vmatprep.subr.mxu0 0.0
      %3068 = vmatpush2.msra.mxu0 0.0
      %3069 = vmatprep.subr.mxu0 0.0
      %3070 = vmatpush2.msra.mxu0 0.0
      %3071 = vmatprep.subr.mxu0 0.0
      %3072 = vmatpush2.msra.mxu0 0.0
      %3073 = vmatprep.subr.mxu0 0.0
      %3074 = vmatpush2.msra.mxu0 0.0
      %3075 = vmatprep.subr.mxu0 0.0
      %3076 = vmatpush2.msra.mxu0 0.0
      %3077 = vmatprep.mubr.f32.mxu0 0.0
      %3078 = vmatmul.mubr.f32.gmra.mxu0 %v3011
      %v3079 = vpop.f32.mrf.mxu0
      %v3080 = vadd.f32 %v3008, %v3079
      %v3081 = vpop.f32.mrf.mxu0
      %3082 = vdwg.mxu0
      %v3083 = vmax.f32 %v3080, 0.0
      %v3084 = vld [vmem:[%s15] sm:$0xff]
      %v3085 = vld [vmem:[%s16] sm:$0xff]
      %3087 = vset.pattern.permute.xlu0 0
      %3088 = vperm.xlu0 %3087, %v3085
      %v3089 = vpop.permute.xlu0 %3088
      %v3092 = vsel %vm763, %v3084, 0
      %3094 = vmatprep.subr.mxu0 0.0
      %3095 = vmatpush1.msra.mxu0 0.0
      %3096 = vmatprep.subr.mxu0 0.0
      %3097 = vmatpush1.msra.mxu0 0.0
      %3098 = vmatprep.subr.mxu0 0.0
      %3099 = vmatpush1.msra.mxu0 0.0
      %3100 = vmatprep.subr.mxu0 0.0
      %3101 = vmatpush1.msra.mxu0 0.0
      %3102 = vmatprep.subr.mxu0 0.0
      %3103 = vmatpush1.msra.mxu0 0.0
      %3104 = vmatprep.subr.mxu0 0.0
      %3105 = vmatpush1.msra.mxu0 0.0
      %3106 = vmatprep.subr.mxu0 0.0
      %3107 = vmatpush1.msra.mxu0 0.0
      %3108 = vmatprep.subr.mxu0 0.0
      %3109 = vmatpush1.msra.mxu0 0.0
      %3110 = vmatprep.subr.mxu0 0.0
      %3111 = vmatpush1.msra.mxu0 0.0
      %3112 = vmatprep.subr.mxu0 0.0
      %3113 = vmatpush1.msra.mxu0 0.0
      %3114 = vmatprep.subr.mxu0 0.0
      %3115 = vmatpush1.msra.mxu0 0.0
      %3116 = vmatprep.subr.mxu0 0.0
      %3117 = vmatpush1.msra.mxu0 0.0
      %3118 = vmatprep.subr.mxu0 0.0
      %3119 = vmatpush1.msra.mxu0 0.0
      %3120 = vmatprep.subr.mxu0 0.0
      %3121 = vmatpush1.msra.mxu0 0.0
      %3122 = vmatprep.subr.mxu0 0.0
      %3123 = vmatpush1.msra.mxu0 0.0
      %3124 = vmatprep.subr.mxu0 0.0
      %3125 = vmatpush1.msra.mxu0 %v3083
      %3126 = vmatprep.subr.mxu0 0.0
      %3127 = vmatpush2.msra.mxu0 0.0
      %3128 = vmatprep.subr.mxu0 0.0
      %3129 = vmatpush2.msra.mxu0 0.0
      %3130 = vmatprep.subr.mxu0 0.0
      %3131 = vmatpush2.msra.mxu0 0.0
      %3132 = vmatprep.subr.mxu0 0.0
      %3133 = vmatpush2.msra.mxu0 0.0
      %3134 = vmatprep.subr.mxu0 0.0
      %3135 = vmatpush2.msra.mxu0 0.0
      %3136 = vmatprep.subr.mxu0 0.0
      %3137 = vmatpush2.msra.mxu0 0.0
      %3138 = vmatprep.subr.mxu0 0.0
      %3139 = vmatpush2.msra.mxu0 0.0
      %3140 = vmatprep.subr.mxu0 0.0
      %3141 = vmatpush2.msra.mxu0 0.0
      %3142 = vmatprep.subr.mxu0 0.0
      %3143 = vmatpush2.msra.mxu0 0.0
      %3144 = vmatprep.subr.mxu0 0.0
      %3145 = vmatpush2.msra.mxu0 0.0
      %3146 = vmatprep.subr.mxu0 0.0
      %3147 = vmatpush2.msra.mxu0 0.0
      %3148 = vmatprep.subr.mxu0 0.0
      %3149 = vmatpush2.msra.mxu0 0.0
      %3150 = vmatprep.subr.mxu0 0.0
      %3151 = vmatpush2.msra.mxu0 0.0
      %3152 = vmatprep.subr.mxu0 0.0
      %3153 = vmatpush2.msra.mxu0 0.0
      %3154 = vmatprep.subr.mxu0 0.0
      %3155 = vmatpush2.msra.mxu0 0.0
      %3156 = vmatprep.subr.mxu0 0.0
      %3157 = vmatpush2.msra.mxu0 0.0
      %3158 = vmatprep.mubr.f32.mxu0 0.0
      %3159 = vmatmul.mubr.f32.gmra.mxu0 %v3092
      %v3160 = vpop.f32.mrf.mxu0
      %v3161 = vadd.f32 %v3089, %v3160
      %v3162 = vpop.f32.mrf.mxu0
      %3163 = vdwg.mxu0
      %v3164 = vadd.f32 %v3002, %v3161
      %v3165 = vld [vmem:[%s17] sm:$0xff]
      %v3166 = vld [vmem:[%s18] sm:$0xff]
      %v3167 = vsel %vm607, %v3164, 0.0
      %v3168 = vrot.slane %v3167, 4
      %v3169 = vadd.f32 %v3167, %v3168
      %v3170 = vrot.slane %v3169, 2
      %v3171 = vadd.f32 %v3169, %v3170
      %v3172 = vrot.slane %v3171, 1
      %v3173 = vadd.f32 %v3171, %v3172
      %v3174 = vmul.f32 %v3173, %v2976
      %v3175 = vsub.f32 %v3164, %v3174
      %v3176 = vmul.f32 %v3175, %v3175
      %v3177 = vsel %vm607, %v3176, 0.0
      %v3178 = vrot.slane %v3177, 4
      %v3179 = vadd.f32 %v3177, %v3178
      %v3180 = vrot.slane %v3179, 2
      %v3181 = vadd.f32 %v3179, %v3180
      %v3182 = vrot.slane %v3181, 1
      %v3183 = vadd.f32 %v3181, %v3182
      %v3184 = vmul.f32 %v3183, %v2976
      %v3185 = vadd.f32 %v3184, 1e-05
      %v3186 = vrsqrt.pop %v3185
      %v3187 = vmul.f32 %v3175, %v3186
      %3189 = vset.pattern.permute.xlu0 0
      %3190 = vperm.xlu0 %3189, %v3165
      %v3191 = vpop.permute.xlu0 %3190
      %v3193 = vmul.f32 %v3187, %v3191
      %3195 = vset.pattern.permute.xlu0 0
      %3196 = vperm.xlu0 %3195, %v3166
      %v3197 = vpop.permute.xlu0 %3196
      %v3199 = vadd.f32 %v3193, %v3197
      %v3201 = vsel %vm607, %v3199, 0
      %3203 = vmatprep.subr.mxu0 0.0
      %3204 = vmatpush1.msra.mxu0 0.0
      %3205 = vmatprep.subr.mxu0 0.0
      %3206 = vmatpush1.msra.mxu0 0.0
      %3207 = vmatprep.subr.mxu0 0.0
      %3208 = vmatpush1.msra.mxu0 0.0
      %3209 = vmatprep.subr.mxu0 0.0
      %3210 = vmatpush1.msra.mxu0 0.0
      %3211 = vmatprep.subr.mxu0 0.0
      %3212 = vmatpush1.msra.mxu0 0.0
      %3213 = vmatprep.subr.mxu0 0.0
      %3214 = vmatpush1.msra.mxu0 0.0
      %3215 = vmatprep.subr.mxu0 0.0
      %3216 = vmatpush1.msra.mxu0 0.0
      %3217 = vmatprep.subr.mxu0 0.0
      %3218 = vmatpush1.msra.mxu0 0.0
      %3219 = vmatprep.subr.mxu0 0.0
      %3220 = vmatpush1.msra.mxu0 %v606
      %3221 = vmatprep.subr.mxu0 0.0
      %3222 = vmatpush1.msra.mxu0 %v605
      %3223 = vmatprep.subr.mxu0 0.0
      %3224 = vmatpush1.msra.mxu0 %v604
      %3225 = vmatprep.subr.mxu0 0.0
      %3226 = vmatpush1.msra.mxu0 %v603
      %3227 = vmatprep.subr.mxu0 0.0
      %3228 = vmatpush1.msra.mxu0 %v602
      %3229 = vmatprep.subr.mxu0 0.0
      %3230 = vmatpush1.msra.mxu0 %v601
      %3231 = vmatprep.subr.mxu0 0.0
      %3232 = vmatpush1.msra.mxu0 %v600
      %3233 = vmatprep.subr.mxu0 0.0
      %3234 = vmatpush1.msra.mxu0 %v599
      %3235 = vmatprep.subr.mxu0 0.0
      %3236 = vmatpush2.msra.mxu0 0.0
      %3237 = vmatprep.subr.mxu0 0.0
      %3238 = vmatpush2.msra.mxu0 0.0
      %3239 = vmatprep.subr.mxu0 0.0
      %3240 = vmatpush2.msra.mxu0 0.0
      %3241 = vmatprep.subr.mxu0 0.0
      %3242 = vmatpush2.msra.mxu0 0.0
      %3243 = vmatprep.subr.mxu0 0.0
      %3244 = vmatpush2.msra.mxu0 0.0
      %3245 = vmatprep.subr.mxu0 0.0
      %3246 = vmatpush2.msra.mxu0 0.0
      %3247 = vmatprep.subr.mxu0 0.0
      %3248 = vmatpush2.msra.mxu0 0.0
      %3249 = vmatprep.subr.mxu0 0.0
      %3250 = vmatpush2.msra.mxu0 0.0
      %3251 = vmatprep.subr.mxu0 0.0
      %3252 = vmatpush2.msra.mxu0 0.0
      %3253 = vmatprep.subr.mxu0 0.0
      %3254 = vmatpush2.msra.mxu0 0.0
      %3255 = vmatprep.subr.mxu0 0.0
      %3256 = vmatpush2.msra.mxu0 0.0
      %3257 = vmatprep.subr.mxu0 0.0
      %3258 = vmatpush2.msra.mxu0 0.0
      %3259 = vmatprep.subr.mxu0 0.0
      %3260 = vmatpush2.msra.mxu0 0.0
      %3261 = vmatprep.subr.mxu0 0.0
      %3262 = vmatpush2.msra.mxu0 0.0
      %3263 = vmatprep.subr.mxu0 0.0
      %3264 = vmatpush2.msra.mxu0 0.0
      %3265 = vmatprep.subr.mxu0 0.0
      %3266 = vmatpush2.msra.mxu0 0.0
      %3267 = vmatprep.mubr.f32.mxu0 0.0
      %3268 = vmatmul.mubr.f32.gmra.mxu0 %v3201
      %v3269 = vpop.f32.mrf.mxu0
      %v3270 = vadd.f32 0.0, %v3269
      %v3271 = vpop.f32.mrf.mxu0
      %3272 = vdwg.mxu0
      %v3273 = vld [vmem:[%s5] sm:$0xff]
      %3274 = vmatprep.subr.mxu0 0.0
      %3275 = vmatpush1.msra.mxu0 0.0
      %3276 = vmatprep.subr.mxu0 0.0
      %3277 = vmatpush1.msra.mxu0 0.0
      %3278 = vmatprep.subr.mxu0 0.0
      %3279 = vmatpush1.msra.mxu0 0.0
      %3280 = vmatprep.subr.mxu0 0.0
      %3281 = vmatpush1.msra.mxu0 0.0
      %3282 = vmatprep.subr.mxu0 0.0
      %3283 = vmatpush1.msra.mxu0 0.0
      %3284 = vmatprep.subr.mxu0 0.0
      %3285 = vmatpush1.msra.mxu0 0.0
      %3286 = vmatprep.subr.mxu0 0.0
      %3287 = vmatpush1.msra.mxu0 0.0
      %3288 = vmatprep.subr.mxu0 0.0
      %3289 = vmatpush1.msra.mxu0 0.0
      %3290 = vmatprep.subr.mxu0 0.0
      %3291 = vmatpush1.msra.mxu0 %v690
      %3292 = vmatprep.subr.mxu0 0.0
      %3293 = vmatpush1.msra.mxu0 %v689
      %3294 = vmatprep.subr.mxu0 0.0
      %3295 = vmatpush1.msra.mxu0 %v688
      %3296 = vmatprep.subr.mxu0 0.0
      %3297 = vmatpush1.msra.mxu0 %v687
      %3298 = vmatprep.subr.mxu0 0.0
      %3299 = vmatpush1.msra.mxu0 %v686
      %3300 = vmatprep.subr.mxu0 0.0
      %3301 = vmatpush1.msra.mxu0 %v685
      %3302 = vmatprep.subr.mxu0 0.0
      %3303 = vmatpush1.msra.mxu0 %v684
      %3304 = vmatprep.subr.mxu0 0.0
      %3305 = vmatpush1.msra.mxu0 %v683
      %3306 = vmatprep.subr.mxu0 0.0
      %3307 = vmatpush2.msra.mxu0 0.0
      %3308 = vmatprep.subr.mxu0 0.0
      %3309 = vmatpush2.msra.mxu0 0.0
      %3310 = vmatprep.subr.mxu0 0.0
      %3311 = vmatpush2.msra.mxu0 0.0
      %3312 = vmatprep.subr.mxu0 0.0
      %3313 = vmatpush2.msra.mxu0 0.0
      %3314 = vmatprep.subr.mxu0 0.0
      %3315 = vmatpush2.msra.mxu0 0.0
      %3316 = vmatprep.subr.mxu0 0.0
      %3317 = vmatpush2.msra.mxu0 0.0
      %3318 = vmatprep.subr.mxu0 0.0
      %3319 = vmatpush2.msra.mxu0 0.0
      %3320 = vmatprep.subr.mxu0 0.0
      %3321 = vmatpush2.msra.mxu0 0.0
      %3322 = vmatprep.subr.mxu0 0.0
      %3323 = vmatpush2.msra.mxu0 0.0
      %3324 = vmatprep.subr.mxu0 0.0
      %3325 = vmatpush2.msra.mxu0 0.0
      %3326 = vmatprep.subr.mxu0 0.0
      %3327 = vmatpush2.msra.mxu0 0.0
      %3328 = vmatprep.subr.mxu0 0.0
      %3329 = vmatpush2.msra.mxu0 0.0
      %3330 = vmatprep.subr.mxu0 0.0
      %3331 = vmatpush2.msra.mxu0 0.0
      %3332 = vmatprep.subr.mxu0 0.0
      %3333 = vmatpush2.msra.mxu0 0.0
      %3334 = vmatprep.subr.mxu0 0.0
      %3335 = vmatpush2.msra.mxu0 0.0
      %3336 = vmatprep.subr.mxu0 0.0
      %3337 = vmatpush2.msra.mxu0 0.0
      %3338 = vmatprep.mubr.f32.mxu0 0.0
      %3339 = vmatmul.mubr.f32.gmra.mxu0 %v3201
      %v3340 = vpop.f32.mrf.mxu0
      %v3341 = vadd.f32 0.0, %v3340
      %v3342 = vpop.f32.mrf.mxu0
      %3343 = vdwg.mxu0
      %s3344 = scalar_lea.vmem %s5, 8
      %v3345 = vld [vmem:[%s3344] sm:$0xff]
      %v3347 = vsel %vm763, %v3345, 0
      %3349 = vmatprep.subr.mxu0 0.0
      %3350 = vmatpush1.msra.mxu0 0.0
      %3351 = vmatprep.subr.mxu0 0.0
      %3352 = vmatpush1.msra.mxu0 0.0
      %3353 = vmatprep.subr.mxu0 0.0
      %3354 = vmatpush1.msra.mxu0 0.0
      %3355 = vmatprep.subr.mxu0 0.0
      %3356 = vmatpush1.msra.mxu0 0.0
      %3357 = vmatprep.subr.mxu0 0.0
      %3358 = vmatpush1.msra.mxu0 0.0
      %3359 = vmatprep.subr.mxu0 0.0
      %3360 = vmatpush1.msra.mxu0 0.0
      %3361 = vmatprep.subr.mxu0 0.0
      %3362 = vmatpush1.msra.mxu0 0.0
      %3363 = vmatprep.subr.mxu0 0.0
      %3364 = vmatpush1.msra.mxu0 0.0
      %3365 = vmatprep.subr.mxu0 0.0
      %3366 = vmatpush1.msra.mxu0 0.0
      %3367 = vmatprep.subr.mxu0 0.0
      %3368 = vmatpush1.msra.mxu0 0.0
      %3369 = vmatprep.subr.mxu0 0.0
      %3370 = vmatpush1.msra.mxu0 0.0
      %3371 = vmatprep.subr.mxu0 0.0
      %3372 = vmatpush1.msra.mxu0 0.0
      %3373 = vmatprep.subr.mxu0 0.0
      %3374 = vmatpush1.msra.mxu0 0.0
      %3375 = vmatprep.subr.mxu0 0.0
      %3376 = vmatpush1.msra.mxu0 0.0
      %3377 = vmatprep.subr.mxu0 0.0
      %3378 = vmatpush1.msra.mxu0 0.0
      %3379 = vmatprep.subr.mxu0 0.0
      %3380 = vmatpush1.msra.mxu0 %v3341
      %3381 = vmatprep.subr.mxu0 0.0
      %3382 = vmatpush2.msra.mxu0 0.0
      %3383 = vmatprep.subr.mxu0 0.0
      %3384 = vmatpush2.msra.mxu0 0.0
      %3385 = vmatprep.subr.mxu0 0.0
      %3386 = vmatpush2.msra.mxu0 0.0
      %3387 = vmatprep.subr.mxu0 0.0
      %3388 = vmatpush2.msra.mxu0 0.0
      %3389 = vmatprep.subr.mxu0 0.0
      %3390 = vmatpush2.msra.mxu0 0.0
      %3391 = vmatprep.subr.mxu0 0.0
      %3392 = vmatpush2.msra.mxu0 0.0
      %3393 = vmatprep.subr.mxu0 0.0
      %3394 = vmatpush2.msra.mxu0 0.0
      %3395 = vmatprep.subr.mxu0 0.0
      %3396 = vmatpush2.msra.mxu0 0.0
      %3397 = vmatprep.subr.mxu0 0.0
      %3398 = vmatpush2.msra.mxu0 0.0
      %3399 = vmatprep.subr.mxu0 0.0
      %3400 = vmatpush2.msra.mxu0 0.0
      %3401 = vmatprep.subr.mxu0 0.0
      %3402 = vmatpush2.msra.mxu0 0.0
      %3403 = vmatprep.subr.mxu0 0.0
      %3404 = vmatpush2.msra.mxu0 0.0
      %3405 = vmatprep.subr.mxu0 0.0
      %3406 = vmatpush2.msra.mxu0 0.0
      %3407 = vmatprep.subr.mxu0 0.0
      %3408 = vmatpush2.msra.mxu0 0.0
      %3409 = vmatprep.subr.mxu0 0.0
      %3410 = vmatpush2.msra.mxu0 0.0
      %3411 = vmatprep.subr.mxu0 0.0
      %3412 = vmatpush2.msra.mxu0 0.0
      %3413 = vmatprep.mubr.f32.mxu0 0.0
      %3414 = vmatmul.mubr.f32.gmra.mxu0 %v3347
      %v3415 = vpop.f32.mrf.mxu0
      %v3416 = vadd.f32 0.0, %v3415
      %v3417 = vpop.f32.mrf.mxu0
      %3418 = vdwg.mxu0
      %v3420 = vsel %vm763, %v3273, 0
      %3422 = vmatprep.subr.mxu0 0.0
      %3423 = vmatpush1.msra.mxu0 0.0
      %3424 = vmatprep.subr.mxu0 0.0
      %3425 = vmatpush1.msra.mxu0 0.0
      %3426 = vmatprep.subr.mxu0 0.0
      %3427 = vmatpush1.msra.mxu0 0.0
      %3428 = vmatprep.subr.mxu0 0.0
      %3429 = vmatpush1.msra.mxu0 0.0
      %3430 = vmatprep.subr.mxu0 0.0
      %3431 = vmatpush1.msra.mxu0 0.0
      %3432 = vmatprep.subr.mxu0 0.0
      %3433 = vmatpush1.msra.mxu0 0.0
      %3434 = vmatprep.subr.mxu0 0.0
      %3435 = vmatpush1.msra.mxu0 0.0
      %3436 = vmatprep.subr.mxu0 0.0
      %3437 = vmatpush1.msra.mxu0 0.0
      %3438 = vmatprep.subr.mxu0 0.0
      %3439 = vmatpush1.msra.mxu0 0.0
      %3440 = vmatprep.subr.mxu0 0.0
      %3441 = vmatpush1.msra.mxu0 0.0
      %3442 = vmatprep.subr.mxu0 0.0
      %3443 = vmatpush1.msra.mxu0 0.0
      %3444 = vmatprep.subr.mxu0 0.0
      %3445 = vmatpush1.msra.mxu0 0.0
      %3446 = vmatprep.subr.mxu0 0.0
      %3447 = vmatpush1.msra.mxu0 0.0
      %3448 = vmatprep.subr.mxu0 0.0
      %3449 = vmatpush1.msra.mxu0 0.0
      %3450 = vmatprep.subr.mxu0 0.0
      %3451 = vmatpush1.msra.mxu0 0.0
      %3452 = vmatprep.subr.mxu0 0.0
      %3453 = vmatpush1.msra.mxu0 %v3270
      %3454 = vmatprep.subr.mxu0 0.0
      %3455 = vmatpush2.msra.mxu0 0.0
      %3456 = vmatprep.subr.mxu0 0.0
      %3457 = vmatpush2.msra.mxu0 0.0
      %3458 = vmatprep.subr.mxu0 0.0
      %3459 = vmatpush2.msra.mxu0 0.0
      %3460 = vmatprep.subr.mxu0 0.0
      %3461 = vmatpush2.msra.mxu0 0.0
      %3462 = vmatprep.subr.mxu0 0.0
      %3463 = vmatpush2.msra.mxu0 0.0
      %3464 = vmatprep.subr.mxu0 0.0
      %3465 = vmatpush2.msra.mxu0 0.0
      %3466 = vmatprep.subr.mxu0 0.0
      %3467 = vmatpush2.msra.mxu0 0.0
      %3468 = vmatprep.subr.mxu0 0.0
      %3469 = vmatpush2.msra.mxu0 0.0
      %3470 = vmatprep.subr.mxu0 0.0
      %3471 = vmatpush2.msra.mxu0 0.0
      %3472 = vmatprep.subr.mxu0 0.0
      %3473 = vmatpush2.msra.mxu0 0.0
      %3474 = vmatprep.subr.mxu0 0.0
      %3475 = vmatpush2.msra.mxu0 0.0
      %3476 = vmatprep.subr.mxu0 0.0
      %3477 = vmatpush2.msra.mxu0 0.0
      %3478 = vmatprep.subr.mxu0 0.0
      %3479 = vmatpush2.msra.mxu0 0.0
      %3480 = vmatprep.subr.mxu0 0.0
      %3481 = vmatpush2.msra.mxu0 0.0
      %3482 = vmatprep.subr.mxu0 0.0
      %3483 = vmatpush2.msra.mxu0 0.0
      %3484 = vmatprep.subr.mxu0 0.0
      %3485 = vmatpush2.msra.mxu0 0.0
      %3486 = vmatprep.mubr.f32.mxu0 0.0
      %3487 = vmatmul.mubr.f32.gmra.mxu0 %v3420
      %v3488 = vpop.f32.mrf.mxu0
      %v3489 = vadd.f32 %v3416, %v3488
      %v3490 = vpop.f32.mrf.mxu0
      %3491 = vdwg.mxu0
      %3492 = vmatprep.subr.mxu0 0.0
      %3493 = vmatpush1.msra.mxu0 0.0
      %3494 = vmatprep.subr.mxu0 0.0
      %3495 = vmatpush1.msra.mxu0 0.0
      %3496 = vmatprep.subr.mxu0 0.0
      %3497 = vmatpush1.msra.mxu0 0.0
      %3498 = vmatprep.subr.mxu0 0.0
      %3499 = vmatpush1.msra.mxu0 0.0
      %3500 = vmatprep.subr.mxu0 0.0
      %3501 = vmatpush1.msra.mxu0 0.0
      %3502 = vmatprep.subr.mxu0 0.0
      %3503 = vmatpush1.msra.mxu0 0.0
      %3504 = vmatprep.subr.mxu0 0.0
      %3505 = vmatpush1.msra.mxu0 0.0
      %3506 = vmatprep.subr.mxu0 0.0
      %3507 = vmatpush1.msra.mxu0 0.0
      %3508 = vmatprep.subr.mxu0 0.0
      %3509 = vmatpush1.msra.mxu0 %v918
      %3510 = vmatprep.subr.mxu0 0.0
      %3511 = vmatpush1.msra.mxu0 %v917
      %3512 = vmatprep.subr.mxu0 0.0
      %3513 = vmatpush1.msra.mxu0 %v916
      %3514 = vmatprep.subr.mxu0 0.0
      %3515 = vmatpush1.msra.mxu0 %v915
      %3516 = vmatprep.subr.mxu0 0.0
      %3517 = vmatpush1.msra.mxu0 %v914
      %3518 = vmatprep.subr.mxu0 0.0
      %3519 = vmatpush1.msra.mxu0 %v913
      %3520 = vmatprep.subr.mxu0 0.0
      %3521 = vmatpush1.msra.mxu0 %v912
      %3522 = vmatprep.subr.mxu0 0.0
      %3523 = vmatpush1.msra.mxu0 %v911
      %3524 = vmatprep.subr.mxu0 0.0
      %3525 = vmatpush2.msra.mxu0 0.0
      %3526 = vmatprep.subr.mxu0 0.0
      %3527 = vmatpush2.msra.mxu0 0.0
      %3528 = vmatprep.subr.mxu0 0.0
      %3529 = vmatpush2.msra.mxu0 0.0
      %3530 = vmatprep.subr.mxu0 0.0
      %3531 = vmatpush2.msra.mxu0 0.0
      %3532 = vmatprep.subr.mxu0 0.0
      %3533 = vmatpush2.msra.mxu0 0.0
      %3534 = vmatprep.subr.mxu0 0.0
      %3535 = vmatpush2.msra.mxu0 0.0
      %3536 = vmatprep.subr.mxu0 0.0
      %3537 = vmatpush2.msra.mxu0 0.0
      %3538 = vmatprep.subr.mxu0 0.0
      %3539 = vmatpush2.msra.mxu0 0.0
      %3540 = vmatprep.subr.mxu0 0.0
      %3541 = vmatpush2.msra.mxu0 0.0
      %3542 = vmatprep.subr.mxu0 0.0
      %3543 = vmatpush2.msra.mxu0 0.0
      %3544 = vmatprep.subr.mxu0 0.0
      %3545 = vmatpush2.msra.mxu0 0.0
      %3546 = vmatprep.subr.mxu0 0.0
      %3547 = vmatpush2.msra.mxu0 0.0
      %3548 = vmatprep.subr.mxu0 0.0
      %3549 = vmatpush2.msra.mxu0 0.0
      %3550 = vmatprep.subr.mxu0 0.0
      %3551 = vmatpush2.msra.mxu0 0.0
      %3552 = vmatprep.subr.mxu0 0.0
      %3553 = vmatpush2.msra.mxu0 0.0
      %3554 = vmatprep.subr.mxu0 0.0
      %3555 = vmatpush2.msra.mxu0 0.0
      %3556 = vmatprep.mubr.f32.mxu0 0.0
      %3557 = vmatmul.mubr.f32.gmra.mxu0 %v3201
      %v3558 = vpop.f32.mrf.mxu0
      %v3559 = vadd.f32 0.0, %v3558
      %v3560 = vpop.f32.mrf.mxu0
      %3561 = vdwg.mxu0
      %s3562 = scalar_lea.vmem %s5, 16
      %v3563 = vld [vmem:[%s3562] sm:$0xff]
      %v3565 = vsel %vm763, %v3563, 0
      %3567 = vmatprep.subr.mxu0 0.0
      %3568 = vmatpush1.msra.mxu0 0.0
      %3569 = vmatprep.subr.mxu0 0.0
      %3570 = vmatpush1.msra.mxu0 0.0
      %3571 = vmatprep.subr.mxu0 0.0
      %3572 = vmatpush1.msra.mxu0 0.0
      %3573 = vmatprep.subr.mxu0 0.0
      %3574 = vmatpush1.msra.mxu0 0.0
      %3575 = vmatprep.subr.mxu0 0.0
      %3576 = vmatpush1.msra.mxu0 0.0
      %3577 = vmatprep.subr.mxu0 0.0
      %3578 = vmatpush1.msra.mxu0 0.0
      %3579 = vmatprep.subr.mxu0 0.0
      %3580 = vmatpush1.msra.mxu0 0.0
      %3581 = vmatprep.subr.mxu0 0.0
      %3582 = vmatpush1.msra.mxu0 0.0
      %3583 = vmatprep.subr.mxu0 0.0
      %3584 = vmatpush1.msra.mxu0 0.0
      %3585 = vmatprep.subr.mxu0 0.0
      %3586 = vmatpush1.msra.mxu0 0.0
      %3587 = vmatprep.subr.mxu0 0.0
      %3588 = vmatpush1.msra.mxu0 0.0
      %3589 = vmatprep.subr.mxu0 0.0
      %3590 = vmatpush1.msra.mxu0 0.0
      %3591 = vmatprep.subr.mxu0 0.0
      %3592 = vmatpush1.msra.mxu0 0.0
      %3593 = vmatprep.subr.mxu0 0.0
      %3594 = vmatpush1.msra.mxu0 0.0
      %3595 = vmatprep.subr.mxu0 0.0
      %3596 = vmatpush1.msra.mxu0 0.0
      %3597 = vmatprep.subr.mxu0 0.0
      %3598 = vmatpush1.msra.mxu0 %v3559
      %3599 = vmatprep.subr.mxu0 0.0
      %3600 = vmatpush2.msra.mxu0 0.0
      %3601 = vmatprep.subr.mxu0 0.0
      %3602 = vmatpush2.msra.mxu0 0.0
      %3603 = vmatprep.subr.mxu0 0.0
      %3604 = vmatpush2.msra.mxu0 0.0
      %3605 = vmatprep.subr.mxu0 0.0
      %3606 = vmatpush2.msra.mxu0 0.0
      %3607 = vmatprep.subr.mxu0 0.0
      %3608 = vmatpush2.msra.mxu0 0.0
      %3609 = vmatprep.subr.mxu0 0.0
      %3610 = vmatpush2.msra.mxu0 0.0
      %3611 = vmatprep.subr.mxu0 0.0
      %3612 = vmatpush2.msra.mxu0 0.0
      %3613 = vmatprep.subr.mxu0 0.0
      %3614 = vmatpush2.msra.mxu0 0.0
      %3615 = vmatprep.subr.mxu0 0.0
      %3616 = vmatpush2.msra.mxu0 0.0
      %3617 = vmatprep.subr.mxu0 0.0
      %3618 = vmatpush2.msra.mxu0 0.0
      %3619 = vmatprep.subr.mxu0 0.0
      %3620 = vmatpush2.msra.mxu0 0.0
      %3621 = vmatprep.subr.mxu0 0.0
      %3622 = vmatpush2.msra.mxu0 0.0
      %3623 = vmatprep.subr.mxu0 0.0
      %3624 = vmatpush2.msra.mxu0 0.0
      %3625 = vmatprep.subr.mxu0 0.0
      %3626 = vmatpush2.msra.mxu0 0.0
      %3627 = vmatprep.subr.mxu0 0.0
      %3628 = vmatpush2.msra.mxu0 0.0
      %3629 = vmatprep.subr.mxu0 0.0
      %3630 = vmatpush2.msra.mxu0 0.0
      %3631 = vmatprep.mubr.f32.mxu0 0.0
      %3632 = vmatmul.mubr.f32.gmra.mxu0 %v3565
      %v3633 = vpop.f32.mrf.mxu0
      %v3634 = vadd.f32 0.0, %v3633
      %v3635 = vpop.f32.mrf.mxu0
      %3636 = vdwg.mxu0
      %v3637 = vadd.f32 %v3489, %v3634
      %3638 = vmatprep.subr.mxu0 0.0
      %3639 = vmatpush1.msra.mxu0 0.0
      %3640 = vmatprep.subr.mxu0 0.0
      %3641 = vmatpush1.msra.mxu0 0.0
      %3642 = vmatprep.subr.mxu0 0.0
      %3643 = vmatpush1.msra.mxu0 0.0
      %3644 = vmatprep.subr.mxu0 0.0
      %3645 = vmatpush1.msra.mxu0 0.0
      %3646 = vmatprep.subr.mxu0 0.0
      %3647 = vmatpush1.msra.mxu0 0.0
      %3648 = vmatprep.subr.mxu0 0.0
      %3649 = vmatpush1.msra.mxu0 0.0
      %3650 = vmatprep.subr.mxu0 0.0
      %3651 = vmatpush1.msra.mxu0 0.0
      %3652 = vmatprep.subr.mxu0 0.0
      %3653 = vmatpush1.msra.mxu0 0.0
      %3654 = vmatprep.subr.mxu0 0.0
      %3655 = vmatpush1.msra.mxu0 %v1073
      %3656 = vmatprep.subr.mxu0 0.0
      %3657 = vmatpush1.msra.mxu0 %v1072
      %3658 = vmatprep.subr.mxu0 0.0
      %3659 = vmatpush1.msra.mxu0 %v1071
      %3660 = vmatprep.subr.mxu0 0.0
      %3661 = vmatpush1.msra.mxu0 %v1070
      %3662 = vmatprep.subr.mxu0 0.0
      %3663 = vmatpush1.msra.mxu0 %v1069
      %3664 = vmatprep.subr.mxu0 0.0
      %3665 = vmatpush1.msra.mxu0 %v1068
      %3666 = vmatprep.subr.mxu0 0.0
      %3667 = vmatpush1.msra.mxu0 %v1067
      %3668 = vmatprep.subr.mxu0 0.0
      %3669 = vmatpush1.msra.mxu0 %v1066
      %3670 = vmatprep.subr.mxu0 0.0
      %3671 = vmatpush2.msra.mxu0 0.0
      %3672 = vmatprep.subr.mxu0 0.0
      %3673 = vmatpush2.msra.mxu0 0.0
      %3674 = vmatprep.subr.mxu0 0.0
      %3675 = vmatpush2.msra.mxu0 0.0
      %3676 = vmatprep.subr.mxu0 0.0
      %3677 = vmatpush2.msra.mxu0 0.0
      %3678 = vmatprep.subr.mxu0 0.0
      %3679 = vmatpush2.msra.mxu0 0.0
      %3680 = vmatprep.subr.mxu0 0.0
      %3681 = vmatpush2.msra.mxu0 0.0
      %3682 = vmatprep.subr.mxu0 0.0
      %3683 = vmatpush2.msra.mxu0 0.0
      %3684 = vmatprep.subr.mxu0 0.0
      %3685 = vmatpush2.msra.mxu0 0.0
      %3686 = vmatprep.subr.mxu0 0.0
      %3687 = vmatpush2.msra.mxu0 0.0
      %3688 = vmatprep.subr.mxu0 0.0
      %3689 = vmatpush2.msra.mxu0 0.0
      %3690 = vmatprep.subr.mxu0 0.0
      %3691 = vmatpush2.msra.mxu0 0.0
      %3692 = vmatprep.subr.mxu0 0.0
      %3693 = vmatpush2.msra.mxu0 0.0
      %3694 = vmatprep.subr.mxu0 0.0
      %3695 = vmatpush2.msra.mxu0 0.0
      %3696 = vmatprep.subr.mxu0 0.0
      %3697 = vmatpush2.msra.mxu0 0.0
      %3698 = vmatprep.subr.mxu0 0.0
      %3699 = vmatpush2.msra.mxu0 0.0
      %3700 = vmatprep.subr.mxu0 0.0
      %3701 = vmatpush2.msra.mxu0 0.0
      %3702 = vmatprep.mubr.f32.mxu0 0.0
      %3703 = vmatmul.mubr.f32.gmra.mxu0 %v3201
      %v3704 = vpop.f32.mrf.mxu0
      %v3705 = vadd.f32 0.0, %v3704
      %v3706 = vpop.f32.mrf.mxu0
      %3707 = vdwg.mxu0
      %s3708 = scalar_lea.vmem %s5, 24
      %v3709 = vld [vmem:[%s3708] sm:$0xff]
      %v3711 = vsel %vm763, %v3709, 0
      %3713 = vmatprep.subr.mxu0 0.0
      %3714 = vmatpush1.msra.mxu0 0.0
      %3715 = vmatprep.subr.mxu0 0.0
      %3716 = vmatpush1.msra.mxu0 0.0
      %3717 = vmatprep.subr.mxu0 0.0
      %3718 = vmatpush1.msra.mxu0 0.0
      %3719 = vmatprep.subr.mxu0 0.0
      %3720 = vmatpush1.msra.mxu0 0.0
      %3721 = vmatprep.subr.mxu0 0.0
      %3722 = vmatpush1.msra.mxu0 0.0
      %3723 = vmatprep.subr.mxu0 0.0
      %3724 = vmatpush1.msra.mxu0 0.0
      %3725 = vmatprep.subr.mxu0 0.0
      %3726 = vmatpush1.msra.mxu0 0.0
      %3727 = vmatprep.subr.mxu0 0.0
      %3728 = vmatpush1.msra.mxu0 0.0
      %3729 = vmatprep.subr.mxu0 0.0
      %3730 = vmatpush1.msra.mxu0 0.0
      %3731 = vmatprep.subr.mxu0 0.0
      %3732 = vmatpush1.msra.mxu0 0.0
      %3733 = vmatprep.subr.mxu0 0.0
      %3734 = vmatpush1.msra.mxu0 0.0
      %3735 = vmatprep.subr.mxu0 0.0
      %3736 = vmatpush1.msra.mxu0 0.0
      %3737 = vmatprep.subr.mxu0 0.0
      %3738 = vmatpush1.msra.mxu0 0.0
      %3739 = vmatprep.subr.mxu0 0.0
      %3740 = vmatpush1.msra.mxu0 0.0
      %3741 = vmatprep.subr.mxu0 0.0
      %3742 = vmatpush1.msra.mxu0 0.0
      %3743 = vmatprep.subr.mxu0 0.0
      %3744 = vmatpush1.msra.mxu0 %v3705
      %3745 = vmatprep.subr.mxu0 0.0
      %3746 = vmatpush2.msra.mxu0 0.0
      %3747 = vmatprep.subr.mxu0 0.0
      %3748 = vmatpush2.msra.mxu0 0.0
      %3749 = vmatprep.subr.mxu0 0.0
      %3750 = vmatpush2.msra.mxu0 0.0
      %3751 = vmatprep.subr.mxu0 0.0
      %3752 = vmatpush2.msra.mxu0 0.0
      %3753 = vmatprep.subr.mxu0 0.0
      %3754 = vmatpush2.msra.mxu0 0.0
      %3755 = vmatprep.subr.mxu0 0.0
      %3756 = vmatpush2.msra.mxu0 0.0
      %3757 = vmatprep.subr.mxu0 0.0
      %3758 = vmatpush2.msra.mxu0 0.0
      %3759 = vmatprep.subr.mxu0 0.0
      %3760 = vmatpush2.msra.mxu0 0.0
      %3761 = vmatprep.subr.mxu0 0.0
      %3762 = vmatpush2.msra.mxu0 0.0
      %3763 = vmatprep.subr.mxu0 0.0
      %3764 = vmatpush2.msra.mxu0 0.0
      %3765 = vmatprep.subr.mxu0 0.0
      %3766 = vmatpush2.msra.mxu0 0.0
      %3767 = vmatprep.subr.mxu0 0.0
      %3768 = vmatpush2.msra.mxu0 0.0
      %3769 = vmatprep.subr.mxu0 0.0
      %3770 = vmatpush2.msra.mxu0 0.0
      %3771 = vmatprep.subr.mxu0 0.0
      %3772 = vmatpush2.msra.mxu0 0.0
      %3773 = vmatprep.subr.mxu0 0.0
      %3774 = vmatpush2.msra.mxu0 0.0
      %3775 = vmatprep.subr.mxu0 0.0
      %3776 = vmatpush2.msra.mxu0 0.0
      %3777 = vmatprep.mubr.f32.mxu0 0.0
      %3778 = vmatmul.mubr.f32.gmra.mxu0 %v3711
      %v3779 = vpop.f32.mrf.mxu0
      %v3780 = vadd.f32 0.0, %v3779
      %v3781 = vpop.f32.mrf.mxu0
      %3782 = vdwg.mxu0
      %v3783 = vadd.f32 %v3637, %v3780
      %3784 = vmatprep.subr.mxu0 0.0
      %3785 = vmatpush1.msra.mxu0 0.0
      %3786 = vmatprep.subr.mxu0 0.0
      %3787 = vmatpush1.msra.mxu0 0.0
      %3788 = vmatprep.subr.mxu0 0.0
      %3789 = vmatpush1.msra.mxu0 0.0
      %3790 = vmatprep.subr.mxu0 0.0
      %3791 = vmatpush1.msra.mxu0 0.0
      %3792 = vmatprep.subr.mxu0 0.0
      %3793 = vmatpush1.msra.mxu0 0.0
      %3794 = vmatprep.subr.mxu0 0.0
      %3795 = vmatpush1.msra.mxu0 0.0
      %3796 = vmatprep.subr.mxu0 0.0
      %3797 = vmatpush1.msra.mxu0 0.0
      %3798 = vmatprep.subr.mxu0 0.0
      %3799 = vmatpush1.msra.mxu0 0.0
      %3800 = vmatprep.subr.mxu0 0.0
      %3801 = vmatpush1.msra.mxu0 %v1228
      %3802 = vmatprep.subr.mxu0 0.0
      %3803 = vmatpush1.msra.mxu0 %v1227
      %3804 = vmatprep.subr.mxu0 0.0
      %3805 = vmatpush1.msra.mxu0 %v1226
      %3806 = vmatprep.subr.mxu0 0.0
      %3807 = vmatpush1.msra.mxu0 %v1225
      %3808 = vmatprep.subr.mxu0 0.0
      %3809 = vmatpush1.msra.mxu0 %v1224
      %3810 = vmatprep.subr.mxu0 0.0
      %3811 = vmatpush1.msra.mxu0 %v1223
      %3812 = vmatprep.subr.mxu0 0.0
      %3813 = vmatpush1.msra.mxu0 %v1222
      %3814 = vmatprep.subr.mxu0 0.0
      %3815 = vmatpush1.msra.mxu0 %v1221
      %3816 = vmatprep.subr.mxu0 0.0
      %3817 = vmatpush2.msra.mxu0 0.0
      %3818 = vmatprep.subr.mxu0 0.0
      %3819 = vmatpush2.msra.mxu0 0.0
      %3820 = vmatprep.subr.mxu0 0.0
      %3821 = vmatpush2.msra.mxu0 0.0
      %3822 = vmatprep.subr.mxu0 0.0
      %3823 = vmatpush2.msra.mxu0 0.0
      %3824 = vmatprep.subr.mxu0 0.0
      %3825 = vmatpush2.msra.mxu0 0.0
      %3826 = vmatprep.subr.mxu0 0.0
      %3827 = vmatpush2.msra.mxu0 0.0
      %3828 = vmatprep.subr.mxu0 0.0
      %3829 = vmatpush2.msra.mxu0 0.0
      %3830 = vmatprep.subr.mxu0 0.0
      %3831 = vmatpush2.msra.mxu0 0.0
      %3832 = vmatprep.subr.mxu0 0.0
      %3833 = vmatpush2.msra.mxu0 0.0
      %3834 = vmatprep.subr.mxu0 0.0
      %3835 = vmatpush2.msra.mxu0 0.0
      %3836 = vmatprep.subr.mxu0 0.0
      %3837 = vmatpush2.msra.mxu0 0.0
      %3838 = vmatprep.subr.mxu0 0.0
      %3839 = vmatpush2.msra.mxu0 0.0
      %3840 = vmatprep.subr.mxu0 0.0
      %3841 = vmatpush2.msra.mxu0 0.0
      %3842 = vmatprep.subr.mxu0 0.0
      %3843 = vmatpush2.msra.mxu0 0.0
      %3844 = vmatprep.subr.mxu0 0.0
      %3845 = vmatpush2.msra.mxu0 0.0
      %3846 = vmatprep.subr.mxu0 0.0
      %3847 = vmatpush2.msra.mxu0 0.0
      %3848 = vmatprep.mubr.f32.mxu0 0.0
      %3849 = vmatmul.mubr.f32.gmra.mxu0 %v3201
      %v3850 = vpop.f32.mrf.mxu0
      %v3851 = vadd.f32 0.0, %v3850
      %v3852 = vpop.f32.mrf.mxu0
      %3853 = vdwg.mxu0
      %s3854 = scalar_lea.vmem %s5, 32
      %v3855 = vld [vmem:[%s3854] sm:$0xff]
      %v3857 = vsel %vm763, %v3855, 0
      %3859 = vmatprep.subr.mxu0 0.0
      %3860 = vmatpush1.msra.mxu0 0.0
      %3861 = vmatprep.subr.mxu0 0.0
      %3862 = vmatpush1.msra.mxu0 0.0
      %3863 = vmatprep.subr.mxu0 0.0
      %3864 = vmatpush1.msra.mxu0 0.0
      %3865 = vmatprep.subr.mxu0 0.0
      %3866 = vmatpush1.msra.mxu0 0.0
      %3867 = vmatprep.subr.mxu0 0.0
      %3868 = vmatpush1.msra.mxu0 0.0
      %3869 = vmatprep.subr.mxu0 0.0
      %3870 = vmatpush1.msra.mxu0 0.0
      %3871 = vmatprep.subr.mxu0 0.0
      %3872 = vmatpush1.msra.mxu0 0.0
      %3873 = vmatprep.subr.mxu0 0.0
      %3874 = vmatpush1.msra.mxu0 0.0
      %3875 = vmatprep.subr.mxu0 0.0
      %3876 = vmatpush1.msra.mxu0 0.0
      %3877 = vmatprep.subr.mxu0 0.0
      %3878 = vmatpush1.msra.mxu0 0.0
      %3879 = vmatprep.subr.mxu0 0.0
      %3880 = vmatpush1.msra.mxu0 0.0
      %3881 = vmatprep.subr.mxu0 0.0
      %3882 = vmatpush1.msra.mxu0 0.0
      %3883 = vmatprep.subr.mxu0 0.0
      %3884 = vmatpush1.msra.mxu0 0.0
      %3885 = vmatprep.subr.mxu0 0.0
      %3886 = vmatpush1.msra.mxu0 0.0
      %3887 = vmatprep.subr.mxu0 0.0
      %3888 = vmatpush1.msra.mxu0 0.0
      %3889 = vmatprep.subr.mxu0 0.0
      %3890 = vmatpush1.msra.mxu0 %v3851
      %3891 = vmatprep.subr.mxu0 0.0
      %3892 = vmatpush2.msra.mxu0 0.0
      %3893 = vmatprep.subr.mxu0 0.0
      %3894 = vmatpush2.msra.mxu0 0.0
      %3895 = vmatprep.subr.mxu0 0.0
      %3896 = vmatpush2.msra.mxu0 0.0
      %3897 = vmatprep.subr.mxu0 0.0
      %3898 = vmatpush2.msra.mxu0 0.0
      %3899 = vmatprep.subr.mxu0 0.0
      %3900 = vmatpush2.msra.mxu0 0.0
      %3901 = vmatprep.subr.mxu0 0.0
      %3902 = vmatpush2.msra.mxu0 0.0
      %3903 = vmatprep.subr.mxu0 0.0
      %3904 = vmatpush2.msra.mxu0 0.0
      %3905 = vmatprep.subr.mxu0 0.0
      %3906 = vmatpush2.msra.mxu0 0.0
      %3907 = vmatprep.subr.mxu0 0.0
      %3908 = vmatpush2.msra.mxu0 0.0
      %3909 = vmatprep.subr.mxu0 0.0
      %3910 = vmatpush2.msra.mxu0 0.0
      %3911 = vmatprep.subr.mxu0 0.0
      %3912 = vmatpush2.msra.mxu0 0.0
      %3913 = vmatprep.subr.mxu0 0.0
      %3914 = vmatpush2.msra.mxu0 0.0
      %3915 = vmatprep.subr.mxu0 0.0
      %3916 = vmatpush2.msra.mxu0 0.0
      %3917 = vmatprep.subr.mxu0 0.0
      %3918 = vmatpush2.msra.mxu0 0.0
      %3919 = vmatprep.subr.mxu0 0.0
      %3920 = vmatpush2.msra.mxu0 0.0
      %3921 = vmatprep.subr.mxu0 0.0
      %3922 = vmatpush2.msra.mxu0 0.0
      %3923 = vmatprep.mubr.f32.mxu0 0.0
      %3924 = vmatmul.mubr.f32.gmra.mxu0 %v3857
      %v3925 = vpop.f32.mrf.mxu0
      %v3926 = vadd.f32 0.0, %v3925
      %v3927 = vpop.f32.mrf.mxu0
      %3928 = vdwg.mxu0
      %v3929 = vadd.f32 %v3783, %v3926
      %3930 = vmatprep.subr.mxu0 0.0
      %3931 = vmatpush1.msra.mxu0 0.0
      %3932 = vmatprep.subr.mxu0 0.0
      %3933 = vmatpush1.msra.mxu0 0.0
      %3934 = vmatprep.subr.mxu0 0.0
      %3935 = vmatpush1.msra.mxu0 0.0
      %3936 = vmatprep.subr.mxu0 0.0
      %3937 = vmatpush1.msra.mxu0 0.0
      %3938 = vmatprep.subr.mxu0 0.0
      %3939 = vmatpush1.msra.mxu0 0.0
      %3940 = vmatprep.subr.mxu0 0.0
      %3941 = vmatpush1.msra.mxu0 0.0
      %3942 = vmatprep.subr.mxu0 0.0
      %3943 = vmatpush1.msra.mxu0 0.0
      %3944 = vmatprep.subr.mxu0 0.0
      %3945 = vmatpush1.msra.mxu0 0.0
      %3946 = vmatprep.subr.mxu0 0.0
      %3947 = vmatpush1.msra.mxu0 %v1383
      %3948 = vmatprep.subr.mxu0 0.0
      %3949 = vmatpush1.msra.mxu0 %v1382
      %3950 = vmatprep.subr.mxu0 0.0
      %3951 = vmatpush1.msra.mxu0 %v1381
      %3952 = vmatprep.subr.mxu0 0.0
      %3953 = vmatpush1.msra.mxu0 %v1380
      %3954 = vmatprep.subr.mxu0 0.0
      %3955 = vmatpush1.msra.mxu0 %v1379
      %3956 = vmatprep.subr.mxu0 0.0
      %3957 = vmatpush1.msra.mxu0 %v1378
      %3958 = vmatprep.subr.mxu0 0.0
      %3959 = vmatpush1.msra.mxu0 %v1377
      %3960 = vmatprep.subr.mxu0 0.0
      %3961 = vmatpush1.msra.mxu0 %v1376
      %3962 = vmatprep.subr.mxu0 0.0
      %3963 = vmatpush2.msra.mxu0 0.0
      %3964 = vmatprep.subr.mxu0 0.0
      %3965 = vmatpush2.msra.mxu0 0.0
      %3966 = vmatprep.subr.mxu0 0.0
      %3967 = vmatpush2.msra.mxu0 0.0
      %3968 = vmatprep.subr.mxu0 0.0
      %3969 = vmatpush2.msra.mxu0 0.0
      %3970 = vmatprep.subr.mxu0 0.0
      %3971 = vmatpush2.msra.mxu0 0.0
      %3972 = vmatprep.subr.mxu0 0.0
      %3973 = vmatpush2.msra.mxu0 0.0
      %3974 = vmatprep.subr.mxu0 0.0
      %3975 = vmatpush2.msra.mxu0 0.0
      %3976 = vmatprep.subr.mxu0 0.0
      %3977 = vmatpush2.msra.mxu0 0.0
      %3978 = vmatprep.subr.mxu0 0.0
      %3979 = vmatpush2.msra.mxu0 0.0
      %3980 = vmatprep.subr.mxu0 0.0
      %3981 = vmatpush2.msra.mxu0 0.0
      %3982 = vmatprep.subr.mxu0 0.0
      %3983 = vmatpush2.msra.mxu0 0.0
      %3984 = vmatprep.subr.mxu0 0.0
      %3985 = vmatpush2.msra.mxu0 0.0
      %3986 = vmatprep.subr.mxu0 0.0
      %3987 = vmatpush2.msra.mxu0 0.0
      %3988 = vmatprep.subr.mxu0 0.0
      %3989 = vmatpush2.msra.mxu0 0.0
      %3990 = vmatprep.subr.mxu0 0.0
      %3991 = vmatpush2.msra.mxu0 0.0
      %3992 = vmatprep.subr.mxu0 0.0
      %3993 = vmatpush2.msra.mxu0 0.0
      %3994 = vmatprep.mubr.f32.mxu0 0.0
      %3995 = vmatmul.mubr.f32.gmra.mxu0 %v3201
      %v3996 = vpop.f32.mrf.mxu0
      %v3997 = vadd.f32 0.0, %v3996
      %v3998 = vpop.f32.mrf.mxu0
      %3999 = vdwg.mxu0
      %s4000 = scalar_lea.vmem %s5, 40
      %v4001 = vld [vmem:[%s4000] sm:$0xff]
      %v4003 = vsel %vm763, %v4001, 0
      %4005 = vmatprep.subr.mxu0 0.0
      %4006 = vmatpush1.msra.mxu0 0.0
      %4007 = vmatprep.subr.mxu0 0.0
      %4008 = vmatpush1.msra.mxu0 0.0
      %4009 = vmatprep.subr.mxu0 0.0
      %4010 = vmatpush1.msra.mxu0 0.0
      %4011 = vmatprep.subr.mxu0 0.0
      %4012 = vmatpush1.msra.mxu0 0.0
      %4013 = vmatprep.subr.mxu0 0.0
      %4014 = vmatpush1.msra.mxu0 0.0
      %4015 = vmatprep.subr.mxu0 0.0
      %4016 = vmatpush1.msra.mxu0 0.0
      %4017 = vmatprep.subr.mxu0 0.0
      %4018 = vmatpush1.msra.mxu0 0.0
      %4019 = vmatprep.subr.mxu0 0.0
      %4020 = vmatpush1.msra.mxu0 0.0
      %4021 = vmatprep.subr.mxu0 0.0
      %4022 = vmatpush1.msra.mxu0 0.0
      %4023 = vmatprep.subr.mxu0 0.0
      %4024 = vmatpush1.msra.mxu0 0.0
      %4025 = vmatprep.subr.mxu0 0.0
      %4026 = vmatpush1.msra.mxu0 0.0
      %4027 = vmatprep.subr.mxu0 0.0
      %4028 = vmatpush1.msra.mxu0 0.0
      %4029 = vmatprep.subr.mxu0 0.0
      %4030 = vmatpush1.msra.mxu0 0.0
      %4031 = vmatprep.subr.mxu0 0.0
      %4032 = vmatpush1.msra.mxu0 0.0
      %4033 = vmatprep.subr.mxu0 0.0
      %4034 = vmatpush1.msra.mxu0 0.0
      %4035 = vmatprep.subr.mxu0 0.0
      %4036 = vmatpush1.msra.mxu0 %v3997
      %4037 = vmatprep.subr.mxu0 0.0
      %4038 = vmatpush2.msra.mxu0 0.0
      %4039 = vmatprep.subr.mxu0 0.0
      %4040 = vmatpush2.msra.mxu0 0.0
      %4041 = vmatprep.subr.mxu0 0.0
      %4042 = vmatpush2.msra.mxu0 0.0
      %4043 = vmatprep.subr.mxu0 0.0
      %4044 = vmatpush2.msra.mxu0 0.0
      %4045 = vmatprep.subr.mxu0 0.0
      %4046 = vmatpush2.msra.mxu0 0.0
      %4047 = vmatprep.subr.mxu0 0.0
      %4048 = vmatpush2.msra.mxu0 0.0
      %4049 = vmatprep.subr.mxu0 0.0
      %4050 = vmatpush2.msra.mxu0 0.0
      %4051 = vmatprep.subr.mxu0 0.0
      %4052 = vmatpush2.msra.mxu0 0.0
      %4053 = vmatprep.subr.mxu0 0.0
      %4054 = vmatpush2.msra.mxu0 0.0
      %4055 = vmatprep.subr.mxu0 0.0
      %4056 = vmatpush2.msra.mxu0 0.0
      %4057 = vmatprep.subr.mxu0 0.0
      %4058 = vmatpush2.msra.mxu0 0.0
      %4059 = vmatprep.subr.mxu0 0.0
      %4060 = vmatpush2.msra.mxu0 0.0
      %4061 = vmatprep.subr.mxu0 0.0
      %4062 = vmatpush2.msra.mxu0 0.0
      %4063 = vmatprep.subr.mxu0 0.0
      %4064 = vmatpush2.msra.mxu0 0.0
      %4065 = vmatprep.subr.mxu0 0.0
      %4066 = vmatpush2.msra.mxu0 0.0
      %4067 = vmatprep.subr.mxu0 0.0
      %4068 = vmatpush2.msra.mxu0 0.0
      %4069 = vmatprep.mubr.f32.mxu0 0.0
      %4070 = vmatmul.mubr.f32.gmra.mxu0 %v4003
      %v4071 = vpop.f32.mrf.mxu0
      %v4072 = vadd.f32 0.0, %v4071
      %v4073 = vpop.f32.mrf.mxu0
      %4074 = vdwg.mxu0
      %v4075 = vadd.f32 %v3929, %v4072
      %4076 = vmatprep.subr.mxu0 0.0
      %4077 = vmatpush1.msra.mxu0 0.0
      %4078 = vmatprep.subr.mxu0 0.0
      %4079 = vmatpush1.msra.mxu0 0.0
      %4080 = vmatprep.subr.mxu0 0.0
      %4081 = vmatpush1.msra.mxu0 0.0
      %4082 = vmatprep.subr.mxu0 0.0
      %4083 = vmatpush1.msra.mxu0 0.0
      %4084 = vmatprep.subr.mxu0 0.0
      %4085 = vmatpush1.msra.mxu0 0.0
      %4086 = vmatprep.subr.mxu0 0.0
      %4087 = vmatpush1.msra.mxu0 0.0
      %4088 = vmatprep.subr.mxu0 0.0
      %4089 = vmatpush1.msra.mxu0 0.0
      %4090 = vmatprep.subr.mxu0 0.0
      %4091 = vmatpush1.msra.mxu0 0.0
      %4092 = vmatprep.subr.mxu0 0.0
      %4093 = vmatpush1.msra.mxu0 %v1538
      %4094 = vmatprep.subr.mxu0 0.0
      %4095 = vmatpush1.msra.mxu0 %v1537
      %4096 = vmatprep.subr.mxu0 0.0
      %4097 = vmatpush1.msra.mxu0 %v1536
      %4098 = vmatprep.subr.mxu0 0.0
      %4099 = vmatpush1.msra.mxu0 %v1535
      %4100 = vmatprep.subr.mxu0 0.0
      %4101 = vmatpush1.msra.mxu0 %v1534
      %4102 = vmatprep.subr.mxu0 0.0
      %4103 = vmatpush1.msra.mxu0 %v1533
      %4104 = vmatprep.subr.mxu0 0.0
      %4105 = vmatpush1.msra.mxu0 %v1532
      %4106 = vmatprep.subr.mxu0 0.0
      %4107 = vmatpush1.msra.mxu0 %v1531
      %4108 = vmatprep.subr.mxu0 0.0
      %4109 = vmatpush2.msra.mxu0 0.0
      %4110 = vmatprep.subr.mxu0 0.0
      %4111 = vmatpush2.msra.mxu0 0.0
      %4112 = vmatprep.subr.mxu0 0.0
      %4113 = vmatpush2.msra.mxu0 0.0
      %4114 = vmatprep.subr.mxu0 0.0
      %4115 = vmatpush2.msra.mxu0 0.0
      %4116 = vmatprep.subr.mxu0 0.0
      %4117 = vmatpush2.msra.mxu0 0.0
      %4118 = vmatprep.subr.mxu0 0.0
      %4119 = vmatpush2.msra.mxu0 0.0
      %4120 = vmatprep.subr.mxu0 0.0
      %4121 = vmatpush2.msra.mxu0 0.0
      %4122 = vmatprep.subr.mxu0 0.0
      %4123 = vmatpush2.msra.mxu0 0.0
      %4124 = vmatprep.subr.mxu0 0.0
      %4125 = vmatpush2.msra.mxu0 0.0
      %4126 = vmatprep.subr.mxu0 0.0
      %4127 = vmatpush2.msra.mxu0 0.0
      %4128 = vmatprep.subr.mxu0 0.0
      %4129 = vmatpush2.msra.mxu0 0.0
      %4130 = vmatprep.subr.mxu0 0.0
      %4131 = vmatpush2.msra.mxu0 0.0
      %4132 = vmatprep.subr.mxu0 0.0
      %4133 = vmatpush2.msra.mxu0 0.0
      %4134 = vmatprep.subr.mxu0 0.0
      %4135 = vmatpush2.msra.mxu0 0.0
      %4136 = vmatprep.subr.mxu0 0.0
      %4137 = vmatpush2.msra.mxu0 0.0
      %4138 = vmatprep.subr.mxu0 0.0
      %4139 = vmatpush2.msra.mxu0 0.0
      %4140 = vmatprep.mubr.f32.mxu0 0.0
      %4141 = vmatmul.mubr.f32.gmra.mxu0 %v3201
      %v4142 = vpop.f32.mrf.mxu0
      %v4143 = vadd.f32 0.0, %v4142
      %v4144 = vpop.f32.mrf.mxu0
      %4145 = vdwg.mxu0
      %s4146 = scalar_lea.vmem %s5, 48
      %v4147 = vld [vmem:[%s4146] sm:$0xff]
      %v4149 = vsel %vm763, %v4147, 0
      %4151 = vmatprep.subr.mxu0 0.0
      %4152 = vmatpush1.msra.mxu0 0.0
      %4153 = vmatprep.subr.mxu0 0.0
      %4154 = vmatpush1.msra.mxu0 0.0
      %4155 = vmatprep.subr.mxu0 0.0
      %4156 = vmatpush1.msra.mxu0 0.0
      %4157 = vmatprep.subr.mxu0 0.0
      %4158 = vmatpush1.msra.mxu0 0.0
      %4159 = vmatprep.subr.mxu0 0.0
      %4160 = vmatpush1.msra.mxu0 0.0
      %4161 = vmatprep.subr.mxu0 0.0
      %4162 = vmatpush1.msra.mxu0 0.0
      %4163 = vmatprep.subr.mxu0 0.0
      %4164 = vmatpush1.msra.mxu0 0.0
      %4165 = vmatprep.subr.mxu0 0.0
      %4166 = vmatpush1.msra.mxu0 0.0
      %4167 = vmatprep.subr.mxu0 0.0
      %4168 = vmatpush1.msra.mxu0 0.0
      %4169 = vmatprep.subr.mxu0 0.0
      %4170 = vmatpush1.msra.mxu0 0.0
      %4171 = vmatprep.subr.mxu0 0.0
      %4172 = vmatpush1.msra.mxu0 0.0
      %4173 = vmatprep.subr.mxu0 0.0
      %4174 = vmatpush1.msra.mxu0 0.0
      %4175 = vmatprep.subr.mxu0 0.0
      %4176 = vmatpush1.msra.mxu0 0.0
      %4177 = vmatprep.subr.mxu0 0.0
      %4178 = vmatpush1.msra.mxu0 0.0
      %4179 = vmatprep.subr.mxu0 0.0
      %4180 = vmatpush1.msra.mxu0 0.0
      %4181 = vmatprep.subr.mxu0 0.0
      %4182 = vmatpush1.msra.mxu0 %v4143
      %4183 = vmatprep.subr.mxu0 0.0
      %4184 = vmatpush2.msra.mxu0 0.0
      %4185 = vmatprep.subr.mxu0 0.0
      %4186 = vmatpush2.msra.mxu0 0.0
      %4187 = vmatprep.subr.mxu0 0.0
      %4188 = vmatpush2.msra.mxu0 0.0
      %4189 = vmatprep.subr.mxu0 0.0
      %4190 = vmatpush2.msra.mxu0 0.0
      %4191 = vmatprep.subr.mxu0 0.0
      %4192 = vmatpush2.msra.mxu0 0.0
      %4193 = vmatprep.subr.mxu0 0.0
      %4194 = vmatpush2.msra.mxu0 0.0
      %4195 = vmatprep.subr.mxu0 0.0
      %4196 = vmatpush2.msra.mxu0 0.0
      %4197 = vmatprep.subr.mxu0 0.0
      %4198 = vmatpush2.msra.mxu0 0.0
      %4199 = vmatprep.subr.mxu0 0.0
      %4200 = vmatpush2.msra.mxu0 0.0
      %4201 = vmatprep.subr.mxu0 0.0
      %4202 = vmatpush2.msra.mxu0 0.0
      %4203 = vmatprep.subr.mxu0 0.0
      %4204 = vmatpush2.msra.mxu0 0.0
      %4205 = vmatprep.subr.mxu0 0.0
      %4206 = vmatpush2.msra.mxu0 0.0
      %4207 = vmatprep.subr.mxu0 0.0
      %4208 = vmatpush2.msra.mxu0 0.0
      %4209 = vmatprep.subr.mxu0 0.0
      %4210 = vmatpush2.msra.mxu0 0.0
      %4211 = vmatprep.subr.mxu0 0.0
      %4212 = vmatpush2.msra.mxu0 0.0
      %4213 = vmatprep.subr.mxu0 0.0
      %4214 = vmatpush2.msra.mxu0 0.0
      %4215 = vmatprep.mubr.f32.mxu0 0.0
      %4216 = vmatmul.mubr.f32.gmra.mxu0 %v4149
      %v4217 = vpop.f32.mrf.mxu0
      %v4218 = vadd.f32 0.0, %v4217
      %v4219 = vpop.f32.mrf.mxu0
      %4220 = vdwg.mxu0
      %v4221 = vadd.f32 %v4075, %v4218
      %4222 = vmatprep.subr.mxu0 0.0
      %4223 = vmatpush1.msra.mxu0 0.0
      %4224 = vmatprep.subr.mxu0 0.0
      %4225 = vmatpush1.msra.mxu0 0.0
      %4226 = vmatprep.subr.mxu0 0.0
      %4227 = vmatpush1.msra.mxu0 0.0
      %4228 = vmatprep.subr.mxu0 0.0
      %4229 = vmatpush1.msra.mxu0 0.0
      %4230 = vmatprep.subr.mxu0 0.0
      %4231 = vmatpush1.msra.mxu0 0.0
      %4232 = vmatprep.subr.mxu0 0.0
      %4233 = vmatpush1.msra.mxu0 0.0
      %4234 = vmatprep.subr.mxu0 0.0
      %4235 = vmatpush1.msra.mxu0 0.0
      %4236 = vmatprep.subr.mxu0 0.0
      %4237 = vmatpush1.msra.mxu0 0.0
      %4238 = vmatprep.subr.mxu0 0.0
      %4239 = vmatpush1.msra.mxu0 %v1693
      %4240 = vmatprep.subr.mxu0 0.0
      %4241 = vmatpush1.msra.mxu0 %v1692
      %4242 = vmatprep.subr.mxu0 0.0
      %4243 = vmatpush1.msra.mxu0 %v1691
      %4244 = vmatprep.subr.mxu0 0.0
      %4245 = vmatpush1.msra.mxu0 %v1690
      %4246 = vmatprep.subr.mxu0 0.0
      %4247 = vmatpush1.msra.mxu0 %v1689
      %4248 = vmatprep.subr.mxu0 0.0
      %4249 = vmatpush1.msra.mxu0 %v1688
      %4250 = vmatprep.subr.mxu0 0.0
      %4251 = vmatpush1.msra.mxu0 %v1687
      %4252 = vmatprep.subr.mxu0 0.0
      %4253 = vmatpush1.msra.mxu0 %v1686
      %4254 = vmatprep.subr.mxu0 0.0
      %4255 = vmatpush2.msra.mxu0 0.0
      %4256 = vmatprep.subr.mxu0 0.0
      %4257 = vmatpush2.msra.mxu0 0.0
      %4258 = vmatprep.subr.mxu0 0.0
      %4259 = vmatpush2.msra.mxu0 0.0
      %4260 = vmatprep.subr.mxu0 0.0
      %4261 = vmatpush2.msra.mxu0 0.0
      %4262 = vmatprep.subr.mxu0 0.0
      %4263 = vmatpush2.msra.mxu0 0.0
      %4264 = vmatprep.subr.mxu0 0.0
      %4265 = vmatpush2.msra.mxu0 0.0
      %4266 = vmatprep.subr.mxu0 0.0
      %4267 = vmatpush2.msra.mxu0 0.0
      %4268 = vmatprep.subr.mxu0 0.0
      %4269 = vmatpush2.msra.mxu0 0.0
      %4270 = vmatprep.subr.mxu0 0.0
      %4271 = vmatpush2.msra.mxu0 0.0
      %4272 = vmatprep.subr.mxu0 0.0
      %4273 = vmatpush2.msra.mxu0 0.0
      %4274 = vmatprep.subr.mxu0 0.0
      %4275 = vmatpush2.msra.mxu0 0.0
      %4276 = vmatprep.subr.mxu0 0.0
      %4277 = vmatpush2.msra.mxu0 0.0
      %4278 = vmatprep.subr.mxu0 0.0
      %4279 = vmatpush2.msra.mxu0 0.0
      %4280 = vmatprep.subr.mxu0 0.0
      %4281 = vmatpush2.msra.mxu0 0.0
      %4282 = vmatprep.subr.mxu0 0.0
      %4283 = vmatpush2.msra.mxu0 0.0
      %4284 = vmatprep.subr.mxu0 0.0
      %4285 = vmatpush2.msra.mxu0 0.0
      %4286 = vmatprep.mubr.f32.mxu0 0.0
      %4287 = vmatmul.mubr.f32.gmra.mxu0 %v3201
      %v4288 = vpop.f32.mrf.mxu0
      %v4289 = vadd.f32 0.0, %v4288
      %v4290 = vpop.f32.mrf.mxu0
      %4291 = vdwg.mxu0
      %s4292 = scalar_lea.vmem %s5, 56
      %v4293 = vld [vmem:[%s4292] sm:$0xff]
      %v4295 = vsel %vm763, %v4293, 0
      %4297 = vmatprep.subr.mxu0 0.0
      %4298 = vmatpush1.msra.mxu0 0.0
      %4299 = vmatprep.subr.mxu0 0.0
      %4300 = vmatpush1.msra.mxu0 0.0
      %4301 = vmatprep.subr.mxu0 0.0
      %4302 = vmatpush1.msra.mxu0 0.0
      %4303 = vmatprep.subr.mxu0 0.0
      %4304 = vmatpush1.msra.mxu0 0.0
      %4305 = vmatprep.subr.mxu0 0.0
      %4306 = vmatpush1.msra.mxu0 0.0
      %4307 = vmatprep.subr.mxu0 0.0
      %4308 = vmatpush1.msra.mxu0 0.0
      %4309 = vmatprep.subr.mxu0 0.0
      %4310 = vmatpush1.msra.mxu0 0.0
      %4311 = vmatprep.subr.mxu0 0.0
      %4312 = vmatpush1.msra.mxu0 0.0
      %4313 = vmatprep.subr.mxu0 0.0
      %4314 = vmatpush1.msra.mxu0 0.0
      %4315 = vmatprep.subr.mxu0 0.0
      %4316 = vmatpush1.msra.mxu0 0.0
      %4317 = vmatprep.subr.mxu0 0.0
      %4318 = vmatpush1.msra.mxu0 0.0
      %4319 = vmatprep.subr.mxu0 0.0
      %4320 = vmatpush1.msra.mxu0 0.0
      %4321 = vmatprep.subr.mxu0 0.0
      %4322 = vmatpush1.msra.mxu0 0.0
      %4323 = vmatprep.subr.mxu0 0.0
      %4324 = vmatpush1.msra.mxu0 0.0
      %4325 = vmatprep.subr.mxu0 0.0
      %4326 = vmatpush1.msra.mxu0 0.0
      %4327 = vmatprep.subr.mxu0 0.0
      %4328 = vmatpush1.msra.mxu0 %v4289
      %4329 = vmatprep.subr.mxu0 0.0
      %4330 = vmatpush2.msra.mxu0 0.0
      %4331 = vmatprep.subr.mxu0 0.0
      %4332 = vmatpush2.msra.mxu0 0.0
      %4333 = vmatprep.subr.mxu0 0.0
      %4334 = vmatpush2.msra.mxu0 0.0
      %4335 = vmatprep.subr.mxu0 0.0
      %4336 = vmatpush2.msra.mxu0 0.0
      %4337 = vmatprep.subr.mxu0 0.0
      %4338 = vmatpush2.msra.mxu0 0.0
      %4339 = vmatprep.subr.mxu0 0.0
      %4340 = vmatpush2.msra.mxu0 0.0
      %4341 = vmatprep.subr.mxu0 0.0
      %4342 = vmatpush2.msra.mxu0 0.0
      %4343 = vmatprep.subr.mxu0 0.0
      %4344 = vmatpush2.msra.mxu0 0.0
      %4345 = vmatprep.subr.mxu0 0.0
      %4346 = vmatpush2.msra.mxu0 0.0
      %4347 = vmatprep.subr.mxu0 0.0
      %4348 = vmatpush2.msra.mxu0 0.0
      %4349 = vmatprep.subr.mxu0 0.0
      %4350 = vmatpush2.msra.mxu0 0.0
      %4351 = vmatprep.subr.mxu0 0.0
      %4352 = vmatpush2.msra.mxu0 0.0
      %4353 = vmatprep.subr.mxu0 0.0
      %4354 = vmatpush2.msra.mxu0 0.0
      %4355 = vmatprep.subr.mxu0 0.0
      %4356 = vmatpush2.msra.mxu0 0.0
      %4357 = vmatprep.subr.mxu0 0.0
      %4358 = vmatpush2.msra.mxu0 0.0
      %4359 = vmatprep.subr.mxu0 0.0
      %4360 = vmatpush2.msra.mxu0 0.0
      %4361 = vmatprep.mubr.f32.mxu0 0.0
      %4362 = vmatmul.mubr.f32.gmra.mxu0 %v4295
      %v4363 = vpop.f32.mrf.mxu0
      %v4364 = vadd.f32 0.0, %v4363
      %v4365 = vpop.f32.mrf.mxu0
      %4366 = vdwg.mxu0
      %v4367 = vadd.f32 %v4221, %v4364
      %4368 = vmatprep.subr.mxu0 0.0
      %4369 = vmatpush1.msra.mxu0 0.0
      %4370 = vmatprep.subr.mxu0 0.0
      %4371 = vmatpush1.msra.mxu0 0.0
      %4372 = vmatprep.subr.mxu0 0.0
      %4373 = vmatpush1.msra.mxu0 0.0
      %4374 = vmatprep.subr.mxu0 0.0
      %4375 = vmatpush1.msra.mxu0 0.0
      %4376 = vmatprep.subr.mxu0 0.0
      %4377 = vmatpush1.msra.mxu0 0.0
      %4378 = vmatprep.subr.mxu0 0.0
      %4379 = vmatpush1.msra.mxu0 0.0
      %4380 = vmatprep.subr.mxu0 0.0
      %4381 = vmatpush1.msra.mxu0 0.0
      %4382 = vmatprep.subr.mxu0 0.0
      %4383 = vmatpush1.msra.mxu0 0.0
      %4384 = vmatprep.subr.mxu0 0.0
      %4385 = vmatpush1.msra.mxu0 %v1848
      %4386 = vmatprep.subr.mxu0 0.0
      %4387 = vmatpush1.msra.mxu0 %v1847
      %4388 = vmatprep.subr.mxu0 0.0
      %4389 = vmatpush1.msra.mxu0 %v1846
      %4390 = vmatprep.subr.mxu0 0.0
      %4391 = vmatpush1.msra.mxu0 %v1845
      %4392 = vmatprep.subr.mxu0 0.0
      %4393 = vmatpush1.msra.mxu0 %v1844
      %4394 = vmatprep.subr.mxu0 0.0
      %4395 = vmatpush1.msra.mxu0 %v1843
      %4396 = vmatprep.subr.mxu0 0.0
      %4397 = vmatpush1.msra.mxu0 %v1842
      %4398 = vmatprep.subr.mxu0 0.0
      %4399 = vmatpush1.msra.mxu0 %v1841
      %4400 = vmatprep.subr.mxu0 0.0
      %4401 = vmatpush2.msra.mxu0 0.0
      %4402 = vmatprep.subr.mxu0 0.0
      %4403 = vmatpush2.msra.mxu0 0.0
      %4404 = vmatprep.subr.mxu0 0.0
      %4405 = vmatpush2.msra.mxu0 0.0
      %4406 = vmatprep.subr.mxu0 0.0
      %4407 = vmatpush2.msra.mxu0 0.0
      %4408 = vmatprep.subr.mxu0 0.0
      %4409 = vmatpush2.msra.mxu0 0.0
      %4410 = vmatprep.subr.mxu0 0.0
      %4411 = vmatpush2.msra.mxu0 0.0
      %4412 = vmatprep.subr.mxu0 0.0
      %4413 = vmatpush2.msra.mxu0 0.0
      %4414 = vmatprep.subr.mxu0 0.0
      %4415 = vmatpush2.msra.mxu0 0.0
      %4416 = vmatprep.subr.mxu0 0.0
      %4417 = vmatpush2.msra.mxu0 0.0
      %4418 = vmatprep.subr.mxu0 0.0
      %4419 = vmatpush2.msra.mxu0 0.0
      %4420 = vmatprep.subr.mxu0 0.0
      %4421 = vmatpush2.msra.mxu0 0.0
      %4422 = vmatprep.subr.mxu0 0.0
      %4423 = vmatpush2.msra.mxu0 0.0
      %4424 = vmatprep.subr.mxu0 0.0
      %4425 = vmatpush2.msra.mxu0 0.0
      %4426 = vmatprep.subr.mxu0 0.0
      %4427 = vmatpush2.msra.mxu0 0.0
      %4428 = vmatprep.subr.mxu0 0.0
      %4429 = vmatpush2.msra.mxu0 0.0
      %4430 = vmatprep.subr.mxu0 0.0
      %4431 = vmatpush2.msra.mxu0 0.0
      %4432 = vmatprep.mubr.f32.mxu0 0.0
      %4433 = vmatmul.mubr.f32.gmra.mxu0 %v3201
      %v4434 = vpop.f32.mrf.mxu0
      %v4435 = vadd.f32 0.0, %v4434
      %v4436 = vpop.f32.mrf.mxu0
      %4437 = vdwg.mxu0
      %s4438 = scalar_lea.vmem %s5, 64
      %v4439 = vld [vmem:[%s4438] sm:$0xff]
      %v4441 = vsel %vm763, %v4439, 0
      %4443 = vmatprep.subr.mxu0 0.0
      %4444 = vmatpush1.msra.mxu0 0.0
      %4445 = vmatprep.subr.mxu0 0.0
      %4446 = vmatpush1.msra.mxu0 0.0
      %4447 = vmatprep.subr.mxu0 0.0
      %4448 = vmatpush1.msra.mxu0 0.0
      %4449 = vmatprep.subr.mxu0 0.0
      %4450 = vmatpush1.msra.mxu0 0.0
      %4451 = vmatprep.subr.mxu0 0.0
      %4452 = vmatpush1.msra.mxu0 0.0
      %4453 = vmatprep.subr.mxu0 0.0
      %4454 = vmatpush1.msra.mxu0 0.0
      %4455 = vmatprep.subr.mxu0 0.0
      %4456 = vmatpush1.msra.mxu0 0.0
      %4457 = vmatprep.subr.mxu0 0.0
      %4458 = vmatpush1.msra.mxu0 0.0
      %4459 = vmatprep.subr.mxu0 0.0
      %4460 = vmatpush1.msra.mxu0 0.0
      %4461 = vmatprep.subr.mxu0 0.0
      %4462 = vmatpush1.msra.mxu0 0.0
      %4463 = vmatprep.subr.mxu0 0.0
      %4464 = vmatpush1.msra.mxu0 0.0
      %4465 = vmatprep.subr.mxu0 0.0
      %4466 = vmatpush1.msra.mxu0 0.0
      %4467 = vmatprep.subr.mxu0 0.0
      %4468 = vmatpush1.msra.mxu0 0.0
      %4469 = vmatprep.subr.mxu0 0.0
      %4470 = vmatpush1.msra.mxu0 0.0
      %4471 = vmatprep.subr.mxu0 0.0
      %4472 = vmatpush1.msra.mxu0 0.0
      %4473 = vmatprep.subr.mxu0 0.0
      %4474 = vmatpush1.msra.mxu0 %v4435
      %4475 = vmatprep.subr.mxu0 0.0
      %4476 = vmatpush2.msra.mxu0 0.0
      %4477 = vmatprep.subr.mxu0 0.0
      %4478 = vmatpush2.msra.mxu0 0.0
      %4479 = vmatprep.subr.mxu0 0.0
      %4480 = vmatpush2.msra.mxu0 0.0
      %4481 = vmatprep.subr.mxu0 0.0
      %4482 = vmatpush2.msra.mxu0 0.0
      %4483 = vmatprep.subr.mxu0 0.0
      %4484 = vmatpush2.msra.mxu0 0.0
      %4485 = vmatprep.subr.mxu0 0.0
      %4486 = vmatpush2.msra.mxu0 0.0
      %4487 = vmatprep.subr.mxu0 0.0
      %4488 = vmatpush2.msra.mxu0 0.0
      %4489 = vmatprep.subr.mxu0 0.0
      %4490 = vmatpush2.msra.mxu0 0.0
      %4491 = vmatprep.subr.mxu0 0.0
      %4492 = vmatpush2.msra.mxu0 0.0
      %4493 = vmatprep.subr.mxu0 0.0
      %4494 = vmatpush2.msra.mxu0 0.0
      %4495 = vmatprep.subr.mxu0 0.0
      %4496 = vmatpush2.msra.mxu0 0.0
      %4497 = vmatprep.subr.mxu0 0.0
      %4498 = vmatpush2.msra.mxu0 0.0
      %4499 = vmatprep.subr.mxu0 0.0
      %4500 = vmatpush2.msra.mxu0 0.0
      %4501 = vmatprep.subr.mxu0 0.0
      %4502 = vmatpush2.msra.mxu0 0.0
      %4503 = vmatprep.subr.mxu0 0.0
      %4504 = vmatpush2.msra.mxu0 0.0
      %4505 = vmatprep.subr.mxu0 0.0
      %4506 = vmatpush2.msra.mxu0 0.0
      %4507 = vmatprep.mubr.f32.mxu0 0.0
      %4508 = vmatmul.mubr.f32.gmra.mxu0 %v4441
      %v4509 = vpop.f32.mrf.mxu0
      %v4510 = vadd.f32 0.0, %v4509
      %v4511 = vpop.f32.mrf.mxu0
      %4512 = vdwg.mxu0
      %v4513 = vadd.f32 %v4367, %v4510
      %v4514 = vld [vmem:[%s6] sm:$0xff]
      %4516 = vset.pattern.permute.xlu0 0
      %4517 = vperm.xlu0 %4516, %v4514
      %v4518 = vpop.permute.xlu0 %4517
      %v4520 = vadd.f32 %v4513, %v4518
      %v4521 = vmax.f32 %v4520, 0.0
      %v4522 = vadd.f32 %v4521, %v598
      %v4523 = vld [vmem:[%s2] sm:$0xff]
      %v4524 = vld [vmem:[%s2 + $0x8] sm:$0xff]
      %v4525 = vld [vmem:[%s2 + $0x10] sm:$0xff]
      %v4526 = vld [vmem:[%s2 + $0x18] sm:$0xff]
      %v4527 = vld [vmem:[%s2 + $0x20] sm:$0xff]
      %v4528 = vld [vmem:[%s2 + $0x28] sm:$0xff]
      %v4529 = vld [vmem:[%s2 + $0x30] sm:$0xff]
      %v4530 = vld [vmem:[%s2 + $0x38] sm:$0xff]
      %v4532 = vsel %vm607, %v4522, 0
      %4534 = vmatprep.subr.mxu0 0.0
      %4535 = vmatpush1.msra.mxu0 0.0
      %4536 = vmatprep.subr.mxu0 0.0
      %4537 = vmatpush1.msra.mxu0 0.0
      %4538 = vmatprep.subr.mxu0 0.0
      %4539 = vmatpush1.msra.mxu0 0.0
      %4540 = vmatprep.subr.mxu0 0.0
      %4541 = vmatpush1.msra.mxu0 0.0
      %4542 = vmatprep.subr.mxu0 0.0
      %4543 = vmatpush1.msra.mxu0 0.0
      %4544 = vmatprep.subr.mxu0 0.0
      %4545 = vmatpush1.msra.mxu0 0.0
      %4546 = vmatprep.subr.mxu0 0.0
      %4547 = vmatpush1.msra.mxu0 0.0
      %4548 = vmatprep.subr.mxu0 0.0
      %4549 = vmatpush1.msra.mxu0 0.0
      %4550 = vmatprep.subr.mxu0 0.0
      %4551 = vmatpush1.msra.mxu0 %v4530
      %4552 = vmatprep.subr.mxu0 0.0
      %4553 = vmatpush1.msra.mxu0 %v4529
      %4554 = vmatprep.subr.mxu0 0.0
      %4555 = vmatpush1.msra.mxu0 %v4528
      %4556 = vmatprep.subr.mxu0 0.0
      %4557 = vmatpush1.msra.mxu0 %v4527
      %4558 = vmatprep.subr.mxu0 0.0
      %4559 = vmatpush1.msra.mxu0 %v4526
      %4560 = vmatprep.subr.mxu0 0.0
      %4561 = vmatpush1.msra.mxu0 %v4525
      %4562 = vmatprep.subr.mxu0 0.0
      %4563 = vmatpush1.msra.mxu0 %v4524
      %4564 = vmatprep.subr.mxu0 0.0
      %4565 = vmatpush1.msra.mxu0 %v4523
      %4566 = vmatprep.subr.mxu0 0.0
      %4567 = vmatpush2.msra.mxu0 0.0
      %4568 = vmatprep.subr.mxu0 0.0
      %4569 = vmatpush2.msra.mxu0 0.0
      %4570 = vmatprep.subr.mxu0 0.0
      %4571 = vmatpush2.msra.mxu0 0.0
      %4572 = vmatprep.subr.mxu0 0.0
      %4573 = vmatpush2.msra.mxu0 0.0
      %4574 = vmatprep.subr.mxu0 0.0
      %4575 = vmatpush2.msra.mxu0 0.0
      %4576 = vmatprep.subr.mxu0 0.0
      %4577 = vmatpush2.msra.mxu0 0.0
      %4578 = vmatprep.subr.mxu0 0.0
      %4579 = vmatpush2.msra.mxu0 0.0
      %4580 = vmatprep.subr.mxu0 0.0
      %4581 = vmatpush2.msra.mxu0 0.0
      %4582 = vmatprep.subr.mxu0 0.0
      %4583 = vmatpush2.msra.mxu0 0.0
      %4584 = vmatprep.subr.mxu0 0.0
      %4585 = vmatpush2.msra.mxu0 0.0
      %4586 = vmatprep.subr.mxu0 0.0
      %4587 = vmatpush2.msra.mxu0 0.0
      %4588 = vmatprep.subr.mxu0 0.0
      %4589 = vmatpush2.msra.mxu0 0.0
      %4590 = vmatprep.subr.mxu0 0.0
      %4591 = vmatpush2.msra.mxu0 0.0
      %4592 = vmatprep.subr.mxu0 0.0
      %4593 = vmatpush2.msra.mxu0 0.0
      %4594 = vmatprep.subr.mxu0 0.0
      %4595 = vmatpush2.msra.mxu0 0.0
      %4596 = vmatprep.subr.mxu0 0.0
      %4597 = vmatpush2.msra.mxu0 0.0
      %4598 = vmatprep.mubr.f32.mxu0 0.0
      %4599 = vmatmul.mubr.f32.gmra.mxu0 %v4532
      %v4600 = vpop.f32.mrf.mxu0
      %v4601 = vadd.f32 0.0, %v4600
      %v4602 = vpop.f32.mrf.mxu0
      %4603 = vdwg.mxu0
      %4604 = vst.msk [vmem:[%s597] sm:$0xff] %vm607, %v4601
      %p4605 = scmp.lt.s32.totalorder %s30, 1
      %s4606 = scalar_select %p4605, %s30, 1
      %s4607 = smul.addr %s4606, 8
      %s4608 = scalar_lea.vmem %s19, %s4607
      // Predicated region
      $region97: #{_lambda_.6} parent=95 // pred_check
        %p4609 = pneg %p452
      $region98: #{_lambda_.6} parent=95 // pred_check_branch
        %4611 = sbr.rel (%p4609) target = $region100
      $region99: #{_lambda_.6} parent=95 // pred_region
        _
      $region100: #{_lambda_.6} parent=95 // pred_fallthru
        _
    $region96: #{_lambda_.6} parent=5 // pred_fallthru
      _
    %p4612 = scmp.le.s32.totalorder 2, %s25
    // Predicated region
    $region101: #{_lambda_.6} parent=5 // pred_check
      %p4613 = pneg %p4612
    $region102: #{_lambda_.6} parent=5 // pred_check_branch
      %4615 = sbr.rel (%p4613) target = $region104
    $region103: #{_lambda_.6} parent=5 // pred_region
      %s4616 = ssub.s32 %s25, 2
      // Predicated region
      $region105: #{_lambda_.6} parent=103 // pred_check
        %p4617 = pneg %p458
      $region106: #{_lambda_.6} parent=103 // pred_check_branch
        %4619 = sbr.rel (%p4617) target = $region108
      $region107: #{_lambda_.6} parent=103 // pred_region
        %p4620 = scmp.lt.s32.totalorder %s31, 1
        %s4621 = scalar_select %p4620, %s31, 1
        %s4622 = smul.addr %s4621, 8
        %s4623 = scalar_lea.vmem %s19, %s4622
      $region108: #{_lambda_.6} parent=103 // pred_fallthru
        _
    $region104: #{_lambda_.6} parent=5 // pred_fallthru
      _
  $region6: #{_lambda_.6} parent=0 // loop_footer
    %s29 = sadd.s32 1, %s25
  $region7: #{_lambda_.6} parent=0 // loop_footer_branch
    %24 = sbr.rel target = $region3
  $region8: #{_lambda_.6} parent=0 // loop_exit
    _

</llo_original>
